<compile_context>
chip_gen: v7x
topology: tpu7x:2x2x1
jax: 0.10.0
libtpu: 0.0.40
codegen_flags: <defaults>
</compile_context>

<pallas_src>
import functools

import jax
import jax.numpy as jnp
from jax.experimental import pallas as pl
from jax.experimental.pallas import tpu as pltpu

LANE = 128
SUBLANE = 8


def _round_up(x, m):
    return (x + m - 1) // m * m


def _invres_kernel(x_ref, m_ref, w1_ref, b1_ref, w2_ref, b2_ref, w3_ref,
                   b3_ref, w4_ref, b4_ref, w5_ref, b5_ref, o_ref, *, wp):
    # x_ref : (1, HW, Cip)  spatially zero-padded input, rows flattened,
    #                       channels padded to a lane multiple, rows padded to
    #                       a sublane multiple.
    # m_ref : (HW, 1)       1.0 on interior pixels, 0.0 on halo / pad rows.
    # w1/w3/w5 : (Cp, Cp)   1x1 conv weights (channel-padded).
    # w2/w4    : (9*Cp, Cp) 3x3 conv weights, im2col-packed ((ky,kx)-major).
    # b*       : (1, Cp)
    # o_ref : (1, HW, Cop)  result on the padded domain (halo/pad rows are
    #                       garbage and get sliced off in the wrapper).
    hw = x_ref.shape[1]
    halo = wp + 1                       # largest |row shift| of a 3x3 tap
    x = x_ref[0]                        # (HW, Cip) f32
    mask = m_ref[...]                   # (HW, 1)   f32

    def conv1x1(t, w_ref, b_ref):
        return jnp.dot(t, w_ref[...],
                       preferred_element_type=jnp.float32) + b_ref[...]

    def conv3x3(t, w_ref, b_ref):
        # `t` is zero on every non-interior row, so a 'same' 3x3 conv tap
        # (dy, dx) is the static row window starting at halo + dy*wp + dx of
        # the zero-extended tile: no wrap-around, one concat for the whole
        # extension instead of one per tap.
        cp = t.shape[1]
        cap = jnp.zeros((halo, cp), jnp.float32)
        ext = jnp.concatenate([cap, t, cap], axis=0)       # (HW + 2*halo, Cp)
        taps = [ext[halo + dy * wp + dx: halo + dy * wp + dx + hw, :]
                for dy in (-1, 0, 1) for dx in (-1, 0, 1)]
        patches = jnp.concatenate(taps, axis=1)            # (HW, 9*Cp)
        return jnp.dot(patches, w_ref[...],
                       preferred_element_type=jnp.float32) + b_ref[...]

    relu = lambda v: jnp.maximum(v, 0.0)

    t1 = relu(conv1x1(x, w1_ref, b1_ref)) * mask    # zero halo -> valid conv2 input
    x1 = relu(conv3x3(t1, w2_ref, b2_ref))
    t3 = relu(conv1x1(x1, w3_ref, b3_ref)) * mask   # zero halo -> valid conv4 input
    x2 = relu(conv3x3(t3, w4_ref, b4_ref))
    x3 = conv1x1(x, w5_ref, b5_ref) + x2            # skip branch conv5(x) + x2

    o_ref[0] = x3.astype(o_ref.dtype)


# ---------- wrapper-side weight packing (layout work stays out of the kernel) --


def _pack_1x1(w_oihw, cip, cop):
    # PyTorch 1x1 conv weight (Co, Ci, 1, 1) -> right-matmul matrix (Cip, Cop).
    co, ci = w_oihw.shape[:2]
    m = jnp.zeros((cip, cop), jnp.float32)
    return m.at[:ci, :co].set(jnp.transpose(w_oihw[:, :, 0, 0], (1, 0)))


def _pack_3x3(w_oihw, cip, cop):
    # (Co, Ci, 3, 3) -> im2col-packed (9*Cip, Cop), tap blocks in (ky,kx) order.
    co, ci = w_oihw.shape[:2]
    w_hwio = jnp.transpose(w_oihw, (2, 3, 1, 0))          # (3, 3, Ci, Co)
    blocks = []
    for ky in range(3):
        for kx in range(3):
            blk = jnp.zeros((cip, cop), jnp.float32).at[:ci, :co].set(w_hwio[ky, kx])
            blocks.append(blk)
    return jnp.concatenate(blocks, axis=0)


def _pack_bias(b, cop):
    return jnp.zeros((1, cop), jnp.float32).at[0, :b.shape[0]].set(b)


@jax.jit
def inv_res_block(x_nchw, w1, b1, w2, b2, w3, b3, w4, b4, w5, b5):
    n, ci, h, w = x_nchw.shape
    co = w1.shape[0]
    cip = _round_up(ci, LANE)
    cop = _round_up(co, LANE)
    hp, wp = h + 2, w + 2
    hw_img = hp * wp
    hw = _round_up(hw_img, SUBLANE)

    # NCHW -> NHWC, channel-pad to a lane multiple, 1-pixel spatial zero halo,
    # flatten rows and pad the row count to a sublane multiple so the kernel
    # only ever sees lane- and sublane-dense (HW, C) tiles.
    x_nhwc = jnp.transpose(x_nchw, (0, 2, 3, 1)).astype(jnp.float32)
    x_nhwc = jnp.pad(x_nhwc, ((0, 0), (1, 1), (1, 1), (0, cip - ci)))
    x_rows = x_nhwc.reshape(n, hw_img, cip)
    x_rows = jnp.pad(x_rows, ((0, 0), (0, hw - hw_img), (0, 0)))

    mask = jnp.zeros((hp, wp), jnp.float32).at[1:h + 1, 1:w + 1].set(1.0)
    mask = jnp.pad(mask.reshape(hw_img, 1), ((0, hw - hw_img), (0, 0)))

    args = (
        x_rows, mask,
        _pack_1x1(w1, cip, cop), _pack_bias(b1, cop),
        _pack_3x3(w2, cop, cop), _pack_bias(b2, cop),
        _pack_1x1(w3, cop, cop), _pack_bias(b3, cop),
        _pack_3x3(w4, cop, cop), _pack_bias(b4, cop),
        _pack_1x1(w5, cip, cop), _pack_bias(b5, cop),
    )

    out_rows = pl.pallas_call(
        functools.partial(_invres_kernel, wp=wp),
        out_shape=jax.ShapeDtypeStruct((n, hw, cop), jnp.float32),
        grid_spec=pltpu.PrefetchScalarGridSpec(
            num_scalar_prefetch=0,
            grid=(n,),
            in_specs=[
                pl.BlockSpec((1, hw, cip), lambda b: (b, 0, 0)),
                pl.BlockSpec((hw, 1), lambda b: (0, 0)),
                pl.BlockSpec((cip, cop), lambda b: (0, 0)),
                pl.BlockSpec((1, cop), lambda b: (0, 0)),
                pl.BlockSpec((9 * cop, cop), lambda b: (0, 0)),
                pl.BlockSpec((1, cop), lambda b: (0, 0)),
                pl.BlockSpec((cop, cop), lambda b: (0, 0)),
                pl.BlockSpec((1, cop), lambda b: (0, 0)),
                pl.BlockSpec((9 * cop, cop), lambda b: (0, 0)),
                pl.BlockSpec((1, cop), lambda b: (0, 0)),
                pl.BlockSpec((cip, cop), lambda b: (0, 0)),
                pl.BlockSpec((1, cop), lambda b: (0, 0)),
            ],
            out_specs=pl.BlockSpec((1, hw, cop), lambda b: (b, 0, 0)),
        ),
        compiler_params=pltpu.CompilerParams(
            dimension_semantics=("parallel",),
            vmem_limit_bytes=48 * 1024 * 1024,
        ),
    )(*args)

    out = out_rows[:, :hw_img, :].reshape(n, hp, wp, cop)
    out = out[:, 1:h + 1, 1:w + 1, :co]
    return jnp.transpose(out, (0, 3, 1, 2))


# ----------------------------- pure-JAX reference ------------------------------


def _reference(x, w1, b1, w2, b2, w3, b3, w4, b4, w5, b5):
    def conv(v, wgt, b, pad):
        y = jax.lax.conv_general_dilated(
            v, jnp.transpose(wgt, (2, 3, 1, 0)), (1, 1),
            [(pad, pad), (pad, pad)],
            dimension_numbers=("NCHW", "HWIO", "NCHW"))
        return y + b.reshape(1, -1, 1, 1)

    r = jax.nn.relu
    x1 = r(conv(r(conv(x, w1, b1, 0)), w2, b2, 1))
    x2 = r(conv(r(conv(x1, w3, b3, 0)), w4, b4, 1))
    return conv(x, w5, b5, 0) + x2


if __name__ == "__main__":
    key = jax.random.PRNGKey(0)
    ks = jax.random.split(key, 11)

    n, c_in, c_out, h, w = 2, 4, 8, 16, 16
    x = jax.random.normal(ks[0], (n, c_in, h, w), jnp.float32)

    def conv_w(k, co, ci, ksz):
        fan_in = ci * ksz * ksz
        std = (2.0 / fan_in) ** 0.5
        return jax.random.normal(k, (co, ci, ksz, ksz), jnp.float32) * std

    w1 = conv_w(ks[1], c_out, c_in, 1); b1 = 0.05 * jax.random.normal(ks[2], (c_out,), jnp.float32)
    w2 = conv_w(ks[3], c_out, c_out, 3); b2 = 0.05 * jax.random.normal(ks[4], (c_out,), jnp.float32)
    w3 = conv_w(ks[5], c_out, c_out, 1); b3 = 0.05 * jax.random.normal(ks[6], (c_out,), jnp.float32)
    w4 = conv_w(ks[7], c_out, c_out, 3); b4 = 0.05 * jax.random.normal(ks[8], (c_out,), jnp.float32)
    w5 = conv_w(ks[9], c_out, c_in, 1); b5 = 0.05 * jax.random.normal(ks[10], (c_out,), jnp.float32)

    out = inv_res_block(x, w1, b1, w2, b2, w3, b3, w4, b4, w5, b5)
    out = jax.block_until_ready(out)

    ref = _reference(x, w1, b1, w2, b2, w3, b3, w4, b4, w5, b5)
    assert out.shape == (n, c_out, h, w)
    assert jnp.allclose(out, ref, rtol=1e-3, atol=1e-3), \
        float(jnp.max(jnp.abs(out - ref)))

    print("KERNEL_OK")
</pallas_src>

<mosaic_0001>
module attributes {stable_mosaic.version = 11 : i64} {
  func.func @_invres_kernel(%arg0: i32, %arg1: memref<1x328x128xf32, #tpu.memory_space<vmem>>, %arg2: memref<328x1xf32, #tpu.memory_space<vmem>>, %arg3: memref<128x128xf32, #tpu.memory_space<vmem>>, %arg4: memref<1x128xf32, #tpu.memory_space<vmem>>, %arg5: memref<1152x128xf32, #tpu.memory_space<vmem>>, %arg6: memref<1x128xf32, #tpu.memory_space<vmem>>, %arg7: memref<128x128xf32, #tpu.memory_space<vmem>>, %arg8: memref<1x128xf32, #tpu.memory_space<vmem>>, %arg9: memref<1152x128xf32, #tpu.memory_space<vmem>>, %arg10: memref<1x128xf32, #tpu.memory_space<vmem>>, %arg11: memref<128x128xf32, #tpu.memory_space<vmem>>, %arg12: memref<1x128xf32, #tpu.memory_space<vmem>>, %arg13: memref<1x328x128xf32, #tpu.memory_space<vmem>>) attributes {dimension_semantics = [#tpu.dimension_semantics<parallel>], iteration_bounds = array<i64: 2>, scalar_prefetch = 0 : i64, scratch_operands = 0 : i64, tpu.core_type = #tpu.core_type<tc>, window_params = [{transform_indices = @transform_0, window_bounds = array<i64: 1, 328, 128>}, {pipeline_mode = #tpu.pipeline_mode<synchronous>, transform_indices = @transform_1, window_bounds = array<i64: 328, 1>}, {pipeline_mode = #tpu.pipeline_mode<synchronous>, transform_indices = @transform_2, window_bounds = array<i64: 128, 128>}, {pipeline_mode = #tpu.pipeline_mode<synchronous>, transform_indices = @transform_3, window_bounds = array<i64: 1, 128>}, {pipeline_mode = #tpu.pipeline_mode<synchronous>, transform_indices = @transform_4, window_bounds = array<i64: 1152, 128>}, {pipeline_mode = #tpu.pipeline_mode<synchronous>, transform_indices = @transform_5, window_bounds = array<i64: 1, 128>}, {pipeline_mode = #tpu.pipeline_mode<synchronous>, transform_indices = @transform_6, window_bounds = array<i64: 128, 128>}, {pipeline_mode = #tpu.pipeline_mode<synchronous>, transform_indices = @transform_7, window_bounds = array<i64: 1, 128>}, {pipeline_mode = #tpu.pipeline_mode<synchronous>, transform_indices = @transform_8, window_bounds = array<i64: 1152, 128>}, {pipeline_mode = #tpu.pipeline_mode<synchronous>, transform_indices = @transform_9, window_bounds = array<i64: 1, 128>}, {pipeline_mode = #tpu.pipeline_mode<synchronous>, transform_indices = @transform_10, window_bounds = array<i64: 128, 128>}, {pipeline_mode = #tpu.pipeline_mode<synchronous>, transform_indices = @transform_11, window_bounds = array<i64: 1, 128>}, {transform_indices = @transform_12, window_bounds = array<i64: 1, 328, 128>}]} {
    %c0 = arith.constant 0 : index
    %c0_0 = arith.constant 0 : index
    %c0_1 = arith.constant 0 : index
    %0 = vector.load %arg1[%c0, %c0_0, %c0_1] : memref<1x328x128xf32, #tpu.memory_space<vmem>>, vector<1x328x128xf32>
    %1 = vector.shape_cast %0 : vector<1x328x128xf32> to vector<328x128xf32>
    %c0_2 = arith.constant 0 : index
    %c0_3 = arith.constant 0 : index
    %2 = vector.load %arg2[%c0_2, %c0_3] : memref<328x1xf32, #tpu.memory_space<vmem>>, vector<328x1xf32>
    %c0_4 = arith.constant 0 : index
    %c0_5 = arith.constant 0 : index
    %3 = vector.load %arg3[%c0_4, %c0_5] : memref<128x128xf32, #tpu.memory_space<vmem>>, vector<128x128xf32>
    %cst = arith.constant dense<0.000000e+00> : vector<328x128xf32>
    %4 = tpu.matmul %1, %3, %cst {dimension_numbers = #tpu.dot_dimension_numbers<[1], [0], [0], [1], [0, 0, 1, 1], [], []>} : vector<328x128xf32>, vector<128x128xf32>, vector<328x128xf32> -> vector<328x128xf32>
    %c0_6 = arith.constant 0 : index
    %c0_7 = arith.constant 0 : index
    %5 = vector.load %arg4[%c0_6, %c0_7] : memref<1x128xf32, #tpu.memory_space<vmem>>, vector<1x128xf32>
    %6 = vector.broadcast %5 : vector<1x128xf32> to vector<328x128xf32>
    %7 = arith.addf %4, %6 : vector<328x128xf32>
    %cst_8 = arith.constant 0.000000e+00 : f32
    %8 = vector.broadcast %cst_8 : f32 to vector<328x128xf32>
    %9 = arith.maximumf %7, %8 : vector<328x128xf32>
    %10 = vector.broadcast %2 : vector<328x1xf32> to vector<328x128xf32>
    %11 = arith.mulf %9, %10 : vector<328x128xf32>
    %cst_9 = arith.constant 0.000000e+00 : f32
    %12 = vector.broadcast %cst_9 : f32 to vector<19x128xf32>
    %13 = tpu.concatenate %12, %11, %12 in 0 : vector<19x128xf32>, vector<328x128xf32>, vector<19x128xf32> -> vector<366x128xf32>
    %14 = vector.extract_strided_slice %13 {offsets = [0, 0], sizes = [328, 128], strides = [1, 1]} : vector<366x128xf32> to vector<328x128xf32>
    %15 = vector.extract_strided_slice %13 {offsets = [1, 0], sizes = [328, 128], strides = [1, 1]} : vector<366x128xf32> to vector<328x128xf32>
    %16 = vector.extract_strided_slice %13 {offsets = [2, 0], sizes = [328, 128], strides = [1, 1]} : vector<366x128xf32> to vector<328x128xf32>
    %17 = vector.extract_strided_slice %13 {offsets = [18, 0], sizes = [328, 128], strides = [1, 1]} : vector<366x128xf32> to vector<328x128xf32>
    %18 = vector.extract_strided_slice %13 {offsets = [19, 0], sizes = [328, 128], strides = [1, 1]} : vector<366x128xf32> to vector<328x128xf32>
    %19 = vector.extract_strided_slice %13 {offsets = [20, 0], sizes = [328, 128], strides = [1, 1]} : vector<366x128xf32> to vector<328x128xf32>
    %20 = vector.extract_strided_slice %13 {offsets = [36, 0], sizes = [328, 128], strides = [1, 1]} : vector<366x128xf32> to vector<328x128xf32>
    %21 = vector.extract_strided_slice %13 {offsets = [37, 0], sizes = [328, 128], strides = [1, 1]} : vector<366x128xf32> to vector<328x128xf32>
    %22 = vector.extract_strided_slice %13 {offsets = [38, 0], sizes = [328, 128], strides = [1, 1]} : vector<366x128xf32> to vector<328x128xf32>
    %23 = tpu.concatenate %14, %15, %16, %17, %18, %19, %20, %21, %22 in 1 : vector<328x128xf32>, vector<328x128xf32>, vector<328x128xf32>, vector<328x128xf32>, vector<328x128xf32>, vector<328x128xf32>, vector<328x128xf32>, vector<328x128xf32>, vector<328x128xf32> -> vector<328x1152xf32>
    %c0_10 = arith.constant 0 : index
    %c0_11 = arith.constant 0 : index
    %24 = vector.load %arg5[%c0_10, %c0_11] : memref<1152x128xf32, #tpu.memory_space<vmem>>, vector<1152x128xf32>
    %cst_12 = arith.constant dense<0.000000e+00> : vector<328x128xf32>
    %25 = tpu.matmul %23, %24, %cst_12 {dimension_numbers = #tpu.dot_dimension_numbers<[1], [0], [0], [1], [0, 0, 1, 1], [], []>} : vector<328x1152xf32>, vector<1152x128xf32>, vector<328x128xf32> -> vector<328x128xf32>
    %c0_13 = arith.constant 0 : index
    %c0_14 = arith.constant 0 : index
    %26 = vector.load %arg6[%c0_13, %c0_14] : memref<1x128xf32, #tpu.memory_space<vmem>>, vector<1x128xf32>
    %27 = vector.broadcast %26 : vector<1x128xf32> to vector<328x128xf32>
    %28 = arith.addf %25, %27 : vector<328x128xf32>
    %cst_15 = arith.constant 0.000000e+00 : f32
    %29 = vector.broadcast %cst_15 : f32 to vector<328x128xf32>
    %30 = arith.maximumf %28, %29 : vector<328x128xf32>
    %c0_16 = arith.constant 0 : index
    %c0_17 = arith.constant 0 : index
    %31 = vector.load %arg7[%c0_16, %c0_17] : memref<128x128xf32, #tpu.memory_space<vmem>>, vector<128x128xf32>
    %cst_18 = arith.constant dense<0.000000e+00> : vector<328x128xf32>
    %32 = tpu.matmul %30, %31, %cst_18 {dimension_numbers = #tpu.dot_dimension_numbers<[1], [0], [0], [1], [0, 0, 1, 1], [], []>} : vector<328x128xf32>, vector<128x128xf32>, vector<328x128xf32> -> vector<328x128xf32>
    %c0_19 = arith.constant 0 : index
    %c0_20 = arith.constant 0 : index
    %33 = vector.load %arg8[%c0_19, %c0_20] : memref<1x128xf32, #tpu.memory_space<vmem>>, vector<1x128xf32>
    %34 = vector.broadcast %33 : vector<1x128xf32> to vector<328x128xf32>
    %35 = arith.addf %32, %34 : vector<328x128xf32>
    %cst_21 = arith.constant 0.000000e+00 : f32
    %36 = vector.broadcast %cst_21 : f32 to vector<328x128xf32>
    %37 = arith.maximumf %35, %36 : vector<328x128xf32>
    %38 = vector.broadcast %2 : vector<328x1xf32> to vector<328x128xf32>
    %39 = arith.mulf %37, %38 : vector<328x128xf32>
    %cst_22 = arith.constant 0.000000e+00 : f32
    %40 = vector.broadcast %cst_22 : f32 to vector<19x128xf32>
    %41 = tpu.concatenate %40, %39, %40 in 0 : vector<19x128xf32>, vector<328x128xf32>, vector<19x128xf32> -> vector<366x128xf32>
    %42 = vector.extract_strided_slice %41 {offsets = [0, 0], sizes = [328, 128], strides = [1, 1]} : vector<366x128xf32> to vector<328x128xf32>
    %43 = vector.extract_strided_slice %41 {offsets = [1, 0], sizes = [328, 128], strides = [1, 1]} : vector<366x128xf32> to vector<328x128xf32>
    %44 = vector.extract_strided_slice %41 {offsets = [2, 0], sizes = [328, 128], strides = [1, 1]} : vector<366x128xf32> to vector<328x128xf32>
    %45 = vector.extract_strided_slice %41 {offsets = [18, 0], sizes = [328, 128], strides = [1, 1]} : vector<366x128xf32> to vector<328x128xf32>
    %46 = vector.extract_strided_slice %41 {offsets = [19, 0], sizes = [328, 128], strides = [1, 1]} : vector<366x128xf32> to vector<328x128xf32>
    %47 = vector.extract_strided_slice %41 {offsets = [20, 0], sizes = [328, 128], strides = [1, 1]} : vector<366x128xf32> to vector<328x128xf32>
    %48 = vector.extract_strided_slice %41 {offsets = [36, 0], sizes = [328, 128], strides = [1, 1]} : vector<366x128xf32> to vector<328x128xf32>
    %49 = vector.extract_strided_slice %41 {offsets = [37, 0], sizes = [328, 128], strides = [1, 1]} : vector<366x128xf32> to vector<328x128xf32>
    %50 = vector.extract_strided_slice %41 {offsets = [38, 0], sizes = [328, 128], strides = [1, 1]} : vector<366x128xf32> to vector<328x128xf32>
    %51 = tpu.concatenate %42, %43, %44, %45, %46, %47, %48, %49, %50 in 1 : vector<328x128xf32>, vector<328x128xf32>, vector<328x128xf32>, vector<328x128xf32>, vector<328x128xf32>, vector<328x128xf32>, vector<328x128xf32>, vector<328x128xf32>, vector<328x128xf32> -> vector<328x1152xf32>
    %c0_23 = arith.constant 0 : index
    %c0_24 = arith.constant 0 : index
    %52 = vector.load %arg9[%c0_23, %c0_24] : memref<1152x128xf32, #tpu.memory_space<vmem>>, vector<1152x128xf32>
    %cst_25 = arith.constant dense<0.000000e+00> : vector<328x128xf32>
    %53 = tpu.matmul %51, %52, %cst_25 {dimension_numbers = #tpu.dot_dimension_numbers<[1], [0], [0], [1], [0, 0, 1, 1], [], []>} : vector<328x1152xf32>, vector<1152x128xf32>, vector<328x128xf32> -> vector<328x128xf32>
    %c0_26 = arith.constant 0 : index
    %c0_27 = arith.constant 0 : index
    %54 = vector.load %arg10[%c0_26, %c0_27] : memref<1x128xf32, #tpu.memory_space<vmem>>, vector<1x128xf32>
    %55 = vector.broadcast %54 : vector<1x128xf32> to vector<328x128xf32>
    %56 = arith.addf %53, %55 : vector<328x128xf32>
    %cst_28 = arith.constant 0.000000e+00 : f32
    %57 = vector.broadcast %cst_28 : f32 to vector<328x128xf32>
    %58 = arith.maximumf %56, %57 : vector<328x128xf32>
    %c0_29 = arith.constant 0 : index
    %c0_30 = arith.constant 0 : index
    %59 = vector.load %arg11[%c0_29, %c0_30] : memref<128x128xf32, #tpu.memory_space<vmem>>, vector<128x128xf32>
    %cst_31 = arith.constant dense<0.000000e+00> : vector<328x128xf32>
    %60 = tpu.matmul %1, %59, %cst_31 {dimension_numbers = #tpu.dot_dimension_numbers<[1], [0], [0], [1], [0, 0, 1, 1], [], []>} : vector<328x128xf32>, vector<128x128xf32>, vector<328x128xf32> -> vector<328x128xf32>
    %c0_32 = arith.constant 0 : index
    %c0_33 = arith.constant 0 : index
    %61 = vector.load %arg12[%c0_32, %c0_33] : memref<1x128xf32, #tpu.memory_space<vmem>>, vector<1x128xf32>
    %62 = vector.broadcast %61 : vector<1x128xf32> to vector<328x128xf32>
    %63 = arith.addf %60, %62 : vector<328x128xf32>
    %64 = arith.addf %63, %58 : vector<328x128xf32>
    %c0_34 = arith.constant 0 : index
    %c0_35 = arith.constant 0 : index
    %c0_36 = arith.constant 0 : index
    %65 = vector.load %arg13[%c0_34, %c0_35, %c0_36] : memref<1x328x128xf32, #tpu.memory_space<vmem>>, vector<1x328x128xf32>
    %66 = vector.shape_cast %65 : vector<1x328x128xf32> to vector<328x128xf32>
    %67 = vector.shape_cast %64 : vector<328x128xf32> to vector<1x328x128xf32>
    tpu.vector_store %arg13[%c0_34, %c0_35, %c0_36], %67 {strides = array<i32>} : memref<1x328x128xf32, #tpu.memory_space<vmem>>, vector<1x328x128xf32>,
    return
  }
  func.func @transform_0(%arg0: i32) -> (i32, i32, i32) {
    %c0_i32 = arith.constant 0 : i32
    %c0_i32_0 = arith.constant 0 : i32
    %c0_i32_1 = arith.constant 0 : i32
    return %arg0, %c0_i32, %c0_i32_0 : i32, i32, i32
  }
  func.func @transform_1(%arg0: i32) -> (i32, i32) {
    %c0_i32 = arith.constant 0 : i32
    %c0_i32_0 = arith.constant 0 : i32
    %c0_i32_1 = arith.constant 0 : i32
    return %c0_i32, %c0_i32_0 : i32, i32
  }
  func.func @transform_2(%arg0: i32) -> (i32, i32) {
    %c0_i32 = arith.constant 0 : i32
    %c0_i32_0 = arith.constant 0 : i32
    %c0_i32_1 = arith.constant 0 : i32
    return %c0_i32, %c0_i32_0 : i32, i32
  }
  func.func @transform_3(%arg0: i32) -> (i32, i32) {
    %c0_i32 = arith.constant 0 : i32
    %c0_i32_0 = arith.constant 0 : i32
    %c0_i32_1 = arith.constant 0 : i32
    return %c0_i32, %c0_i32_0 : i32, i32
  }
  func.func @transform_4(%arg0: i32) -> (i32, i32) {
    %c0_i32 = arith.constant 0 : i32
    %c0_i32_0 = arith.constant 0 : i32
    %c0_i32_1 = arith.constant 0 : i32
    return %c0_i32, %c0_i32_0 : i32, i32
  }
  func.func @transform_5(%arg0: i32) -> (i32, i32) {
    %c0_i32 = arith.constant 0 : i32
    %c0_i32_0 = arith.constant 0 : i32
    %c0_i32_1 = arith.constant 0 : i32
    return %c0_i32, %c0_i32_0 : i32, i32
  }
  func.func @transform_6(%arg0: i32) -> (i32, i32) {
    %c0_i32 = arith.constant 0 : i32
    %c0_i32_0 = arith.constant 0 : i32
    %c0_i32_1 = arith.constant 0 : i32
    return %c0_i32, %c0_i32_0 : i32, i32
  }
  func.func @transform_7(%arg0: i32) -> (i32, i32) {
    %c0_i32 = arith.constant 0 : i32
    %c0_i32_0 = arith.constant 0 : i32
    %c0_i32_1 = arith.constant 0 : i32
    return %c0_i32, %c0_i32_0 : i32, i32
  }
  func.func @transform_8(%arg0: i32) -> (i32, i32) {
    %c0_i32 = arith.constant 0 : i32
    %c0_i32_0 = arith.constant 0 : i32
    %c0_i32_1 = arith.constant 0 : i32
    return %c0_i32, %c0_i32_0 : i32, i32
  }
  func.func @transform_9(%arg0: i32) -> (i32, i32) {
    %c0_i32 = arith.constant 0 : i32
    %c0_i32_0 = arith.constant 0 : i32
    %c0_i32_1 = arith.constant 0 : i32
    return %c0_i32, %c0_i32_0 : i32, i32
  }
  func.func @transform_10(%arg0: i32) -> (i32, i32) {
    %c0_i32 = arith.constant 0 : i32
    %c0_i32_0 = arith.constant 0 : i32
    %c0_i32_1 = arith.constant 0 : i32
    return %c0_i32, %c0_i32_0 : i32, i32
  }
  func.func @transform_11(%arg0: i32) -> (i32, i32) {
    %c0_i32 = arith.constant 0 : i32
    %c0_i32_0 = arith.constant 0 : i32
    %c0_i32_1 = arith.constant 0 : i32
    return %c0_i32, %c0_i32_0 : i32, i32
  }
  func.func @transform_12(%arg0: i32) -> (i32, i32, i32) {
    %c0_i32 = arith.constant 0 : i32
    %c0_i32_0 = arith.constant 0 : i32
    %c0_i32_1 = arith.constant 0 : i32
    return %arg0, %c0_i32, %c0_i32_0 : i32, i32, i32
  }
}

</mosaic_0001>

<llo_original>
// kernel: inv_res_block.1
$region0: #{inv_res_block.1}
  #allocation0 [shape = 'u32[]', space=smem, size = 0x4, offset = 0x4, fixed_abs, tag = 'smem constant byte address 0x4 - core index']
  #allocation1 [shape = 'u32[144,128]{1,0:T(1,128)}', space=vmem, size = 0x12000, scoped, tag = 'internal scratch']
  %s0 = inlined_call_operand.vmem [shape: f32[2,328,128], index: 0, kind: input, shape index: {}]
  %s1 = inlined_call_operand.vmem [shape: f32[328,1], index: 1, kind: input, shape index: {}]
  %s2 = inlined_call_operand.vmem [shape: f32[128,128], index: 2, kind: input, shape index: {}]
  %s3 = inlined_call_operand.vmem [shape: f32[1,128], index: 3, kind: input, shape index: {}]
  %s4 = inlined_call_operand.vmem [shape: f32[1152,128], index: 4, kind: input, shape index: {}]
  %s5 = inlined_call_operand.vmem [shape: f32[1,128], index: 5, kind: input, shape index: {}]
  %s6 = inlined_call_operand.vmem [shape: f32[128,128], index: 6, kind: input, shape index: {}]
  %s7 = inlined_call_operand.vmem [shape: f32[1,128], index: 7, kind: input, shape index: {}]
  %s8 = inlined_call_operand.vmem [shape: f32[1152,128], index: 8, kind: input, shape index: {}]
  %s9 = inlined_call_operand.vmem [shape: f32[1,128], index: 9, kind: input, shape index: {}]
  %s10 = inlined_call_operand.vmem [shape: f32[128,128], index: 10, kind: input, shape index: {}]
  %s11 = inlined_call_operand.vmem [shape: f32[1,128], index: 11, kind: input, shape index: {}]
  %s12 = inlined_call_operand.vmem [shape: f32[2,328,128], index: 12, kind: output, shape index: {}]
  %s13 = sld [smem:[#allocation0]]
  $region81: #{inv_res_block.1} parent=0
    _
  %s15 = ssub.s32 1, %s13
  %s16 = scalar_select 0, %s15, %s13
  loop: start=0, step=1, limit=4
  $region2: #{inv_res_block.1} parent=0 // loop_pre_header
    _
  $region3: #{inv_res_block.1} parent=0 // loop_header
    %s18 = sphi 0, %s22
    %p19 = scmp.ge.s32.totalorder %s18, 4
    %s28 = sphi 0, %s30
    %s31 = sphi 0, %s28
    %s32 = sphi 0, %s31
    %s48 = sphi 0, %s32
    %s52 = sphi 0, %s52
    %s54 = sphi 0, %s52
    %s55 = sphi 0, %s54
    %s69 = sphi 0, %s55
    %s73 = sphi 0, %s73
    %s75 = sphi 0, %s73
    %s76 = sphi 0, %s75
    %s90 = sphi 0, %s76
    %s94 = sphi 0, %s94
    %s96 = sphi 0, %s94
    %s97 = sphi 0, %s96
    %s111 = sphi 0, %s97
    %s115 = sphi 0, %s115
    %s117 = sphi 0, %s115
    %s118 = sphi 0, %s117
    %s132 = sphi 0, %s118
    %s136 = sphi 0, %s136
    %s138 = sphi 0, %s136
    %s139 = sphi 0, %s138
    %s153 = sphi 0, %s139
    %s157 = sphi 0, %s157
    %s159 = sphi 0, %s157
    %s160 = sphi 0, %s159
    %s174 = sphi 0, %s160
    %s178 = sphi 0, %s178
    %s180 = sphi 0, %s178
    %s181 = sphi 0, %s180
    %s195 = sphi 0, %s181
    %s199 = sphi 0, %s199
    %s201 = sphi 0, %s199
    %s202 = sphi 0, %s201
    %s216 = sphi 0, %s202
    %s220 = sphi 0, %s220
    %s222 = sphi 0, %s220
    %s223 = sphi 0, %s222
    %s237 = sphi 0, %s223
    %s241 = sphi 0, %s241
    %s243 = sphi 0, %s241
    %s244 = sphi 0, %s243
    %s258 = sphi 0, %s244
    %s262 = sphi 0, %s262
    %s264 = sphi 0, %s262
    %s265 = sphi 0, %s264
    %s279 = sphi 0, %s265
    %s285 = sphi 0, %s287
    %s288 = sphi 0, %s285
    %s289 = sphi 0, %s288
    %s305 = sphi 0, %s289
  $region4: #{inv_res_block.1} parent=0 // loop_header_branch
    %21 = sbr.rel (%p19) target = $region8
  $region5: #{inv_res_block.1} parent=0 // loop_body
    %s23 = ssub.s32 %s18, 1
    %s24 = ssub.s32 %s18, 2
    %s25 = sadd.s32 %s18, 1
    %s26 = ssub.s32 %s18, %s25
    %p27 = scmp.eq.s32.totalorder %s26, 0
    %s29 = sadd.s32 %s28, 1
    %s30 = scalar_select %p27, %s28, %s29
    %p33 = pneg %p27
    %p34 = scmp.eq.s32.totalorder %s18, 1
    %p35 = por %p33, %p34
    %p36 = scmp.ne.s32.totalorder %s28, %s31
    %p37 = scmp.eq.s32.totalorder %s18, 0
    %p38 = por %p36, %p37
    %p39 = scmp.ne.s32.totalorder %s28, %s31
    %p40 = scmp.eq.s32.totalorder %s23, 1
    %p41 = por %p39, %p40
    %p42 = scmp.ne.s32.totalorder %s31, %s32
    %p43 = scmp.eq.s32.totalorder %s23, 0
    %p44 = por %p42, %p43
    %p45 = scmp.ne.s32.totalorder %s31, %s32
    %p46 = scmp.eq.s32.totalorder %s24, 1
    %p47 = por %p45, %p46
    %p49 = scmp.ne.s32.totalorder %s32, %s48
    %p50 = scmp.eq.s32.totalorder %s24, 0
    %p51 = por %p49, %p50
    %s53 = sadd.s32 %s52, 1
    %p56 = scmp.eq.s32.totalorder %s18, 1
    %p57 = scmp.ne.s32.totalorder %s52, %s54
    %p58 = scmp.eq.s32.totalorder %s18, 0
    %p59 = por %p57, %p58
    %p60 = scmp.ne.s32.totalorder %s52, %s54
    %p61 = scmp.eq.s32.totalorder %s23, 1
    %p62 = por %p60, %p61
    %p63 = scmp.ne.s32.totalorder %s54, %s55
    %p64 = scmp.eq.s32.totalorder %s23, 0
    %p65 = por %p63, %p64
    %p66 = scmp.ne.s32.totalorder %s54, %s55
    %p67 = scmp.eq.s32.totalorder %s24, 1
    %p68 = por %p66, %p67
    %p70 = scmp.ne.s32.totalorder %s55, %s69
    %p71 = scmp.eq.s32.totalorder %s24, 0
    %p72 = por %p70, %p71
    %s74 = sadd.s32 %s73, 1
    %p77 = scmp.eq.s32.totalorder %s18, 1
    %p78 = scmp.ne.s32.totalorder %s73, %s75
    %p79 = scmp.eq.s32.totalorder %s18, 0
    %p80 = por %p78, %p79
    %p81 = scmp.ne.s32.totalorder %s73, %s75
    %p82 = scmp.eq.s32.totalorder %s23, 1
    %p83 = por %p81, %p82
    %p84 = scmp.ne.s32.totalorder %s75, %s76
    %p85 = scmp.eq.s32.totalorder %s23, 0
    %p86 = por %p84, %p85
    %p87 = scmp.ne.s32.totalorder %s75, %s76
    %p88 = scmp.eq.s32.totalorder %s24, 1
    %p89 = por %p87, %p88
    %p91 = scmp.ne.s32.totalorder %s76, %s90
    %p92 = scmp.eq.s32.totalorder %s24, 0
    %p93 = por %p91, %p92
    %s95 = sadd.s32 %s94, 1
    %p98 = scmp.eq.s32.totalorder %s18, 1
    %p99 = scmp.ne.s32.totalorder %s94, %s96
    %p100 = scmp.eq.s32.totalorder %s18, 0
    %p101 = por %p99, %p100
    %p102 = scmp.ne.s32.totalorder %s94, %s96
    %p103 = scmp.eq.s32.totalorder %s23, 1
    %p104 = por %p102, %p103
    %p105 = scmp.ne.s32.totalorder %s96, %s97
    %p106 = scmp.eq.s32.totalorder %s23, 0
    %p107 = por %p105, %p106
    %p108 = scmp.ne.s32.totalorder %s96, %s97
    %p109 = scmp.eq.s32.totalorder %s24, 1
    %p110 = por %p108, %p109
    %p112 = scmp.ne.s32.totalorder %s97, %s111
    %p113 = scmp.eq.s32.totalorder %s24, 0
    %p114 = por %p112, %p113
    %s116 = sadd.s32 %s115, 1
    %p119 = scmp.eq.s32.totalorder %s18, 1
    %p120 = scmp.ne.s32.totalorder %s115, %s117
    %p121 = scmp.eq.s32.totalorder %s18, 0
    %p122 = por %p120, %p121
    %p123 = scmp.ne.s32.totalorder %s115, %s117
    %p124 = scmp.eq.s32.totalorder %s23, 1
    %p125 = por %p123, %p124
    %p126 = scmp.ne.s32.totalorder %s117, %s118
    %p127 = scmp.eq.s32.totalorder %s23, 0
    %p128 = por %p126, %p127
    %p129 = scmp.ne.s32.totalorder %s117, %s118
    %p130 = scmp.eq.s32.totalorder %s24, 1
    %p131 = por %p129, %p130
    %p133 = scmp.ne.s32.totalorder %s118, %s132
    %p134 = scmp.eq.s32.totalorder %s24, 0
    %p135 = por %p133, %p134
    %s137 = sadd.s32 %s136, 1
    %p140 = scmp.eq.s32.totalorder %s18, 1
    %p141 = scmp.ne.s32.totalorder %s136, %s138
    %p142 = scmp.eq.s32.totalorder %s18, 0
    %p143 = por %p141, %p142
    %p144 = scmp.ne.s32.totalorder %s136, %s138
    %p145 = scmp.eq.s32.totalorder %s23, 1
    %p146 = por %p144, %p145
    %p147 = scmp.ne.s32.totalorder %s138, %s139
    %p148 = scmp.eq.s32.totalorder %s23, 0
    %p149 = por %p147, %p148
    %p150 = scmp.ne.s32.totalorder %s138, %s139
    %p151 = scmp.eq.s32.totalorder %s24, 1
    %p152 = por %p150, %p151
    %p154 = scmp.ne.s32.totalorder %s139, %s153
    %p155 = scmp.eq.s32.totalorder %s24, 0
    %p156 = por %p154, %p155
    %s158 = sadd.s32 %s157, 1
    %p161 = scmp.eq.s32.totalorder %s18, 1
    %p162 = scmp.ne.s32.totalorder %s157, %s159
    %p163 = scmp.eq.s32.totalorder %s18, 0
    %p164 = por %p162, %p163
    %p165 = scmp.ne.s32.totalorder %s157, %s159
    %p166 = scmp.eq.s32.totalorder %s23, 1
    %p167 = por %p165, %p166
    %p168 = scmp.ne.s32.totalorder %s159, %s160
    %p169 = scmp.eq.s32.totalorder %s23, 0
    %p170 = por %p168, %p169
    %p171 = scmp.ne.s32.totalorder %s159, %s160
    %p172 = scmp.eq.s32.totalorder %s24, 1
    %p173 = por %p171, %p172
    %p175 = scmp.ne.s32.totalorder %s160, %s174
    %p176 = scmp.eq.s32.totalorder %s24, 0
    %p177 = por %p175, %p176
    %s179 = sadd.s32 %s178, 1
    %p182 = scmp.eq.s32.totalorder %s18, 1
    %p183 = scmp.ne.s32.totalorder %s178, %s180
    %p184 = scmp.eq.s32.totalorder %s18, 0
    %p185 = por %p183, %p184
    %p186 = scmp.ne.s32.totalorder %s178, %s180
    %p187 = scmp.eq.s32.totalorder %s23, 1
    %p188 = por %p186, %p187
    %p189 = scmp.ne.s32.totalorder %s180, %s181
    %p190 = scmp.eq.s32.totalorder %s23, 0
    %p191 = por %p189, %p190
    %p192 = scmp.ne.s32.totalorder %s180, %s181
    %p193 = scmp.eq.s32.totalorder %s24, 1
    %p194 = por %p192, %p193
    %p196 = scmp.ne.s32.totalorder %s181, %s195
    %p197 = scmp.eq.s32.totalorder %s24, 0
    %p198 = por %p196, %p197
    %s200 = sadd.s32 %s199, 1
    %p203 = scmp.eq.s32.totalorder %s18, 1
    %p204 = scmp.ne.s32.totalorder %s199, %s201
    %p205 = scmp.eq.s32.totalorder %s18, 0
    %p206 = por %p204, %p205
    %p207 = scmp.ne.s32.totalorder %s199, %s201
    %p208 = scmp.eq.s32.totalorder %s23, 1
    %p209 = por %p207, %p208
    %p210 = scmp.ne.s32.totalorder %s201, %s202
    %p211 = scmp.eq.s32.totalorder %s23, 0
    %p212 = por %p210, %p211
    %p213 = scmp.ne.s32.totalorder %s201, %s202
    %p214 = scmp.eq.s32.totalorder %s24, 1
    %p215 = por %p213, %p214
    %p217 = scmp.ne.s32.totalorder %s202, %s216
    %p218 = scmp.eq.s32.totalorder %s24, 0
    %p219 = por %p217, %p218
    %s221 = sadd.s32 %s220, 1
    %p224 = scmp.eq.s32.totalorder %s18, 1
    %p225 = scmp.ne.s32.totalorder %s220, %s222
    %p226 = scmp.eq.s32.totalorder %s18, 0
    %p227 = por %p225, %p226
    %p228 = scmp.ne.s32.totalorder %s220, %s222
    %p229 = scmp.eq.s32.totalorder %s23, 1
    %p230 = por %p228, %p229
    %p231 = scmp.ne.s32.totalorder %s222, %s223
    %p232 = scmp.eq.s32.totalorder %s23, 0
    %p233 = por %p231, %p232
    %p234 = scmp.ne.s32.totalorder %s222, %s223
    %p235 = scmp.eq.s32.totalorder %s24, 1
    %p236 = por %p234, %p235
    %p238 = scmp.ne.s32.totalorder %s223, %s237
    %p239 = scmp.eq.s32.totalorder %s24, 0
    %p240 = por %p238, %p239
    %s242 = sadd.s32 %s241, 1
    %p245 = scmp.eq.s32.totalorder %s18, 1
    %p246 = scmp.ne.s32.totalorder %s241, %s243
    %p247 = scmp.eq.s32.totalorder %s18, 0
    %p248 = por %p246, %p247
    %p249 = scmp.ne.s32.totalorder %s241, %s243
    %p250 = scmp.eq.s32.totalorder %s23, 1
    %p251 = por %p249, %p250
    %p252 = scmp.ne.s32.totalorder %s243, %s244
    %p253 = scmp.eq.s32.totalorder %s23, 0
    %p254 = por %p252, %p253
    %p255 = scmp.ne.s32.totalorder %s243, %s244
    %p256 = scmp.eq.s32.totalorder %s24, 1
    %p257 = por %p255, %p256
    %p259 = scmp.ne.s32.totalorder %s244, %s258
    %p260 = scmp.eq.s32.totalorder %s24, 0
    %p261 = por %p259, %p260
    %s263 = sadd.s32 %s262, 1
    %p266 = scmp.eq.s32.totalorder %s18, 1
    %p267 = scmp.ne.s32.totalorder %s262, %s264
    %p268 = scmp.eq.s32.totalorder %s18, 0
    %p269 = por %p267, %p268
    %p270 = scmp.ne.s32.totalorder %s262, %s264
    %p271 = scmp.eq.s32.totalorder %s23, 1
    %p272 = por %p270, %p271
    %p273 = scmp.ne.s32.totalorder %s264, %s265
    %p274 = scmp.eq.s32.totalorder %s23, 0
    %p275 = por %p273, %p274
    %p276 = scmp.ne.s32.totalorder %s264, %s265
    %p277 = scmp.eq.s32.totalorder %s24, 1
    %p278 = por %p276, %p277
    %p280 = scmp.ne.s32.totalorder %s265, %s279
    %p281 = scmp.eq.s32.totalorder %s24, 0
    %p282 = por %p280, %p281
    %s283 = ssub.s32 %s18, %s25
    %p284 = scmp.eq.s32.totalorder %s283, 0
    %s286 = sadd.s32 %s285, 1
    %s287 = scalar_select %p284, %s285, %s286
    %p290 = pneg %p284
    %p291 = scmp.eq.s32.totalorder %s18, 1
    %p292 = por %p290, %p291
    %p293 = scmp.ne.s32.totalorder %s285, %s288
    %p294 = scmp.eq.s32.totalorder %s18, 0
    %p295 = por %p293, %p294
    %p296 = scmp.ne.s32.totalorder %s285, %s288
    %p297 = scmp.eq.s32.totalorder %s23, 1
    %p298 = por %p296, %p297
    %p299 = scmp.ne.s32.totalorder %s288, %s289
    %p300 = scmp.eq.s32.totalorder %s23, 0
    %p301 = por %p299, %p300
    %p302 = scmp.ne.s32.totalorder %s288, %s289
    %p303 = scmp.eq.s32.totalorder %s24, 1
    %p304 = por %p302, %p303
    %p306 = scmp.ne.s32.totalorder %s289, %s305
    %p307 = scmp.eq.s32.totalorder %s24, 0
    %p308 = por %p306, %p307
    %p309 = scmp.le.s32.totalorder 1, %s18
    %p310 = scmp.lt.s32.totalorder %s18, 3
    %p311 = pnand %p309, %p310
    %p312 = pneg %p311
    // Predicated region
    $region9: #{inv_res_block.1} parent=5 // pred_check
      _
    $region10: #{inv_res_block.1} parent=5 // pred_check_branch
      %314 = sbr.rel (%p311) target = $region12
    $region11: #{inv_res_block.1} parent=5 // pred_region
      %s315 = ssub.s32 %s18, 1
      // Predicated region
      $region13: #{inv_res_block.1} parent=11 // pred_check
        %p316 = pneg %p65
      $region14: #{inv_res_block.1} parent=11 // pred_check_branch
        %318 = sbr.rel (%p316) target = $region16
      $region15: #{inv_res_block.1} parent=11 // pred_region
        _
      $region16: #{inv_res_block.1} parent=11 // pred_fallthru
        _
      // Predicated region
      $region17: #{inv_res_block.1} parent=11 // pred_check
        %p319 = pneg %p86
      $region18: #{inv_res_block.1} parent=11 // pred_check_branch
        %321 = sbr.rel (%p319) target = $region20
      $region19: #{inv_res_block.1} parent=11 // pred_region
        _
      $region20: #{inv_res_block.1} parent=11 // pred_fallthru
        _
      // Predicated region
      $region21: #{inv_res_block.1} parent=11 // pred_check
        %p322 = pneg %p107
      $region22: #{inv_res_block.1} parent=11 // pred_check_branch
        %324 = sbr.rel (%p322) target = $region24
      $region23: #{inv_res_block.1} parent=11 // pred_region
        _
      $region24: #{inv_res_block.1} parent=11 // pred_fallthru
        _
      // Predicated region
      $region25: #{inv_res_block.1} parent=11 // pred_check
        %p325 = pneg %p128
      $region26: #{inv_res_block.1} parent=11 // pred_check_branch
        %327 = sbr.rel (%p325) target = $region28
      $region27: #{inv_res_block.1} parent=11 // pred_region
        _
      $region28: #{inv_res_block.1} parent=11 // pred_fallthru
        _
      // Predicated region
      $region29: #{inv_res_block.1} parent=11 // pred_check
        %p328 = pneg %p149
      $region30: #{inv_res_block.1} parent=11 // pred_check_branch
        %330 = sbr.rel (%p328) target = $region32
      $region31: #{inv_res_block.1} parent=11 // pred_region
        _
      $region32: #{inv_res_block.1} parent=11 // pred_fallthru
        _
      // Predicated region
      $region33: #{inv_res_block.1} parent=11 // pred_check
        %p331 = pneg %p170
      $region34: #{inv_res_block.1} parent=11 // pred_check_branch
        %333 = sbr.rel (%p331) target = $region36
      $region35: #{inv_res_block.1} parent=11 // pred_region
        _
      $region36: #{inv_res_block.1} parent=11 // pred_fallthru
        _
      // Predicated region
      $region37: #{inv_res_block.1} parent=11 // pred_check
        %p334 = pneg %p191
      $region38: #{inv_res_block.1} parent=11 // pred_check_branch
        %336 = sbr.rel (%p334) target = $region40
      $region39: #{inv_res_block.1} parent=11 // pred_region
        _
      $region40: #{inv_res_block.1} parent=11 // pred_fallthru
        _
      // Predicated region
      $region41: #{inv_res_block.1} parent=11 // pred_check
        %p337 = pneg %p212
      $region42: #{inv_res_block.1} parent=11 // pred_check_branch
        %339 = sbr.rel (%p337) target = $region44
      $region43: #{inv_res_block.1} parent=11 // pred_region
        _
      $region44: #{inv_res_block.1} parent=11 // pred_fallthru
        _
      // Predicated region
      $region45: #{inv_res_block.1} parent=11 // pred_check
        %p340 = pneg %p233
      $region46: #{inv_res_block.1} parent=11 // pred_check_branch
        %342 = sbr.rel (%p340) target = $region48
      $region47: #{inv_res_block.1} parent=11 // pred_region
        _
      $region48: #{inv_res_block.1} parent=11 // pred_fallthru
        _
      // Predicated region
      $region49: #{inv_res_block.1} parent=11 // pred_check
        %p343 = pneg %p254
      $region50: #{inv_res_block.1} parent=11 // pred_check_branch
        %345 = sbr.rel (%p343) target = $region52
      $region51: #{inv_res_block.1} parent=11 // pred_region
        _
      $region52: #{inv_res_block.1} parent=11 // pred_fallthru
        _
      // Predicated region
      $region53: #{inv_res_block.1} parent=11 // pred_check
        %p346 = pneg %p275
      $region54: #{inv_res_block.1} parent=11 // pred_check_branch
        %348 = sbr.rel (%p346) target = $region56
      $region55: #{inv_res_block.1} parent=11 // pred_region
        _
      $region56: #{inv_res_block.1} parent=11 // pred_fallthru
        _
    $region12: #{inv_res_block.1} parent=5 // pred_fallthru
      _
    %p349 = scmp.lt.s32.totalorder %s18, 2
    // Predicated region
    $region57: #{inv_res_block.1} parent=5 // pred_check
      %p350 = pneg %p349
    $region58: #{inv_res_block.1} parent=5 // pred_check_branch
      %352 = sbr.rel (%p350) target = $region60
    $region59: #{inv_res_block.1} parent=5 // pred_region
      // Predicated region
      $region61: #{inv_res_block.1} parent=59 // pred_check
        %p353 = pneg %p38
      $region62: #{inv_res_block.1} parent=59 // pred_check_branch
        %355 = sbr.rel (%p353) target = $region64
      $region63: #{inv_res_block.1} parent=59 // pred_region
        %p356 = scmp.lt.s32.totalorder %s18, 1
        %s357 = scalar_select %p356, %s18, 1
        %s358 = smul.addr %s357, 41
        %s359 = smul.addr %s358, 8
        %s360 = scalar_lea.vmem %s0, %s359
      $region64: #{inv_res_block.1} parent=59 // pred_fallthru
        _
    $region60: #{inv_res_block.1} parent=5 // pred_fallthru
      _
    %p361 = scmp.le.s32.totalorder 1, %s18
    %p362 = scmp.lt.s32.totalorder %s18, 3
    %p363 = pnand %p361, %p362
    %p364 = pneg %p363
    // Predicated region
    $region65: #{inv_res_block.1} parent=5 // pred_check
      _
    $region66: #{inv_res_block.1} parent=5 // pred_check_branch
      %366 = sbr.rel (%p363) target = $region68
    $region67: #{inv_res_block.1} parent=5 // pred_region
      %s367 = ssub.s32 %s18, 1
      %p368 = scmp.lt.s32.totalorder %s23, 1
      %s369 = scalar_select %p368, %s23, 1
      %s370 = smul.addr %s369, 41
      %s371 = smul.addr %s370, 8
      %s372 = scalar_lea.vmem %s0, %s371
      %p373 = pneg %p44
      %p374 = pneg %p41
      %p375 = pneg %p65
      %p376 = pneg %p62
      %p377 = pneg %p86
      %p378 = pneg %p83
      %p379 = pneg %p107
      %p380 = pneg %p104
      %p381 = pneg %p128
      %p382 = pneg %p125
      %p383 = pneg %p149
      %p384 = pneg %p146
      %p385 = pneg %p170
      %p386 = pneg %p167
      %p387 = pneg %p191
      %p388 = pneg %p188
      %p389 = pneg %p212
      %p390 = pneg %p209
      %p391 = pneg %p233
      %p392 = pneg %p230
      %p393 = pneg %p254
      %p394 = pneg %p251
      %p395 = pneg %p275
      %p396 = pneg %p272
      %p397 = pneg %p301
      %p398 = pneg %p298
      %p399 = scmp.lt.s32.totalorder %s23, 1
      %s400 = scalar_select %p399, %s23, 1
      %s401 = smul.addr %s400, 41
      %s402 = smul.addr %s401, 8
      %s403 = scalar_lea.vmem %s12, %s402
      %p404 = scmp.lt.s32.totalorder %s23, 1
      %s405 = scalar_select %p404, %s23, 1
      %s406 = smul.addr %s405, 41
      %s407 = smul.addr %s406, 8
      %s408 = scalar_lea.vmem %s0, %s407
      %p409 = scmp.lt.s32.totalorder %s23, 1
      %s410 = scalar_select %p409, %s23, 1
      %s411 = smul.addr %s410, 41
      %s412 = smul.addr %s411, 8
      %s413 = scalar_lea.vmem %s12, %s412
      %v414 = vld [vmem:[%s408] sm:$0xff]
      %v415 = vld [vmem:[%s408 + $0x8] sm:$0xff]
      %v416 = vld [vmem:[%s408 + $0x10] sm:$0xff]
      %v417 = vld [vmem:[%s408 + $0x18] sm:$0xff]
      %v418 = vld [vmem:[%s408 + $0x20] sm:$0xff]
      %v419 = vld [vmem:[%s408 + $0x28] sm:$0xff]
      %v420 = vld [vmem:[%s408 + $0x30] sm:$0xff]
      %v421 = vld [vmem:[%s408 + $0x38] sm:$0xff]
      %v422 = vld [vmem:[%s408 + $0x40] sm:$0xff]
      %v423 = vld [vmem:[%s408 + $0x48] sm:$0xff]
      %v424 = vld [vmem:[%s408 + $0x50] sm:$0xff]
      %v425 = vld [vmem:[%s408 + $0x58] sm:$0xff]
      %v426 = vld [vmem:[%s408 + $0x60] sm:$0xff]
      %v427 = vld [vmem:[%s408 + $0x68] sm:$0xff]
      %v428 = vld [vmem:[%s408 + $0x70] sm:$0xff]
      %v429 = vld [vmem:[%s408 + $0x78] sm:$0xff]
      %v430 = vld [vmem:[%s408 + $0x80] sm:$0xff]
      %v431 = vld [vmem:[%s408 + $0x88] sm:$0xff]
      %v432 = vld [vmem:[%s408 + $0x90] sm:$0xff]
      %v433 = vld [vmem:[%s408 + $0x98] sm:$0xff]
      %v434 = vld [vmem:[%s408 + $0xa0] sm:$0xff]
      %v435 = vld [vmem:[%s408 + $0xa8] sm:$0xff]
      %v436 = vld [vmem:[%s408 + $0xb0] sm:$0xff]
      %v437 = vld [vmem:[%s408 + $0xb8] sm:$0xff]
      %v438 = vld [vmem:[%s408 + $0xc0] sm:$0xff]
      %v439 = vld [vmem:[%s408 + $0xc8] sm:$0xff]
      %v440 = vld [vmem:[%s408 + $0xd0] sm:$0xff]
      %v441 = vld [vmem:[%s408 + $0xd8] sm:$0xff]
      %v442 = vld [vmem:[%s408 + $0xe0] sm:$0xff]
      %v443 = vld [vmem:[%s408 + $0xe8] sm:$0xff]
      %v444 = vld [vmem:[%s408 + $0xf0] sm:$0xff]
      %v445 = vld [vmem:[%s408 + $0xf8] sm:$0xff]
      %v446 = vld [vmem:[%s408 + $0x100] sm:$0xff]
      %v447 = vld [vmem:[%s408 + $0x108] sm:$0xff]
      %v448 = vld [vmem:[%s408 + $0x110] sm:$0xff]
      %v449 = vld [vmem:[%s408 + $0x118] sm:$0xff]
      %v450 = vld [vmem:[%s408 + $0x120] sm:$0xff]
      %v451 = vld [vmem:[%s408 + $0x128] sm:$0xff]
      %v452 = vld [vmem:[%s408 + $0x130] sm:$0xff]
      %v453 = vld [vmem:[%s408 + $0x138] sm:$0xff]
      %v454 = vld [vmem:[%s408 + $0x140] sm:$0xff]
      %v455 = vld [vmem:[%s1] sm:$0xff]
      %v456 = vld [vmem:[%s1 + $0x8] sm:$0xff]
      %v457 = vld [vmem:[%s1 + $0x10] sm:$0xff]
      %v458 = vld [vmem:[%s1 + $0x18] sm:$0xff]
      %v459 = vld [vmem:[%s1 + $0x20] sm:$0xff]
      %v460 = vld [vmem:[%s1 + $0x28] sm:$0xff]
      %v461 = vld [vmem:[%s1 + $0x30] sm:$0xff]
      %v462 = vld [vmem:[%s1 + $0x38] sm:$0xff]
      %v463 = vld [vmem:[%s1 + $0x40] sm:$0xff]
      %v464 = vld [vmem:[%s1 + $0x48] sm:$0xff]
      %v465 = vld [vmem:[%s1 + $0x50] sm:$0xff]
      %v466 = vld [vmem:[%s1 + $0x58] sm:$0xff]
      %v467 = vld [vmem:[%s1 + $0x60] sm:$0xff]
      %v468 = vld [vmem:[%s1 + $0x68] sm:$0xff]
      %v469 = vld [vmem:[%s1 + $0x70] sm:$0xff]
      %v470 = vld [vmem:[%s1 + $0x78] sm:$0xff]
      %v471 = vld [vmem:[%s1 + $0x80] sm:$0xff]
      %v472 = vld [vmem:[%s1 + $0x88] sm:$0xff]
      %v473 = vld [vmem:[%s1 + $0x90] sm:$0xff]
      %v474 = vld [vmem:[%s1 + $0x98] sm:$0xff]
      %v475 = vld [vmem:[%s1 + $0xa0] sm:$0xff]
      %v476 = vld [vmem:[%s1 + $0xa8] sm:$0xff]
      %v477 = vld [vmem:[%s1 + $0xb0] sm:$0xff]
      %v478 = vld [vmem:[%s1 + $0xb8] sm:$0xff]
      %v479 = vld [vmem:[%s1 + $0xc0] sm:$0xff]
      %v480 = vld [vmem:[%s1 + $0xc8] sm:$0xff]
      %v481 = vld [vmem:[%s1 + $0xd0] sm:$0xff]
      %v482 = vld [vmem:[%s1 + $0xd8] sm:$0xff]
      %v483 = vld [vmem:[%s1 + $0xe0] sm:$0xff]
      %v484 = vld [vmem:[%s1 + $0xe8] sm:$0xff]
      %v485 = vld [vmem:[%s1 + $0xf0] sm:$0xff]
      %v486 = vld [vmem:[%s1 + $0xf8] sm:$0xff]
      %v487 = vld [vmem:[%s1 + $0x100] sm:$0xff]
      %v488 = vld [vmem:[%s1 + $0x108] sm:$0xff]
      %v489 = vld [vmem:[%s1 + $0x110] sm:$0xff]
      %v490 = vld [vmem:[%s1 + $0x118] sm:$0xff]
      %v491 = vld [vmem:[%s1 + $0x120] sm:$0xff]
      %v492 = vld [vmem:[%s1 + $0x128] sm:$0xff]
      %v493 = vld [vmem:[%s1 + $0x130] sm:$0xff]
      %v494 = vld [vmem:[%s1 + $0x138] sm:$0xff]
      %v495 = vld [vmem:[%s1 + $0x140] sm:$0xff]
      %v496 = vld [vmem:[%s2] sm:$0xff]
      %v497 = vld [vmem:[%s2 + $0x8] sm:$0xff]
      %v498 = vld [vmem:[%s2 + $0x10] sm:$0xff]
      %v499 = vld [vmem:[%s2 + $0x18] sm:$0xff]
      %v500 = vld [vmem:[%s2 + $0x20] sm:$0xff]
      %v501 = vld [vmem:[%s2 + $0x28] sm:$0xff]
      %v502 = vld [vmem:[%s2 + $0x30] sm:$0xff]
      %v503 = vld [vmem:[%s2 + $0x38] sm:$0xff]
      %v504 = vld [vmem:[%s2 + $0x40] sm:$0xff]
      %v505 = vld [vmem:[%s2 + $0x48] sm:$0xff]
      %v506 = vld [vmem:[%s2 + $0x50] sm:$0xff]
      %v507 = vld [vmem:[%s2 + $0x58] sm:$0xff]
      %v508 = vld [vmem:[%s2 + $0x60] sm:$0xff]
      %v509 = vld [vmem:[%s2 + $0x68] sm:$0xff]
      %v510 = vld [vmem:[%s2 + $0x70] sm:$0xff]
      %v511 = vld [vmem:[%s2 + $0x78] sm:$0xff]
      %v512 = vld [vmem:[%s3] sm:$0x1]
      %v514 = vlaneseq
      %v515 = vshrl.u32 %v514, 7
      %v516 = vsub.s32 0, %v515
      %v517 = vrot.slane %v512, %v516
      %519 = vmatprep.subr.mxu0 0.0
      %520 = vmatpush1.msra.mxu0 %v496
      %521 = vmatprep.subr.mxu0 0.0
      %522 = vmatpush1.msra.mxu0 %v497
      %523 = vmatprep.subr.mxu0 0.0
      %524 = vmatpush1.msra.mxu0 %v498
      %525 = vmatprep.subr.mxu0 0.0
      %526 = vmatpush1.msra.mxu0 %v499
      %527 = vmatprep.subr.mxu0 0.0
      %528 = vmatpush1.msra.mxu0 %v500
      %529 = vmatprep.subr.mxu0 0.0
      %530 = vmatpush1.msra.mxu0 %v501
      %531 = vmatprep.subr.mxu0 0.0
      %532 = vmatpush1.msra.mxu0 %v502
      %533 = vmatprep.subr.mxu0 0.0
      %534 = vmatpush1.msra.mxu0 %v503
      %535 = vmatprep.subr.mxu0 0.0
      %536 = vmatpush1.msra.mxu0 %v504
      %537 = vmatprep.subr.mxu0 0.0
      %538 = vmatpush1.msra.mxu0 %v505
      %539 = vmatprep.subr.mxu0 0.0
      %540 = vmatpush1.msra.mxu0 %v506
      %541 = vmatprep.subr.mxu0 0.0
      %542 = vmatpush1.msra.mxu0 %v507
      %543 = vmatprep.subr.mxu0 0.0
      %544 = vmatpush1.msra.mxu0 %v508
      %545 = vmatprep.subr.mxu0 0.0
      %546 = vmatpush1.msra.mxu0 %v509
      %547 = vmatprep.subr.mxu0 0.0
      %548 = vmatpush1.msra.mxu0 %v510
      %549 = vmatprep.subr.mxu0 0.0
      %550 = vmatpush1.msra.mxu0 %v511
      %551 = vmatprep.subr.mxu0 0.0
      %552 = vmatpush1.msra.mxu0 0.0
      %553 = vmatprep.subr.mxu0 0.0
      %554 = vmatpush1.msra.mxu0 0.0
      %555 = vmatprep.subr.mxu0 0.0
      %556 = vmatpush1.msra.mxu0 0.0
      %557 = vmatprep.subr.mxu0 0.0
      %558 = vmatpush1.msra.mxu0 0.0
      %559 = vmatprep.subr.mxu0 0.0
      %560 = vmatpush1.msra.mxu0 0.0
      %561 = vmatprep.subr.mxu0 0.0
      %562 = vmatpush1.msra.mxu0 0.0
      %563 = vmatprep.subr.mxu0 0.0
      %564 = vmatpush1.msra.mxu0 0.0
      %565 = vmatprep.subr.mxu0 0.0
      %566 = vmatpush1.msra.mxu0 0.0
      %567 = vmatprep.subr.mxu0 0.0
      %568 = vmatpush1.msra.mxu0 0.0
      %569 = vmatprep.subr.mxu0 0.0
      %570 = vmatpush1.msra.mxu0 0.0
      %571 = vmatprep.subr.mxu0 0.0
      %572 = vmatpush1.msra.mxu0 0.0
      %573 = vmatprep.subr.mxu0 0.0
      %574 = vmatpush1.msra.mxu0 0.0
      %575 = vmatprep.subr.mxu0 0.0
      %576 = vmatpush1.msra.mxu0 0.0
      %577 = vmatprep.subr.mxu0 0.0
      %578 = vmatpush1.msra.mxu0 0.0
      %579 = vmatprep.subr.mxu0 0.0
      %580 = vmatpush1.msra.mxu0 0.0
      %581 = vmatprep.subr.mxu0 0.0
      %582 = vmatpush1.msra.mxu0 0.0
      %583 = vmatprep.mubr.f32.mxu0 0.0
      %584 = vmatmul.mubr.f32.gmra.mrb[0].mxu0 %v414
      %v585 = vpop.f32.mrb[0].mxu0
      %v586 = vadd.f32 %v517, %v585
      %v587 = vpop.f32.mrb[0].mxu0
      %588 = vmatprep.mubr.f32.mxu0 0.0
      %589 = vmatmul.mubr.f32.gmra.mrb[0].mxu0 %v415
      %v590 = vpop.f32.mrb[0].mxu0
      %v591 = vadd.f32 %v517, %v590
      %v592 = vpop.f32.mrb[0].mxu0
      %593 = vmatprep.mubr.f32.mxu0 0.0
      %594 = vmatmul.mubr.f32.gmra.mrb[0].mxu0 %v416
      %v595 = vpop.f32.mrb[0].mxu0
      %v596 = vadd.f32 %v517, %v595
      %v597 = vpop.f32.mrb[0].mxu0
      %598 = vmatprep.mubr.f32.mxu0 0.0
      %599 = vmatmul.mubr.f32.gmra.mrb[0].mxu0 %v417
      %v600 = vpop.f32.mrb[0].mxu0
      %v601 = vadd.f32 %v517, %v600
      %v602 = vpop.f32.mrb[0].mxu0
      %603 = vmatprep.mubr.f32.mxu0 0.0
      %604 = vmatmul.mubr.f32.gmra.mrb[0].mxu0 %v418
      %v605 = vpop.f32.mrb[0].mxu0
      %v606 = vadd.f32 %v517, %v605
      %v607 = vpop.f32.mrb[0].mxu0
      %608 = vmatprep.mubr.f32.mxu0 0.0
      %609 = vmatmul.mubr.f32.gmra.mrb[0].mxu0 %v419
      %v610 = vpop.f32.mrb[0].mxu0
      %v611 = vadd.f32 %v517, %v610
      %v612 = vpop.f32.mrb[0].mxu0
      %613 = vmatprep.mubr.f32.mxu0 0.0
      %614 = vmatmul.mubr.f32.gmra.mrb[0].mxu0 %v420
      %v615 = vpop.f32.mrb[0].mxu0
      %v616 = vadd.f32 %v517, %v615
      %v617 = vpop.f32.mrb[0].mxu0
      %618 = vmatprep.mubr.f32.mxu0 0.0
      %619 = vmatmul.mubr.f32.gmra.mrb[0].mxu0 %v421
      %v620 = vpop.f32.mrb[0].mxu0
      %v621 = vadd.f32 %v517, %v620
      %v622 = vpop.f32.mrb[0].mxu0
      %623 = vmatprep.mubr.f32.mxu0 0.0
      %624 = vmatmul.mubr.f32.gmra.mrb[0].mxu0 %v422
      %v625 = vpop.f32.mrb[0].mxu0
      %v626 = vadd.f32 %v517, %v625
      %v627 = vpop.f32.mrb[0].mxu0
      %628 = vmatprep.mubr.f32.mxu0 0.0
      %629 = vmatmul.mubr.f32.gmra.mrb[0].mxu0 %v423
      %v630 = vpop.f32.mrb[0].mxu0
      %v631 = vadd.f32 %v517, %v630
      %v632 = vpop.f32.mrb[0].mxu0
      %633 = vmatprep.mubr.f32.mxu0 0.0
      %634 = vmatmul.mubr.f32.gmra.mrb[0].mxu0 %v424
      %v635 = vpop.f32.mrb[0].mxu0
      %v636 = vadd.f32 %v517, %v635
      %v637 = vpop.f32.mrb[0].mxu0
      %638 = vmatprep.mubr.f32.mxu0 0.0
      %639 = vmatmul.mubr.f32.gmra.mrb[0].mxu0 %v425
      %v640 = vpop.f32.mrb[0].mxu0
      %v641 = vadd.f32 %v517, %v640
      %v642 = vpop.f32.mrb[0].mxu0
      %643 = vmatprep.mubr.f32.mxu0 0.0
      %644 = vmatmul.mubr.f32.gmra.mrb[0].mxu0 %v426
      %v645 = vpop.f32.mrb[0].mxu0
      %v646 = vadd.f32 %v517, %v645
      %v647 = vpop.f32.mrb[0].mxu0
      %648 = vmatprep.mubr.f32.mxu0 0.0
      %649 = vmatmul.mubr.f32.gmra.mrb[0].mxu0 %v427
      %v650 = vpop.f32.mrb[0].mxu0
      %v651 = vadd.f32 %v517, %v650
      %v652 = vpop.f32.mrb[0].mxu0
      %653 = vmatprep.mubr.f32.mxu0 0.0
      %654 = vmatmul.mubr.f32.gmra.mrb[0].mxu0 %v428
      %v655 = vpop.f32.mrb[0].mxu0
      %v656 = vadd.f32 %v517, %v655
      %v657 = vpop.f32.mrb[0].mxu0
      %658 = vmatprep.mubr.f32.mxu0 0.0
      %659 = vmatmul.mubr.f32.gmra.mrb[0].mxu0 %v429
      %v660 = vpop.f32.mrb[0].mxu0
      %v661 = vadd.f32 %v517, %v660
      %v662 = vpop.f32.mrb[0].mxu0
      %663 = vmatprep.mubr.f32.mxu0 0.0
      %664 = vmatmul.mubr.f32.gmra.mrb[0].mxu0 %v430
      %v665 = vpop.f32.mrb[0].mxu0
      %v666 = vadd.f32 %v517, %v665
      %v667 = vpop.f32.mrb[0].mxu0
      %668 = vmatprep.mubr.f32.mxu0 0.0
      %669 = vmatmul.mubr.f32.gmra.mrb[0].mxu0 %v431
      %v670 = vpop.f32.mrb[0].mxu0
      %v671 = vadd.f32 %v517, %v670
      %v672 = vpop.f32.mrb[0].mxu0
      %673 = vmatprep.mubr.f32.mxu0 0.0
      %674 = vmatmul.mubr.f32.gmra.mrb[0].mxu0 %v432
      %v675 = vpop.f32.mrb[0].mxu0
      %v676 = vadd.f32 %v517, %v675
      %v677 = vpop.f32.mrb[0].mxu0
      %678 = vmatprep.mubr.f32.mxu0 0.0
      %679 = vmatmul.mubr.f32.gmra.mrb[0].mxu0 %v433
      %v680 = vpop.f32.mrb[0].mxu0
      %v681 = vadd.f32 %v517, %v680
      %v682 = vpop.f32.mrb[0].mxu0
      %683 = vmatprep.mubr.f32.mxu0 0.0
      %684 = vmatmul.mubr.f32.gmra.mrb[0].mxu0 %v434
      %v685 = vpop.f32.mrb[0].mxu0
      %v686 = vadd.f32 %v517, %v685
      %v687 = vpop.f32.mrb[0].mxu0
      %688 = vmatprep.mubr.f32.mxu0 0.0
      %689 = vmatmul.mubr.f32.gmra.mrb[0].mxu0 %v435
      %v690 = vpop.f32.mrb[0].mxu0
      %v691 = vadd.f32 %v517, %v690
      %v692 = vpop.f32.mrb[0].mxu0
      %693 = vmatprep.mubr.f32.mxu0 0.0
      %694 = vmatmul.mubr.f32.gmra.mrb[0].mxu0 %v436
      %v695 = vpop.f32.mrb[0].mxu0
      %v696 = vadd.f32 %v517, %v695
      %v697 = vpop.f32.mrb[0].mxu0
      %698 = vmatprep.mubr.f32.mxu0 0.0
      %699 = vmatmul.mubr.f32.gmra.mrb[0].mxu0 %v437
      %v700 = vpop.f32.mrb[0].mxu0
      %v701 = vadd.f32 %v517, %v700
      %v702 = vpop.f32.mrb[0].mxu0
      %703 = vmatprep.mubr.f32.mxu0 0.0
      %704 = vmatmul.mubr.f32.gmra.mrb[0].mxu0 %v438
      %v705 = vpop.f32.mrb[0].mxu0
      %v706 = vadd.f32 %v517, %v705
      %v707 = vpop.f32.mrb[0].mxu0
      %708 = vmatprep.mubr.f32.mxu0 0.0
      %709 = vmatmul.mubr.f32.gmra.mrb[0].mxu0 %v439
      %v710 = vpop.f32.mrb[0].mxu0
      %v711 = vadd.f32 %v517, %v710
      %v712 = vpop.f32.mrb[0].mxu0
      %713 = vmatprep.mubr.f32.mxu0 0.0
      %714 = vmatmul.mubr.f32.gmra.mrb[0].mxu0 %v440
      %v715 = vpop.f32.mrb[0].mxu0
      %v716 = vadd.f32 %v517, %v715
      %v717 = vpop.f32.mrb[0].mxu0
      %718 = vmatprep.mubr.f32.mxu0 0.0
      %719 = vmatmul.mubr.f32.gmra.mrb[0].mxu0 %v441
      %v720 = vpop.f32.mrb[0].mxu0
      %v721 = vadd.f32 %v517, %v720
      %v722 = vpop.f32.mrb[0].mxu0
      %723 = vmatprep.mubr.f32.mxu0 0.0
      %724 = vmatmul.mubr.f32.gmra.mrb[0].mxu0 %v442
      %v725 = vpop.f32.mrb[0].mxu0
      %v726 = vadd.f32 %v517, %v725
      %v727 = vpop.f32.mrb[0].mxu0
      %728 = vmatprep.mubr.f32.mxu0 0.0
      %729 = vmatmul.mubr.f32.gmra.mrb[0].mxu0 %v443
      %v730 = vpop.f32.mrb[0].mxu0
      %v731 = vadd.f32 %v517, %v730
      %v732 = vpop.f32.mrb[0].mxu0
      %733 = vmatprep.mubr.f32.mxu0 0.0
      %734 = vmatmul.mubr.f32.gmra.mrb[0].mxu0 %v444
      %v735 = vpop.f32.mrb[0].mxu0
      %v736 = vadd.f32 %v517, %v735
      %v737 = vpop.f32.mrb[0].mxu0
      %738 = vmatprep.mubr.f32.mxu0 0.0
      %739 = vmatmul.mubr.f32.gmra.mrb[0].mxu0 %v445
      %v740 = vpop.f32.mrb[0].mxu0
      %v741 = vadd.f32 %v517, %v740
      %v742 = vpop.f32.mrb[0].mxu0
      %743 = vmatprep.mubr.f32.mxu0 0.0
      %744 = vmatmul.mubr.f32.gmra.mrb[0].mxu0 %v446
      %v745 = vpop.f32.mrb[0].mxu0
      %v746 = vadd.f32 %v517, %v745
      %v747 = vpop.f32.mrb[0].mxu0
      %748 = vmatprep.mubr.f32.mxu0 0.0
      %749 = vmatmul.mubr.f32.gmra.mrb[0].mxu0 %v447
      %v750 = vpop.f32.mrb[0].mxu0
      %v751 = vadd.f32 %v517, %v750
      %v752 = vpop.f32.mrb[0].mxu0
      %753 = vmatprep.mubr.f32.mxu0 0.0
      %754 = vmatmul.mubr.f32.gmra.mrb[0].mxu0 %v448
      %v755 = vpop.f32.mrb[0].mxu0
      %v756 = vadd.f32 %v517, %v755
      %v757 = vpop.f32.mrb[0].mxu0
      %758 = vmatprep.mubr.f32.mxu0 0.0
      %759 = vmatmul.mubr.f32.gmra.mrb[0].mxu0 %v449
      %v760 = vpop.f32.mrb[0].mxu0
      %v761 = vadd.f32 %v517, %v760
      %v762 = vpop.f32.mrb[0].mxu0
      %763 = vmatprep.mubr.f32.mxu0 0.0
      %764 = vmatmul.mubr.f32.gmra.mrb[0].mxu0 %v450
      %v765 = vpop.f32.mrb[0].mxu0
      %v766 = vadd.f32 %v517, %v765
      %v767 = vpop.f32.mrb[0].mxu0
      %768 = vmatprep.mubr.f32.mxu0 0.0
      %769 = vmatmul.mubr.f32.gmra.mrb[0].mxu0 %v451
      %v770 = vpop.f32.mrb[0].mxu0
      %v771 = vadd.f32 %v517, %v770
      %v772 = vpop.f32.mrb[0].mxu0
      %773 = vmatprep.mubr.f32.mxu0 0.0
      %774 = vmatmul.mubr.f32.gmra.mrb[0].mxu0 %v452
      %v775 = vpop.f32.mrb[0].mxu0
      %v776 = vadd.f32 %v517, %v775
      %v777 = vpop.f32.mrb[0].mxu0
      %778 = vmatprep.mubr.f32.mxu0 0.0
      %779 = vmatmul.mubr.f32.gmra.mrb[0].mxu0 %v453
      %v780 = vpop.f32.mrb[0].mxu0
      %v781 = vadd.f32 %v517, %v780
      %v782 = vpop.f32.mrb[0].mxu0
      %783 = vmatprep.mubr.f32.mxu0 0.0
      %784 = vmatmul.mubr.f32.gmra.mrb[0].mxu0 %v454
      %v785 = vpop.f32.mrb[0].mxu0
      %v786 = vadd.f32 %v517, %v785
      %v787 = vpop.f32.mrb[0].mxu0
      %788 = vdwg.mxu0
      %v789 = vmax.f32 %v586, 0.0
      %v790 = vmax.f32 %v591, 0.0
      %v791 = vmax.f32 %v596, 0.0
      %v792 = vmax.f32 %v601, 0.0
      %v793 = vmax.f32 %v606, 0.0
      %v794 = vmax.f32 %v611, 0.0
      %v795 = vmax.f32 %v616, 0.0
      %v796 = vmax.f32 %v621, 0.0
      %v797 = vmax.f32 %v626, 0.0
      %v798 = vmax.f32 %v631, 0.0
      %v799 = vmax.f32 %v636, 0.0
      %v800 = vmax.f32 %v641, 0.0
      %v801 = vmax.f32 %v646, 0.0
      %v802 = vmax.f32 %v651, 0.0
      %v803 = vmax.f32 %v656, 0.0
      %v804 = vmax.f32 %v661, 0.0
      %v805 = vmax.f32 %v666, 0.0
      %v806 = vmax.f32 %v671, 0.0
      %v807 = vmax.f32 %v676, 0.0
      %v808 = vmax.f32 %v681, 0.0
      %v809 = vmax.f32 %v686, 0.0
      %v810 = vmax.f32 %v691, 0.0
      %v811 = vmax.f32 %v696, 0.0
      %v812 = vmax.f32 %v701, 0.0
      %v813 = vmax.f32 %v706, 0.0
      %v814 = vmax.f32 %v711, 0.0
      %v815 = vmax.f32 %v716, 0.0
      %v816 = vmax.f32 %v721, 0.0
      %v817 = vmax.f32 %v726, 0.0
      %v818 = vmax.f32 %v731, 0.0
      %v819 = vmax.f32 %v736, 0.0
      %v820 = vmax.f32 %v741, 0.0
      %v821 = vmax.f32 %v746, 0.0
      %v822 = vmax.f32 %v751, 0.0
      %v823 = vmax.f32 %v756, 0.0
      %v824 = vmax.f32 %v761, 0.0
      %v825 = vmax.f32 %v766, 0.0
      %v826 = vmax.f32 %v771, 0.0
      %v827 = vmax.f32 %v776, 0.0
      %v828 = vmax.f32 %v781, 0.0
      %v829 = vmax.f32 %v786, 0.0
      %831 = vset.pattern.permute.xlu0 0
      %832 = vperm.xlu0 %831, %v455
      %v833 = vpop.permute.xlu0 %832
      %836 = vset.pattern.permute.xlu0 0
      %837 = vperm.xlu0 %836, %v456
      %v838 = vpop.permute.xlu0 %837
      %841 = vset.pattern.permute.xlu0 0
      %842 = vperm.xlu0 %841, %v457
      %v843 = vpop.permute.xlu0 %842
      %846 = vset.pattern.permute.xlu0 0
      %847 = vperm.xlu0 %846, %v458
      %v848 = vpop.permute.xlu0 %847
      %851 = vset.pattern.permute.xlu0 0
      %852 = vperm.xlu0 %851, %v459
      %v853 = vpop.permute.xlu0 %852
      %856 = vset.pattern.permute.xlu0 0
      %857 = vperm.xlu0 %856, %v460
      %v858 = vpop.permute.xlu0 %857
      %861 = vset.pattern.permute.xlu0 0
      %862 = vperm.xlu0 %861, %v461
      %v863 = vpop.permute.xlu0 %862
      %866 = vset.pattern.permute.xlu0 0
      %867 = vperm.xlu0 %866, %v462
      %v868 = vpop.permute.xlu0 %867
      %871 = vset.pattern.permute.xlu0 0
      %872 = vperm.xlu0 %871, %v463
      %v873 = vpop.permute.xlu0 %872
      %876 = vset.pattern.permute.xlu0 0
      %877 = vperm.xlu0 %876, %v464
      %v878 = vpop.permute.xlu0 %877
      %881 = vset.pattern.permute.xlu0 0
      %882 = vperm.xlu0 %881, %v465
      %v883 = vpop.permute.xlu0 %882
      %886 = vset.pattern.permute.xlu0 0
      %887 = vperm.xlu0 %886, %v466
      %v888 = vpop.permute.xlu0 %887
      %891 = vset.pattern.permute.xlu0 0
      %892 = vperm.xlu0 %891, %v467
      %v893 = vpop.permute.xlu0 %892
      %896 = vset.pattern.permute.xlu0 0
      %897 = vperm.xlu0 %896, %v468
      %v898 = vpop.permute.xlu0 %897
      %901 = vset.pattern.permute.xlu0 0
      %902 = vperm.xlu0 %901, %v469
      %v903 = vpop.permute.xlu0 %902
      %906 = vset.pattern.permute.xlu0 0
      %907 = vperm.xlu0 %906, %v470
      %v908 = vpop.permute.xlu0 %907
      %911 = vset.pattern.permute.xlu0 0
      %912 = vperm.xlu0 %911, %v471
      %v913 = vpop.permute.xlu0 %912
      %916 = vset.pattern.permute.xlu0 0
      %917 = vperm.xlu0 %916, %v472
      %v918 = vpop.permute.xlu0 %917
      %921 = vset.pattern.permute.xlu0 0
      %922 = vperm.xlu0 %921, %v473
      %v923 = vpop.permute.xlu0 %922
      %926 = vset.pattern.permute.xlu0 0
      %927 = vperm.xlu0 %926, %v474
      %v928 = vpop.permute.xlu0 %927
      %931 = vset.pattern.permute.xlu0 0
      %932 = vperm.xlu0 %931, %v475
      %v933 = vpop.permute.xlu0 %932
      %936 = vset.pattern.permute.xlu0 0
      %937 = vperm.xlu0 %936, %v476
      %v938 = vpop.permute.xlu0 %937
      %941 = vset.pattern.permute.xlu0 0
      %942 = vperm.xlu0 %941, %v477
      %v943 = vpop.permute.xlu0 %942
      %946 = vset.pattern.permute.xlu0 0
      %947 = vperm.xlu0 %946, %v478
      %v948 = vpop.permute.xlu0 %947
      %951 = vset.pattern.permute.xlu0 0
      %952 = vperm.xlu0 %951, %v479
      %v953 = vpop.permute.xlu0 %952
      %956 = vset.pattern.permute.xlu0 0
      %957 = vperm.xlu0 %956, %v480
      %v958 = vpop.permute.xlu0 %957
      %961 = vset.pattern.permute.xlu0 0
      %962 = vperm.xlu0 %961, %v481
      %v963 = vpop.permute.xlu0 %962
      %966 = vset.pattern.permute.xlu0 0
      %967 = vperm.xlu0 %966, %v482
      %v968 = vpop.permute.xlu0 %967
      %971 = vset.pattern.permute.xlu0 0
      %972 = vperm.xlu0 %971, %v483
      %v973 = vpop.permute.xlu0 %972
      %976 = vset.pattern.permute.xlu0 0
      %977 = vperm.xlu0 %976, %v484
      %v978 = vpop.permute.xlu0 %977
      %981 = vset.pattern.permute.xlu0 0
      %982 = vperm.xlu0 %981, %v485
      %v983 = vpop.permute.xlu0 %982
      %986 = vset.pattern.permute.xlu0 0
      %987 = vperm.xlu0 %986, %v486
      %v988 = vpop.permute.xlu0 %987
      %991 = vset.pattern.permute.xlu0 0
      %992 = vperm.xlu0 %991, %v487
      %v993 = vpop.permute.xlu0 %992
      %996 = vset.pattern.permute.xlu0 0
      %997 = vperm.xlu0 %996, %v488
      %v998 = vpop.permute.xlu0 %997
      %1001 = vset.pattern.permute.xlu0 0
      %1002 = vperm.xlu0 %1001, %v489
      %v1003 = vpop.permute.xlu0 %1002
      %1006 = vset.pattern.permute.xlu0 0
      %1007 = vperm.xlu0 %1006, %v490
      %v1008 = vpop.permute.xlu0 %1007
      %1011 = vset.pattern.permute.xlu0 0
      %1012 = vperm.xlu0 %1011, %v491
      %v1013 = vpop.permute.xlu0 %1012
      %1016 = vset.pattern.permute.xlu0 0
      %1017 = vperm.xlu0 %1016, %v492
      %v1018 = vpop.permute.xlu0 %1017
      %1021 = vset.pattern.permute.xlu0 0
      %1022 = vperm.xlu0 %1021, %v493
      %v1023 = vpop.permute.xlu0 %1022
      %1026 = vset.pattern.permute.xlu0 0
      %1027 = vperm.xlu0 %1026, %v494
      %v1028 = vpop.permute.xlu0 %1027
      %1031 = vset.pattern.permute.xlu0 0
      %1032 = vperm.xlu0 %1031, %v495
      %v1033 = vpop.permute.xlu0 %1032
      %v1035 = vmul.f32 %v789, %v833
      %v1036 = vmul.f32 %v790, %v838
      %v1037 = vmul.f32 %v791, %v843
      %v1038 = vmul.f32 %v792, %v848
      %v1039 = vmul.f32 %v793, %v853
      %v1040 = vmul.f32 %v794, %v858
      %v1041 = vmul.f32 %v795, %v863
      %v1042 = vmul.f32 %v796, %v868
      %v1043 = vmul.f32 %v797, %v873
      %v1044 = vmul.f32 %v798, %v878
      %v1045 = vmul.f32 %v799, %v883
      %v1046 = vmul.f32 %v800, %v888
      %v1047 = vmul.f32 %v801, %v893
      %v1048 = vmul.f32 %v802, %v898
      %v1049 = vmul.f32 %v803, %v903
      %v1050 = vmul.f32 %v804, %v908
      %v1051 = vmul.f32 %v805, %v913
      %v1052 = vmul.f32 %v806, %v918
      %v1053 = vmul.f32 %v807, %v923
      %v1054 = vmul.f32 %v808, %v928
      %v1055 = vmul.f32 %v809, %v933
      %v1056 = vmul.f32 %v810, %v938
      %v1057 = vmul.f32 %v811, %v943
      %v1058 = vmul.f32 %v812, %v948
      %v1059 = vmul.f32 %v813, %v953
      %v1060 = vmul.f32 %v814, %v958
      %v1061 = vmul.f32 %v815, %v963
      %v1062 = vmul.f32 %v816, %v968
      %v1063 = vmul.f32 %v817, %v973
      %v1064 = vmul.f32 %v818, %v978
      %v1065 = vmul.f32 %v819, %v983
      %v1066 = vmul.f32 %v820, %v988
      %v1067 = vmul.f32 %v821, %v993
      %v1068 = vmul.f32 %v822, %v998
      %v1069 = vmul.f32 %v823, %v1003
      %v1070 = vmul.f32 %v824, %v1008
      %v1071 = vmul.f32 %v825, %v1013
      %v1072 = vmul.f32 %v826, %v1018
      %v1073 = vmul.f32 %v827, %v1023
      %v1074 = vmul.f32 %v828, %v1028
      %v1075 = vmul.f32 %v829, %v1033
      %vm1117 = vcmask 1042432
      %v1118 = vrot.slane %v1035, 5
      %v1119 = vrot.slane %v1036, 5
      %v1120 = vsel %vm1117, %v1118, %v1119
      %v1121 = vrot.slane %v1037, 5
      %v1122 = vsel %vm1117, %v1119, %v1121
      %v1123 = vrot.slane %v1038, 5
      %v1124 = vsel %vm1117, %v1121, %v1123
      %v1125 = vrot.slane %v1039, 5
      %v1126 = vsel %vm1117, %v1123, %v1125
      %v1127 = vrot.slane %v1040, 5
      %v1128 = vsel %vm1117, %v1125, %v1127
      %v1129 = vrot.slane %v1041, 5
      %v1130 = vsel %vm1117, %v1127, %v1129
      %v1131 = vrot.slane %v1042, 5
      %v1132 = vsel %vm1117, %v1129, %v1131
      %v1133 = vrot.slane %v1043, 5
      %v1134 = vsel %vm1117, %v1131, %v1133
      %v1135 = vrot.slane %v1044, 5
      %v1136 = vsel %vm1117, %v1133, %v1135
      %v1137 = vrot.slane %v1045, 5
      %v1138 = vsel %vm1117, %v1135, %v1137
      %v1139 = vrot.slane %v1046, 5
      %v1140 = vsel %vm1117, %v1137, %v1139
      %v1141 = vrot.slane %v1047, 5
      %v1142 = vsel %vm1117, %v1139, %v1141
      %v1143 = vrot.slane %v1048, 5
      %v1144 = vsel %vm1117, %v1141, %v1143
      %v1145 = vrot.slane %v1049, 5
      %v1146 = vsel %vm1117, %v1143, %v1145
      %v1147 = vrot.slane %v1050, 5
      %v1148 = vsel %vm1117, %v1145, %v1147
      %v1149 = vrot.slane %v1051, 5
      %v1150 = vsel %vm1117, %v1147, %v1149
      %v1151 = vrot.slane %v1052, 5
      %v1152 = vsel %vm1117, %v1149, %v1151
      %v1153 = vrot.slane %v1053, 5
      %v1154 = vsel %vm1117, %v1151, %v1153
      %v1155 = vrot.slane %v1054, 5
      %v1156 = vsel %vm1117, %v1153, %v1155
      %v1157 = vrot.slane %v1055, 5
      %v1158 = vsel %vm1117, %v1155, %v1157
      %v1159 = vrot.slane %v1056, 5
      %v1160 = vsel %vm1117, %v1157, %v1159
      %v1161 = vrot.slane %v1057, 5
      %v1162 = vsel %vm1117, %v1159, %v1161
      %v1163 = vrot.slane %v1058, 5
      %v1164 = vsel %vm1117, %v1161, %v1163
      %v1165 = vrot.slane %v1059, 5
      %v1166 = vsel %vm1117, %v1163, %v1165
      %v1167 = vrot.slane %v1060, 5
      %v1168 = vsel %vm1117, %v1165, %v1167
      %v1169 = vrot.slane %v1061, 5
      %v1170 = vsel %vm1117, %v1167, %v1169
      %v1171 = vrot.slane %v1062, 5
      %v1172 = vsel %vm1117, %v1169, %v1171
      %v1173 = vrot.slane %v1063, 5
      %v1174 = vsel %vm1117, %v1171, %v1173
      %v1175 = vrot.slane %v1064, 5
      %v1176 = vsel %vm1117, %v1173, %v1175
      %v1177 = vrot.slane %v1065, 5
      %v1178 = vsel %vm1117, %v1175, %v1177
      %v1179 = vrot.slane %v1066, 5
      %v1180 = vsel %vm1117, %v1177, %v1179
      %v1181 = vrot.slane %v1067, 5
      %v1182 = vsel %vm1117, %v1179, %v1181
      %v1183 = vrot.slane %v1068, 5
      %v1184 = vsel %vm1117, %v1181, %v1183
      %v1185 = vrot.slane %v1069, 5
      %v1186 = vsel %vm1117, %v1183, %v1185
      %v1187 = vrot.slane %v1070, 5
      %v1188 = vsel %vm1117, %v1185, %v1187
      %v1189 = vrot.slane %v1071, 5
      %v1190 = vsel %vm1117, %v1187, %v1189
      %v1191 = vrot.slane %v1072, 5
      %v1192 = vsel %vm1117, %v1189, %v1191
      %v1193 = vrot.slane %v1073, 5
      %v1194 = vsel %vm1117, %v1191, %v1193
      %v1195 = vrot.slane %v1074, 5
      %v1196 = vsel %vm1117, %v1193, %v1195
      %v1197 = vrot.slane %v1075, 5
      %v1198 = vsel %vm1117, %v1195, %v1197
      %v1239 = vsel %vm1117, 0.0, %v1118
      %v1240 = vsel %vm1117, %v1197, 0.0
      %vm1243 = vcmask 1046528
      %v1244 = vrot.slane 0.0, 1
      %v1245 = vsel %vm1243, %v1244, %v1244
      %v1246 = vrot.slane %v1239, 1
      %v1247 = vsel %vm1243, %v1244, %v1246
      %v1248 = vrot.slane %v1120, 1
      %v1249 = vsel %vm1243, %v1246, %v1248
      %v1250 = vrot.slane %v1122, 1
      %v1251 = vsel %vm1243, %v1248, %v1250
      %v1252 = vrot.slane %v1124, 1
      %v1253 = vsel %vm1243, %v1250, %v1252
      %v1254 = vrot.slane %v1126, 1
      %v1255 = vsel %vm1243, %v1252, %v1254
      %v1256 = vrot.slane %v1128, 1
      %v1257 = vsel %vm1243, %v1254, %v1256
      %v1258 = vrot.slane %v1130, 1
      %v1259 = vsel %vm1243, %v1256, %v1258
      %v1260 = vrot.slane %v1132, 1
      %v1261 = vsel %vm1243, %v1258, %v1260
      %v1262 = vrot.slane %v1134, 1
      %v1263 = vsel %vm1243, %v1260, %v1262
      %v1264 = vrot.slane %v1136, 1
      %v1265 = vsel %vm1243, %v1262, %v1264
      %v1266 = vrot.slane %v1138, 1
      %v1267 = vsel %vm1243, %v1264, %v1266
      %v1268 = vrot.slane %v1140, 1
      %v1269 = vsel %vm1243, %v1266, %v1268
      %v1270 = vrot.slane %v1142, 1
      %v1271 = vsel %vm1243, %v1268, %v1270
      %v1272 = vrot.slane %v1144, 1
      %v1273 = vsel %vm1243, %v1270, %v1272
      %v1274 = vrot.slane %v1146, 1
      %v1275 = vsel %vm1243, %v1272, %v1274
      %v1276 = vrot.slane %v1148, 1
      %v1277 = vsel %vm1243, %v1274, %v1276
      %v1278 = vrot.slane %v1150, 1
      %v1279 = vsel %vm1243, %v1276, %v1278
      %v1280 = vrot.slane %v1152, 1
      %v1281 = vsel %vm1243, %v1278, %v1280
      %v1282 = vrot.slane %v1154, 1
      %v1283 = vsel %vm1243, %v1280, %v1282
      %v1284 = vrot.slane %v1156, 1
      %v1285 = vsel %vm1243, %v1282, %v1284
      %v1286 = vrot.slane %v1158, 1
      %v1287 = vsel %vm1243, %v1284, %v1286
      %v1288 = vrot.slane %v1160, 1
      %v1289 = vsel %vm1243, %v1286, %v1288
      %v1290 = vrot.slane %v1162, 1
      %v1291 = vsel %vm1243, %v1288, %v1290
      %v1292 = vrot.slane %v1164, 1
      %v1293 = vsel %vm1243, %v1290, %v1292
      %v1294 = vrot.slane %v1166, 1
      %v1295 = vsel %vm1243, %v1292, %v1294
      %v1296 = vrot.slane %v1168, 1
      %v1297 = vsel %vm1243, %v1294, %v1296
      %v1298 = vrot.slane %v1170, 1
      %v1299 = vsel %vm1243, %v1296, %v1298
      %v1300 = vrot.slane %v1172, 1
      %v1301 = vsel %vm1243, %v1298, %v1300
      %v1302 = vrot.slane %v1174, 1
      %v1303 = vsel %vm1243, %v1300, %v1302
      %v1304 = vrot.slane %v1176, 1
      %v1305 = vsel %vm1243, %v1302, %v1304
      %v1306 = vrot.slane %v1178, 1
      %v1307 = vsel %vm1243, %v1304, %v1306
      %v1308 = vrot.slane %v1180, 1
      %v1309 = vsel %vm1243, %v1306, %v1308
      %v1310 = vrot.slane %v1182, 1
      %v1311 = vsel %vm1243, %v1308, %v1310
      %v1312 = vrot.slane %v1184, 1
      %v1313 = vsel %vm1243, %v1310, %v1312
      %v1314 = vrot.slane %v1186, 1
      %v1315 = vsel %vm1243, %v1312, %v1314
      %v1316 = vrot.slane %v1188, 1
      %v1317 = vsel %vm1243, %v1314, %v1316
      %v1318 = vrot.slane %v1190, 1
      %v1319 = vsel %vm1243, %v1316, %v1318
      %v1320 = vrot.slane %v1192, 1
      %v1321 = vsel %vm1243, %v1318, %v1320
      %v1322 = vrot.slane %v1194, 1
      %v1323 = vsel %vm1243, %v1320, %v1322
      %v1324 = vrot.slane %v1196, 1
      %v1325 = vsel %vm1243, %v1322, %v1324
      %vm1367 = vcmask 1045504
      %v1368 = vrot.slane 0.0, 2
      %v1369 = vsel %vm1367, %v1368, %v1368
      %v1370 = vrot.slane %v1239, 2
      %v1371 = vsel %vm1367, %v1368, %v1370
      %v1372 = vrot.slane %v1120, 2
      %v1373 = vsel %vm1367, %v1370, %v1372
      %v1374 = vrot.slane %v1122, 2
      %v1375 = vsel %vm1367, %v1372, %v1374
      %v1376 = vrot.slane %v1124, 2
      %v1377 = vsel %vm1367, %v1374, %v1376
      %v1378 = vrot.slane %v1126, 2
      %v1379 = vsel %vm1367, %v1376, %v1378
      %v1380 = vrot.slane %v1128, 2
      %v1381 = vsel %vm1367, %v1378, %v1380
      %v1382 = vrot.slane %v1130, 2
      %v1383 = vsel %vm1367, %v1380, %v1382
      %v1384 = vrot.slane %v1132, 2
      %v1385 = vsel %vm1367, %v1382, %v1384
      %v1386 = vrot.slane %v1134, 2
      %v1387 = vsel %vm1367, %v1384, %v1386
      %v1388 = vrot.slane %v1136, 2
      %v1389 = vsel %vm1367, %v1386, %v1388
      %v1390 = vrot.slane %v1138, 2
      %v1391 = vsel %vm1367, %v1388, %v1390
      %v1392 = vrot.slane %v1140, 2
      %v1393 = vsel %vm1367, %v1390, %v1392
      %v1394 = vrot.slane %v1142, 2
      %v1395 = vsel %vm1367, %v1392, %v1394
      %v1396 = vrot.slane %v1144, 2
      %v1397 = vsel %vm1367, %v1394, %v1396
      %v1398 = vrot.slane %v1146, 2
      %v1399 = vsel %vm1367, %v1396, %v1398
      %v1400 = vrot.slane %v1148, 2
      %v1401 = vsel %vm1367, %v1398, %v1400
      %v1402 = vrot.slane %v1150, 2
      %v1403 = vsel %vm1367, %v1400, %v1402
      %v1404 = vrot.slane %v1152, 2
      %v1405 = vsel %vm1367, %v1402, %v1404
      %v1406 = vrot.slane %v1154, 2
      %v1407 = vsel %vm1367, %v1404, %v1406
      %v1408 = vrot.slane %v1156, 2
      %v1409 = vsel %vm1367, %v1406, %v1408
      %v1410 = vrot.slane %v1158, 2
      %v1411 = vsel %vm1367, %v1408, %v1410
      %v1412 = vrot.slane %v1160, 2
      %v1413 = vsel %vm1367, %v1410, %v1412
      %v1414 = vrot.slane %v1162, 2
      %v1415 = vsel %vm1367, %v1412, %v1414
      %v1416 = vrot.slane %v1164, 2
      %v1417 = vsel %vm1367, %v1414, %v1416
      %v1418 = vrot.slane %v1166, 2
      %v1419 = vsel %vm1367, %v1416, %v1418
      %v1420 = vrot.slane %v1168, 2
      %v1421 = vsel %vm1367, %v1418, %v1420
      %v1422 = vrot.slane %v1170, 2
      %v1423 = vsel %vm1367, %v1420, %v1422
      %v1424 = vrot.slane %v1172, 2
      %v1425 = vsel %vm1367, %v1422, %v1424
      %v1426 = vrot.slane %v1174, 2
      %v1427 = vsel %vm1367, %v1424, %v1426
      %v1428 = vrot.slane %v1176, 2
      %v1429 = vsel %vm1367, %v1426, %v1428
      %v1430 = vrot.slane %v1178, 2
      %v1431 = vsel %vm1367, %v1428, %v1430
      %v1432 = vrot.slane %v1180, 2
      %v1433 = vsel %vm1367, %v1430, %v1432
      %v1434 = vrot.slane %v1182, 2
      %v1435 = vsel %vm1367, %v1432, %v1434
      %v1436 = vrot.slane %v1184, 2
      %v1437 = vsel %vm1367, %v1434, %v1436
      %v1438 = vrot.slane %v1186, 2
      %v1439 = vsel %vm1367, %v1436, %v1438
      %v1440 = vrot.slane %v1188, 2
      %v1441 = vsel %vm1367, %v1438, %v1440
      %v1442 = vrot.slane %v1190, 2
      %v1443 = vsel %vm1367, %v1440, %v1442
      %v1444 = vrot.slane %v1192, 2
      %v1445 = vsel %vm1367, %v1442, %v1444
      %v1446 = vrot.slane %v1194, 2
      %v1447 = vsel %vm1367, %v1444, %v1446
      %v1448 = vrot.slane %v1196, 2
      %v1449 = vsel %vm1367, %v1446, %v1448
      %v1492 = vrot.slane %v1198, 2
      %v1493 = vsel %vm1367, %v1448, %v1492
      %v1494 = vrot.slane %v1240, 2
      %v1495 = vsel %vm1367, %v1492, %v1494
      %vm1498 = vcmask 1044480
      %v1499 = vrot.slane %v1239, 3
      %v1500 = vrot.slane %v1120, 3
      %v1501 = vsel %vm1498, %v1499, %v1500
      %v1502 = vrot.slane %v1122, 3
      %v1503 = vsel %vm1498, %v1500, %v1502
      %v1504 = vrot.slane %v1124, 3
      %v1505 = vsel %vm1498, %v1502, %v1504
      %v1506 = vrot.slane %v1126, 3
      %v1507 = vsel %vm1498, %v1504, %v1506
      %v1508 = vrot.slane %v1128, 3
      %v1509 = vsel %vm1498, %v1506, %v1508
      %v1510 = vrot.slane %v1130, 3
      %v1511 = vsel %vm1498, %v1508, %v1510
      %v1512 = vrot.slane %v1132, 3
      %v1513 = vsel %vm1498, %v1510, %v1512
      %v1514 = vrot.slane %v1134, 3
      %v1515 = vsel %vm1498, %v1512, %v1514
      %v1516 = vrot.slane %v1136, 3
      %v1517 = vsel %vm1498, %v1514, %v1516
      %v1518 = vrot.slane %v1138, 3
      %v1519 = vsel %vm1498, %v1516, %v1518
      %v1520 = vrot.slane %v1140, 3
      %v1521 = vsel %vm1498, %v1518, %v1520
      %v1522 = vrot.slane %v1142, 3
      %v1523 = vsel %vm1498, %v1520, %v1522
      %v1524 = vrot.slane %v1144, 3
      %v1525 = vsel %vm1498, %v1522, %v1524
      %v1526 = vrot.slane %v1146, 3
      %v1527 = vsel %vm1498, %v1524, %v1526
      %v1528 = vrot.slane %v1148, 3
      %v1529 = vsel %vm1498, %v1526, %v1528
      %v1530 = vrot.slane %v1150, 3
      %v1531 = vsel %vm1498, %v1528, %v1530
      %v1532 = vrot.slane %v1152, 3
      %v1533 = vsel %vm1498, %v1530, %v1532
      %v1534 = vrot.slane %v1154, 3
      %v1535 = vsel %vm1498, %v1532, %v1534
      %v1536 = vrot.slane %v1156, 3
      %v1537 = vsel %vm1498, %v1534, %v1536
      %v1538 = vrot.slane %v1158, 3
      %v1539 = vsel %vm1498, %v1536, %v1538
      %v1540 = vrot.slane %v1160, 3
      %v1541 = vsel %vm1498, %v1538, %v1540
      %v1542 = vrot.slane %v1162, 3
      %v1543 = vsel %vm1498, %v1540, %v1542
      %v1544 = vrot.slane %v1164, 3
      %v1545 = vsel %vm1498, %v1542, %v1544
      %v1546 = vrot.slane %v1166, 3
      %v1547 = vsel %vm1498, %v1544, %v1546
      %v1548 = vrot.slane %v1168, 3
      %v1549 = vsel %vm1498, %v1546, %v1548
      %v1550 = vrot.slane %v1170, 3
      %v1551 = vsel %vm1498, %v1548, %v1550
      %v1552 = vrot.slane %v1172, 3
      %v1553 = vsel %vm1498, %v1550, %v1552
      %v1554 = vrot.slane %v1174, 3
      %v1555 = vsel %vm1498, %v1552, %v1554
      %v1556 = vrot.slane %v1176, 3
      %v1557 = vsel %vm1498, %v1554, %v1556
      %v1558 = vrot.slane %v1178, 3
      %v1559 = vsel %vm1498, %v1556, %v1558
      %v1560 = vrot.slane %v1180, 3
      %v1561 = vsel %vm1498, %v1558, %v1560
      %v1562 = vrot.slane %v1182, 3
      %v1563 = vsel %vm1498, %v1560, %v1562
      %v1564 = vrot.slane %v1184, 3
      %v1565 = vsel %vm1498, %v1562, %v1564
      %v1566 = vrot.slane %v1186, 3
      %v1567 = vsel %vm1498, %v1564, %v1566
      %v1568 = vrot.slane %v1188, 3
      %v1569 = vsel %vm1498, %v1566, %v1568
      %v1570 = vrot.slane %v1190, 3
      %v1571 = vsel %vm1498, %v1568, %v1570
      %v1572 = vrot.slane %v1192, 3
      %v1573 = vsel %vm1498, %v1570, %v1572
      %v1574 = vrot.slane %v1194, 3
      %v1575 = vsel %vm1498, %v1572, %v1574
      %v1576 = vrot.slane %v1196, 3
      %v1577 = vsel %vm1498, %v1574, %v1576
      %v1578 = vrot.slane %v1198, 3
      %v1579 = vsel %vm1498, %v1576, %v1578
      %v1580 = vrot.slane %v1240, 3
      %v1581 = vsel %vm1498, %v1578, %v1580
      %vm1623 = vcmask 1043456
      %v1624 = vrot.slane %v1239, 4
      %v1625 = vrot.slane %v1120, 4
      %v1626 = vsel %vm1623, %v1624, %v1625
      %v1627 = vrot.slane %v1122, 4
      %v1628 = vsel %vm1623, %v1625, %v1627
      %v1629 = vrot.slane %v1124, 4
      %v1630 = vsel %vm1623, %v1627, %v1629
      %v1631 = vrot.slane %v1126, 4
      %v1632 = vsel %vm1623, %v1629, %v1631
      %v1633 = vrot.slane %v1128, 4
      %v1634 = vsel %vm1623, %v1631, %v1633
      %v1635 = vrot.slane %v1130, 4
      %v1636 = vsel %vm1623, %v1633, %v1635
      %v1637 = vrot.slane %v1132, 4
      %v1638 = vsel %vm1623, %v1635, %v1637
      %v1639 = vrot.slane %v1134, 4
      %v1640 = vsel %vm1623, %v1637, %v1639
      %v1641 = vrot.slane %v1136, 4
      %v1642 = vsel %vm1623, %v1639, %v1641
      %v1643 = vrot.slane %v1138, 4
      %v1644 = vsel %vm1623, %v1641, %v1643
      %v1645 = vrot.slane %v1140, 4
      %v1646 = vsel %vm1623, %v1643, %v1645
      %v1647 = vrot.slane %v1142, 4
      %v1648 = vsel %vm1623, %v1645, %v1647
      %v1649 = vrot.slane %v1144, 4
      %v1650 = vsel %vm1623, %v1647, %v1649
      %v1651 = vrot.slane %v1146, 4
      %v1652 = vsel %vm1623, %v1649, %v1651
      %v1653 = vrot.slane %v1148, 4
      %v1654 = vsel %vm1623, %v1651, %v1653
      %v1655 = vrot.slane %v1150, 4
      %v1656 = vsel %vm1623, %v1653, %v1655
      %v1657 = vrot.slane %v1152, 4
      %v1658 = vsel %vm1623, %v1655, %v1657
      %v1659 = vrot.slane %v1154, 4
      %v1660 = vsel %vm1623, %v1657, %v1659
      %v1661 = vrot.slane %v1156, 4
      %v1662 = vsel %vm1623, %v1659, %v1661
      %v1663 = vrot.slane %v1158, 4
      %v1664 = vsel %vm1623, %v1661, %v1663
      %v1665 = vrot.slane %v1160, 4
      %v1666 = vsel %vm1623, %v1663, %v1665
      %v1667 = vrot.slane %v1162, 4
      %v1668 = vsel %vm1623, %v1665, %v1667
      %v1669 = vrot.slane %v1164, 4
      %v1670 = vsel %vm1623, %v1667, %v1669
      %v1671 = vrot.slane %v1166, 4
      %v1672 = vsel %vm1623, %v1669, %v1671
      %v1673 = vrot.slane %v1168, 4
      %v1674 = vsel %vm1623, %v1671, %v1673
      %v1675 = vrot.slane %v1170, 4
      %v1676 = vsel %vm1623, %v1673, %v1675
      %v1677 = vrot.slane %v1172, 4
      %v1678 = vsel %vm1623, %v1675, %v1677
      %v1679 = vrot.slane %v1174, 4
      %v1680 = vsel %vm1623, %v1677, %v1679
      %v1681 = vrot.slane %v1176, 4
      %v1682 = vsel %vm1623, %v1679, %v1681
      %v1683 = vrot.slane %v1178, 4
      %v1684 = vsel %vm1623, %v1681, %v1683
      %v1685 = vrot.slane %v1180, 4
      %v1686 = vsel %vm1623, %v1683, %v1685
      %v1687 = vrot.slane %v1182, 4
      %v1688 = vsel %vm1623, %v1685, %v1687
      %v1689 = vrot.slane %v1184, 4
      %v1690 = vsel %vm1623, %v1687, %v1689
      %v1691 = vrot.slane %v1186, 4
      %v1692 = vsel %vm1623, %v1689, %v1691
      %v1693 = vrot.slane %v1188, 4
      %v1694 = vsel %vm1623, %v1691, %v1693
      %v1695 = vrot.slane %v1190, 4
      %v1696 = vsel %vm1623, %v1693, %v1695
      %v1697 = vrot.slane %v1192, 4
      %v1698 = vsel %vm1623, %v1695, %v1697
      %v1699 = vrot.slane %v1194, 4
      %v1700 = vsel %vm1623, %v1697, %v1699
      %v1701 = vrot.slane %v1196, 4
      %v1702 = vsel %vm1623, %v1699, %v1701
      %v1703 = vrot.slane %v1198, 4
      %v1704 = vsel %vm1623, %v1701, %v1703
      %v1705 = vrot.slane %v1240, 4
      %v1706 = vsel %vm1623, %v1703, %v1705
      %v1748 = vrot.slane 0.0, 4
      %v1749 = vsel %vm1623, %v1705, %v1748
      %v1750 = vsel %vm1623, %v1748, %v1748
      %v1753 = vrot.slane %v1122, 5
      %v1754 = vrot.slane %v1124, 5
      %v1755 = vsel %vm1117, %v1753, %v1754
      %v1756 = vrot.slane %v1126, 5
      %v1757 = vsel %vm1117, %v1754, %v1756
      %v1758 = vrot.slane %v1128, 5
      %v1759 = vsel %vm1117, %v1756, %v1758
      %v1760 = vrot.slane %v1130, 5
      %v1761 = vsel %vm1117, %v1758, %v1760
      %v1762 = vrot.slane %v1132, 5
      %v1763 = vsel %vm1117, %v1760, %v1762
      %v1764 = vrot.slane %v1134, 5
      %v1765 = vsel %vm1117, %v1762, %v1764
      %v1766 = vrot.slane %v1136, 5
      %v1767 = vsel %vm1117, %v1764, %v1766
      %v1768 = vrot.slane %v1138, 5
      %v1769 = vsel %vm1117, %v1766, %v1768
      %v1770 = vrot.slane %v1140, 5
      %v1771 = vsel %vm1117, %v1768, %v1770
      %v1772 = vrot.slane %v1142, 5
      %v1773 = vsel %vm1117, %v1770, %v1772
      %v1774 = vrot.slane %v1144, 5
      %v1775 = vsel %vm1117, %v1772, %v1774
      %v1776 = vrot.slane %v1146, 5
      %v1777 = vsel %vm1117, %v1774, %v1776
      %v1778 = vrot.slane %v1148, 5
      %v1779 = vsel %vm1117, %v1776, %v1778
      %v1780 = vrot.slane %v1150, 5
      %v1781 = vsel %vm1117, %v1778, %v1780
      %v1782 = vrot.slane %v1152, 5
      %v1783 = vsel %vm1117, %v1780, %v1782
      %v1784 = vrot.slane %v1154, 5
      %v1785 = vsel %vm1117, %v1782, %v1784
      %v1786 = vrot.slane %v1156, 5
      %v1787 = vsel %vm1117, %v1784, %v1786
      %v1788 = vrot.slane %v1158, 5
      %v1789 = vsel %vm1117, %v1786, %v1788
      %v1790 = vrot.slane %v1160, 5
      %v1791 = vsel %vm1117, %v1788, %v1790
      %v1792 = vrot.slane %v1162, 5
      %v1793 = vsel %vm1117, %v1790, %v1792
      %v1794 = vrot.slane %v1164, 5
      %v1795 = vsel %vm1117, %v1792, %v1794
      %v1796 = vrot.slane %v1166, 5
      %v1797 = vsel %vm1117, %v1794, %v1796
      %v1798 = vrot.slane %v1168, 5
      %v1799 = vsel %vm1117, %v1796, %v1798
      %v1800 = vrot.slane %v1170, 5
      %v1801 = vsel %vm1117, %v1798, %v1800
      %v1802 = vrot.slane %v1172, 5
      %v1803 = vsel %vm1117, %v1800, %v1802
      %v1804 = vrot.slane %v1174, 5
      %v1805 = vsel %vm1117, %v1802, %v1804
      %v1806 = vrot.slane %v1176, 5
      %v1807 = vsel %vm1117, %v1804, %v1806
      %v1808 = vrot.slane %v1178, 5
      %v1809 = vsel %vm1117, %v1806, %v1808
      %v1810 = vrot.slane %v1180, 5
      %v1811 = vsel %vm1117, %v1808, %v1810
      %v1812 = vrot.slane %v1182, 5
      %v1813 = vsel %vm1117, %v1810, %v1812
      %v1814 = vrot.slane %v1184, 5
      %v1815 = vsel %vm1117, %v1812, %v1814
      %v1816 = vrot.slane %v1186, 5
      %v1817 = vsel %vm1117, %v1814, %v1816
      %v1818 = vrot.slane %v1188, 5
      %v1819 = vsel %vm1117, %v1816, %v1818
      %v1820 = vrot.slane %v1190, 5
      %v1821 = vsel %vm1117, %v1818, %v1820
      %v1822 = vrot.slane %v1192, 5
      %v1823 = vsel %vm1117, %v1820, %v1822
      %v1824 = vrot.slane %v1194, 5
      %v1825 = vsel %vm1117, %v1822, %v1824
      %v1826 = vrot.slane %v1196, 5
      %v1827 = vsel %vm1117, %v1824, %v1826
      %v1828 = vrot.slane %v1198, 5
      %v1829 = vsel %vm1117, %v1826, %v1828
      %v1830 = vrot.slane %v1240, 5
      %v1831 = vsel %vm1117, %v1828, %v1830
      %v1832 = vrot.slane 0.0, 5
      %v1833 = vsel %vm1117, %v1830, %v1832
      %v1834 = vsel %vm1117, %v1832, %v1832
      %vm1876 = vcmask 1041408
      %v1877 = vrot.slane %v1122, 6
      %v1878 = vrot.slane %v1124, 6
      %v1879 = vsel %vm1876, %v1877, %v1878
      %v1880 = vrot.slane %v1126, 6
      %v1881 = vsel %vm1876, %v1878, %v1880
      %v1882 = vrot.slane %v1128, 6
      %v1883 = vsel %vm1876, %v1880, %v1882
      %v1884 = vrot.slane %v1130, 6
      %v1885 = vsel %vm1876, %v1882, %v1884
      %v1886 = vrot.slane %v1132, 6
      %v1887 = vsel %vm1876, %v1884, %v1886
      %v1888 = vrot.slane %v1134, 6
      %v1889 = vsel %vm1876, %v1886, %v1888
      %v1890 = vrot.slane %v1136, 6
      %v1891 = vsel %vm1876, %v1888, %v1890
      %v1892 = vrot.slane %v1138, 6
      %v1893 = vsel %vm1876, %v1890, %v1892
      %v1894 = vrot.slane %v1140, 6
      %v1895 = vsel %vm1876, %v1892, %v1894
      %v1896 = vrot.slane %v1142, 6
      %v1897 = vsel %vm1876, %v1894, %v1896
      %v1898 = vrot.slane %v1144, 6
      %v1899 = vsel %vm1876, %v1896, %v1898
      %v1900 = vrot.slane %v1146, 6
      %v1901 = vsel %vm1876, %v1898, %v1900
      %v1902 = vrot.slane %v1148, 6
      %v1903 = vsel %vm1876, %v1900, %v1902
      %v1904 = vrot.slane %v1150, 6
      %v1905 = vsel %vm1876, %v1902, %v1904
      %v1906 = vrot.slane %v1152, 6
      %v1907 = vsel %vm1876, %v1904, %v1906
      %v1908 = vrot.slane %v1154, 6
      %v1909 = vsel %vm1876, %v1906, %v1908
      %v1910 = vrot.slane %v1156, 6
      %v1911 = vsel %vm1876, %v1908, %v1910
      %v1912 = vrot.slane %v1158, 6
      %v1913 = vsel %vm1876, %v1910, %v1912
      %v1914 = vrot.slane %v1160, 6
      %v1915 = vsel %vm1876, %v1912, %v1914
      %v1916 = vrot.slane %v1162, 6
      %v1917 = vsel %vm1876, %v1914, %v1916
      %v1918 = vrot.slane %v1164, 6
      %v1919 = vsel %vm1876, %v1916, %v1918
      %v1920 = vrot.slane %v1166, 6
      %v1921 = vsel %vm1876, %v1918, %v1920
      %v1922 = vrot.slane %v1168, 6
      %v1923 = vsel %vm1876, %v1920, %v1922
      %v1924 = vrot.slane %v1170, 6
      %v1925 = vsel %vm1876, %v1922, %v1924
      %v1926 = vrot.slane %v1172, 6
      %v1927 = vsel %vm1876, %v1924, %v1926
      %v1928 = vrot.slane %v1174, 6
      %v1929 = vsel %vm1876, %v1926, %v1928
      %v1930 = vrot.slane %v1176, 6
      %v1931 = vsel %vm1876, %v1928, %v1930
      %v1932 = vrot.slane %v1178, 6
      %v1933 = vsel %vm1876, %v1930, %v1932
      %v1934 = vrot.slane %v1180, 6
      %v1935 = vsel %vm1876, %v1932, %v1934
      %v1936 = vrot.slane %v1182, 6
      %v1937 = vsel %vm1876, %v1934, %v1936
      %v1938 = vrot.slane %v1184, 6
      %v1939 = vsel %vm1876, %v1936, %v1938
      %v1940 = vrot.slane %v1186, 6
      %v1941 = vsel %vm1876, %v1938, %v1940
      %v1942 = vrot.slane %v1188, 6
      %v1943 = vsel %vm1876, %v1940, %v1942
      %v1944 = vrot.slane %v1190, 6
      %v1945 = vsel %vm1876, %v1942, %v1944
      %v1946 = vrot.slane %v1192, 6
      %v1947 = vsel %vm1876, %v1944, %v1946
      %v1948 = vrot.slane %v1194, 6
      %v1949 = vsel %vm1876, %v1946, %v1948
      %v1950 = vrot.slane %v1196, 6
      %v1951 = vsel %vm1876, %v1948, %v1950
      %v1952 = vrot.slane %v1198, 6
      %v1953 = vsel %vm1876, %v1950, %v1952
      %v1954 = vrot.slane %v1240, 6
      %v1955 = vsel %vm1876, %v1952, %v1954
      %v1956 = vrot.slane 0.0, 6
      %v1957 = vsel %vm1876, %v1954, %v1956
      %v1958 = vsel %vm1876, %v1956, %v1956
      %v2000 = vld [vmem:[%s4] sm:$0xff]
      %v2001 = vld [vmem:[%s4 + $0x8] sm:$0xff]
      %v2002 = vld [vmem:[%s4 + $0x10] sm:$0xff]
      %v2003 = vld [vmem:[%s4 + $0x18] sm:$0xff]
      %v2004 = vld [vmem:[%s4 + $0x20] sm:$0xff]
      %v2005 = vld [vmem:[%s4 + $0x28] sm:$0xff]
      %v2006 = vld [vmem:[%s4 + $0x30] sm:$0xff]
      %v2007 = vld [vmem:[%s4 + $0x38] sm:$0xff]
      %v2008 = vld [vmem:[%s4 + $0x40] sm:$0xff]
      %v2009 = vld [vmem:[%s4 + $0x48] sm:$0xff]
      %v2010 = vld [vmem:[%s4 + $0x50] sm:$0xff]
      %v2011 = vld [vmem:[%s4 + $0x58] sm:$0xff]
      %v2012 = vld [vmem:[%s4 + $0x60] sm:$0xff]
      %v2013 = vld [vmem:[%s4 + $0x68] sm:$0xff]
      %v2014 = vld [vmem:[%s4 + $0x70] sm:$0xff]
      %v2015 = vld [vmem:[%s4 + $0x78] sm:$0xff]
      %v2016 = vld [vmem:[%s4 + $0x80] sm:$0xff]
      %v2017 = vld [vmem:[%s4 + $0x88] sm:$0xff]
      %v2018 = vld [vmem:[%s4 + $0x90] sm:$0xff]
      %v2019 = vld [vmem:[%s4 + $0x98] sm:$0xff]
      %v2020 = vld [vmem:[%s4 + $0xa0] sm:$0xff]
      %v2021 = vld [vmem:[%s4 + $0xa8] sm:$0xff]
      %v2022 = vld [vmem:[%s4 + $0xb0] sm:$0xff]
      %v2023 = vld [vmem:[%s4 + $0xb8] sm:$0xff]
      %v2024 = vld [vmem:[%s4 + $0xc0] sm:$0xff]
      %v2025 = vld [vmem:[%s4 + $0xc8] sm:$0xff]
      %v2026 = vld [vmem:[%s4 + $0xd0] sm:$0xff]
      %v2027 = vld [vmem:[%s4 + $0xd8] sm:$0xff]
      %v2028 = vld [vmem:[%s4 + $0xe0] sm:$0xff]
      %v2029 = vld [vmem:[%s4 + $0xe8] sm:$0xff]
      %v2030 = vld [vmem:[%s4 + $0xf0] sm:$0xff]
      %v2031 = vld [vmem:[%s4 + $0xf8] sm:$0xff]
      %v2032 = vld [vmem:[%s4 + $0x100] sm:$0xff]
      %v2033 = vld [vmem:[%s4 + $0x108] sm:$0xff]
      %v2034 = vld [vmem:[%s4 + $0x110] sm:$0xff]
      %v2035 = vld [vmem:[%s4 + $0x118] sm:$0xff]
      %v2036 = vld [vmem:[%s4 + $0x120] sm:$0xff]
      %v2037 = vld [vmem:[%s4 + $0x128] sm:$0xff]
      %v2038 = vld [vmem:[%s4 + $0x130] sm:$0xff]
      %v2039 = vld [vmem:[%s4 + $0x138] sm:$0xff]
      %v2040 = vld [vmem:[%s4 + $0x140] sm:$0xff]
      %v2041 = vld [vmem:[%s4 + $0x148] sm:$0xff]
      %v2042 = vld [vmem:[%s4 + $0x150] sm:$0xff]
      %v2043 = vld [vmem:[%s4 + $0x158] sm:$0xff]
      %v2044 = vld [vmem:[%s4 + $0x160] sm:$0xff]
      %v2045 = vld [vmem:[%s4 + $0x168] sm:$0xff]
      %v2046 = vld [vmem:[%s4 + $0x170] sm:$0xff]
      %v2047 = vld [vmem:[%s4 + $0x178] sm:$0xff]
      %v2048 = vld [vmem:[%s4 + $0x180] sm:$0xff]
      %v2049 = vld [vmem:[%s4 + $0x188] sm:$0xff]
      %v2050 = vld [vmem:[%s4 + $0x190] sm:$0xff]
      %v2051 = vld [vmem:[%s4 + $0x198] sm:$0xff]
      %v2052 = vld [vmem:[%s4 + $0x1a0] sm:$0xff]
      %v2053 = vld [vmem:[%s4 + $0x1a8] sm:$0xff]
      %v2054 = vld [vmem:[%s4 + $0x1b0] sm:$0xff]
      %v2055 = vld [vmem:[%s4 + $0x1b8] sm:$0xff]
      %v2056 = vld [vmem:[%s4 + $0x1c0] sm:$0xff]
      %v2057 = vld [vmem:[%s4 + $0x1c8] sm:$0xff]
      %v2058 = vld [vmem:[%s4 + $0x1d0] sm:$0xff]
      %v2059 = vld [vmem:[%s4 + $0x1d8] sm:$0xff]
      %v2060 = vld [vmem:[%s4 + $0x1e0] sm:$0xff]
      %v2061 = vld [vmem:[%s4 + $0x1e8] sm:$0xff]
      %v2062 = vld [vmem:[%s4 + $0x1f0] sm:$0xff]
      %v2063 = vld [vmem:[%s4 + $0x1f8] sm:$0xff]
      %v2064 = vld [vmem:[%s4 + $0x200] sm:$0xff]
      %v2065 = vld [vmem:[%s4 + $0x208] sm:$0xff]
      %v2066 = vld [vmem:[%s4 + $0x210] sm:$0xff]
      %v2067 = vld [vmem:[%s4 + $0x218] sm:$0xff]
      %v2068 = vld [vmem:[%s4 + $0x220] sm:$0xff]
      %v2069 = vld [vmem:[%s4 + $0x228] sm:$0xff]
      %v2070 = vld [vmem:[%s4 + $0x230] sm:$0xff]
      %v2071 = vld [vmem:[%s4 + $0x238] sm:$0xff]
      %v2072 = vld [vmem:[%s4 + $0x240] sm:$0xff]
      %v2073 = vld [vmem:[%s4 + $0x248] sm:$0xff]
      %v2074 = vld [vmem:[%s4 + $0x250] sm:$0xff]
      %v2075 = vld [vmem:[%s4 + $0x258] sm:$0xff]
      %v2076 = vld [vmem:[%s4 + $0x260] sm:$0xff]
      %v2077 = vld [vmem:[%s4 + $0x268] sm:$0xff]
      %v2078 = vld [vmem:[%s4 + $0x270] sm:$0xff]
      %v2079 = vld [vmem:[%s4 + $0x278] sm:$0xff]
      %v2080 = vld [vmem:[%s4 + $0x280] sm:$0xff]
      %v2081 = vld [vmem:[%s4 + $0x288] sm:$0xff]
      %v2082 = vld [vmem:[%s4 + $0x290] sm:$0xff]
      %v2083 = vld [vmem:[%s4 + $0x298] sm:$0xff]
      %v2084 = vld [vmem:[%s4 + $0x2a0] sm:$0xff]
      %v2085 = vld [vmem:[%s4 + $0x2a8] sm:$0xff]
      %v2086 = vld [vmem:[%s4 + $0x2b0] sm:$0xff]
      %v2087 = vld [vmem:[%s4 + $0x2b8] sm:$0xff]
      %v2088 = vld [vmem:[%s4 + $0x2c0] sm:$0xff]
      %v2089 = vld [vmem:[%s4 + $0x2c8] sm:$0xff]
      %v2090 = vld [vmem:[%s4 + $0x2d0] sm:$0xff]
      %v2091 = vld [vmem:[%s4 + $0x2d8] sm:$0xff]
      %v2092 = vld [vmem:[%s4 + $0x2e0] sm:$0xff]
      %v2093 = vld [vmem:[%s4 + $0x2e8] sm:$0xff]
      %v2094 = vld [vmem:[%s4 + $0x2f0] sm:$0xff]
      %v2095 = vld [vmem:[%s4 + $0x2f8] sm:$0xff]
      %v2096 = vld [vmem:[%s4 + $0x300] sm:$0xff]
      %v2097 = vld [vmem:[%s4 + $0x308] sm:$0xff]
      %v2098 = vld [vmem:[%s4 + $0x310] sm:$0xff]
      %v2099 = vld [vmem:[%s4 + $0x318] sm:$0xff]
      %v2100 = vld [vmem:[%s4 + $0x320] sm:$0xff]
      %v2101 = vld [vmem:[%s4 + $0x328] sm:$0xff]
      %v2102 = vld [vmem:[%s4 + $0x330] sm:$0xff]
      %v2103 = vld [vmem:[%s4 + $0x338] sm:$0xff]
      %v2104 = vld [vmem:[%s4 + $0x340] sm:$0xff]
      %v2105 = vld [vmem:[%s4 + $0x348] sm:$0xff]
      %v2106 = vld [vmem:[%s4 + $0x350] sm:$0xff]
      %v2107 = vld [vmem:[%s4 + $0x358] sm:$0xff]
      %v2108 = vld [vmem:[%s4 + $0x360] sm:$0xff]
      %v2109 = vld [vmem:[%s4 + $0x368] sm:$0xff]
      %v2110 = vld [vmem:[%s4 + $0x370] sm:$0xff]
      %v2111 = vld [vmem:[%s4 + $0x378] sm:$0xff]
      %v2112 = vld [vmem:[%s4 + $0x380] sm:$0xff]
      %v2113 = vld [vmem:[%s4 + $0x388] sm:$0xff]
      %v2114 = vld [vmem:[%s4 + $0x390] sm:$0xff]
      %v2115 = vld [vmem:[%s4 + $0x398] sm:$0xff]
      %v2116 = vld [vmem:[%s4 + $0x3a0] sm:$0xff]
      %v2117 = vld [vmem:[%s4 + $0x3a8] sm:$0xff]
      %v2118 = vld [vmem:[%s4 + $0x3b0] sm:$0xff]
      %v2119 = vld [vmem:[%s4 + $0x3b8] sm:$0xff]
      %v2120 = vld [vmem:[%s4 + $0x3c0] sm:$0xff]
      %v2121 = vld [vmem:[%s4 + $0x3c8] sm:$0xff]
      %v2122 = vld [vmem:[%s4 + $0x3d0] sm:$0xff]
      %v2123 = vld [vmem:[%s4 + $0x3d8] sm:$0xff]
      %v2124 = vld [vmem:[%s4 + $0x3e0] sm:$0xff]
      %v2125 = vld [vmem:[%s4 + $0x3e8] sm:$0xff]
      %v2126 = vld [vmem:[%s4 + $0x3f0] sm:$0xff]
      %v2127 = vld [vmem:[%s4 + $0x3f8] sm:$0xff]
      %v2128 = vld [vmem:[%s4 + $0x400] sm:$0xff]
      %v2129 = vld [vmem:[%s4 + $0x408] sm:$0xff]
      %v2130 = vld [vmem:[%s4 + $0x410] sm:$0xff]
      %v2131 = vld [vmem:[%s4 + $0x418] sm:$0xff]
      %v2132 = vld [vmem:[%s4 + $0x420] sm:$0xff]
      %v2133 = vld [vmem:[%s4 + $0x428] sm:$0xff]
      %v2134 = vld [vmem:[%s4 + $0x430] sm:$0xff]
      %v2135 = vld [vmem:[%s4 + $0x438] sm:$0xff]
      %v2136 = vld [vmem:[%s4 + $0x440] sm:$0xff]
      %v2137 = vld [vmem:[%s4 + $0x448] sm:$0xff]
      %v2138 = vld [vmem:[%s4 + $0x450] sm:$0xff]
      %v2139 = vld [vmem:[%s4 + $0x458] sm:$0xff]
      %v2140 = vld [vmem:[%s4 + $0x460] sm:$0xff]
      %v2141 = vld [vmem:[%s4 + $0x468] sm:$0xff]
      %v2142 = vld [vmem:[%s4 + $0x470] sm:$0xff]
      %v2143 = vld [vmem:[%s4 + $0x478] sm:$0xff]
      %v2144 = vld [vmem:[%s5] sm:$0x1]
      %v2146 = vlaneseq
      %v2147 = vshrl.u32 %v2146, 7
      %v2148 = vsub.s32 0, %v2147
      %v2149 = vrot.slane %v2144, %v2148
      %2151 = vmatprep.subr.mxu0 0.0
      %2152 = vmatpush1.msra.mxu0 %v2000
      %2153 = vmatprep.subr.mxu0 0.0
      %2154 = vmatpush1.msra.mxu0 %v2001
      %2155 = vmatprep.subr.mxu0 0.0
      %2156 = vmatpush1.msra.mxu0 %v2002
      %2157 = vmatprep.subr.mxu0 0.0
      %2158 = vmatpush1.msra.mxu0 %v2003
      %2159 = vmatprep.subr.mxu0 0.0
      %2160 = vmatpush1.msra.mxu0 %v2004
      %2161 = vmatprep.subr.mxu0 0.0
      %2162 = vmatpush1.msra.mxu0 %v2005
      %2163 = vmatprep.subr.mxu0 0.0
      %2164 = vmatpush1.msra.mxu0 %v2006
      %2165 = vmatprep.subr.mxu0 0.0
      %2166 = vmatpush1.msra.mxu0 %v2007
      %2167 = vmatprep.subr.mxu0 0.0
      %2168 = vmatpush1.msra.mxu0 %v2008
      %2169 = vmatprep.subr.mxu0 0.0
      %2170 = vmatpush1.msra.mxu0 %v2009
      %2171 = vmatprep.subr.mxu0 0.0
      %2172 = vmatpush1.msra.mxu0 %v2010
      %2173 = vmatprep.subr.mxu0 0.0
      %2174 = vmatpush1.msra.mxu0 %v2011
      %2175 = vmatprep.subr.mxu0 0.0
      %2176 = vmatpush1.msra.mxu0 %v2012
      %2177 = vmatprep.subr.mxu0 0.0
      %2178 = vmatpush1.msra.mxu0 %v2013
      %2179 = vmatprep.subr.mxu0 0.0
      %2180 = vmatpush1.msra.mxu0 %v2014
      %2181 = vmatprep.subr.mxu0 0.0
      %2182 = vmatpush1.msra.mxu0 %v2015
      %2183 = vmatprep.subr.mxu0 0.0
      %2184 = vmatpush1.msra.mxu0 %v2016
      %2185 = vmatprep.subr.mxu0 0.0
      %2186 = vmatpush1.msra.mxu0 %v2017
      %2187 = vmatprep.subr.mxu0 0.0
      %2188 = vmatpush1.msra.mxu0 %v2018
      %2189 = vmatprep.subr.mxu0 0.0
      %2190 = vmatpush1.msra.mxu0 %v2019
      %2191 = vmatprep.subr.mxu0 0.0
      %2192 = vmatpush1.msra.mxu0 %v2020
      %2193 = vmatprep.subr.mxu0 0.0
      %2194 = vmatpush1.msra.mxu0 %v2021
      %2195 = vmatprep.subr.mxu0 0.0
      %2196 = vmatpush1.msra.mxu0 %v2022
      %2197 = vmatprep.subr.mxu0 0.0
      %2198 = vmatpush1.msra.mxu0 %v2023
      %2199 = vmatprep.subr.mxu0 0.0
      %2200 = vmatpush1.msra.mxu0 %v2024
      %2201 = vmatprep.subr.mxu0 0.0
      %2202 = vmatpush1.msra.mxu0 %v2025
      %2203 = vmatprep.subr.mxu0 0.0
      %2204 = vmatpush1.msra.mxu0 %v2026
      %2205 = vmatprep.subr.mxu0 0.0
      %2206 = vmatpush1.msra.mxu0 %v2027
      %2207 = vmatprep.subr.mxu0 0.0
      %2208 = vmatpush1.msra.mxu0 %v2028
      %2209 = vmatprep.subr.mxu0 0.0
      %2210 = vmatpush1.msra.mxu0 %v2029
      %2211 = vmatprep.subr.mxu0 0.0
      %2212 = vmatpush1.msra.mxu0 %v2030
      %2213 = vmatprep.subr.mxu0 0.0
      %2214 = vmatpush1.msra.mxu0 %v2031
      %2215 = vmatprep.mubr.f32.mxu0 %v1245
      %2216 = vmatmul.mubr.f32.gmra.mrb[0].mxu0 0.0
      %v2217 = vpop.f32.mrb[0].mxu0
      %v2218 = vadd.f32 %v2149, %v2217
      %v2219 = vpop.f32.mrb[0].mxu0
      %2220 = vmatprep.mubr.f32.mxu0 %v1247
      %2221 = vmatmul.mubr.f32.gmra.mrb[0].mxu0 0.0
      %v2222 = vpop.f32.mrb[0].mxu0
      %v2223 = vadd.f32 %v2149, %v2222
      %v2224 = vpop.f32.mrb[0].mxu0
      %2225 = vmatprep.mubr.f32.mxu0 %v1249
      %2226 = vmatmul.mubr.f32.gmra.mrb[0].mxu0 %v1239
      %v2227 = vpop.f32.mrb[0].mxu0
      %v2228 = vadd.f32 %v2149, %v2227
      %v2229 = vpop.f32.mrb[0].mxu0
      %2230 = vmatprep.mubr.f32.mxu0 %v1251
      %2231 = vmatmul.mubr.f32.gmra.mrb[0].mxu0 %v1120
      %v2232 = vpop.f32.mrb[0].mxu0
      %v2233 = vadd.f32 %v2149, %v2232
      %v2234 = vpop.f32.mrb[0].mxu0
      %2235 = vmatprep.mubr.f32.mxu0 %v1253
      %2236 = vmatmul.mubr.f32.gmra.mrb[0].mxu0 %v1122
      %v2237 = vpop.f32.mrb[0].mxu0
      %v2238 = vadd.f32 %v2149, %v2237
      %v2239 = vpop.f32.mrb[0].mxu0
      %2240 = vmatprep.mubr.f32.mxu0 %v1255
      %2241 = vmatmul.mubr.f32.gmra.mrb[0].mxu0 %v1124
      %v2242 = vpop.f32.mrb[0].mxu0
      %v2243 = vadd.f32 %v2149, %v2242
      %v2244 = vpop.f32.mrb[0].mxu0
      %2245 = vmatprep.mubr.f32.mxu0 %v1257
      %2246 = vmatmul.mubr.f32.gmra.mrb[0].mxu0 %v1126
      %v2247 = vpop.f32.mrb[0].mxu0
      %v2248 = vadd.f32 %v2149, %v2247
      %v2249 = vpop.f32.mrb[0].mxu0
      %2250 = vmatprep.mubr.f32.mxu0 %v1259
      %2251 = vmatmul.mubr.f32.gmra.mrb[0].mxu0 %v1128
      %v2252 = vpop.f32.mrb[0].mxu0
      %v2253 = vadd.f32 %v2149, %v2252
      %v2254 = vpop.f32.mrb[0].mxu0
      %2255 = vmatprep.mubr.f32.mxu0 %v1261
      %2256 = vmatmul.mubr.f32.gmra.mrb[0].mxu0 %v1130
      %v2257 = vpop.f32.mrb[0].mxu0
      %v2258 = vadd.f32 %v2149, %v2257
      %v2259 = vpop.f32.mrb[0].mxu0
      %2260 = vmatprep.mubr.f32.mxu0 %v1263
      %2261 = vmatmul.mubr.f32.gmra.mrb[0].mxu0 %v1132
      %v2262 = vpop.f32.mrb[0].mxu0
      %v2263 = vadd.f32 %v2149, %v2262
      %v2264 = vpop.f32.mrb[0].mxu0
      %2265 = vmatprep.mubr.f32.mxu0 %v1265
      %2266 = vmatmul.mubr.f32.gmra.mrb[0].mxu0 %v1134
      %v2267 = vpop.f32.mrb[0].mxu0
      %v2268 = vadd.f32 %v2149, %v2267
      %v2269 = vpop.f32.mrb[0].mxu0
      %2270 = vmatprep.mubr.f32.mxu0 %v1267
      %2271 = vmatmul.mubr.f32.gmra.mrb[0].mxu0 %v1136
      %v2272 = vpop.f32.mrb[0].mxu0
      %v2273 = vadd.f32 %v2149, %v2272
      %v2274 = vpop.f32.mrb[0].mxu0
      %2275 = vmatprep.mubr.f32.mxu0 %v1269
      %2276 = vmatmul.mubr.f32.gmra.mrb[0].mxu0 %v1138
      %v2277 = vpop.f32.mrb[0].mxu0
      %v2278 = vadd.f32 %v2149, %v2277
      %v2279 = vpop.f32.mrb[0].mxu0
      %2280 = vmatprep.mubr.f32.mxu0 %v1271
      %2281 = vmatmul.mubr.f32.gmra.mrb[0].mxu0 %v1140
      %v2282 = vpop.f32.mrb[0].mxu0
      %v2283 = vadd.f32 %v2149, %v2282
      %v2284 = vpop.f32.mrb[0].mxu0
      %2285 = vmatprep.mubr.f32.mxu0 %v1273
      %2286 = vmatmul.mubr.f32.gmra.mrb[0].mxu0 %v1142
      %v2287 = vpop.f32.mrb[0].mxu0
      %v2288 = vadd.f32 %v2149, %v2287
      %v2289 = vpop.f32.mrb[0].mxu0
      %2290 = vmatprep.mubr.f32.mxu0 %v1275
      %2291 = vmatmul.mubr.f32.gmra.mrb[0].mxu0 %v1144
      %v2292 = vpop.f32.mrb[0].mxu0
      %v2293 = vadd.f32 %v2149, %v2292
      %v2294 = vpop.f32.mrb[0].mxu0
      %2295 = vmatprep.mubr.f32.mxu0 %v1277
      %2296 = vmatmul.mubr.f32.gmra.mrb[0].mxu0 %v1146
      %v2297 = vpop.f32.mrb[0].mxu0
      %v2298 = vadd.f32 %v2149, %v2297
      %v2299 = vpop.f32.mrb[0].mxu0
      %2300 = vmatprep.mubr.f32.mxu0 %v1279
      %2301 = vmatmul.mubr.f32.gmra.mrb[0].mxu0 %v1148
      %v2302 = vpop.f32.mrb[0].mxu0
      %v2303 = vadd.f32 %v2149, %v2302
      %v2304 = vpop.f32.mrb[0].mxu0
      %2305 = vmatprep.mubr.f32.mxu0 %v1281
      %2306 = vmatmul.mubr.f32.gmra.mrb[0].mxu0 %v1150
      %v2307 = vpop.f32.mrb[0].mxu0
      %v2308 = vadd.f32 %v2149, %v2307
      %v2309 = vpop.f32.mrb[0].mxu0
      %2310 = vmatprep.mubr.f32.mxu0 %v1283
      %2311 = vmatmul.mubr.f32.gmra.mrb[0].mxu0 %v1152
      %v2312 = vpop.f32.mrb[0].mxu0
      %v2313 = vadd.f32 %v2149, %v2312
      %v2314 = vpop.f32.mrb[0].mxu0
      %2315 = vmatprep.mubr.f32.mxu0 %v1285
      %2316 = vmatmul.mubr.f32.gmra.mrb[0].mxu0 %v1154
      %v2317 = vpop.f32.mrb[0].mxu0
      %v2318 = vadd.f32 %v2149, %v2317
      %v2319 = vpop.f32.mrb[0].mxu0
      %2320 = vmatprep.mubr.f32.mxu0 %v1287
      %2321 = vmatmul.mubr.f32.gmra.mrb[0].mxu0 %v1156
      %v2322 = vpop.f32.mrb[0].mxu0
      %v2323 = vadd.f32 %v2149, %v2322
      %v2324 = vpop.f32.mrb[0].mxu0
      %2325 = vmatprep.mubr.f32.mxu0 %v1289
      %2326 = vmatmul.mubr.f32.gmra.mrb[0].mxu0 %v1158
      %v2327 = vpop.f32.mrb[0].mxu0
      %v2328 = vadd.f32 %v2149, %v2327
      %v2329 = vpop.f32.mrb[0].mxu0
      %2330 = vmatprep.mubr.f32.mxu0 %v1291
      %2331 = vmatmul.mubr.f32.gmra.mrb[0].mxu0 %v1160
      %v2332 = vpop.f32.mrb[0].mxu0
      %v2333 = vadd.f32 %v2149, %v2332
      %v2334 = vpop.f32.mrb[0].mxu0
      %2335 = vmatprep.mubr.f32.mxu0 %v1293
      %2336 = vmatmul.mubr.f32.gmra.mrb[0].mxu0 %v1162
      %v2337 = vpop.f32.mrb[0].mxu0
      %v2338 = vadd.f32 %v2149, %v2337
      %v2339 = vpop.f32.mrb[0].mxu0
      %2340 = vmatprep.mubr.f32.mxu0 %v1295
      %2341 = vmatmul.mubr.f32.gmra.mrb[0].mxu0 %v1164
      %v2342 = vpop.f32.mrb[0].mxu0
      %v2343 = vadd.f32 %v2149, %v2342
      %v2344 = vpop.f32.mrb[0].mxu0
      %2345 = vmatprep.mubr.f32.mxu0 %v1297
      %2346 = vmatmul.mubr.f32.gmra.mrb[0].mxu0 %v1166
      %v2347 = vpop.f32.mrb[0].mxu0
      %v2348 = vadd.f32 %v2149, %v2347
      %v2349 = vpop.f32.mrb[0].mxu0
      %2350 = vmatprep.mubr.f32.mxu0 %v1299
      %2351 = vmatmul.mubr.f32.gmra.mrb[0].mxu0 %v1168
      %v2352 = vpop.f32.mrb[0].mxu0
      %v2353 = vadd.f32 %v2149, %v2352
      %v2354 = vpop.f32.mrb[0].mxu0
      %2355 = vmatprep.mubr.f32.mxu0 %v1301
      %2356 = vmatmul.mubr.f32.gmra.mrb[0].mxu0 %v1170
      %v2357 = vpop.f32.mrb[0].mxu0
      %v2358 = vadd.f32 %v2149, %v2357
      %v2359 = vpop.f32.mrb[0].mxu0
      %2360 = vmatprep.mubr.f32.mxu0 %v1303
      %2361 = vmatmul.mubr.f32.gmra.mrb[0].mxu0 %v1172
      %v2362 = vpop.f32.mrb[0].mxu0
      %v2363 = vadd.f32 %v2149, %v2362
      %v2364 = vpop.f32.mrb[0].mxu0
      %2365 = vmatprep.mubr.f32.mxu0 %v1305
      %2366 = vmatmul.mubr.f32.gmra.mrb[0].mxu0 %v1174
      %v2367 = vpop.f32.mrb[0].mxu0
      %v2368 = vadd.f32 %v2149, %v2367
      %v2369 = vpop.f32.mrb[0].mxu0
      %2370 = vmatprep.mubr.f32.mxu0 %v1307
      %2371 = vmatmul.mubr.f32.gmra.mrb[0].mxu0 %v1176
      %v2372 = vpop.f32.mrb[0].mxu0
      %v2373 = vadd.f32 %v2149, %v2372
      %v2374 = vpop.f32.mrb[0].mxu0
      %2375 = vmatprep.mubr.f32.mxu0 %v1309
      %2376 = vmatmul.mubr.f32.gmra.mrb[0].mxu0 %v1178
      %v2377 = vpop.f32.mrb[0].mxu0
      %v2378 = vadd.f32 %v2149, %v2377
      %v2379 = vpop.f32.mrb[0].mxu0
      %2380 = vmatprep.mubr.f32.mxu0 %v1311
      %2381 = vmatmul.mubr.f32.gmra.mrb[0].mxu0 %v1180
      %v2382 = vpop.f32.mrb[0].mxu0
      %v2383 = vadd.f32 %v2149, %v2382
      %v2384 = vpop.f32.mrb[0].mxu0
      %2385 = vmatprep.mubr.f32.mxu0 %v1313
      %2386 = vmatmul.mubr.f32.gmra.mrb[0].mxu0 %v1182
      %v2387 = vpop.f32.mrb[0].mxu0
      %v2388 = vadd.f32 %v2149, %v2387
      %v2389 = vpop.f32.mrb[0].mxu0
      %2390 = vmatprep.mubr.f32.mxu0 %v1315
      %2391 = vmatmul.mubr.f32.gmra.mrb[0].mxu0 %v1184
      %v2392 = vpop.f32.mrb[0].mxu0
      %v2393 = vadd.f32 %v2149, %v2392
      %v2394 = vpop.f32.mrb[0].mxu0
      %2395 = vmatprep.mubr.f32.mxu0 %v1317
      %2396 = vmatmul.mubr.f32.gmra.mrb[0].mxu0 %v1186
      %v2397 = vpop.f32.mrb[0].mxu0
      %v2398 = vadd.f32 %v2149, %v2397
      %v2399 = vpop.f32.mrb[0].mxu0
      %2400 = vmatprep.mubr.f32.mxu0 %v1319
      %2401 = vmatmul.mubr.f32.gmra.mrb[0].mxu0 %v1188
      %v2402 = vpop.f32.mrb[0].mxu0
      %v2403 = vadd.f32 %v2149, %v2402
      %v2404 = vpop.f32.mrb[0].mxu0
      %2405 = vmatprep.mubr.f32.mxu0 %v1321
      %2406 = vmatmul.mubr.f32.gmra.mrb[0].mxu0 %v1190
      %v2407 = vpop.f32.mrb[0].mxu0
      %v2408 = vadd.f32 %v2149, %v2407
      %v2409 = vpop.f32.mrb[0].mxu0
      %2410 = vmatprep.mubr.f32.mxu0 %v1323
      %2411 = vmatmul.mubr.f32.gmra.mrb[0].mxu0 %v1192
      %v2412 = vpop.f32.mrb[0].mxu0
      %v2413 = vadd.f32 %v2149, %v2412
      %v2414 = vpop.f32.mrb[0].mxu0
      %2415 = vmatprep.mubr.f32.mxu0 %v1325
      %2416 = vmatmul.mubr.f32.gmra.mrb[0].mxu0 %v1194
      %v2417 = vpop.f32.mrb[0].mxu0
      %v2418 = vadd.f32 %v2149, %v2417
      %v2419 = vpop.f32.mrb[0].mxu0
      %2420 = vdwg.mxu0
      %2421 = vmatprep.subr.mxu0 0.0
      %2422 = vmatpush1.msra.mxu0 %v2032
      %2423 = vmatprep.subr.mxu0 0.0
      %2424 = vmatpush1.msra.mxu0 %v2033
      %2425 = vmatprep.subr.mxu0 0.0
      %2426 = vmatpush1.msra.mxu0 %v2034
      %2427 = vmatprep.subr.mxu0 0.0
      %2428 = vmatpush1.msra.mxu0 %v2035
      %2429 = vmatprep.subr.mxu0 0.0
      %2430 = vmatpush1.msra.mxu0 %v2036
      %2431 = vmatprep.subr.mxu0 0.0
      %2432 = vmatpush1.msra.mxu0 %v2037
      %2433 = vmatprep.subr.mxu0 0.0
      %2434 = vmatpush1.msra.mxu0 %v2038
      %2435 = vmatprep.subr.mxu0 0.0
      %2436 = vmatpush1.msra.mxu0 %v2039
      %2437 = vmatprep.subr.mxu0 0.0
      %2438 = vmatpush1.msra.mxu0 %v2040
      %2439 = vmatprep.subr.mxu0 0.0
      %2440 = vmatpush1.msra.mxu0 %v2041
      %2441 = vmatprep.subr.mxu0 0.0
      %2442 = vmatpush1.msra.mxu0 %v2042
      %2443 = vmatprep.subr.mxu0 0.0
      %2444 = vmatpush1.msra.mxu0 %v2043
      %2445 = vmatprep.subr.mxu0 0.0
      %2446 = vmatpush1.msra.mxu0 %v2044
      %2447 = vmatprep.subr.mxu0 0.0
      %2448 = vmatpush1.msra.mxu0 %v2045
      %2449 = vmatprep.subr.mxu0 0.0
      %2450 = vmatpush1.msra.mxu0 %v2046
      %2451 = vmatprep.subr.mxu0 0.0
      %2452 = vmatpush1.msra.mxu0 %v2047
      %2453 = vmatprep.subr.mxu0 0.0
      %2454 = vmatpush1.msra.mxu0 %v2048
      %2455 = vmatprep.subr.mxu0 0.0
      %2456 = vmatpush1.msra.mxu0 %v2049
      %2457 = vmatprep.subr.mxu0 0.0
      %2458 = vmatpush1.msra.mxu0 %v2050
      %2459 = vmatprep.subr.mxu0 0.0
      %2460 = vmatpush1.msra.mxu0 %v2051
      %2461 = vmatprep.subr.mxu0 0.0
      %2462 = vmatpush1.msra.mxu0 %v2052
      %2463 = vmatprep.subr.mxu0 0.0
      %2464 = vmatpush1.msra.mxu0 %v2053
      %2465 = vmatprep.subr.mxu0 0.0
      %2466 = vmatpush1.msra.mxu0 %v2054
      %2467 = vmatprep.subr.mxu0 0.0
      %2468 = vmatpush1.msra.mxu0 %v2055
      %2469 = vmatprep.subr.mxu0 0.0
      %2470 = vmatpush1.msra.mxu0 %v2056
      %2471 = vmatprep.subr.mxu0 0.0
      %2472 = vmatpush1.msra.mxu0 %v2057
      %2473 = vmatprep.subr.mxu0 0.0
      %2474 = vmatpush1.msra.mxu0 %v2058
      %2475 = vmatprep.subr.mxu0 0.0
      %2476 = vmatpush1.msra.mxu0 %v2059
      %2477 = vmatprep.subr.mxu0 0.0
      %2478 = vmatpush1.msra.mxu0 %v2060
      %2479 = vmatprep.subr.mxu0 0.0
      %2480 = vmatpush1.msra.mxu0 %v2061
      %2481 = vmatprep.subr.mxu0 0.0
      %2482 = vmatpush1.msra.mxu0 %v2062
      %2483 = vmatprep.subr.mxu0 0.0
      %2484 = vmatpush1.msra.mxu0 %v2063
      %2485 = vmatprep.mubr.f32.mxu0 %v1373
      %2486 = vmatmul.mubr.f32.gmra.mrb[0].mxu0 %v1369
      %v2487 = vpop.f32.mrb[0].mxu0
      %v2488 = vadd.f32 %v2218, %v2487
      %v2489 = vpop.f32.mrb[0].mxu0
      %2490 = vmatprep.mubr.f32.mxu0 %v1375
      %2491 = vmatmul.mubr.f32.gmra.mrb[0].mxu0 %v1371
      %v2492 = vpop.f32.mrb[0].mxu0
      %v2493 = vadd.f32 %v2223, %v2492
      %v2494 = vpop.f32.mrb[0].mxu0
      %2495 = vmatprep.mubr.f32.mxu0 %v1377
      %2496 = vmatmul.mubr.f32.gmra.mrb[0].mxu0 %v1373
      %v2497 = vpop.f32.mrb[0].mxu0
      %v2498 = vadd.f32 %v2228, %v2497
      %v2499 = vpop.f32.mrb[0].mxu0
      %2500 = vmatprep.mubr.f32.mxu0 %v1379
      %2501 = vmatmul.mubr.f32.gmra.mrb[0].mxu0 %v1375
      %v2502 = vpop.f32.mrb[0].mxu0
      %v2503 = vadd.f32 %v2233, %v2502
      %v2504 = vpop.f32.mrb[0].mxu0
      %2505 = vmatprep.mubr.f32.mxu0 %v1381
      %2506 = vmatmul.mubr.f32.gmra.mrb[0].mxu0 %v1377
      %v2507 = vpop.f32.mrb[0].mxu0
      %v2508 = vadd.f32 %v2238, %v2507
      %v2509 = vpop.f32.mrb[0].mxu0
      %2510 = vmatprep.mubr.f32.mxu0 %v1383
      %2511 = vmatmul.mubr.f32.gmra.mrb[0].mxu0 %v1379
      %v2512 = vpop.f32.mrb[0].mxu0
      %v2513 = vadd.f32 %v2243, %v2512
      %v2514 = vpop.f32.mrb[0].mxu0
      %2515 = vmatprep.mubr.f32.mxu0 %v1385
      %2516 = vmatmul.mubr.f32.gmra.mrb[0].mxu0 %v1381
      %v2517 = vpop.f32.mrb[0].mxu0
      %v2518 = vadd.f32 %v2248, %v2517
      %v2519 = vpop.f32.mrb[0].mxu0
      %2520 = vmatprep.mubr.f32.mxu0 %v1387
      %2521 = vmatmul.mubr.f32.gmra.mrb[0].mxu0 %v1383
      %v2522 = vpop.f32.mrb[0].mxu0
      %v2523 = vadd.f32 %v2253, %v2522
      %v2524 = vpop.f32.mrb[0].mxu0
      %2525 = vmatprep.mubr.f32.mxu0 %v1389
      %2526 = vmatmul.mubr.f32.gmra.mrb[0].mxu0 %v1385
      %v2527 = vpop.f32.mrb[0].mxu0
      %v2528 = vadd.f32 %v2258, %v2527
      %v2529 = vpop.f32.mrb[0].mxu0
      %2530 = vmatprep.mubr.f32.mxu0 %v1391
      %2531 = vmatmul.mubr.f32.gmra.mrb[0].mxu0 %v1387
      %v2532 = vpop.f32.mrb[0].mxu0
      %v2533 = vadd.f32 %v2263, %v2532
      %v2534 = vpop.f32.mrb[0].mxu0
      %2535 = vmatprep.mubr.f32.mxu0 %v1393
      %2536 = vmatmul.mubr.f32.gmra.mrb[0].mxu0 %v1389
      %v2537 = vpop.f32.mrb[0].mxu0
      %v2538 = vadd.f32 %v2268, %v2537
      %v2539 = vpop.f32.mrb[0].mxu0
      %2540 = vmatprep.mubr.f32.mxu0 %v1395
      %2541 = vmatmul.mubr.f32.gmra.mrb[0].mxu0 %v1391
      %v2542 = vpop.f32.mrb[0].mxu0
      %v2543 = vadd.f32 %v2273, %v2542
      %v2544 = vpop.f32.mrb[0].mxu0
      %2545 = vmatprep.mubr.f32.mxu0 %v1397
      %2546 = vmatmul.mubr.f32.gmra.mrb[0].mxu0 %v1393
      %v2547 = vpop.f32.mrb[0].mxu0
      %v2548 = vadd.f32 %v2278, %v2547
      %v2549 = vpop.f32.mrb[0].mxu0
      %2550 = vmatprep.mubr.f32.mxu0 %v1399
      %2551 = vmatmul.mubr.f32.gmra.mrb[0].mxu0 %v1395
      %v2552 = vpop.f32.mrb[0].mxu0
      %v2553 = vadd.f32 %v2283, %v2552
      %v2554 = vpop.f32.mrb[0].mxu0
      %2555 = vmatprep.mubr.f32.mxu0 %v1401
      %2556 = vmatmul.mubr.f32.gmra.mrb[0].mxu0 %v1397
      %v2557 = vpop.f32.mrb[0].mxu0
      %v2558 = vadd.f32 %v2288, %v2557
      %v2559 = vpop.f32.mrb[0].mxu0
      %2560 = vmatprep.mubr.f32.mxu0 %v1403
      %2561 = vmatmul.mubr.f32.gmra.mrb[0].mxu0 %v1399
      %v2562 = vpop.f32.mrb[0].mxu0
      %v2563 = vadd.f32 %v2293, %v2562
      %v2564 = vpop.f32.mrb[0].mxu0
      %2565 = vmatprep.mubr.f32.mxu0 %v1405
      %2566 = vmatmul.mubr.f32.gmra.mrb[0].mxu0 %v1401
      %v2567 = vpop.f32.mrb[0].mxu0
      %v2568 = vadd.f32 %v2298, %v2567
      %v2569 = vpop.f32.mrb[0].mxu0
      %2570 = vmatprep.mubr.f32.mxu0 %v1407
      %2571 = vmatmul.mubr.f32.gmra.mrb[0].mxu0 %v1403
      %v2572 = vpop.f32.mrb[0].mxu0
      %v2573 = vadd.f32 %v2303, %v2572
      %v2574 = vpop.f32.mrb[0].mxu0
      %2575 = vmatprep.mubr.f32.mxu0 %v1409
      %2576 = vmatmul.mubr.f32.gmra.mrb[0].mxu0 %v1405
      %v2577 = vpop.f32.mrb[0].mxu0
      %v2578 = vadd.f32 %v2308, %v2577
      %v2579 = vpop.f32.mrb[0].mxu0
      %2580 = vmatprep.mubr.f32.mxu0 %v1411
      %2581 = vmatmul.mubr.f32.gmra.mrb[0].mxu0 %v1407
      %v2582 = vpop.f32.mrb[0].mxu0
      %v2583 = vadd.f32 %v2313, %v2582
      %v2584 = vpop.f32.mrb[0].mxu0
      %2585 = vmatprep.mubr.f32.mxu0 %v1413
      %2586 = vmatmul.mubr.f32.gmra.mrb[0].mxu0 %v1409
      %v2587 = vpop.f32.mrb[0].mxu0
      %v2588 = vadd.f32 %v2318, %v2587
      %v2589 = vpop.f32.mrb[0].mxu0
      %2590 = vmatprep.mubr.f32.mxu0 %v1415
      %2591 = vmatmul.mubr.f32.gmra.mrb[0].mxu0 %v1411
      %v2592 = vpop.f32.mrb[0].mxu0
      %v2593 = vadd.f32 %v2323, %v2592
      %v2594 = vpop.f32.mrb[0].mxu0
      %2595 = vmatprep.mubr.f32.mxu0 %v1417
      %2596 = vmatmul.mubr.f32.gmra.mrb[0].mxu0 %v1413
      %v2597 = vpop.f32.mrb[0].mxu0
      %v2598 = vadd.f32 %v2328, %v2597
      %v2599 = vpop.f32.mrb[0].mxu0
      %2600 = vmatprep.mubr.f32.mxu0 %v1419
      %2601 = vmatmul.mubr.f32.gmra.mrb[0].mxu0 %v1415
      %v2602 = vpop.f32.mrb[0].mxu0
      %v2603 = vadd.f32 %v2333, %v2602
      %v2604 = vpop.f32.mrb[0].mxu0
      %2605 = vmatprep.mubr.f32.mxu0 %v1421
      %2606 = vmatmul.mubr.f32.gmra.mrb[0].mxu0 %v1417
      %v2607 = vpop.f32.mrb[0].mxu0
      %v2608 = vadd.f32 %v2338, %v2607
      %v2609 = vpop.f32.mrb[0].mxu0
      %2610 = vmatprep.mubr.f32.mxu0 %v1423
      %2611 = vmatmul.mubr.f32.gmra.mrb[0].mxu0 %v1419
      %v2612 = vpop.f32.mrb[0].mxu0
      %v2613 = vadd.f32 %v2343, %v2612
      %v2614 = vpop.f32.mrb[0].mxu0
      %2615 = vmatprep.mubr.f32.mxu0 %v1425
      %2616 = vmatmul.mubr.f32.gmra.mrb[0].mxu0 %v1421
      %v2617 = vpop.f32.mrb[0].mxu0
      %v2618 = vadd.f32 %v2348, %v2617
      %v2619 = vpop.f32.mrb[0].mxu0
      %2620 = vmatprep.mubr.f32.mxu0 %v1427
      %2621 = vmatmul.mubr.f32.gmra.mrb[0].mxu0 %v1423
      %v2622 = vpop.f32.mrb[0].mxu0
      %v2623 = vadd.f32 %v2353, %v2622
      %v2624 = vpop.f32.mrb[0].mxu0
      %2625 = vmatprep.mubr.f32.mxu0 %v1429
      %2626 = vmatmul.mubr.f32.gmra.mrb[0].mxu0 %v1425
      %v2627 = vpop.f32.mrb[0].mxu0
      %v2628 = vadd.f32 %v2358, %v2627
      %v2629 = vpop.f32.mrb[0].mxu0
      %2630 = vmatprep.mubr.f32.mxu0 %v1431
      %2631 = vmatmul.mubr.f32.gmra.mrb[0].mxu0 %v1427
      %v2632 = vpop.f32.mrb[0].mxu0
      %v2633 = vadd.f32 %v2363, %v2632
      %v2634 = vpop.f32.mrb[0].mxu0
      %2635 = vmatprep.mubr.f32.mxu0 %v1433
      %2636 = vmatmul.mubr.f32.gmra.mrb[0].mxu0 %v1429
      %v2637 = vpop.f32.mrb[0].mxu0
      %v2638 = vadd.f32 %v2368, %v2637
      %v2639 = vpop.f32.mrb[0].mxu0
      %2640 = vmatprep.mubr.f32.mxu0 %v1435
      %2641 = vmatmul.mubr.f32.gmra.mrb[0].mxu0 %v1431
      %v2642 = vpop.f32.mrb[0].mxu0
      %v2643 = vadd.f32 %v2373, %v2642
      %v2644 = vpop.f32.mrb[0].mxu0
      %2645 = vmatprep.mubr.f32.mxu0 %v1437
      %2646 = vmatmul.mubr.f32.gmra.mrb[0].mxu0 %v1433
      %v2647 = vpop.f32.mrb[0].mxu0
      %v2648 = vadd.f32 %v2378, %v2647
      %v2649 = vpop.f32.mrb[0].mxu0
      %2650 = vmatprep.mubr.f32.mxu0 %v1439
      %2651 = vmatmul.mubr.f32.gmra.mrb[0].mxu0 %v1435
      %v2652 = vpop.f32.mrb[0].mxu0
      %v2653 = vadd.f32 %v2383, %v2652
      %v2654 = vpop.f32.mrb[0].mxu0
      %2655 = vmatprep.mubr.f32.mxu0 %v1441
      %2656 = vmatmul.mubr.f32.gmra.mrb[0].mxu0 %v1437
      %v2657 = vpop.f32.mrb[0].mxu0
      %v2658 = vadd.f32 %v2388, %v2657
      %v2659 = vpop.f32.mrb[0].mxu0
      %2660 = vmatprep.mubr.f32.mxu0 %v1443
      %2661 = vmatmul.mubr.f32.gmra.mrb[0].mxu0 %v1439
      %v2662 = vpop.f32.mrb[0].mxu0
      %v2663 = vadd.f32 %v2393, %v2662
      %v2664 = vpop.f32.mrb[0].mxu0
      %2665 = vmatprep.mubr.f32.mxu0 %v1445
      %2666 = vmatmul.mubr.f32.gmra.mrb[0].mxu0 %v1441
      %v2667 = vpop.f32.mrb[0].mxu0
      %v2668 = vadd.f32 %v2398, %v2667
      %v2669 = vpop.f32.mrb[0].mxu0
      %2670 = vmatprep.mubr.f32.mxu0 %v1447
      %2671 = vmatmul.mubr.f32.gmra.mrb[0].mxu0 %v1443
      %v2672 = vpop.f32.mrb[0].mxu0
      %v2673 = vadd.f32 %v2403, %v2672
      %v2674 = vpop.f32.mrb[0].mxu0
      %2675 = vmatprep.mubr.f32.mxu0 %v1449
      %2676 = vmatmul.mubr.f32.gmra.mrb[0].mxu0 %v1445
      %v2677 = vpop.f32.mrb[0].mxu0
      %v2678 = vadd.f32 %v2408, %v2677
      %v2679 = vpop.f32.mrb[0].mxu0
      %2680 = vmatprep.mubr.f32.mxu0 %v1493
      %2681 = vmatmul.mubr.f32.gmra.mrb[0].mxu0 %v1447
      %v2682 = vpop.f32.mrb[0].mxu0
      %v2683 = vadd.f32 %v2413, %v2682
      %v2684 = vpop.f32.mrb[0].mxu0
      %2685 = vmatprep.mubr.f32.mxu0 %v1495
      %2686 = vmatmul.mubr.f32.gmra.mrb[0].mxu0 %v1449
      %v2687 = vpop.f32.mrb[0].mxu0
      %v2688 = vadd.f32 %v2418, %v2687
      %v2689 = vpop.f32.mrb[0].mxu0
      %2690 = vdwg.mxu0
      %2691 = vmatprep.subr.mxu0 0.0
      %2692 = vmatpush1.msra.mxu0 %v2064
      %2693 = vmatprep.subr.mxu0 0.0
      %2694 = vmatpush1.msra.mxu0 %v2065
      %2695 = vmatprep.subr.mxu0 0.0
      %2696 = vmatpush1.msra.mxu0 %v2066
      %2697 = vmatprep.subr.mxu0 0.0
      %2698 = vmatpush1.msra.mxu0 %v2067
      %2699 = vmatprep.subr.mxu0 0.0
      %2700 = vmatpush1.msra.mxu0 %v2068
      %2701 = vmatprep.subr.mxu0 0.0
      %2702 = vmatpush1.msra.mxu0 %v2069
      %2703 = vmatprep.subr.mxu0 0.0
      %2704 = vmatpush1.msra.mxu0 %v2070
      %2705 = vmatprep.subr.mxu0 0.0
      %2706 = vmatpush1.msra.mxu0 %v2071
      %2707 = vmatprep.subr.mxu0 0.0
      %2708 = vmatpush1.msra.mxu0 %v2072
      %2709 = vmatprep.subr.mxu0 0.0
      %2710 = vmatpush1.msra.mxu0 %v2073
      %2711 = vmatprep.subr.mxu0 0.0
      %2712 = vmatpush1.msra.mxu0 %v2074
      %2713 = vmatprep.subr.mxu0 0.0
      %2714 = vmatpush1.msra.mxu0 %v2075
      %2715 = vmatprep.subr.mxu0 0.0
      %2716 = vmatpush1.msra.mxu0 %v2076
      %2717 = vmatprep.subr.mxu0 0.0
      %2718 = vmatpush1.msra.mxu0 %v2077
      %2719 = vmatprep.subr.mxu0 0.0
      %2720 = vmatpush1.msra.mxu0 %v2078
      %2721 = vmatprep.subr.mxu0 0.0
      %2722 = vmatpush1.msra.mxu0 %v2079
      %2723 = vmatprep.subr.mxu0 0.0
      %2724 = vmatpush1.msra.mxu0 %v2080
      %2725 = vmatprep.subr.mxu0 0.0
      %2726 = vmatpush1.msra.mxu0 %v2081
      %2727 = vmatprep.subr.mxu0 0.0
      %2728 = vmatpush1.msra.mxu0 %v2082
      %2729 = vmatprep.subr.mxu0 0.0
      %2730 = vmatpush1.msra.mxu0 %v2083
      %2731 = vmatprep.subr.mxu0 0.0
      %2732 = vmatpush1.msra.mxu0 %v2084
      %2733 = vmatprep.subr.mxu0 0.0
      %2734 = vmatpush1.msra.mxu0 %v2085
      %2735 = vmatprep.subr.mxu0 0.0
      %2736 = vmatpush1.msra.mxu0 %v2086
      %2737 = vmatprep.subr.mxu0 0.0
      %2738 = vmatpush1.msra.mxu0 %v2087
      %2739 = vmatprep.subr.mxu0 0.0
      %2740 = vmatpush1.msra.mxu0 %v2088
      %2741 = vmatprep.subr.mxu0 0.0
      %2742 = vmatpush1.msra.mxu0 %v2089
      %2743 = vmatprep.subr.mxu0 0.0
      %2744 = vmatpush1.msra.mxu0 %v2090
      %2745 = vmatprep.subr.mxu0 0.0
      %2746 = vmatpush1.msra.mxu0 %v2091
      %2747 = vmatprep.subr.mxu0 0.0
      %2748 = vmatpush1.msra.mxu0 %v2092
      %2749 = vmatprep.subr.mxu0 0.0
      %2750 = vmatpush1.msra.mxu0 %v2093
      %2751 = vmatprep.subr.mxu0 0.0
      %2752 = vmatpush1.msra.mxu0 %v2094
      %2753 = vmatprep.subr.mxu0 0.0
      %2754 = vmatpush1.msra.mxu0 %v2095
      %2755 = vmatprep.mubr.f32.mxu0 %v1626
      %2756 = vmatmul.mubr.f32.gmra.mrb[0].mxu0 %v1501
      %v2757 = vpop.f32.mrb[0].mxu0
      %v2758 = vadd.f32 %v2488, %v2757
      %v2759 = vpop.f32.mrb[0].mxu0
      %2760 = vmatprep.mubr.f32.mxu0 %v1628
      %2761 = vmatmul.mubr.f32.gmra.mrb[0].mxu0 %v1503
      %v2762 = vpop.f32.mrb[0].mxu0
      %v2763 = vadd.f32 %v2493, %v2762
      %v2764 = vpop.f32.mrb[0].mxu0
      %2765 = vmatprep.mubr.f32.mxu0 %v1630
      %2766 = vmatmul.mubr.f32.gmra.mrb[0].mxu0 %v1505
      %v2767 = vpop.f32.mrb[0].mxu0
      %v2768 = vadd.f32 %v2498, %v2767
      %v2769 = vpop.f32.mrb[0].mxu0
      %2770 = vmatprep.mubr.f32.mxu0 %v1632
      %2771 = vmatmul.mubr.f32.gmra.mrb[0].mxu0 %v1507
      %v2772 = vpop.f32.mrb[0].mxu0
      %v2773 = vadd.f32 %v2503, %v2772
      %v2774 = vpop.f32.mrb[0].mxu0
      %2775 = vmatprep.mubr.f32.mxu0 %v1634
      %2776 = vmatmul.mubr.f32.gmra.mrb[0].mxu0 %v1509
      %v2777 = vpop.f32.mrb[0].mxu0
      %v2778 = vadd.f32 %v2508, %v2777
      %v2779 = vpop.f32.mrb[0].mxu0
      %2780 = vmatprep.mubr.f32.mxu0 %v1636
      %2781 = vmatmul.mubr.f32.gmra.mrb[0].mxu0 %v1511
      %v2782 = vpop.f32.mrb[0].mxu0
      %v2783 = vadd.f32 %v2513, %v2782
      %v2784 = vpop.f32.mrb[0].mxu0
      %2785 = vmatprep.mubr.f32.mxu0 %v1638
      %2786 = vmatmul.mubr.f32.gmra.mrb[0].mxu0 %v1513
      %v2787 = vpop.f32.mrb[0].mxu0
      %v2788 = vadd.f32 %v2518, %v2787
      %v2789 = vpop.f32.mrb[0].mxu0
      %2790 = vmatprep.mubr.f32.mxu0 %v1640
      %2791 = vmatmul.mubr.f32.gmra.mrb[0].mxu0 %v1515
      %v2792 = vpop.f32.mrb[0].mxu0
      %v2793 = vadd.f32 %v2523, %v2792
      %v2794 = vpop.f32.mrb[0].mxu0
      %2795 = vmatprep.mubr.f32.mxu0 %v1642
      %2796 = vmatmul.mubr.f32.gmra.mrb[0].mxu0 %v1517
      %v2797 = vpop.f32.mrb[0].mxu0
      %v2798 = vadd.f32 %v2528, %v2797
      %v2799 = vpop.f32.mrb[0].mxu0
      %2800 = vmatprep.mubr.f32.mxu0 %v1644
      %2801 = vmatmul.mubr.f32.gmra.mrb[0].mxu0 %v1519
      %v2802 = vpop.f32.mrb[0].mxu0
      %v2803 = vadd.f32 %v2533, %v2802
      %v2804 = vpop.f32.mrb[0].mxu0
      %2805 = vmatprep.mubr.f32.mxu0 %v1646
      %2806 = vmatmul.mubr.f32.gmra.mrb[0].mxu0 %v1521
      %v2807 = vpop.f32.mrb[0].mxu0
      %v2808 = vadd.f32 %v2538, %v2807
      %v2809 = vpop.f32.mrb[0].mxu0
      %2810 = vmatprep.mubr.f32.mxu0 %v1648
      %2811 = vmatmul.mubr.f32.gmra.mrb[0].mxu0 %v1523
      %v2812 = vpop.f32.mrb[0].mxu0
      %v2813 = vadd.f32 %v2543, %v2812
      %v2814 = vpop.f32.mrb[0].mxu0
      %2815 = vmatprep.mubr.f32.mxu0 %v1650
      %2816 = vmatmul.mubr.f32.gmra.mrb[0].mxu0 %v1525
      %v2817 = vpop.f32.mrb[0].mxu0
      %v2818 = vadd.f32 %v2548, %v2817
      %v2819 = vpop.f32.mrb[0].mxu0
      %2820 = vmatprep.mubr.f32.mxu0 %v1652
      %2821 = vmatmul.mubr.f32.gmra.mrb[0].mxu0 %v1527
      %v2822 = vpop.f32.mrb[0].mxu0
      %v2823 = vadd.f32 %v2553, %v2822
      %v2824 = vpop.f32.mrb[0].mxu0
      %2825 = vmatprep.mubr.f32.mxu0 %v1654
      %2826 = vmatmul.mubr.f32.gmra.mrb[0].mxu0 %v1529
      %v2827 = vpop.f32.mrb[0].mxu0
      %v2828 = vadd.f32 %v2558, %v2827
      %v2829 = vpop.f32.mrb[0].mxu0
      %2830 = vmatprep.mubr.f32.mxu0 %v1656
      %2831 = vmatmul.mubr.f32.gmra.mrb[0].mxu0 %v1531
      %v2832 = vpop.f32.mrb[0].mxu0
      %v2833 = vadd.f32 %v2563, %v2832
      %v2834 = vpop.f32.mrb[0].mxu0
      %2835 = vmatprep.mubr.f32.mxu0 %v1658
      %2836 = vmatmul.mubr.f32.gmra.mrb[0].mxu0 %v1533
      %v2837 = vpop.f32.mrb[0].mxu0
      %v2838 = vadd.f32 %v2568, %v2837
      %v2839 = vpop.f32.mrb[0].mxu0
      %2840 = vmatprep.mubr.f32.mxu0 %v1660
      %2841 = vmatmul.mubr.f32.gmra.mrb[0].mxu0 %v1535
      %v2842 = vpop.f32.mrb[0].mxu0
      %v2843 = vadd.f32 %v2573, %v2842
      %v2844 = vpop.f32.mrb[0].mxu0
      %2845 = vmatprep.mubr.f32.mxu0 %v1662
      %2846 = vmatmul.mubr.f32.gmra.mrb[0].mxu0 %v1537
      %v2847 = vpop.f32.mrb[0].mxu0
      %v2848 = vadd.f32 %v2578, %v2847
      %v2849 = vpop.f32.mrb[0].mxu0
      %2850 = vmatprep.mubr.f32.mxu0 %v1664
      %2851 = vmatmul.mubr.f32.gmra.mrb[0].mxu0 %v1539
      %v2852 = vpop.f32.mrb[0].mxu0
      %v2853 = vadd.f32 %v2583, %v2852
      %v2854 = vpop.f32.mrb[0].mxu0
      %2855 = vmatprep.mubr.f32.mxu0 %v1666
      %2856 = vmatmul.mubr.f32.gmra.mrb[0].mxu0 %v1541
      %v2857 = vpop.f32.mrb[0].mxu0
      %v2858 = vadd.f32 %v2588, %v2857
      %v2859 = vpop.f32.mrb[0].mxu0
      %2860 = vmatprep.mubr.f32.mxu0 %v1668
      %2861 = vmatmul.mubr.f32.gmra.mrb[0].mxu0 %v1543
      %v2862 = vpop.f32.mrb[0].mxu0
      %v2863 = vadd.f32 %v2593, %v2862
      %v2864 = vpop.f32.mrb[0].mxu0
      %2865 = vmatprep.mubr.f32.mxu0 %v1670
      %2866 = vmatmul.mubr.f32.gmra.mrb[0].mxu0 %v1545
      %v2867 = vpop.f32.mrb[0].mxu0
      %v2868 = vadd.f32 %v2598, %v2867
      %v2869 = vpop.f32.mrb[0].mxu0
      %2870 = vmatprep.mubr.f32.mxu0 %v1672
      %2871 = vmatmul.mubr.f32.gmra.mrb[0].mxu0 %v1547
      %v2872 = vpop.f32.mrb[0].mxu0
      %v2873 = vadd.f32 %v2603, %v2872
      %v2874 = vpop.f32.mrb[0].mxu0
      %2875 = vmatprep.mubr.f32.mxu0 %v1674
      %2876 = vmatmul.mubr.f32.gmra.mrb[0].mxu0 %v1549
      %v2877 = vpop.f32.mrb[0].mxu0
      %v2878 = vadd.f32 %v2608, %v2877
      %v2879 = vpop.f32.mrb[0].mxu0
      %2880 = vmatprep.mubr.f32.mxu0 %v1676
      %2881 = vmatmul.mubr.f32.gmra.mrb[0].mxu0 %v1551
      %v2882 = vpop.f32.mrb[0].mxu0
      %v2883 = vadd.f32 %v2613, %v2882
      %v2884 = vpop.f32.mrb[0].mxu0
      %2885 = vmatprep.mubr.f32.mxu0 %v1678
      %2886 = vmatmul.mubr.f32.gmra.mrb[0].mxu0 %v1553
      %v2887 = vpop.f32.mrb[0].mxu0
      %v2888 = vadd.f32 %v2618, %v2887
      %v2889 = vpop.f32.mrb[0].mxu0
      %2890 = vmatprep.mubr.f32.mxu0 %v1680
      %2891 = vmatmul.mubr.f32.gmra.mrb[0].mxu0 %v1555
      %v2892 = vpop.f32.mrb[0].mxu0
      %v2893 = vadd.f32 %v2623, %v2892
      %v2894 = vpop.f32.mrb[0].mxu0
      %2895 = vmatprep.mubr.f32.mxu0 %v1682
      %2896 = vmatmul.mubr.f32.gmra.mrb[0].mxu0 %v1557
      %v2897 = vpop.f32.mrb[0].mxu0
      %v2898 = vadd.f32 %v2628, %v2897
      %v2899 = vpop.f32.mrb[0].mxu0
      %2900 = vmatprep.mubr.f32.mxu0 %v1684
      %2901 = vmatmul.mubr.f32.gmra.mrb[0].mxu0 %v1559
      %v2902 = vpop.f32.mrb[0].mxu0
      %v2903 = vadd.f32 %v2633, %v2902
      %v2904 = vpop.f32.mrb[0].mxu0
      %2905 = vmatprep.mubr.f32.mxu0 %v1686
      %2906 = vmatmul.mubr.f32.gmra.mrb[0].mxu0 %v1561
      %v2907 = vpop.f32.mrb[0].mxu0
      %v2908 = vadd.f32 %v2638, %v2907
      %v2909 = vpop.f32.mrb[0].mxu0
      %2910 = vmatprep.mubr.f32.mxu0 %v1688
      %2911 = vmatmul.mubr.f32.gmra.mrb[0].mxu0 %v1563
      %v2912 = vpop.f32.mrb[0].mxu0
      %v2913 = vadd.f32 %v2643, %v2912
      %v2914 = vpop.f32.mrb[0].mxu0
      %2915 = vmatprep.mubr.f32.mxu0 %v1690
      %2916 = vmatmul.mubr.f32.gmra.mrb[0].mxu0 %v1565
      %v2917 = vpop.f32.mrb[0].mxu0
      %v2918 = vadd.f32 %v2648, %v2917
      %v2919 = vpop.f32.mrb[0].mxu0
      %2920 = vmatprep.mubr.f32.mxu0 %v1692
      %2921 = vmatmul.mubr.f32.gmra.mrb[0].mxu0 %v1567
      %v2922 = vpop.f32.mrb[0].mxu0
      %v2923 = vadd.f32 %v2653, %v2922
      %v2924 = vpop.f32.mrb[0].mxu0
      %2925 = vmatprep.mubr.f32.mxu0 %v1694
      %2926 = vmatmul.mubr.f32.gmra.mrb[0].mxu0 %v1569
      %v2927 = vpop.f32.mrb[0].mxu0
      %v2928 = vadd.f32 %v2658, %v2927
      %v2929 = vpop.f32.mrb[0].mxu0
      %2930 = vmatprep.mubr.f32.mxu0 %v1696
      %2931 = vmatmul.mubr.f32.gmra.mrb[0].mxu0 %v1571
      %v2932 = vpop.f32.mrb[0].mxu0
      %v2933 = vadd.f32 %v2663, %v2932
      %v2934 = vpop.f32.mrb[0].mxu0
      %2935 = vmatprep.mubr.f32.mxu0 %v1698
      %2936 = vmatmul.mubr.f32.gmra.mrb[0].mxu0 %v1573
      %v2937 = vpop.f32.mrb[0].mxu0
      %v2938 = vadd.f32 %v2668, %v2937
      %v2939 = vpop.f32.mrb[0].mxu0
      %2940 = vmatprep.mubr.f32.mxu0 %v1700
      %2941 = vmatmul.mubr.f32.gmra.mrb[0].mxu0 %v1575
      %v2942 = vpop.f32.mrb[0].mxu0
      %v2943 = vadd.f32 %v2673, %v2942
      %v2944 = vpop.f32.mrb[0].mxu0
      %2945 = vmatprep.mubr.f32.mxu0 %v1702
      %2946 = vmatmul.mubr.f32.gmra.mrb[0].mxu0 %v1577
      %v2947 = vpop.f32.mrb[0].mxu0
      %v2948 = vadd.f32 %v2678, %v2947
      %v2949 = vpop.f32.mrb[0].mxu0
      %2950 = vmatprep.mubr.f32.mxu0 %v1704
      %2951 = vmatmul.mubr.f32.gmra.mrb[0].mxu0 %v1579
      %v2952 = vpop.f32.mrb[0].mxu0
      %v2953 = vadd.f32 %v2683, %v2952
      %v2954 = vpop.f32.mrb[0].mxu0
      %2955 = vmatprep.mubr.f32.mxu0 %v1706
      %2956 = vmatmul.mubr.f32.gmra.mrb[0].mxu0 %v1581
      %v2957 = vpop.f32.mrb[0].mxu0
      %v2958 = vadd.f32 %v2688, %v2957
      %v2959 = vpop.f32.mrb[0].mxu0
      %2960 = vdwg.mxu0
      %2961 = vmatprep.subr.mxu0 0.0
      %2962 = vmatpush1.msra.mxu0 %v2096
      %2963 = vmatprep.subr.mxu0 0.0
      %2964 = vmatpush1.msra.mxu0 %v2097
      %2965 = vmatprep.subr.mxu0 0.0
      %2966 = vmatpush1.msra.mxu0 %v2098
      %2967 = vmatprep.subr.mxu0 0.0
      %2968 = vmatpush1.msra.mxu0 %v2099
      %2969 = vmatprep.subr.mxu0 0.0
      %2970 = vmatpush1.msra.mxu0 %v2100
      %2971 = vmatprep.subr.mxu0 0.0
      %2972 = vmatpush1.msra.mxu0 %v2101
      %2973 = vmatprep.subr.mxu0 0.0
      %2974 = vmatpush1.msra.mxu0 %v2102
      %2975 = vmatprep.subr.mxu0 0.0
      %2976 = vmatpush1.msra.mxu0 %v2103
      %2977 = vmatprep.subr.mxu0 0.0
      %2978 = vmatpush1.msra.mxu0 %v2104
      %2979 = vmatprep.subr.mxu0 0.0
      %2980 = vmatpush1.msra.mxu0 %v2105
      %2981 = vmatprep.subr.mxu0 0.0
      %2982 = vmatpush1.msra.mxu0 %v2106
      %2983 = vmatprep.subr.mxu0 0.0
      %2984 = vmatpush1.msra.mxu0 %v2107
      %2985 = vmatprep.subr.mxu0 0.0
      %2986 = vmatpush1.msra.mxu0 %v2108
      %2987 = vmatprep.subr.mxu0 0.0
      %2988 = vmatpush1.msra.mxu0 %v2109
      %2989 = vmatprep.subr.mxu0 0.0
      %2990 = vmatpush1.msra.mxu0 %v2110
      %2991 = vmatprep.subr.mxu0 0.0
      %2992 = vmatpush1.msra.mxu0 %v2111
      %2993 = vmatprep.subr.mxu0 0.0
      %2994 = vmatpush1.msra.mxu0 %v2112
      %2995 = vmatprep.subr.mxu0 0.0
      %2996 = vmatpush1.msra.mxu0 %v2113
      %2997 = vmatprep.subr.mxu0 0.0
      %2998 = vmatpush1.msra.mxu0 %v2114
      %2999 = vmatprep.subr.mxu0 0.0
      %3000 = vmatpush1.msra.mxu0 %v2115
      %3001 = vmatprep.subr.mxu0 0.0
      %3002 = vmatpush1.msra.mxu0 %v2116
      %3003 = vmatprep.subr.mxu0 0.0
      %3004 = vmatpush1.msra.mxu0 %v2117
      %3005 = vmatprep.subr.mxu0 0.0
      %3006 = vmatpush1.msra.mxu0 %v2118
      %3007 = vmatprep.subr.mxu0 0.0
      %3008 = vmatpush1.msra.mxu0 %v2119
      %3009 = vmatprep.subr.mxu0 0.0
      %3010 = vmatpush1.msra.mxu0 %v2120
      %3011 = vmatprep.subr.mxu0 0.0
      %3012 = vmatpush1.msra.mxu0 %v2121
      %3013 = vmatprep.subr.mxu0 0.0
      %3014 = vmatpush1.msra.mxu0 %v2122
      %3015 = vmatprep.subr.mxu0 0.0
      %3016 = vmatpush1.msra.mxu0 %v2123
      %3017 = vmatprep.subr.mxu0 0.0
      %3018 = vmatpush1.msra.mxu0 %v2124
      %3019 = vmatprep.subr.mxu0 0.0
      %3020 = vmatpush1.msra.mxu0 %v2125
      %3021 = vmatprep.subr.mxu0 0.0
      %3022 = vmatpush1.msra.mxu0 %v2126
      %3023 = vmatprep.subr.mxu0 0.0
      %3024 = vmatpush1.msra.mxu0 %v2127
      %3025 = vmatprep.mubr.f32.mxu0 %v1755
      %3026 = vmatmul.mubr.f32.gmra.mrb[0].mxu0 %v1630
      %v3027 = vpop.f32.mrb[0].mxu0
      %v3028 = vadd.f32 %v2758, %v3027
      %v3029 = vpop.f32.mrb[0].mxu0
      %3030 = vmatprep.mubr.f32.mxu0 %v1757
      %3031 = vmatmul.mubr.f32.gmra.mrb[0].mxu0 %v1632
      %v3032 = vpop.f32.mrb[0].mxu0
      %v3033 = vadd.f32 %v2763, %v3032
      %v3034 = vpop.f32.mrb[0].mxu0
      %3035 = vmatprep.mubr.f32.mxu0 %v1759
      %3036 = vmatmul.mubr.f32.gmra.mrb[0].mxu0 %v1634
      %v3037 = vpop.f32.mrb[0].mxu0
      %v3038 = vadd.f32 %v2768, %v3037
      %v3039 = vpop.f32.mrb[0].mxu0
      %3040 = vmatprep.mubr.f32.mxu0 %v1761
      %3041 = vmatmul.mubr.f32.gmra.mrb[0].mxu0 %v1636
      %v3042 = vpop.f32.mrb[0].mxu0
      %v3043 = vadd.f32 %v2773, %v3042
      %v3044 = vpop.f32.mrb[0].mxu0
      %3045 = vmatprep.mubr.f32.mxu0 %v1763
      %3046 = vmatmul.mubr.f32.gmra.mrb[0].mxu0 %v1638
      %v3047 = vpop.f32.mrb[0].mxu0
      %v3048 = vadd.f32 %v2778, %v3047
      %v3049 = vpop.f32.mrb[0].mxu0
      %3050 = vmatprep.mubr.f32.mxu0 %v1765
      %3051 = vmatmul.mubr.f32.gmra.mrb[0].mxu0 %v1640
      %v3052 = vpop.f32.mrb[0].mxu0
      %v3053 = vadd.f32 %v2783, %v3052
      %v3054 = vpop.f32.mrb[0].mxu0
      %3055 = vmatprep.mubr.f32.mxu0 %v1767
      %3056 = vmatmul.mubr.f32.gmra.mrb[0].mxu0 %v1642
      %v3057 = vpop.f32.mrb[0].mxu0
      %v3058 = vadd.f32 %v2788, %v3057
      %v3059 = vpop.f32.mrb[0].mxu0
      %3060 = vmatprep.mubr.f32.mxu0 %v1769
      %3061 = vmatmul.mubr.f32.gmra.mrb[0].mxu0 %v1644
      %v3062 = vpop.f32.mrb[0].mxu0
      %v3063 = vadd.f32 %v2793, %v3062
      %v3064 = vpop.f32.mrb[0].mxu0
      %3065 = vmatprep.mubr.f32.mxu0 %v1771
      %3066 = vmatmul.mubr.f32.gmra.mrb[0].mxu0 %v1646
      %v3067 = vpop.f32.mrb[0].mxu0
      %v3068 = vadd.f32 %v2798, %v3067
      %v3069 = vpop.f32.mrb[0].mxu0
      %3070 = vmatprep.mubr.f32.mxu0 %v1773
      %3071 = vmatmul.mubr.f32.gmra.mrb[0].mxu0 %v1648
      %v3072 = vpop.f32.mrb[0].mxu0
      %v3073 = vadd.f32 %v2803, %v3072
      %v3074 = vpop.f32.mrb[0].mxu0
      %3075 = vmatprep.mubr.f32.mxu0 %v1775
      %3076 = vmatmul.mubr.f32.gmra.mrb[0].mxu0 %v1650
      %v3077 = vpop.f32.mrb[0].mxu0
      %v3078 = vadd.f32 %v2808, %v3077
      %v3079 = vpop.f32.mrb[0].mxu0
      %3080 = vmatprep.mubr.f32.mxu0 %v1777
      %3081 = vmatmul.mubr.f32.gmra.mrb[0].mxu0 %v1652
      %v3082 = vpop.f32.mrb[0].mxu0
      %v3083 = vadd.f32 %v2813, %v3082
      %v3084 = vpop.f32.mrb[0].mxu0
      %3085 = vmatprep.mubr.f32.mxu0 %v1779
      %3086 = vmatmul.mubr.f32.gmra.mrb[0].mxu0 %v1654
      %v3087 = vpop.f32.mrb[0].mxu0
      %v3088 = vadd.f32 %v2818, %v3087
      %v3089 = vpop.f32.mrb[0].mxu0
      %3090 = vmatprep.mubr.f32.mxu0 %v1781
      %3091 = vmatmul.mubr.f32.gmra.mrb[0].mxu0 %v1656
      %v3092 = vpop.f32.mrb[0].mxu0
      %v3093 = vadd.f32 %v2823, %v3092
      %v3094 = vpop.f32.mrb[0].mxu0
      %3095 = vmatprep.mubr.f32.mxu0 %v1783
      %3096 = vmatmul.mubr.f32.gmra.mrb[0].mxu0 %v1658
      %v3097 = vpop.f32.mrb[0].mxu0
      %v3098 = vadd.f32 %v2828, %v3097
      %v3099 = vpop.f32.mrb[0].mxu0
      %3100 = vmatprep.mubr.f32.mxu0 %v1785
      %3101 = vmatmul.mubr.f32.gmra.mrb[0].mxu0 %v1660
      %v3102 = vpop.f32.mrb[0].mxu0
      %v3103 = vadd.f32 %v2833, %v3102
      %v3104 = vpop.f32.mrb[0].mxu0
      %3105 = vmatprep.mubr.f32.mxu0 %v1787
      %3106 = vmatmul.mubr.f32.gmra.mrb[0].mxu0 %v1662
      %v3107 = vpop.f32.mrb[0].mxu0
      %v3108 = vadd.f32 %v2838, %v3107
      %v3109 = vpop.f32.mrb[0].mxu0
      %3110 = vmatprep.mubr.f32.mxu0 %v1789
      %3111 = vmatmul.mubr.f32.gmra.mrb[0].mxu0 %v1664
      %v3112 = vpop.f32.mrb[0].mxu0
      %v3113 = vadd.f32 %v2843, %v3112
      %v3114 = vpop.f32.mrb[0].mxu0
      %3115 = vmatprep.mubr.f32.mxu0 %v1791
      %3116 = vmatmul.mubr.f32.gmra.mrb[0].mxu0 %v1666
      %v3117 = vpop.f32.mrb[0].mxu0
      %v3118 = vadd.f32 %v2848, %v3117
      %v3119 = vpop.f32.mrb[0].mxu0
      %3120 = vmatprep.mubr.f32.mxu0 %v1793
      %3121 = vmatmul.mubr.f32.gmra.mrb[0].mxu0 %v1668
      %v3122 = vpop.f32.mrb[0].mxu0
      %v3123 = vadd.f32 %v2853, %v3122
      %v3124 = vpop.f32.mrb[0].mxu0
      %3125 = vmatprep.mubr.f32.mxu0 %v1795
      %3126 = vmatmul.mubr.f32.gmra.mrb[0].mxu0 %v1670
      %v3127 = vpop.f32.mrb[0].mxu0
      %v3128 = vadd.f32 %v2858, %v3127
      %v3129 = vpop.f32.mrb[0].mxu0
      %3130 = vmatprep.mubr.f32.mxu0 %v1797
      %3131 = vmatmul.mubr.f32.gmra.mrb[0].mxu0 %v1672
      %v3132 = vpop.f32.mrb[0].mxu0
      %v3133 = vadd.f32 %v2863, %v3132
      %v3134 = vpop.f32.mrb[0].mxu0
      %3135 = vmatprep.mubr.f32.mxu0 %v1799
      %3136 = vmatmul.mubr.f32.gmra.mrb[0].mxu0 %v1674
      %v3137 = vpop.f32.mrb[0].mxu0
      %v3138 = vadd.f32 %v2868, %v3137
      %v3139 = vpop.f32.mrb[0].mxu0
      %3140 = vmatprep.mubr.f32.mxu0 %v1801
      %3141 = vmatmul.mubr.f32.gmra.mrb[0].mxu0 %v1676
      %v3142 = vpop.f32.mrb[0].mxu0
      %v3143 = vadd.f32 %v2873, %v3142
      %v3144 = vpop.f32.mrb[0].mxu0
      %3145 = vmatprep.mubr.f32.mxu0 %v1803
      %3146 = vmatmul.mubr.f32.gmra.mrb[0].mxu0 %v1678
      %v3147 = vpop.f32.mrb[0].mxu0
      %v3148 = vadd.f32 %v2878, %v3147
      %v3149 = vpop.f32.mrb[0].mxu0
      %3150 = vmatprep.mubr.f32.mxu0 %v1805
      %3151 = vmatmul.mubr.f32.gmra.mrb[0].mxu0 %v1680
      %v3152 = vpop.f32.mrb[0].mxu0
      %v3153 = vadd.f32 %v2883, %v3152
      %v3154 = vpop.f32.mrb[0].mxu0
      %3155 = vmatprep.mubr.f32.mxu0 %v1807
      %3156 = vmatmul.mubr.f32.gmra.mrb[0].mxu0 %v1682
      %v3157 = vpop.f32.mrb[0].mxu0
      %v3158 = vadd.f32 %v2888, %v3157
      %v3159 = vpop.f32.mrb[0].mxu0
      %3160 = vmatprep.mubr.f32.mxu0 %v1809
      %3161 = vmatmul.mubr.f32.gmra.mrb[0].mxu0 %v1684
      %v3162 = vpop.f32.mrb[0].mxu0
      %v3163 = vadd.f32 %v2893, %v3162
      %v3164 = vpop.f32.mrb[0].mxu0
      %3165 = vmatprep.mubr.f32.mxu0 %v1811
      %3166 = vmatmul.mubr.f32.gmra.mrb[0].mxu0 %v1686
      %v3167 = vpop.f32.mrb[0].mxu0
      %v3168 = vadd.f32 %v2898, %v3167
      %v3169 = vpop.f32.mrb[0].mxu0
      %3170 = vmatprep.mubr.f32.mxu0 %v1813
      %3171 = vmatmul.mubr.f32.gmra.mrb[0].mxu0 %v1688
      %v3172 = vpop.f32.mrb[0].mxu0
      %v3173 = vadd.f32 %v2903, %v3172
      %v3174 = vpop.f32.mrb[0].mxu0
      %3175 = vmatprep.mubr.f32.mxu0 %v1815
      %3176 = vmatmul.mubr.f32.gmra.mrb[0].mxu0 %v1690
      %v3177 = vpop.f32.mrb[0].mxu0
      %v3178 = vadd.f32 %v2908, %v3177
      %v3179 = vpop.f32.mrb[0].mxu0
      %3180 = vmatprep.mubr.f32.mxu0 %v1817
      %3181 = vmatmul.mubr.f32.gmra.mrb[0].mxu0 %v1692
      %v3182 = vpop.f32.mrb[0].mxu0
      %v3183 = vadd.f32 %v2913, %v3182
      %v3184 = vpop.f32.mrb[0].mxu0
      %3185 = vmatprep.mubr.f32.mxu0 %v1819
      %3186 = vmatmul.mubr.f32.gmra.mrb[0].mxu0 %v1694
      %v3187 = vpop.f32.mrb[0].mxu0
      %v3188 = vadd.f32 %v2918, %v3187
      %v3189 = vpop.f32.mrb[0].mxu0
      %3190 = vmatprep.mubr.f32.mxu0 %v1821
      %3191 = vmatmul.mubr.f32.gmra.mrb[0].mxu0 %v1696
      %v3192 = vpop.f32.mrb[0].mxu0
      %v3193 = vadd.f32 %v2923, %v3192
      %v3194 = vpop.f32.mrb[0].mxu0
      %3195 = vmatprep.mubr.f32.mxu0 %v1823
      %3196 = vmatmul.mubr.f32.gmra.mrb[0].mxu0 %v1698
      %v3197 = vpop.f32.mrb[0].mxu0
      %v3198 = vadd.f32 %v2928, %v3197
      %v3199 = vpop.f32.mrb[0].mxu0
      %3200 = vmatprep.mubr.f32.mxu0 %v1825
      %3201 = vmatmul.mubr.f32.gmra.mrb[0].mxu0 %v1700
      %v3202 = vpop.f32.mrb[0].mxu0
      %v3203 = vadd.f32 %v2933, %v3202
      %v3204 = vpop.f32.mrb[0].mxu0
      %3205 = vmatprep.mubr.f32.mxu0 %v1827
      %3206 = vmatmul.mubr.f32.gmra.mrb[0].mxu0 %v1702
      %v3207 = vpop.f32.mrb[0].mxu0
      %v3208 = vadd.f32 %v2938, %v3207
      %v3209 = vpop.f32.mrb[0].mxu0
      %3210 = vmatprep.mubr.f32.mxu0 %v1829
      %3211 = vmatmul.mubr.f32.gmra.mrb[0].mxu0 %v1704
      %v3212 = vpop.f32.mrb[0].mxu0
      %v3213 = vadd.f32 %v2943, %v3212
      %v3214 = vpop.f32.mrb[0].mxu0
      %3215 = vmatprep.mubr.f32.mxu0 %v1831
      %3216 = vmatmul.mubr.f32.gmra.mrb[0].mxu0 %v1706
      %v3217 = vpop.f32.mrb[0].mxu0
      %v3218 = vadd.f32 %v2948, %v3217
      %v3219 = vpop.f32.mrb[0].mxu0
      %3220 = vmatprep.mubr.f32.mxu0 %v1833
      %3221 = vmatmul.mubr.f32.gmra.mrb[0].mxu0 %v1749
      %v3222 = vpop.f32.mrb[0].mxu0
      %v3223 = vadd.f32 %v2953, %v3222
      %v3224 = vpop.f32.mrb[0].mxu0
      %3225 = vmatprep.mubr.f32.mxu0 %v1834
      %3226 = vmatmul.mubr.f32.gmra.mrb[0].mxu0 %v1750
      %v3227 = vpop.f32.mrb[0].mxu0
      %v3228 = vadd.f32 %v2958, %v3227
      %v3229 = vpop.f32.mrb[0].mxu0
      %3230 = vdwg.mxu0
      %3231 = vmatprep.subr.mxu0 0.0
      %3232 = vmatpush1.msra.mxu0 %v2128
      %3233 = vmatprep.subr.mxu0 0.0
      %3234 = vmatpush1.msra.mxu0 %v2129
      %3235 = vmatprep.subr.mxu0 0.0
      %3236 = vmatpush1.msra.mxu0 %v2130
      %3237 = vmatprep.subr.mxu0 0.0
      %3238 = vmatpush1.msra.mxu0 %v2131
      %3239 = vmatprep.subr.mxu0 0.0
      %3240 = vmatpush1.msra.mxu0 %v2132
      %3241 = vmatprep.subr.mxu0 0.0
      %3242 = vmatpush1.msra.mxu0 %v2133
      %3243 = vmatprep.subr.mxu0 0.0
      %3244 = vmatpush1.msra.mxu0 %v2134
      %3245 = vmatprep.subr.mxu0 0.0
      %3246 = vmatpush1.msra.mxu0 %v2135
      %3247 = vmatprep.subr.mxu0 0.0
      %3248 = vmatpush1.msra.mxu0 %v2136
      %3249 = vmatprep.subr.mxu0 0.0
      %3250 = vmatpush1.msra.mxu0 %v2137
      %3251 = vmatprep.subr.mxu0 0.0
      %3252 = vmatpush1.msra.mxu0 %v2138
      %3253 = vmatprep.subr.mxu0 0.0
      %3254 = vmatpush1.msra.mxu0 %v2139
      %3255 = vmatprep.subr.mxu0 0.0
      %3256 = vmatpush1.msra.mxu0 %v2140
      %3257 = vmatprep.subr.mxu0 0.0
      %3258 = vmatpush1.msra.mxu0 %v2141
      %3259 = vmatprep.subr.mxu0 0.0
      %3260 = vmatpush1.msra.mxu0 %v2142
      %3261 = vmatprep.subr.mxu0 0.0
      %3262 = vmatpush1.msra.mxu0 %v2143
      %3263 = vmatprep.subr.mxu0 0.0
      %3264 = vmatpush1.msra.mxu0 0.0
      %3265 = vmatprep.subr.mxu0 0.0
      %3266 = vmatpush1.msra.mxu0 0.0
      %3267 = vmatprep.subr.mxu0 0.0
      %3268 = vmatpush1.msra.mxu0 0.0
      %3269 = vmatprep.subr.mxu0 0.0
      %3270 = vmatpush1.msra.mxu0 0.0
      %3271 = vmatprep.subr.mxu0 0.0
      %3272 = vmatpush1.msra.mxu0 0.0
      %3273 = vmatprep.subr.mxu0 0.0
      %3274 = vmatpush1.msra.mxu0 0.0
      %3275 = vmatprep.subr.mxu0 0.0
      %3276 = vmatpush1.msra.mxu0 0.0
      %3277 = vmatprep.subr.mxu0 0.0
      %3278 = vmatpush1.msra.mxu0 0.0
      %3279 = vmatprep.subr.mxu0 0.0
      %3280 = vmatpush1.msra.mxu0 0.0
      %3281 = vmatprep.subr.mxu0 0.0
      %3282 = vmatpush1.msra.mxu0 0.0
      %3283 = vmatprep.subr.mxu0 0.0
      %3284 = vmatpush1.msra.mxu0 0.0
      %3285 = vmatprep.subr.mxu0 0.0
      %3286 = vmatpush1.msra.mxu0 0.0
      %3287 = vmatprep.subr.mxu0 0.0
      %3288 = vmatpush1.msra.mxu0 0.0
      %3289 = vmatprep.subr.mxu0 0.0
      %3290 = vmatpush1.msra.mxu0 0.0
      %3291 = vmatprep.subr.mxu0 0.0
      %3292 = vmatpush1.msra.mxu0 0.0
      %3293 = vmatprep.subr.mxu0 0.0
      %3294 = vmatpush1.msra.mxu0 0.0
      %3295 = vmatprep.mubr.f32.mxu0 0.0
      %3296 = vmatmul.mubr.f32.gmra.mrb[0].mxu0 %v1879
      %v3297 = vpop.f32.mrb[0].mxu0
      %v3298 = vadd.f32 %v3028, %v3297
      %v3299 = vpop.f32.mrb[0].mxu0
      %3300 = vmatprep.mubr.f32.mxu0 0.0
      %3301 = vmatmul.mubr.f32.gmra.mrb[0].mxu0 %v1881
      %v3302 = vpop.f32.mrb[0].mxu0
      %v3303 = vadd.f32 %v3033, %v3302
      %v3304 = vpop.f32.mrb[0].mxu0
      %3305 = vmatprep.mubr.f32.mxu0 0.0
      %3306 = vmatmul.mubr.f32.gmra.mrb[0].mxu0 %v1883
      %v3307 = vpop.f32.mrb[0].mxu0
      %v3308 = vadd.f32 %v3038, %v3307
      %v3309 = vpop.f32.mrb[0].mxu0
      %3310 = vmatprep.mubr.f32.mxu0 0.0
      %3311 = vmatmul.mubr.f32.gmra.mrb[0].mxu0 %v1885
      %v3312 = vpop.f32.mrb[0].mxu0
      %v3313 = vadd.f32 %v3043, %v3312
      %v3314 = vpop.f32.mrb[0].mxu0
      %3315 = vmatprep.mubr.f32.mxu0 0.0
      %3316 = vmatmul.mubr.f32.gmra.mrb[0].mxu0 %v1887
      %v3317 = vpop.f32.mrb[0].mxu0
      %v3318 = vadd.f32 %v3048, %v3317
      %v3319 = vpop.f32.mrb[0].mxu0
      %3320 = vmatprep.mubr.f32.mxu0 0.0
      %3321 = vmatmul.mubr.f32.gmra.mrb[0].mxu0 %v1889
      %v3322 = vpop.f32.mrb[0].mxu0
      %v3323 = vadd.f32 %v3053, %v3322
      %v3324 = vpop.f32.mrb[0].mxu0
      %3325 = vmatprep.mubr.f32.mxu0 0.0
      %3326 = vmatmul.mubr.f32.gmra.mrb[0].mxu0 %v1891
      %v3327 = vpop.f32.mrb[0].mxu0
      %v3328 = vadd.f32 %v3058, %v3327
      %v3329 = vpop.f32.mrb[0].mxu0
      %3330 = vmatprep.mubr.f32.mxu0 0.0
      %3331 = vmatmul.mubr.f32.gmra.mrb[0].mxu0 %v1893
      %v3332 = vpop.f32.mrb[0].mxu0
      %v3333 = vadd.f32 %v3063, %v3332
      %v3334 = vpop.f32.mrb[0].mxu0
      %3335 = vmatprep.mubr.f32.mxu0 0.0
      %3336 = vmatmul.mubr.f32.gmra.mrb[0].mxu0 %v1895
      %v3337 = vpop.f32.mrb[0].mxu0
      %v3338 = vadd.f32 %v3068, %v3337
      %v3339 = vpop.f32.mrb[0].mxu0
      %3340 = vmatprep.mubr.f32.mxu0 0.0
      %3341 = vmatmul.mubr.f32.gmra.mrb[0].mxu0 %v1897
      %v3342 = vpop.f32.mrb[0].mxu0
      %v3343 = vadd.f32 %v3073, %v3342
      %v3344 = vpop.f32.mrb[0].mxu0
      %3345 = vmatprep.mubr.f32.mxu0 0.0
      %3346 = vmatmul.mubr.f32.gmra.mrb[0].mxu0 %v1899
      %v3347 = vpop.f32.mrb[0].mxu0
      %v3348 = vadd.f32 %v3078, %v3347
      %v3349 = vpop.f32.mrb[0].mxu0
      %3350 = vmatprep.mubr.f32.mxu0 0.0
      %3351 = vmatmul.mubr.f32.gmra.mrb[0].mxu0 %v1901
      %v3352 = vpop.f32.mrb[0].mxu0
      %v3353 = vadd.f32 %v3083, %v3352
      %v3354 = vpop.f32.mrb[0].mxu0
      %3355 = vmatprep.mubr.f32.mxu0 0.0
      %3356 = vmatmul.mubr.f32.gmra.mrb[0].mxu0 %v1903
      %v3357 = vpop.f32.mrb[0].mxu0
      %v3358 = vadd.f32 %v3088, %v3357
      %v3359 = vpop.f32.mrb[0].mxu0
      %3360 = vmatprep.mubr.f32.mxu0 0.0
      %3361 = vmatmul.mubr.f32.gmra.mrb[0].mxu0 %v1905
      %v3362 = vpop.f32.mrb[0].mxu0
      %v3363 = vadd.f32 %v3093, %v3362
      %v3364 = vpop.f32.mrb[0].mxu0
      %3365 = vmatprep.mubr.f32.mxu0 0.0
      %3366 = vmatmul.mubr.f32.gmra.mrb[0].mxu0 %v1907
      %v3367 = vpop.f32.mrb[0].mxu0
      %v3368 = vadd.f32 %v3098, %v3367
      %v3369 = vpop.f32.mrb[0].mxu0
      %3370 = vmatprep.mubr.f32.mxu0 0.0
      %3371 = vmatmul.mubr.f32.gmra.mrb[0].mxu0 %v1909
      %v3372 = vpop.f32.mrb[0].mxu0
      %v3373 = vadd.f32 %v3103, %v3372
      %v3374 = vpop.f32.mrb[0].mxu0
      %3375 = vmatprep.mubr.f32.mxu0 0.0
      %3376 = vmatmul.mubr.f32.gmra.mrb[0].mxu0 %v1911
      %v3377 = vpop.f32.mrb[0].mxu0
      %v3378 = vadd.f32 %v3108, %v3377
      %v3379 = vpop.f32.mrb[0].mxu0
      %3380 = vmatprep.mubr.f32.mxu0 0.0
      %3381 = vmatmul.mubr.f32.gmra.mrb[0].mxu0 %v1913
      %v3382 = vpop.f32.mrb[0].mxu0
      %v3383 = vadd.f32 %v3113, %v3382
      %v3384 = vpop.f32.mrb[0].mxu0
      %3385 = vmatprep.mubr.f32.mxu0 0.0
      %3386 = vmatmul.mubr.f32.gmra.mrb[0].mxu0 %v1915
      %v3387 = vpop.f32.mrb[0].mxu0
      %v3388 = vadd.f32 %v3118, %v3387
      %v3389 = vpop.f32.mrb[0].mxu0
      %3390 = vmatprep.mubr.f32.mxu0 0.0
      %3391 = vmatmul.mubr.f32.gmra.mrb[0].mxu0 %v1917
      %v3392 = vpop.f32.mrb[0].mxu0
      %v3393 = vadd.f32 %v3123, %v3392
      %v3394 = vpop.f32.mrb[0].mxu0
      %3395 = vmatprep.mubr.f32.mxu0 0.0
      %3396 = vmatmul.mubr.f32.gmra.mrb[0].mxu0 %v1919
      %v3397 = vpop.f32.mrb[0].mxu0
      %v3398 = vadd.f32 %v3128, %v3397
      %v3399 = vpop.f32.mrb[0].mxu0
      %3400 = vmatprep.mubr.f32.mxu0 0.0
      %3401 = vmatmul.mubr.f32.gmra.mrb[0].mxu0 %v1921
      %v3402 = vpop.f32.mrb[0].mxu0
      %v3403 = vadd.f32 %v3133, %v3402
      %v3404 = vpop.f32.mrb[0].mxu0
      %3405 = vmatprep.mubr.f32.mxu0 0.0
      %3406 = vmatmul.mubr.f32.gmra.mrb[0].mxu0 %v1923
      %v3407 = vpop.f32.mrb[0].mxu0
      %v3408 = vadd.f32 %v3138, %v3407
      %v3409 = vpop.f32.mrb[0].mxu0
      %3410 = vmatprep.mubr.f32.mxu0 0.0
      %3411 = vmatmul.mubr.f32.gmra.mrb[0].mxu0 %v1925
      %v3412 = vpop.f32.mrb[0].mxu0
      %v3413 = vadd.f32 %v3143, %v3412
      %v3414 = vpop.f32.mrb[0].mxu0
      %3415 = vmatprep.mubr.f32.mxu0 0.0
      %3416 = vmatmul.mubr.f32.gmra.mrb[0].mxu0 %v1927
      %v3417 = vpop.f32.mrb[0].mxu0
      %v3418 = vadd.f32 %v3148, %v3417
      %v3419 = vpop.f32.mrb[0].mxu0
      %3420 = vmatprep.mubr.f32.mxu0 0.0
      %3421 = vmatmul.mubr.f32.gmra.mrb[0].mxu0 %v1929
      %v3422 = vpop.f32.mrb[0].mxu0
      %v3423 = vadd.f32 %v3153, %v3422
      %v3424 = vpop.f32.mrb[0].mxu0
      %3425 = vmatprep.mubr.f32.mxu0 0.0
      %3426 = vmatmul.mubr.f32.gmra.mrb[0].mxu0 %v1931
      %v3427 = vpop.f32.mrb[0].mxu0
      %v3428 = vadd.f32 %v3158, %v3427
      %v3429 = vpop.f32.mrb[0].mxu0
      %3430 = vmatprep.mubr.f32.mxu0 0.0
      %3431 = vmatmul.mubr.f32.gmra.mrb[0].mxu0 %v1933
      %v3432 = vpop.f32.mrb[0].mxu0
      %v3433 = vadd.f32 %v3163, %v3432
      %v3434 = vpop.f32.mrb[0].mxu0
      %3435 = vmatprep.mubr.f32.mxu0 0.0
      %3436 = vmatmul.mubr.f32.gmra.mrb[0].mxu0 %v1935
      %v3437 = vpop.f32.mrb[0].mxu0
      %v3438 = vadd.f32 %v3168, %v3437
      %v3439 = vpop.f32.mrb[0].mxu0
      %3440 = vmatprep.mubr.f32.mxu0 0.0
      %3441 = vmatmul.mubr.f32.gmra.mrb[0].mxu0 %v1937
      %v3442 = vpop.f32.mrb[0].mxu0
      %v3443 = vadd.f32 %v3173, %v3442
      %v3444 = vpop.f32.mrb[0].mxu0
      %3445 = vmatprep.mubr.f32.mxu0 0.0
      %3446 = vmatmul.mubr.f32.gmra.mrb[0].mxu0 %v1939
      %v3447 = vpop.f32.mrb[0].mxu0
      %v3448 = vadd.f32 %v3178, %v3447
      %v3449 = vpop.f32.mrb[0].mxu0
      %3450 = vmatprep.mubr.f32.mxu0 0.0
      %3451 = vmatmul.mubr.f32.gmra.mrb[0].mxu0 %v1941
      %v3452 = vpop.f32.mrb[0].mxu0
      %v3453 = vadd.f32 %v3183, %v3452
      %v3454 = vpop.f32.mrb[0].mxu0
      %3455 = vmatprep.mubr.f32.mxu0 0.0
      %3456 = vmatmul.mubr.f32.gmra.mrb[0].mxu0 %v1943
      %v3457 = vpop.f32.mrb[0].mxu0
      %v3458 = vadd.f32 %v3188, %v3457
      %v3459 = vpop.f32.mrb[0].mxu0
      %3460 = vmatprep.mubr.f32.mxu0 0.0
      %3461 = vmatmul.mubr.f32.gmra.mrb[0].mxu0 %v1945
      %v3462 = vpop.f32.mrb[0].mxu0
      %v3463 = vadd.f32 %v3193, %v3462
      %v3464 = vpop.f32.mrb[0].mxu0
      %3465 = vmatprep.mubr.f32.mxu0 0.0
      %3466 = vmatmul.mubr.f32.gmra.mrb[0].mxu0 %v1947
      %v3467 = vpop.f32.mrb[0].mxu0
      %v3468 = vadd.f32 %v3198, %v3467
      %v3469 = vpop.f32.mrb[0].mxu0
      %3470 = vmatprep.mubr.f32.mxu0 0.0
      %3471 = vmatmul.mubr.f32.gmra.mrb[0].mxu0 %v1949
      %v3472 = vpop.f32.mrb[0].mxu0
      %v3473 = vadd.f32 %v3203, %v3472
      %v3474 = vpop.f32.mrb[0].mxu0
      %3475 = vmatprep.mubr.f32.mxu0 0.0
      %3476 = vmatmul.mubr.f32.gmra.mrb[0].mxu0 %v1951
      %v3477 = vpop.f32.mrb[0].mxu0
      %v3478 = vadd.f32 %v3208, %v3477
      %v3479 = vpop.f32.mrb[0].mxu0
      %3480 = vmatprep.mubr.f32.mxu0 0.0
      %3481 = vmatmul.mubr.f32.gmra.mrb[0].mxu0 %v1953
      %v3482 = vpop.f32.mrb[0].mxu0
      %v3483 = vadd.f32 %v3213, %v3482
      %v3484 = vpop.f32.mrb[0].mxu0
      %3485 = vmatprep.mubr.f32.mxu0 0.0
      %3486 = vmatmul.mubr.f32.gmra.mrb[0].mxu0 %v1955
      %v3487 = vpop.f32.mrb[0].mxu0
      %v3488 = vadd.f32 %v3218, %v3487
      %v3489 = vpop.f32.mrb[0].mxu0
      %3490 = vmatprep.mubr.f32.mxu0 0.0
      %3491 = vmatmul.mubr.f32.gmra.mrb[0].mxu0 %v1957
      %v3492 = vpop.f32.mrb[0].mxu0
      %v3493 = vadd.f32 %v3223, %v3492
      %v3494 = vpop.f32.mrb[0].mxu0
      %3495 = vmatprep.mubr.f32.mxu0 0.0
      %3496 = vmatmul.mubr.f32.gmra.mrb[0].mxu0 %v1958
      %v3497 = vpop.f32.mrb[0].mxu0
      %v3498 = vadd.f32 %v3228, %v3497
      %v3499 = vpop.f32.mrb[0].mxu0
      %3500 = vdwg.mxu0
      %v3501 = vmax.f32 %v3298, 0.0
      %v3502 = vmax.f32 %v3303, 0.0
      %v3503 = vmax.f32 %v3308, 0.0
      %v3504 = vmax.f32 %v3313, 0.0
      %v3505 = vmax.f32 %v3318, 0.0
      %v3506 = vmax.f32 %v3323, 0.0
      %v3507 = vmax.f32 %v3328, 0.0
      %v3508 = vmax.f32 %v3333, 0.0
      %v3509 = vmax.f32 %v3338, 0.0
      %v3510 = vmax.f32 %v3343, 0.0
      %v3511 = vmax.f32 %v3348, 0.0
      %v3512 = vmax.f32 %v3353, 0.0
      %v3513 = vmax.f32 %v3358, 0.0
      %v3514 = vmax.f32 %v3363, 0.0
      %v3515 = vmax.f32 %v3368, 0.0
      %v3516 = vmax.f32 %v3373, 0.0
      %v3517 = vmax.f32 %v3378, 0.0
      %v3518 = vmax.f32 %v3383, 0.0
      %v3519 = vmax.f32 %v3388, 0.0
      %v3520 = vmax.f32 %v3393, 0.0
      %v3521 = vmax.f32 %v3398, 0.0
      %v3522 = vmax.f32 %v3403, 0.0
      %v3523 = vmax.f32 %v3408, 0.0
      %v3524 = vmax.f32 %v3413, 0.0
      %v3525 = vmax.f32 %v3418, 0.0
      %v3526 = vmax.f32 %v3423, 0.0
      %v3527 = vmax.f32 %v3428, 0.0
      %v3528 = vmax.f32 %v3433, 0.0
      %v3529 = vmax.f32 %v3438, 0.0
      %v3530 = vmax.f32 %v3443, 0.0
      %v3531 = vmax.f32 %v3448, 0.0
      %v3532 = vmax.f32 %v3453, 0.0
      %v3533 = vmax.f32 %v3458, 0.0
      %v3534 = vmax.f32 %v3463, 0.0
      %v3535 = vmax.f32 %v3468, 0.0
      %v3536 = vmax.f32 %v3473, 0.0
      %v3537 = vmax.f32 %v3478, 0.0
      %v3538 = vmax.f32 %v3483, 0.0
      %v3539 = vmax.f32 %v3488, 0.0
      %v3540 = vmax.f32 %v3493, 0.0
      %v3541 = vmax.f32 %v3498, 0.0
      %v3542 = vld [vmem:[%s6] sm:$0xff]
      %v3543 = vld [vmem:[%s6 + $0x8] sm:$0xff]
      %v3544 = vld [vmem:[%s6 + $0x10] sm:$0xff]
      %v3545 = vld [vmem:[%s6 + $0x18] sm:$0xff]
      %v3546 = vld [vmem:[%s6 + $0x20] sm:$0xff]
      %v3547 = vld [vmem:[%s6 + $0x28] sm:$0xff]
      %v3548 = vld [vmem:[%s6 + $0x30] sm:$0xff]
      %v3549 = vld [vmem:[%s6 + $0x38] sm:$0xff]
      %v3550 = vld [vmem:[%s6 + $0x40] sm:$0xff]
      %v3551 = vld [vmem:[%s6 + $0x48] sm:$0xff]
      %v3552 = vld [vmem:[%s6 + $0x50] sm:$0xff]
      %v3553 = vld [vmem:[%s6 + $0x58] sm:$0xff]
      %v3554 = vld [vmem:[%s6 + $0x60] sm:$0xff]
      %v3555 = vld [vmem:[%s6 + $0x68] sm:$0xff]
      %v3556 = vld [vmem:[%s6 + $0x70] sm:$0xff]
      %v3557 = vld [vmem:[%s6 + $0x78] sm:$0xff]
      %v3558 = vld [vmem:[%s7] sm:$0x1]
      %v3560 = vlaneseq
      %v3561 = vshrl.u32 %v3560, 7
      %v3562 = vsub.s32 0, %v3561
      %v3563 = vrot.slane %v3558, %v3562
      %3565 = vmatprep.subr.mxu0 0.0
      %3566 = vmatpush1.msra.mxu0 %v3542
      %3567 = vmatprep.subr.mxu0 0.0
      %3568 = vmatpush1.msra.mxu0 %v3543
      %3569 = vmatprep.subr.mxu0 0.0
      %3570 = vmatpush1.msra.mxu0 %v3544
      %3571 = vmatprep.subr.mxu0 0.0
      %3572 = vmatpush1.msra.mxu0 %v3545
      %3573 = vmatprep.subr.mxu0 0.0
      %3574 = vmatpush1.msra.mxu0 %v3546
      %3575 = vmatprep.subr.mxu0 0.0
      %3576 = vmatpush1.msra.mxu0 %v3547
      %3577 = vmatprep.subr.mxu0 0.0
      %3578 = vmatpush1.msra.mxu0 %v3548
      %3579 = vmatprep.subr.mxu0 0.0
      %3580 = vmatpush1.msra.mxu0 %v3549
      %3581 = vmatprep.subr.mxu0 0.0
      %3582 = vmatpush1.msra.mxu0 %v3550
      %3583 = vmatprep.subr.mxu0 0.0
      %3584 = vmatpush1.msra.mxu0 %v3551
      %3585 = vmatprep.subr.mxu0 0.0
      %3586 = vmatpush1.msra.mxu0 %v3552
      %3587 = vmatprep.subr.mxu0 0.0
      %3588 = vmatpush1.msra.mxu0 %v3553
      %3589 = vmatprep.subr.mxu0 0.0
      %3590 = vmatpush1.msra.mxu0 %v3554
      %3591 = vmatprep.subr.mxu0 0.0
      %3592 = vmatpush1.msra.mxu0 %v3555
      %3593 = vmatprep.subr.mxu0 0.0
      %3594 = vmatpush1.msra.mxu0 %v3556
      %3595 = vmatprep.subr.mxu0 0.0
      %3596 = vmatpush1.msra.mxu0 %v3557
      %3597 = vmatprep.subr.mxu0 0.0
      %3598 = vmatpush1.msra.mxu0 0.0
      %3599 = vmatprep.subr.mxu0 0.0
      %3600 = vmatpush1.msra.mxu0 0.0
      %3601 = vmatprep.subr.mxu0 0.0
      %3602 = vmatpush1.msra.mxu0 0.0
      %3603 = vmatprep.subr.mxu0 0.0
      %3604 = vmatpush1.msra.mxu0 0.0
      %3605 = vmatprep.subr.mxu0 0.0
      %3606 = vmatpush1.msra.mxu0 0.0
      %3607 = vmatprep.subr.mxu0 0.0
      %3608 = vmatpush1.msra.mxu0 0.0
      %3609 = vmatprep.subr.mxu0 0.0
      %3610 = vmatpush1.msra.mxu0 0.0
      %3611 = vmatprep.subr.mxu0 0.0
      %3612 = vmatpush1.msra.mxu0 0.0
      %3613 = vmatprep.subr.mxu0 0.0
      %3614 = vmatpush1.msra.mxu0 0.0
      %3615 = vmatprep.subr.mxu0 0.0
      %3616 = vmatpush1.msra.mxu0 0.0
      %3617 = vmatprep.subr.mxu0 0.0
      %3618 = vmatpush1.msra.mxu0 0.0
      %3619 = vmatprep.subr.mxu0 0.0
      %3620 = vmatpush1.msra.mxu0 0.0
      %3621 = vmatprep.subr.mxu0 0.0
      %3622 = vmatpush1.msra.mxu0 0.0
      %3623 = vmatprep.subr.mxu0 0.0
      %3624 = vmatpush1.msra.mxu0 0.0
      %3625 = vmatprep.subr.mxu0 0.0
      %3626 = vmatpush1.msra.mxu0 0.0
      %3627 = vmatprep.subr.mxu0 0.0
      %3628 = vmatpush1.msra.mxu0 0.0
      %3629 = vmatprep.mubr.f32.mxu0 0.0
      %3630 = vmatmul.mubr.f32.gmra.mrb[0].mxu0 %v3501
      %v3631 = vpop.f32.mrb[0].mxu0
      %v3632 = vadd.f32 %v3563, %v3631
      %v3633 = vpop.f32.mrb[0].mxu0
      %3634 = vmatprep.mubr.f32.mxu0 0.0
      %3635 = vmatmul.mubr.f32.gmra.mrb[0].mxu0 %v3502
      %v3636 = vpop.f32.mrb[0].mxu0
      %v3637 = vadd.f32 %v3563, %v3636
      %v3638 = vpop.f32.mrb[0].mxu0
      %3639 = vmatprep.mubr.f32.mxu0 0.0
      %3640 = vmatmul.mubr.f32.gmra.mrb[0].mxu0 %v3503
      %v3641 = vpop.f32.mrb[0].mxu0
      %v3642 = vadd.f32 %v3563, %v3641
      %v3643 = vpop.f32.mrb[0].mxu0
      %3644 = vmatprep.mubr.f32.mxu0 0.0
      %3645 = vmatmul.mubr.f32.gmra.mrb[0].mxu0 %v3504
      %v3646 = vpop.f32.mrb[0].mxu0
      %v3647 = vadd.f32 %v3563, %v3646
      %v3648 = vpop.f32.mrb[0].mxu0
      %3649 = vmatprep.mubr.f32.mxu0 0.0
      %3650 = vmatmul.mubr.f32.gmra.mrb[0].mxu0 %v3505
      %v3651 = vpop.f32.mrb[0].mxu0
      %v3652 = vadd.f32 %v3563, %v3651
      %v3653 = vpop.f32.mrb[0].mxu0
      %3654 = vmatprep.mubr.f32.mxu0 0.0
      %3655 = vmatmul.mubr.f32.gmra.mrb[0].mxu0 %v3506
      %v3656 = vpop.f32.mrb[0].mxu0
      %v3657 = vadd.f32 %v3563, %v3656
      %v3658 = vpop.f32.mrb[0].mxu0
      %3659 = vmatprep.mubr.f32.mxu0 0.0
      %3660 = vmatmul.mubr.f32.gmra.mrb[0].mxu0 %v3507
      %v3661 = vpop.f32.mrb[0].mxu0
      %v3662 = vadd.f32 %v3563, %v3661
      %v3663 = vpop.f32.mrb[0].mxu0
      %3664 = vmatprep.mubr.f32.mxu0 0.0
      %3665 = vmatmul.mubr.f32.gmra.mrb[0].mxu0 %v3508
      %v3666 = vpop.f32.mrb[0].mxu0
      %v3667 = vadd.f32 %v3563, %v3666
      %v3668 = vpop.f32.mrb[0].mxu0
      %3669 = vmatprep.mubr.f32.mxu0 0.0
      %3670 = vmatmul.mubr.f32.gmra.mrb[0].mxu0 %v3509
      %v3671 = vpop.f32.mrb[0].mxu0
      %v3672 = vadd.f32 %v3563, %v3671
      %v3673 = vpop.f32.mrb[0].mxu0
      %3674 = vmatprep.mubr.f32.mxu0 0.0
      %3675 = vmatmul.mubr.f32.gmra.mrb[0].mxu0 %v3510
      %v3676 = vpop.f32.mrb[0].mxu0
      %v3677 = vadd.f32 %v3563, %v3676
      %v3678 = vpop.f32.mrb[0].mxu0
      %3679 = vmatprep.mubr.f32.mxu0 0.0
      %3680 = vmatmul.mubr.f32.gmra.mrb[0].mxu0 %v3511
      %v3681 = vpop.f32.mrb[0].mxu0
      %v3682 = vadd.f32 %v3563, %v3681
      %v3683 = vpop.f32.mrb[0].mxu0
      %3684 = vmatprep.mubr.f32.mxu0 0.0
      %3685 = vmatmul.mubr.f32.gmra.mrb[0].mxu0 %v3512
      %v3686 = vpop.f32.mrb[0].mxu0
      %v3687 = vadd.f32 %v3563, %v3686
      %v3688 = vpop.f32.mrb[0].mxu0
      %3689 = vmatprep.mubr.f32.mxu0 0.0
      %3690 = vmatmul.mubr.f32.gmra.mrb[0].mxu0 %v3513
      %v3691 = vpop.f32.mrb[0].mxu0
      %v3692 = vadd.f32 %v3563, %v3691
      %v3693 = vpop.f32.mrb[0].mxu0
      %3694 = vmatprep.mubr.f32.mxu0 0.0
      %3695 = vmatmul.mubr.f32.gmra.mrb[0].mxu0 %v3514
      %v3696 = vpop.f32.mrb[0].mxu0
      %v3697 = vadd.f32 %v3563, %v3696
      %v3698 = vpop.f32.mrb[0].mxu0
      %3699 = vmatprep.mubr.f32.mxu0 0.0
      %3700 = vmatmul.mubr.f32.gmra.mrb[0].mxu0 %v3515
      %v3701 = vpop.f32.mrb[0].mxu0
      %v3702 = vadd.f32 %v3563, %v3701
      %v3703 = vpop.f32.mrb[0].mxu0
      %3704 = vmatprep.mubr.f32.mxu0 0.0
      %3705 = vmatmul.mubr.f32.gmra.mrb[0].mxu0 %v3516
      %v3706 = vpop.f32.mrb[0].mxu0
      %v3707 = vadd.f32 %v3563, %v3706
      %v3708 = vpop.f32.mrb[0].mxu0
      %3709 = vmatprep.mubr.f32.mxu0 0.0
      %3710 = vmatmul.mubr.f32.gmra.mrb[0].mxu0 %v3517
      %v3711 = vpop.f32.mrb[0].mxu0
      %v3712 = vadd.f32 %v3563, %v3711
      %v3713 = vpop.f32.mrb[0].mxu0
      %3714 = vmatprep.mubr.f32.mxu0 0.0
      %3715 = vmatmul.mubr.f32.gmra.mrb[0].mxu0 %v3518
      %v3716 = vpop.f32.mrb[0].mxu0
      %v3717 = vadd.f32 %v3563, %v3716
      %v3718 = vpop.f32.mrb[0].mxu0
      %3719 = vmatprep.mubr.f32.mxu0 0.0
      %3720 = vmatmul.mubr.f32.gmra.mrb[0].mxu0 %v3519
      %v3721 = vpop.f32.mrb[0].mxu0
      %v3722 = vadd.f32 %v3563, %v3721
      %v3723 = vpop.f32.mrb[0].mxu0
      %3724 = vmatprep.mubr.f32.mxu0 0.0
      %3725 = vmatmul.mubr.f32.gmra.mrb[0].mxu0 %v3520
      %v3726 = vpop.f32.mrb[0].mxu0
      %v3727 = vadd.f32 %v3563, %v3726
      %v3728 = vpop.f32.mrb[0].mxu0
      %3729 = vmatprep.mubr.f32.mxu0 0.0
      %3730 = vmatmul.mubr.f32.gmra.mrb[0].mxu0 %v3521
      %v3731 = vpop.f32.mrb[0].mxu0
      %v3732 = vadd.f32 %v3563, %v3731
      %v3733 = vpop.f32.mrb[0].mxu0
      %3734 = vmatprep.mubr.f32.mxu0 0.0
      %3735 = vmatmul.mubr.f32.gmra.mrb[0].mxu0 %v3522
      %v3736 = vpop.f32.mrb[0].mxu0
      %v3737 = vadd.f32 %v3563, %v3736
      %v3738 = vpop.f32.mrb[0].mxu0
      %3739 = vmatprep.mubr.f32.mxu0 0.0
      %3740 = vmatmul.mubr.f32.gmra.mrb[0].mxu0 %v3523
      %v3741 = vpop.f32.mrb[0].mxu0
      %v3742 = vadd.f32 %v3563, %v3741
      %v3743 = vpop.f32.mrb[0].mxu0
      %3744 = vmatprep.mubr.f32.mxu0 0.0
      %3745 = vmatmul.mubr.f32.gmra.mrb[0].mxu0 %v3524
      %v3746 = vpop.f32.mrb[0].mxu0
      %v3747 = vadd.f32 %v3563, %v3746
      %v3748 = vpop.f32.mrb[0].mxu0
      %3749 = vmatprep.mubr.f32.mxu0 0.0
      %3750 = vmatmul.mubr.f32.gmra.mrb[0].mxu0 %v3525
      %v3751 = vpop.f32.mrb[0].mxu0
      %v3752 = vadd.f32 %v3563, %v3751
      %v3753 = vpop.f32.mrb[0].mxu0
      %3754 = vmatprep.mubr.f32.mxu0 0.0
      %3755 = vmatmul.mubr.f32.gmra.mrb[0].mxu0 %v3526
      %v3756 = vpop.f32.mrb[0].mxu0
      %v3757 = vadd.f32 %v3563, %v3756
      %v3758 = vpop.f32.mrb[0].mxu0
      %3759 = vmatprep.mubr.f32.mxu0 0.0
      %3760 = vmatmul.mubr.f32.gmra.mrb[0].mxu0 %v3527
      %v3761 = vpop.f32.mrb[0].mxu0
      %v3762 = vadd.f32 %v3563, %v3761
      %v3763 = vpop.f32.mrb[0].mxu0
      %3764 = vmatprep.mubr.f32.mxu0 0.0
      %3765 = vmatmul.mubr.f32.gmra.mrb[0].mxu0 %v3528
      %v3766 = vpop.f32.mrb[0].mxu0
      %v3767 = vadd.f32 %v3563, %v3766
      %v3768 = vpop.f32.mrb[0].mxu0
      %3769 = vmatprep.mubr.f32.mxu0 0.0
      %3770 = vmatmul.mubr.f32.gmra.mrb[0].mxu0 %v3529
      %v3771 = vpop.f32.mrb[0].mxu0
      %v3772 = vadd.f32 %v3563, %v3771
      %v3773 = vpop.f32.mrb[0].mxu0
      %3774 = vmatprep.mubr.f32.mxu0 0.0
      %3775 = vmatmul.mubr.f32.gmra.mrb[0].mxu0 %v3530
      %v3776 = vpop.f32.mrb[0].mxu0
      %v3777 = vadd.f32 %v3563, %v3776
      %v3778 = vpop.f32.mrb[0].mxu0
      %3779 = vmatprep.mubr.f32.mxu0 0.0
      %3780 = vmatmul.mubr.f32.gmra.mrb[0].mxu0 %v3531
      %v3781 = vpop.f32.mrb[0].mxu0
      %v3782 = vadd.f32 %v3563, %v3781
      %v3783 = vpop.f32.mrb[0].mxu0
      %3784 = vmatprep.mubr.f32.mxu0 0.0
      %3785 = vmatmul.mubr.f32.gmra.mrb[0].mxu0 %v3532
      %v3786 = vpop.f32.mrb[0].mxu0
      %v3787 = vadd.f32 %v3563, %v3786
      %v3788 = vpop.f32.mrb[0].mxu0
      %3789 = vmatprep.mubr.f32.mxu0 0.0
      %3790 = vmatmul.mubr.f32.gmra.mrb[0].mxu0 %v3533
      %v3791 = vpop.f32.mrb[0].mxu0
      %v3792 = vadd.f32 %v3563, %v3791
      %v3793 = vpop.f32.mrb[0].mxu0
      %3794 = vmatprep.mubr.f32.mxu0 0.0
      %3795 = vmatmul.mubr.f32.gmra.mrb[0].mxu0 %v3534
      %v3796 = vpop.f32.mrb[0].mxu0
      %v3797 = vadd.f32 %v3563, %v3796
      %v3798 = vpop.f32.mrb[0].mxu0
      %3799 = vmatprep.mubr.f32.mxu0 0.0
      %3800 = vmatmul.mubr.f32.gmra.mrb[0].mxu0 %v3535
      %v3801 = vpop.f32.mrb[0].mxu0
      %v3802 = vadd.f32 %v3563, %v3801
      %v3803 = vpop.f32.mrb[0].mxu0
      %3804 = vmatprep.mubr.f32.mxu0 0.0
      %3805 = vmatmul.mubr.f32.gmra.mrb[0].mxu0 %v3536
      %v3806 = vpop.f32.mrb[0].mxu0
      %v3807 = vadd.f32 %v3563, %v3806
      %v3808 = vpop.f32.mrb[0].mxu0
      %3809 = vmatprep.mubr.f32.mxu0 0.0
      %3810 = vmatmul.mubr.f32.gmra.mrb[0].mxu0 %v3537
      %v3811 = vpop.f32.mrb[0].mxu0
      %v3812 = vadd.f32 %v3563, %v3811
      %v3813 = vpop.f32.mrb[0].mxu0
      %3814 = vmatprep.mubr.f32.mxu0 0.0
      %3815 = vmatmul.mubr.f32.gmra.mrb[0].mxu0 %v3538
      %v3816 = vpop.f32.mrb[0].mxu0
      %v3817 = vadd.f32 %v3563, %v3816
      %v3818 = vpop.f32.mrb[0].mxu0
      %3819 = vmatprep.mubr.f32.mxu0 0.0
      %3820 = vmatmul.mubr.f32.gmra.mrb[0].mxu0 %v3539
      %v3821 = vpop.f32.mrb[0].mxu0
      %v3822 = vadd.f32 %v3563, %v3821
      %v3823 = vpop.f32.mrb[0].mxu0
      %3824 = vmatprep.mubr.f32.mxu0 0.0
      %3825 = vmatmul.mubr.f32.gmra.mrb[0].mxu0 %v3540
      %v3826 = vpop.f32.mrb[0].mxu0
      %v3827 = vadd.f32 %v3563, %v3826
      %v3828 = vpop.f32.mrb[0].mxu0
      %3829 = vmatprep.mubr.f32.mxu0 0.0
      %3830 = vmatmul.mubr.f32.gmra.mrb[0].mxu0 %v3541
      %v3831 = vpop.f32.mrb[0].mxu0
      %v3832 = vadd.f32 %v3563, %v3831
      %v3833 = vpop.f32.mrb[0].mxu0
      %3834 = vdwg.mxu0
      %v3835 = vmax.f32 %v3632, 0.0
      %v3836 = vmax.f32 %v3637, 0.0
      %v3837 = vmax.f32 %v3642, 0.0
      %v3838 = vmax.f32 %v3647, 0.0
      %v3839 = vmax.f32 %v3652, 0.0
      %v3840 = vmax.f32 %v3657, 0.0
      %v3841 = vmax.f32 %v3662, 0.0
      %v3842 = vmax.f32 %v3667, 0.0
      %v3843 = vmax.f32 %v3672, 0.0
      %v3844 = vmax.f32 %v3677, 0.0
      %v3845 = vmax.f32 %v3682, 0.0
      %v3846 = vmax.f32 %v3687, 0.0
      %v3847 = vmax.f32 %v3692, 0.0
      %v3848 = vmax.f32 %v3697, 0.0
      %v3849 = vmax.f32 %v3702, 0.0
      %v3850 = vmax.f32 %v3707, 0.0
      %v3851 = vmax.f32 %v3712, 0.0
      %v3852 = vmax.f32 %v3717, 0.0
      %v3853 = vmax.f32 %v3722, 0.0
      %v3854 = vmax.f32 %v3727, 0.0
      %v3855 = vmax.f32 %v3732, 0.0
      %v3856 = vmax.f32 %v3737, 0.0
      %v3857 = vmax.f32 %v3742, 0.0
      %v3858 = vmax.f32 %v3747, 0.0
      %v3859 = vmax.f32 %v3752, 0.0
      %v3860 = vmax.f32 %v3757, 0.0
      %v3861 = vmax.f32 %v3762, 0.0
      %v3862 = vmax.f32 %v3767, 0.0
      %v3863 = vmax.f32 %v3772, 0.0
      %v3864 = vmax.f32 %v3777, 0.0
      %v3865 = vmax.f32 %v3782, 0.0
      %v3866 = vmax.f32 %v3787, 0.0
      %v3867 = vmax.f32 %v3792, 0.0
      %v3868 = vmax.f32 %v3797, 0.0
      %v3869 = vmax.f32 %v3802, 0.0
      %v3870 = vmax.f32 %v3807, 0.0
      %v3871 = vmax.f32 %v3812, 0.0
      %v3872 = vmax.f32 %v3817, 0.0
      %v3873 = vmax.f32 %v3822, 0.0
      %v3874 = vmax.f32 %v3827, 0.0
      %v3875 = vmax.f32 %v3832, 0.0
      %v3876 = vmul.f32 %v3835, %v833
      %v3877 = vmul.f32 %v3836, %v838
      %v3878 = vmul.f32 %v3837, %v843
      %v3879 = vmul.f32 %v3838, %v848
      %v3880 = vmul.f32 %v3839, %v853
      %v3881 = vmul.f32 %v3840, %v858
      %v3882 = vmul.f32 %v3841, %v863
      %v3883 = vmul.f32 %v3842, %v868
      %v3884 = vmul.f32 %v3843, %v873
      %v3885 = vmul.f32 %v3844, %v878
      %v3886 = vmul.f32 %v3845, %v883
      %v3887 = vmul.f32 %v3846, %v888
      %v3888 = vmul.f32 %v3847, %v893
      %v3889 = vmul.f32 %v3848, %v898
      %v3890 = vmul.f32 %v3849, %v903
      %v3891 = vmul.f32 %v3850, %v908
      %v3892 = vmul.f32 %v3851, %v913
      %v3893 = vmul.f32 %v3852, %v918
      %v3894 = vmul.f32 %v3853, %v923
      %v3895 = vmul.f32 %v3854, %v928
      %v3896 = vmul.f32 %v3855, %v933
      %v3897 = vmul.f32 %v3856, %v938
      %v3898 = vmul.f32 %v3857, %v943
      %v3899 = vmul.f32 %v3858, %v948
      %v3900 = vmul.f32 %v3859, %v953
      %v3901 = vmul.f32 %v3860, %v958
      %v3902 = vmul.f32 %v3861, %v963
      %v3903 = vmul.f32 %v3862, %v968
      %v3904 = vmul.f32 %v3863, %v973
      %v3905 = vmul.f32 %v3864, %v978
      %v3906 = vmul.f32 %v3865, %v983
      %v3907 = vmul.f32 %v3866, %v988
      %v3908 = vmul.f32 %v3867, %v993
      %v3909 = vmul.f32 %v3868, %v998
      %v3910 = vmul.f32 %v3869, %v1003
      %v3911 = vmul.f32 %v3870, %v1008
      %v3912 = vmul.f32 %v3871, %v1013
      %v3913 = vmul.f32 %v3872, %v1018
      %v3914 = vmul.f32 %v3873, %v1023
      %v3915 = vmul.f32 %v3874, %v1028
      %v3916 = vmul.f32 %v3875, %v1033
      %v3958 = vrot.slane %v3876, 5
      %v3959 = vrot.slane %v3877, 5
      %v3960 = vsel %vm1117, %v3958, %v3959
      %v3961 = vrot.slane %v3878, 5
      %v3962 = vsel %vm1117, %v3959, %v3961
      %v3963 = vrot.slane %v3879, 5
      %v3964 = vsel %vm1117, %v3961, %v3963
      %v3965 = vrot.slane %v3880, 5
      %v3966 = vsel %vm1117, %v3963, %v3965
      %v3967 = vrot.slane %v3881, 5
      %v3968 = vsel %vm1117, %v3965, %v3967
      %v3969 = vrot.slane %v3882, 5
      %v3970 = vsel %vm1117, %v3967, %v3969
      %v3971 = vrot.slane %v3883, 5
      %v3972 = vsel %vm1117, %v3969, %v3971
      %v3973 = vrot.slane %v3884, 5
      %v3974 = vsel %vm1117, %v3971, %v3973
      %v3975 = vrot.slane %v3885, 5
      %v3976 = vsel %vm1117, %v3973, %v3975
      %v3977 = vrot.slane %v3886, 5
      %v3978 = vsel %vm1117, %v3975, %v3977
      %v3979 = vrot.slane %v3887, 5
      %v3980 = vsel %vm1117, %v3977, %v3979
      %v3981 = vrot.slane %v3888, 5
      %v3982 = vsel %vm1117, %v3979, %v3981
      %v3983 = vrot.slane %v3889, 5
      %v3984 = vsel %vm1117, %v3981, %v3983
      %v3985 = vrot.slane %v3890, 5
      %v3986 = vsel %vm1117, %v3983, %v3985
      %v3987 = vrot.slane %v3891, 5
      %v3988 = vsel %vm1117, %v3985, %v3987
      %v3989 = vrot.slane %v3892, 5
      %v3990 = vsel %vm1117, %v3987, %v3989
      %v3991 = vrot.slane %v3893, 5
      %v3992 = vsel %vm1117, %v3989, %v3991
      %v3993 = vrot.slane %v3894, 5
      %v3994 = vsel %vm1117, %v3991, %v3993
      %v3995 = vrot.slane %v3895, 5
      %v3996 = vsel %vm1117, %v3993, %v3995
      %v3997 = vrot.slane %v3896, 5
      %v3998 = vsel %vm1117, %v3995, %v3997
      %v3999 = vrot.slane %v3897, 5
      %v4000 = vsel %vm1117, %v3997, %v3999
      %v4001 = vrot.slane %v3898, 5
      %v4002 = vsel %vm1117, %v3999, %v4001
      %v4003 = vrot.slane %v3899, 5
      %v4004 = vsel %vm1117, %v4001, %v4003
      %v4005 = vrot.slane %v3900, 5
      %v4006 = vsel %vm1117, %v4003, %v4005
      %v4007 = vrot.slane %v3901, 5
      %v4008 = vsel %vm1117, %v4005, %v4007
      %v4009 = vrot.slane %v3902, 5
      %v4010 = vsel %vm1117, %v4007, %v4009
      %v4011 = vrot.slane %v3903, 5
      %v4012 = vsel %vm1117, %v4009, %v4011
      %v4013 = vrot.slane %v3904, 5
      %v4014 = vsel %vm1117, %v4011, %v4013
      %v4015 = vrot.slane %v3905, 5
      %v4016 = vsel %vm1117, %v4013, %v4015
      %v4017 = vrot.slane %v3906, 5
      %v4018 = vsel %vm1117, %v4015, %v4017
      %v4019 = vrot.slane %v3907, 5
      %v4020 = vsel %vm1117, %v4017, %v4019
      %v4021 = vrot.slane %v3908, 5
      %v4022 = vsel %vm1117, %v4019, %v4021
      %v4023 = vrot.slane %v3909, 5
      %v4024 = vsel %vm1117, %v4021, %v4023
      %v4025 = vrot.slane %v3910, 5
      %v4026 = vsel %vm1117, %v4023, %v4025
      %v4027 = vrot.slane %v3911, 5
      %v4028 = vsel %vm1117, %v4025, %v4027
      %v4029 = vrot.slane %v3912, 5
      %v4030 = vsel %vm1117, %v4027, %v4029
      %v4031 = vrot.slane %v3913, 5
      %v4032 = vsel %vm1117, %v4029, %v4031
      %v4033 = vrot.slane %v3914, 5
      %v4034 = vsel %vm1117, %v4031, %v4033
      %v4035 = vrot.slane %v3915, 5
      %v4036 = vsel %vm1117, %v4033, %v4035
      %v4037 = vrot.slane %v3916, 5
      %v4038 = vsel %vm1117, %v4035, %v4037
      %v4079 = vsel %vm1117, 0.0, %v3958
      %v4080 = vsel %vm1117, %v4037, 0.0
      %v4082 = vrot.slane %v4079, 1
      %v4083 = vsel %vm1243, %v1244, %v4082
      %v4084 = vrot.slane %v3960, 1
      %v4085 = vsel %vm1243, %v4082, %v4084
      %v4086 = vrot.slane %v3962, 1
      %v4087 = vsel %vm1243, %v4084, %v4086
      %v4088 = vrot.slane %v3964, 1
      %v4089 = vsel %vm1243, %v4086, %v4088
      %v4090 = vrot.slane %v3966, 1
      %v4091 = vsel %vm1243, %v4088, %v4090
      %v4092 = vrot.slane %v3968, 1
      %v4093 = vsel %vm1243, %v4090, %v4092
      %v4094 = vrot.slane %v3970, 1
      %v4095 = vsel %vm1243, %v4092, %v4094
      %v4096 = vrot.slane %v3972, 1
      %v4097 = vsel %vm1243, %v4094, %v4096
      %v4098 = vrot.slane %v3974, 1
      %v4099 = vsel %vm1243, %v4096, %v4098
      %v4100 = vrot.slane %v3976, 1
      %v4101 = vsel %vm1243, %v4098, %v4100
      %v4102 = vrot.slane %v3978, 1
      %v4103 = vsel %vm1243, %v4100, %v4102
      %v4104 = vrot.slane %v3980, 1
      %v4105 = vsel %vm1243, %v4102, %v4104
      %v4106 = vrot.slane %v3982, 1
      %v4107 = vsel %vm1243, %v4104, %v4106
      %v4108 = vrot.slane %v3984, 1
      %v4109 = vsel %vm1243, %v4106, %v4108
      %v4110 = vrot.slane %v3986, 1
      %v4111 = vsel %vm1243, %v4108, %v4110
      %v4112 = vrot.slane %v3988, 1
      %v4113 = vsel %vm1243, %v4110, %v4112
      %v4114 = vrot.slane %v3990, 1
      %v4115 = vsel %vm1243, %v4112, %v4114
      %v4116 = vrot.slane %v3992, 1
      %v4117 = vsel %vm1243, %v4114, %v4116
      %v4118 = vrot.slane %v3994, 1
      %v4119 = vsel %vm1243, %v4116, %v4118
      %v4120 = vrot.slane %v3996, 1
      %v4121 = vsel %vm1243, %v4118, %v4120
      %v4122 = vrot.slane %v3998, 1
      %v4123 = vsel %vm1243, %v4120, %v4122
      %v4124 = vrot.slane %v4000, 1
      %v4125 = vsel %vm1243, %v4122, %v4124
      %v4126 = vrot.slane %v4002, 1
      %v4127 = vsel %vm1243, %v4124, %v4126
      %v4128 = vrot.slane %v4004, 1
      %v4129 = vsel %vm1243, %v4126, %v4128
      %v4130 = vrot.slane %v4006, 1
      %v4131 = vsel %vm1243, %v4128, %v4130
      %v4132 = vrot.slane %v4008, 1
      %v4133 = vsel %vm1243, %v4130, %v4132
      %v4134 = vrot.slane %v4010, 1
      %v4135 = vsel %vm1243, %v4132, %v4134
      %v4136 = vrot.slane %v4012, 1
      %v4137 = vsel %vm1243, %v4134, %v4136
      %v4138 = vrot.slane %v4014, 1
      %v4139 = vsel %vm1243, %v4136, %v4138
      %v4140 = vrot.slane %v4016, 1
      %v4141 = vsel %vm1243, %v4138, %v4140
      %v4142 = vrot.slane %v4018, 1
      %v4143 = vsel %vm1243, %v4140, %v4142
      %v4144 = vrot.slane %v4020, 1
      %v4145 = vsel %vm1243, %v4142, %v4144
      %v4146 = vrot.slane %v4022, 1
      %v4147 = vsel %vm1243, %v4144, %v4146
      %v4148 = vrot.slane %v4024, 1
      %v4149 = vsel %vm1243, %v4146, %v4148
      %v4150 = vrot.slane %v4026, 1
      %v4151 = vsel %vm1243, %v4148, %v4150
      %v4152 = vrot.slane %v4028, 1
      %v4153 = vsel %vm1243, %v4150, %v4152
      %v4154 = vrot.slane %v4030, 1
      %v4155 = vsel %vm1243, %v4152, %v4154
      %v4156 = vrot.slane %v4032, 1
      %v4157 = vsel %vm1243, %v4154, %v4156
      %v4158 = vrot.slane %v4034, 1
      %v4159 = vsel %vm1243, %v4156, %v4158
      %v4160 = vrot.slane %v4036, 1
      %v4161 = vsel %vm1243, %v4158, %v4160
      %v4202 = vrot.slane %v4079, 2
      %v4203 = vsel %vm1367, %v1368, %v4202
      %v4204 = vrot.slane %v3960, 2
      %v4205 = vsel %vm1367, %v4202, %v4204
      %v4206 = vrot.slane %v3962, 2
      %v4207 = vsel %vm1367, %v4204, %v4206
      %v4208 = vrot.slane %v3964, 2
      %v4209 = vsel %vm1367, %v4206, %v4208
      %v4210 = vrot.slane %v3966, 2
      %v4211 = vsel %vm1367, %v4208, %v4210
      %v4212 = vrot.slane %v3968, 2
      %v4213 = vsel %vm1367, %v4210, %v4212
      %v4214 = vrot.slane %v3970, 2
      %v4215 = vsel %vm1367, %v4212, %v4214
      %v4216 = vrot.slane %v3972, 2
      %v4217 = vsel %vm1367, %v4214, %v4216
      %v4218 = vrot.slane %v3974, 2
      %v4219 = vsel %vm1367, %v4216, %v4218
      %v4220 = vrot.slane %v3976, 2
      %v4221 = vsel %vm1367, %v4218, %v4220
      %v4222 = vrot.slane %v3978, 2
      %v4223 = vsel %vm1367, %v4220, %v4222
      %v4224 = vrot.slane %v3980, 2
      %v4225 = vsel %vm1367, %v4222, %v4224
      %v4226 = vrot.slane %v3982, 2
      %v4227 = vsel %vm1367, %v4224, %v4226
      %v4228 = vrot.slane %v3984, 2
      %v4229 = vsel %vm1367, %v4226, %v4228
      %v4230 = vrot.slane %v3986, 2
      %v4231 = vsel %vm1367, %v4228, %v4230
      %v4232 = vrot.slane %v3988, 2
      %v4233 = vsel %vm1367, %v4230, %v4232
      %v4234 = vrot.slane %v3990, 2
      %v4235 = vsel %vm1367, %v4232, %v4234
      %v4236 = vrot.slane %v3992, 2
      %v4237 = vsel %vm1367, %v4234, %v4236
      %v4238 = vrot.slane %v3994, 2
      %v4239 = vsel %vm1367, %v4236, %v4238
      %v4240 = vrot.slane %v3996, 2
      %v4241 = vsel %vm1367, %v4238, %v4240
      %v4242 = vrot.slane %v3998, 2
      %v4243 = vsel %vm1367, %v4240, %v4242
      %v4244 = vrot.slane %v4000, 2
      %v4245 = vsel %vm1367, %v4242, %v4244
      %v4246 = vrot.slane %v4002, 2
      %v4247 = vsel %vm1367, %v4244, %v4246
      %v4248 = vrot.slane %v4004, 2
      %v4249 = vsel %vm1367, %v4246, %v4248
      %v4250 = vrot.slane %v4006, 2
      %v4251 = vsel %vm1367, %v4248, %v4250
      %v4252 = vrot.slane %v4008, 2
      %v4253 = vsel %vm1367, %v4250, %v4252
      %v4254 = vrot.slane %v4010, 2
      %v4255 = vsel %vm1367, %v4252, %v4254
      %v4256 = vrot.slane %v4012, 2
      %v4257 = vsel %vm1367, %v4254, %v4256
      %v4258 = vrot.slane %v4014, 2
      %v4259 = vsel %vm1367, %v4256, %v4258
      %v4260 = vrot.slane %v4016, 2
      %v4261 = vsel %vm1367, %v4258, %v4260
      %v4262 = vrot.slane %v4018, 2
      %v4263 = vsel %vm1367, %v4260, %v4262
      %v4264 = vrot.slane %v4020, 2
      %v4265 = vsel %vm1367, %v4262, %v4264
      %v4266 = vrot.slane %v4022, 2
      %v4267 = vsel %vm1367, %v4264, %v4266
      %v4268 = vrot.slane %v4024, 2
      %v4269 = vsel %vm1367, %v4266, %v4268
      %v4270 = vrot.slane %v4026, 2
      %v4271 = vsel %vm1367, %v4268, %v4270
      %v4272 = vrot.slane %v4028, 2
      %v4273 = vsel %vm1367, %v4270, %v4272
      %v4274 = vrot.slane %v4030, 2
      %v4275 = vsel %vm1367, %v4272, %v4274
      %v4276 = vrot.slane %v4032, 2
      %v4277 = vsel %vm1367, %v4274, %v4276
      %v4278 = vrot.slane %v4034, 2
      %v4279 = vsel %vm1367, %v4276, %v4278
      %v4280 = vrot.slane %v4036, 2
      %v4281 = vsel %vm1367, %v4278, %v4280
      %v4323 = vrot.slane %v4038, 2
      %v4324 = vsel %vm1367, %v4280, %v4323
      %v4325 = vrot.slane %v4080, 2
      %v4326 = vsel %vm1367, %v4323, %v4325
      %v4329 = vrot.slane %v4079, 3
      %v4330 = vrot.slane %v3960, 3
      %v4331 = vsel %vm1498, %v4329, %v4330
      %v4332 = vrot.slane %v3962, 3
      %v4333 = vsel %vm1498, %v4330, %v4332
      %v4334 = vrot.slane %v3964, 3
      %v4335 = vsel %vm1498, %v4332, %v4334
      %v4336 = vrot.slane %v3966, 3
      %v4337 = vsel %vm1498, %v4334, %v4336
      %v4338 = vrot.slane %v3968, 3
      %v4339 = vsel %vm1498, %v4336, %v4338
      %v4340 = vrot.slane %v3970, 3
      %v4341 = vsel %vm1498, %v4338, %v4340
      %v4342 = vrot.slane %v3972, 3
      %v4343 = vsel %vm1498, %v4340, %v4342
      %v4344 = vrot.slane %v3974, 3
      %v4345 = vsel %vm1498, %v4342, %v4344
      %v4346 = vrot.slane %v3976, 3
      %v4347 = vsel %vm1498, %v4344, %v4346
      %v4348 = vrot.slane %v3978, 3
      %v4349 = vsel %vm1498, %v4346, %v4348
      %v4350 = vrot.slane %v3980, 3
      %v4351 = vsel %vm1498, %v4348, %v4350
      %v4352 = vrot.slane %v3982, 3
      %v4353 = vsel %vm1498, %v4350, %v4352
      %v4354 = vrot.slane %v3984, 3
      %v4355 = vsel %vm1498, %v4352, %v4354
      %v4356 = vrot.slane %v3986, 3
      %v4357 = vsel %vm1498, %v4354, %v4356
      %v4358 = vrot.slane %v3988, 3
      %v4359 = vsel %vm1498, %v4356, %v4358
      %v4360 = vrot.slane %v3990, 3
      %v4361 = vsel %vm1498, %v4358, %v4360
      %v4362 = vrot.slane %v3992, 3
      %v4363 = vsel %vm1498, %v4360, %v4362
      %v4364 = vrot.slane %v3994, 3
      %v4365 = vsel %vm1498, %v4362, %v4364
      %v4366 = vrot.slane %v3996, 3
      %v4367 = vsel %vm1498, %v4364, %v4366
      %v4368 = vrot.slane %v3998, 3
      %v4369 = vsel %vm1498, %v4366, %v4368
      %v4370 = vrot.slane %v4000, 3
      %v4371 = vsel %vm1498, %v4368, %v4370
      %v4372 = vrot.slane %v4002, 3
      %v4373 = vsel %vm1498, %v4370, %v4372
      %v4374 = vrot.slane %v4004, 3
      %v4375 = vsel %vm1498, %v4372, %v4374
      %v4376 = vrot.slane %v4006, 3
      %v4377 = vsel %vm1498, %v4374, %v4376
      %v4378 = vrot.slane %v4008, 3
      %v4379 = vsel %vm1498, %v4376, %v4378
      %v4380 = vrot.slane %v4010, 3
      %v4381 = vsel %vm1498, %v4378, %v4380
      %v4382 = vrot.slane %v4012, 3
      %v4383 = vsel %vm1498, %v4380, %v4382
      %v4384 = vrot.slane %v4014, 3
      %v4385 = vsel %vm1498, %v4382, %v4384
      %v4386 = vrot.slane %v4016, 3
      %v4387 = vsel %vm1498, %v4384, %v4386
      %v4388 = vrot.slane %v4018, 3
      %v4389 = vsel %vm1498, %v4386, %v4388
      %v4390 = vrot.slane %v4020, 3
      %v4391 = vsel %vm1498, %v4388, %v4390
      %v4392 = vrot.slane %v4022, 3
      %v4393 = vsel %vm1498, %v4390, %v4392
      %v4394 = vrot.slane %v4024, 3
      %v4395 = vsel %vm1498, %v4392, %v4394
      %v4396 = vrot.slane %v4026, 3
      %v4397 = vsel %vm1498, %v4394, %v4396
      %v4398 = vrot.slane %v4028, 3
      %v4399 = vsel %vm1498, %v4396, %v4398
      %v4400 = vrot.slane %v4030, 3
      %v4401 = vsel %vm1498, %v4398, %v4400
      %v4402 = vrot.slane %v4032, 3
      %v4403 = vsel %vm1498, %v4400, %v4402
      %v4404 = vrot.slane %v4034, 3
      %v4405 = vsel %vm1498, %v4402, %v4404
      %v4406 = vrot.slane %v4036, 3
      %v4407 = vsel %vm1498, %v4404, %v4406
      %v4408 = vrot.slane %v4038, 3
      %v4409 = vsel %vm1498, %v4406, %v4408
      %v4410 = vrot.slane %v4080, 3
      %v4411 = vsel %vm1498, %v4408, %v4410
      %v4453 = vrot.slane %v4079, 4
      %v4454 = vrot.slane %v3960, 4
      %v4455 = vsel %vm1623, %v4453, %v4454
      %v4456 = vrot.slane %v3962, 4
      %v4457 = vsel %vm1623, %v4454, %v4456
      %v4458 = vrot.slane %v3964, 4
      %v4459 = vsel %vm1623, %v4456, %v4458
      %v4460 = vrot.slane %v3966, 4
      %v4461 = vsel %vm1623, %v4458, %v4460
      %v4462 = vrot.slane %v3968, 4
      %v4463 = vsel %vm1623, %v4460, %v4462
      %v4464 = vrot.slane %v3970, 4
      %v4465 = vsel %vm1623, %v4462, %v4464
      %v4466 = vrot.slane %v3972, 4
      %v4467 = vsel %vm1623, %v4464, %v4466
      %v4468 = vrot.slane %v3974, 4
      %v4469 = vsel %vm1623, %v4466, %v4468
      %v4470 = vrot.slane %v3976, 4
      %v4471 = vsel %vm1623, %v4468, %v4470
      %v4472 = vrot.slane %v3978, 4
      %v4473 = vsel %vm1623, %v4470, %v4472
      %v4474 = vrot.slane %v3980, 4
      %v4475 = vsel %vm1623, %v4472, %v4474
      %v4476 = vrot.slane %v3982, 4
      %v4477 = vsel %vm1623, %v4474, %v4476
      %v4478 = vrot.slane %v3984, 4
      %v4479 = vsel %vm1623, %v4476, %v4478
      %v4480 = vrot.slane %v3986, 4
      %v4481 = vsel %vm1623, %v4478, %v4480
      %v4482 = vrot.slane %v3988, 4
      %v4483 = vsel %vm1623, %v4480, %v4482
      %v4484 = vrot.slane %v3990, 4
      %v4485 = vsel %vm1623, %v4482, %v4484
      %v4486 = vrot.slane %v3992, 4
      %v4487 = vsel %vm1623, %v4484, %v4486
      %v4488 = vrot.slane %v3994, 4
      %v4489 = vsel %vm1623, %v4486, %v4488
      %v4490 = vrot.slane %v3996, 4
      %v4491 = vsel %vm1623, %v4488, %v4490
      %v4492 = vrot.slane %v3998, 4
      %v4493 = vsel %vm1623, %v4490, %v4492
      %v4494 = vrot.slane %v4000, 4
      %v4495 = vsel %vm1623, %v4492, %v4494
      %v4496 = vrot.slane %v4002, 4
      %v4497 = vsel %vm1623, %v4494, %v4496
      %v4498 = vrot.slane %v4004, 4
      %v4499 = vsel %vm1623, %v4496, %v4498
      %v4500 = vrot.slane %v4006, 4
      %v4501 = vsel %vm1623, %v4498, %v4500
      %v4502 = vrot.slane %v4008, 4
      %v4503 = vsel %vm1623, %v4500, %v4502
      %v4504 = vrot.slane %v4010, 4
      %v4505 = vsel %vm1623, %v4502, %v4504
      %v4506 = vrot.slane %v4012, 4
      %v4507 = vsel %vm1623, %v4504, %v4506
      %v4508 = vrot.slane %v4014, 4
      %v4509 = vsel %vm1623, %v4506, %v4508
      %v4510 = vrot.slane %v4016, 4
      %v4511 = vsel %vm1623, %v4508, %v4510
      %v4512 = vrot.slane %v4018, 4
      %v4513 = vsel %vm1623, %v4510, %v4512
      %v4514 = vrot.slane %v4020, 4
      %v4515 = vsel %vm1623, %v4512, %v4514
      %v4516 = vrot.slane %v4022, 4
      %v4517 = vsel %vm1623, %v4514, %v4516
      %v4518 = vrot.slane %v4024, 4
      %v4519 = vsel %vm1623, %v4516, %v4518
      %v4520 = vrot.slane %v4026, 4
      %v4521 = vsel %vm1623, %v4518, %v4520
      %v4522 = vrot.slane %v4028, 4
      %v4523 = vsel %vm1623, %v4520, %v4522
      %v4524 = vrot.slane %v4030, 4
      %v4525 = vsel %vm1623, %v4522, %v4524
      %v4526 = vrot.slane %v4032, 4
      %v4527 = vsel %vm1623, %v4524, %v4526
      %v4528 = vrot.slane %v4034, 4
      %v4529 = vsel %vm1623, %v4526, %v4528
      %v4530 = vrot.slane %v4036, 4
      %v4531 = vsel %vm1623, %v4528, %v4530
      %v4532 = vrot.slane %v4038, 4
      %v4533 = vsel %vm1623, %v4530, %v4532
      %v4534 = vrot.slane %v4080, 4
      %v4535 = vsel %vm1623, %v4532, %v4534
      %v4577 = vsel %vm1623, %v4534, %v1748
      %v4579 = vrot.slane %v3962, 5
      %v4580 = vrot.slane %v3964, 5
      %v4581 = vsel %vm1117, %v4579, %v4580
      %v4582 = vrot.slane %v3966, 5
      %v4583 = vsel %vm1117, %v4580, %v4582
      %v4584 = vrot.slane %v3968, 5
      %v4585 = vsel %vm1117, %v4582, %v4584
      %v4586 = vrot.slane %v3970, 5
      %v4587 = vsel %vm1117, %v4584, %v4586
      %v4588 = vrot.slane %v3972, 5
      %v4589 = vsel %vm1117, %v4586, %v4588
      %v4590 = vrot.slane %v3974, 5
      %v4591 = vsel %vm1117, %v4588, %v4590
      %v4592 = vrot.slane %v3976, 5
      %v4593 = vsel %vm1117, %v4590, %v4592
      %v4594 = vrot.slane %v3978, 5
      %v4595 = vsel %vm1117, %v4592, %v4594
      %v4596 = vrot.slane %v3980, 5
      %v4597 = vsel %vm1117, %v4594, %v4596
      %v4598 = vrot.slane %v3982, 5
      %v4599 = vsel %vm1117, %v4596, %v4598
      %v4600 = vrot.slane %v3984, 5
      %v4601 = vsel %vm1117, %v4598, %v4600
      %v4602 = vrot.slane %v3986, 5
      %v4603 = vsel %vm1117, %v4600, %v4602
      %v4604 = vrot.slane %v3988, 5
      %v4605 = vsel %vm1117, %v4602, %v4604
      %v4606 = vrot.slane %v3990, 5
      %v4607 = vsel %vm1117, %v4604, %v4606
      %v4608 = vrot.slane %v3992, 5
      %v4609 = vsel %vm1117, %v4606, %v4608
      %v4610 = vrot.slane %v3994, 5
      %v4611 = vsel %vm1117, %v4608, %v4610
      %v4612 = vrot.slane %v3996, 5
      %v4613 = vsel %vm1117, %v4610, %v4612
      %v4614 = vrot.slane %v3998, 5
      %v4615 = vsel %vm1117, %v4612, %v4614
      %v4616 = vrot.slane %v4000, 5
      %v4617 = vsel %vm1117, %v4614, %v4616
      %v4618 = vrot.slane %v4002, 5
      %v4619 = vsel %vm1117, %v4616, %v4618
      %v4620 = vrot.slane %v4004, 5
      %v4621 = vsel %vm1117, %v4618, %v4620
      %v4622 = vrot.slane %v4006, 5
      %v4623 = vsel %vm1117, %v4620, %v4622
      %v4624 = vrot.slane %v4008, 5
      %v4625 = vsel %vm1117, %v4622, %v4624
      %v4626 = vrot.slane %v4010, 5
      %v4627 = vsel %vm1117, %v4624, %v4626
      %v4628 = vrot.slane %v4012, 5
      %v4629 = vsel %vm1117, %v4626, %v4628
      %v4630 = vrot.slane %v4014, 5
      %v4631 = vsel %vm1117, %v4628, %v4630
      %v4632 = vrot.slane %v4016, 5
      %v4633 = vsel %vm1117, %v4630, %v4632
      %v4634 = vrot.slane %v4018, 5
      %v4635 = vsel %vm1117, %v4632, %v4634
      %v4636 = vrot.slane %v4020, 5
      %v4637 = vsel %vm1117, %v4634, %v4636
      %v4638 = vrot.slane %v4022, 5
      %v4639 = vsel %vm1117, %v4636, %v4638
      %v4640 = vrot.slane %v4024, 5
      %v4641 = vsel %vm1117, %v4638, %v4640
      %v4642 = vrot.slane %v4026, 5
      %v4643 = vsel %vm1117, %v4640, %v4642
      %v4644 = vrot.slane %v4028, 5
      %v4645 = vsel %vm1117, %v4642, %v4644
      %v4646 = vrot.slane %v4030, 5
      %v4647 = vsel %vm1117, %v4644, %v4646
      %v4648 = vrot.slane %v4032, 5
      %v4649 = vsel %vm1117, %v4646, %v4648
      %v4650 = vrot.slane %v4034, 5
      %v4651 = vsel %vm1117, %v4648, %v4650
      %v4652 = vrot.slane %v4036, 5
      %v4653 = vsel %vm1117, %v4650, %v4652
      %v4654 = vrot.slane %v4038, 5
      %v4655 = vsel %vm1117, %v4652, %v4654
      %v4656 = vrot.slane %v4080, 5
      %v4657 = vsel %vm1117, %v4654, %v4656
      %v4658 = vsel %vm1117, %v4656, %v1832
      %v4699 = vrot.slane %v3962, 6
      %v4700 = vrot.slane %v3964, 6
      %v4701 = vsel %vm1876, %v4699, %v4700
      %v4702 = vrot.slane %v3966, 6
      %v4703 = vsel %vm1876, %v4700, %v4702
      %v4704 = vrot.slane %v3968, 6
      %v4705 = vsel %vm1876, %v4702, %v4704
      %v4706 = vrot.slane %v3970, 6
      %v4707 = vsel %vm1876, %v4704, %v4706
      %v4708 = vrot.slane %v3972, 6
      %v4709 = vsel %vm1876, %v4706, %v4708
      %v4710 = vrot.slane %v3974, 6
      %v4711 = vsel %vm1876, %v4708, %v4710
      %v4712 = vrot.slane %v3976, 6
      %v4713 = vsel %vm1876, %v4710, %v4712
      %v4714 = vrot.slane %v3978, 6
      %v4715 = vsel %vm1876, %v4712, %v4714
      %v4716 = vrot.slane %v3980, 6
      %v4717 = vsel %vm1876, %v4714, %v4716
      %v4718 = vrot.slane %v3982, 6
      %v4719 = vsel %vm1876, %v4716, %v4718
      %v4720 = vrot.slane %v3984, 6
      %v4721 = vsel %vm1876, %v4718, %v4720
      %v4722 = vrot.slane %v3986, 6
      %v4723 = vsel %vm1876, %v4720, %v4722
      %v4724 = vrot.slane %v3988, 6
      %v4725 = vsel %vm1876, %v4722, %v4724
      %v4726 = vrot.slane %v3990, 6
      %v4727 = vsel %vm1876, %v4724, %v4726
      %v4728 = vrot.slane %v3992, 6
      %v4729 = vsel %vm1876, %v4726, %v4728
      %v4730 = vrot.slane %v3994, 6
      %v4731 = vsel %vm1876, %v4728, %v4730
      %v4732 = vrot.slane %v3996, 6
      %v4733 = vsel %vm1876, %v4730, %v4732
      %v4734 = vrot.slane %v3998, 6
      %v4735 = vsel %vm1876, %v4732, %v4734
      %v4736 = vrot.slane %v4000, 6
      %v4737 = vsel %vm1876, %v4734, %v4736
      %v4738 = vrot.slane %v4002, 6
      %v4739 = vsel %vm1876, %v4736, %v4738
      %v4740 = vrot.slane %v4004, 6
      %v4741 = vsel %vm1876, %v4738, %v4740
      %v4742 = vrot.slane %v4006, 6
      %v4743 = vsel %vm1876, %v4740, %v4742
      %v4744 = vrot.slane %v4008, 6
      %v4745 = vsel %vm1876, %v4742, %v4744
      %v4746 = vrot.slane %v4010, 6
      %v4747 = vsel %vm1876, %v4744, %v4746
      %v4748 = vrot.slane %v4012, 6
      %v4749 = vsel %vm1876, %v4746, %v4748
      %v4750 = vrot.slane %v4014, 6
      %v4751 = vsel %vm1876, %v4748, %v4750
      %v4752 = vrot.slane %v4016, 6
      %v4753 = vsel %vm1876, %v4750, %v4752
      %v4754 = vrot.slane %v4018, 6
      %v4755 = vsel %vm1876, %v4752, %v4754
      %v4756 = vrot.slane %v4020, 6
      %v4757 = vsel %vm1876, %v4754, %v4756
      %v4758 = vrot.slane %v4022, 6
      %v4759 = vsel %vm1876, %v4756, %v4758
      %v4760 = vrot.slane %v4024, 6
      %v4761 = vsel %vm1876, %v4758, %v4760
      %v4762 = vrot.slane %v4026, 6
      %v4763 = vsel %vm1876, %v4760, %v4762
      %v4764 = vrot.slane %v4028, 6
      %v4765 = vsel %vm1876, %v4762, %v4764
      %v4766 = vrot.slane %v4030, 6
      %v4767 = vsel %vm1876, %v4764, %v4766
      %v4768 = vrot.slane %v4032, 6
      %v4769 = vsel %vm1876, %v4766, %v4768
      %v4770 = vrot.slane %v4034, 6
      %v4771 = vsel %vm1876, %v4768, %v4770
      %v4772 = vrot.slane %v4036, 6
      %v4773 = vsel %vm1876, %v4770, %v4772
      %v4774 = vrot.slane %v4038, 6
      %v4775 = vsel %vm1876, %v4772, %v4774
      %v4776 = vrot.slane %v4080, 6
      %v4777 = vsel %vm1876, %v4774, %v4776
      %v4778 = vsel %vm1876, %v4776, %v1956
      %v4819 = vld [vmem:[%s8] sm:$0xff]
      %v4820 = vld [vmem:[%s8 + $0x8] sm:$0xff]
      %v4821 = vld [vmem:[%s8 + $0x10] sm:$0xff]
      %v4822 = vld [vmem:[%s8 + $0x18] sm:$0xff]
      %v4823 = vld [vmem:[%s8 + $0x20] sm:$0xff]
      %v4824 = vld [vmem:[%s8 + $0x28] sm:$0xff]
      %v4825 = vld [vmem:[%s8 + $0x30] sm:$0xff]
      %v4826 = vld [vmem:[%s8 + $0x38] sm:$0xff]
      %v4827 = vld [vmem:[%s8 + $0x40] sm:$0xff]
      %v4828 = vld [vmem:[%s8 + $0x48] sm:$0xff]
      %v4829 = vld [vmem:[%s8 + $0x50] sm:$0xff]
      %v4830 = vld [vmem:[%s8 + $0x58] sm:$0xff]
      %v4831 = vld [vmem:[%s8 + $0x60] sm:$0xff]
      %v4832 = vld [vmem:[%s8 + $0x68] sm:$0xff]
      %v4833 = vld [vmem:[%s8 + $0x70] sm:$0xff]
      %v4834 = vld [vmem:[%s8 + $0x78] sm:$0xff]
      %v4835 = vld [vmem:[%s8 + $0x80] sm:$0xff]
      %v4836 = vld [vmem:[%s8 + $0x88] sm:$0xff]
      %v4837 = vld [vmem:[%s8 + $0x90] sm:$0xff]
      %v4838 = vld [vmem:[%s8 + $0x98] sm:$0xff]
      %v4839 = vld [vmem:[%s8 + $0xa0] sm:$0xff]
      %v4840 = vld [vmem:[%s8 + $0xa8] sm:$0xff]
      %v4841 = vld [vmem:[%s8 + $0xb0] sm:$0xff]
      %v4842 = vld [vmem:[%s8 + $0xb8] sm:$0xff]
      %v4843 = vld [vmem:[%s8 + $0xc0] sm:$0xff]
      %v4844 = vld [vmem:[%s8 + $0xc8] sm:$0xff]
      %v4845 = vld [vmem:[%s8 + $0xd0] sm:$0xff]
      %v4846 = vld [vmem:[%s8 + $0xd8] sm:$0xff]
      %v4847 = vld [vmem:[%s8 + $0xe0] sm:$0xff]
      %v4848 = vld [vmem:[%s8 + $0xe8] sm:$0xff]
      %v4849 = vld [vmem:[%s8 + $0xf0] sm:$0xff]
      %v4850 = vld [vmem:[%s8 + $0xf8] sm:$0xff]
      %v4851 = vld [vmem:[%s8 + $0x100] sm:$0xff]
      %v4852 = vld [vmem:[%s8 + $0x108] sm:$0xff]
      %v4853 = vld [vmem:[%s8 + $0x110] sm:$0xff]
      %v4854 = vld [vmem:[%s8 + $0x118] sm:$0xff]
      %v4855 = vld [vmem:[%s8 + $0x120] sm:$0xff]
      %v4856 = vld [vmem:[%s8 + $0x128] sm:$0xff]
      %v4857 = vld [vmem:[%s8 + $0x130] sm:$0xff]
      %v4858 = vld [vmem:[%s8 + $0x138] sm:$0xff]
      %v4859 = vld [vmem:[%s8 + $0x140] sm:$0xff]
      %v4860 = vld [vmem:[%s8 + $0x148] sm:$0xff]
      %v4861 = vld [vmem:[%s8 + $0x150] sm:$0xff]
      %v4862 = vld [vmem:[%s8 + $0x158] sm:$0xff]
      %v4863 = vld [vmem:[%s8 + $0x160] sm:$0xff]
      %v4864 = vld [vmem:[%s8 + $0x168] sm:$0xff]
      %v4865 = vld [vmem:[%s8 + $0x170] sm:$0xff]
      %v4866 = vld [vmem:[%s8 + $0x178] sm:$0xff]
      %v4867 = vld [vmem:[%s8 + $0x180] sm:$0xff]
      %v4868 = vld [vmem:[%s8 + $0x188] sm:$0xff]
      %v4869 = vld [vmem:[%s8 + $0x190] sm:$0xff]
      %v4870 = vld [vmem:[%s8 + $0x198] sm:$0xff]
      %v4871 = vld [vmem:[%s8 + $0x1a0] sm:$0xff]
      %v4872 = vld [vmem:[%s8 + $0x1a8] sm:$0xff]
      %v4873 = vld [vmem:[%s8 + $0x1b0] sm:$0xff]
      %v4874 = vld [vmem:[%s8 + $0x1b8] sm:$0xff]
      %v4875 = vld [vmem:[%s8 + $0x1c0] sm:$0xff]
      %v4876 = vld [vmem:[%s8 + $0x1c8] sm:$0xff]
      %v4877 = vld [vmem:[%s8 + $0x1d0] sm:$0xff]
      %v4878 = vld [vmem:[%s8 + $0x1d8] sm:$0xff]
      %v4879 = vld [vmem:[%s8 + $0x1e0] sm:$0xff]
      %v4880 = vld [vmem:[%s8 + $0x1e8] sm:$0xff]
      %v4881 = vld [vmem:[%s8 + $0x1f0] sm:$0xff]
      %v4882 = vld [vmem:[%s8 + $0x1f8] sm:$0xff]
      %v4883 = vld [vmem:[%s8 + $0x200] sm:$0xff]
      %v4884 = vld [vmem:[%s8 + $0x208] sm:$0xff]
      %v4885 = vld [vmem:[%s8 + $0x210] sm:$0xff]
      %v4886 = vld [vmem:[%s8 + $0x218] sm:$0xff]
      %v4887 = vld [vmem:[%s8 + $0x220] sm:$0xff]
      %v4888 = vld [vmem:[%s8 + $0x228] sm:$0xff]
      %v4889 = vld [vmem:[%s8 + $0x230] sm:$0xff]
      %v4890 = vld [vmem:[%s8 + $0x238] sm:$0xff]
      %v4891 = vld [vmem:[%s8 + $0x240] sm:$0xff]
      %v4892 = vld [vmem:[%s8 + $0x248] sm:$0xff]
      %v4893 = vld [vmem:[%s8 + $0x250] sm:$0xff]
      %v4894 = vld [vmem:[%s8 + $0x258] sm:$0xff]
      %v4895 = vld [vmem:[%s8 + $0x260] sm:$0xff]
      %v4896 = vld [vmem:[%s8 + $0x268] sm:$0xff]
      %v4897 = vld [vmem:[%s8 + $0x270] sm:$0xff]
      %v4898 = vld [vmem:[%s8 + $0x278] sm:$0xff]
      %v4899 = vld [vmem:[%s8 + $0x280] sm:$0xff]
      %v4900 = vld [vmem:[%s8 + $0x288] sm:$0xff]
      %v4901 = vld [vmem:[%s8 + $0x290] sm:$0xff]
      %v4902 = vld [vmem:[%s8 + $0x298] sm:$0xff]
      %v4903 = vld [vmem:[%s8 + $0x2a0] sm:$0xff]
      %v4904 = vld [vmem:[%s8 + $0x2a8] sm:$0xff]
      %v4905 = vld [vmem:[%s8 + $0x2b0] sm:$0xff]
      %v4906 = vld [vmem:[%s8 + $0x2b8] sm:$0xff]
      %v4907 = vld [vmem:[%s8 + $0x2c0] sm:$0xff]
      %v4908 = vld [vmem:[%s8 + $0x2c8] sm:$0xff]
      %v4909 = vld [vmem:[%s8 + $0x2d0] sm:$0xff]
      %v4910 = vld [vmem:[%s8 + $0x2d8] sm:$0xff]
      %v4911 = vld [vmem:[%s8 + $0x2e0] sm:$0xff]
      %v4912 = vld [vmem:[%s8 + $0x2e8] sm:$0xff]
      %v4913 = vld [vmem:[%s8 + $0x2f0] sm:$0xff]
      %v4914 = vld [vmem:[%s8 + $0x2f8] sm:$0xff]
      %v4915 = vld [vmem:[%s8 + $0x300] sm:$0xff]
      %v4916 = vld [vmem:[%s8 + $0x308] sm:$0xff]
      %v4917 = vld [vmem:[%s8 + $0x310] sm:$0xff]
      %v4918 = vld [vmem:[%s8 + $0x318] sm:$0xff]
      %v4919 = vld [vmem:[%s8 + $0x320] sm:$0xff]
      %v4920 = vld [vmem:[%s8 + $0x328] sm:$0xff]
      %v4921 = vld [vmem:[%s8 + $0x330] sm:$0xff]
      %v4922 = vld [vmem:[%s8 + $0x338] sm:$0xff]
      %v4923 = vld [vmem:[%s8 + $0x340] sm:$0xff]
      %v4924 = vld [vmem:[%s8 + $0x348] sm:$0xff]
      %v4925 = vld [vmem:[%s8 + $0x350] sm:$0xff]
      %v4926 = vld [vmem:[%s8 + $0x358] sm:$0xff]
      %v4927 = vld [vmem:[%s8 + $0x360] sm:$0xff]
      %v4928 = vld [vmem:[%s8 + $0x368] sm:$0xff]
      %v4929 = vld [vmem:[%s8 + $0x370] sm:$0xff]
      %v4930 = vld [vmem:[%s8 + $0x378] sm:$0xff]
      %v4931 = vld [vmem:[%s8 + $0x380] sm:$0xff]
      %v4932 = vld [vmem:[%s8 + $0x388] sm:$0xff]
      %v4933 = vld [vmem:[%s8 + $0x390] sm:$0xff]
      %v4934 = vld [vmem:[%s8 + $0x398] sm:$0xff]
      %v4935 = vld [vmem:[%s8 + $0x3a0] sm:$0xff]
      %v4936 = vld [vmem:[%s8 + $0x3a8] sm:$0xff]
      %v4937 = vld [vmem:[%s8 + $0x3b0] sm:$0xff]
      %v4938 = vld [vmem:[%s8 + $0x3b8] sm:$0xff]
      %v4939 = vld [vmem:[%s8 + $0x3c0] sm:$0xff]
      %v4940 = vld [vmem:[%s8 + $0x3c8] sm:$0xff]
      %v4941 = vld [vmem:[%s8 + $0x3d0] sm:$0xff]
      %v4942 = vld [vmem:[%s8 + $0x3d8] sm:$0xff]
      %v4943 = vld [vmem:[%s8 + $0x3e0] sm:$0xff]
      %v4944 = vld [vmem:[%s8 + $0x3e8] sm:$0xff]
      %v4945 = vld [vmem:[%s8 + $0x3f0] sm:$0xff]
      %v4946 = vld [vmem:[%s8 + $0x3f8] sm:$0xff]
      %v4947 = vld [vmem:[%s8 + $0x400] sm:$0xff]
      %v4948 = vld [vmem:[%s8 + $0x408] sm:$0xff]
      %v4949 = vld [vmem:[%s8 + $0x410] sm:$0xff]
      %v4950 = vld [vmem:[%s8 + $0x418] sm:$0xff]
      %v4951 = vld [vmem:[%s8 + $0x420] sm:$0xff]
      %v4952 = vld [vmem:[%s8 + $0x428] sm:$0xff]
      %v4953 = vld [vmem:[%s8 + $0x430] sm:$0xff]
      %v4954 = vld [vmem:[%s8 + $0x438] sm:$0xff]
      %v4955 = vld [vmem:[%s8 + $0x440] sm:$0xff]
      %v4956 = vld [vmem:[%s8 + $0x448] sm:$0xff]
      %v4957 = vld [vmem:[%s8 + $0x450] sm:$0xff]
      %v4958 = vld [vmem:[%s8 + $0x458] sm:$0xff]
      %v4959 = vld [vmem:[%s8 + $0x460] sm:$0xff]
      %v4960 = vld [vmem:[%s8 + $0x468] sm:$0xff]
      %v4961 = vld [vmem:[%s8 + $0x470] sm:$0xff]
      %v4962 = vld [vmem:[%s8 + $0x478] sm:$0xff]
      %v4963 = vld [vmem:[%s9] sm:$0x1]
      %v4965 = vlaneseq
      %v4966 = vshrl.u32 %v4965, 7
      %v4967 = vsub.s32 0, %v4966
      %v4968 = vrot.slane %v4963, %v4967
      %4970 = vmatprep.subr.mxu0 0.0
      %4971 = vmatpush1.msra.mxu0 %v4819
      %4972 = vmatprep.subr.mxu0 0.0
      %4973 = vmatpush1.msra.mxu0 %v4820
      %4974 = vmatprep.subr.mxu0 0.0
      %4975 = vmatpush1.msra.mxu0 %v4821
      %4976 = vmatprep.subr.mxu0 0.0
      %4977 = vmatpush1.msra.mxu0 %v4822
      %4978 = vmatprep.subr.mxu0 0.0
      %4979 = vmatpush1.msra.mxu0 %v4823
      %4980 = vmatprep.subr.mxu0 0.0
      %4981 = vmatpush1.msra.mxu0 %v4824
      %4982 = vmatprep.subr.mxu0 0.0
      %4983 = vmatpush1.msra.mxu0 %v4825
      %4984 = vmatprep.subr.mxu0 0.0
      %4985 = vmatpush1.msra.mxu0 %v4826
      %4986 = vmatprep.subr.mxu0 0.0
      %4987 = vmatpush1.msra.mxu0 %v4827
      %4988 = vmatprep.subr.mxu0 0.0
      %4989 = vmatpush1.msra.mxu0 %v4828
      %4990 = vmatprep.subr.mxu0 0.0
      %4991 = vmatpush1.msra.mxu0 %v4829
      %4992 = vmatprep.subr.mxu0 0.0
      %4993 = vmatpush1.msra.mxu0 %v4830
      %4994 = vmatprep.subr.mxu0 0.0
      %4995 = vmatpush1.msra.mxu0 %v4831
      %4996 = vmatprep.subr.mxu0 0.0
      %4997 = vmatpush1.msra.mxu0 %v4832
      %4998 = vmatprep.subr.mxu0 0.0
      %4999 = vmatpush1.msra.mxu0 %v4833
      %5000 = vmatprep.subr.mxu0 0.0
      %5001 = vmatpush1.msra.mxu0 %v4834
      %5002 = vmatprep.subr.mxu0 0.0
      %5003 = vmatpush1.msra.mxu0 %v4835
      %5004 = vmatprep.subr.mxu0 0.0
      %5005 = vmatpush1.msra.mxu0 %v4836
      %5006 = vmatprep.subr.mxu0 0.0
      %5007 = vmatpush1.msra.mxu0 %v4837
      %5008 = vmatprep.subr.mxu0 0.0
      %5009 = vmatpush1.msra.mxu0 %v4838
      %5010 = vmatprep.subr.mxu0 0.0
      %5011 = vmatpush1.msra.mxu0 %v4839
      %5012 = vmatprep.subr.mxu0 0.0
      %5013 = vmatpush1.msra.mxu0 %v4840
      %5014 = vmatprep.subr.mxu0 0.0
      %5015 = vmatpush1.msra.mxu0 %v4841
      %5016 = vmatprep.subr.mxu0 0.0
      %5017 = vmatpush1.msra.mxu0 %v4842
      %5018 = vmatprep.subr.mxu0 0.0
      %5019 = vmatpush1.msra.mxu0 %v4843
      %5020 = vmatprep.subr.mxu0 0.0
      %5021 = vmatpush1.msra.mxu0 %v4844
      %5022 = vmatprep.subr.mxu0 0.0
      %5023 = vmatpush1.msra.mxu0 %v4845
      %5024 = vmatprep.subr.mxu0 0.0
      %5025 = vmatpush1.msra.mxu0 %v4846
      %5026 = vmatprep.subr.mxu0 0.0
      %5027 = vmatpush1.msra.mxu0 %v4847
      %5028 = vmatprep.subr.mxu0 0.0
      %5029 = vmatpush1.msra.mxu0 %v4848
      %5030 = vmatprep.subr.mxu0 0.0
      %5031 = vmatpush1.msra.mxu0 %v4849
      %5032 = vmatprep.subr.mxu0 0.0
      %5033 = vmatpush1.msra.mxu0 %v4850
      %5034 = vmatprep.mubr.f32.mxu0 %v1245
      %5035 = vmatmul.mubr.f32.gmra.mrb[0].mxu0 0.0
      %v5036 = vpop.f32.mrb[0].mxu0
      %v5037 = vadd.f32 %v4968, %v5036
      %v5038 = vpop.f32.mrb[0].mxu0
      %5039 = vmatprep.mubr.f32.mxu0 %v4083
      %5040 = vmatmul.mubr.f32.gmra.mrb[0].mxu0 0.0
      %v5041 = vpop.f32.mrb[0].mxu0
      %v5042 = vadd.f32 %v4968, %v5041
      %v5043 = vpop.f32.mrb[0].mxu0
      %5044 = vmatprep.mubr.f32.mxu0 %v4085
      %5045 = vmatmul.mubr.f32.gmra.mrb[0].mxu0 %v4079
      %v5046 = vpop.f32.mrb[0].mxu0
      %v5047 = vadd.f32 %v4968, %v5046
      %v5048 = vpop.f32.mrb[0].mxu0
      %5049 = vmatprep.mubr.f32.mxu0 %v4087
      %5050 = vmatmul.mubr.f32.gmra.mrb[0].mxu0 %v3960
      %v5051 = vpop.f32.mrb[0].mxu0
      %v5052 = vadd.f32 %v4968, %v5051
      %v5053 = vpop.f32.mrb[0].mxu0
      %5054 = vmatprep.mubr.f32.mxu0 %v4089
      %5055 = vmatmul.mubr.f32.gmra.mrb[0].mxu0 %v3962
      %v5056 = vpop.f32.mrb[0].mxu0
      %v5057 = vadd.f32 %v4968, %v5056
      %v5058 = vpop.f32.mrb[0].mxu0
      %5059 = vmatprep.mubr.f32.mxu0 %v4091
      %5060 = vmatmul.mubr.f32.gmra.mrb[0].mxu0 %v3964
      %v5061 = vpop.f32.mrb[0].mxu0
      %v5062 = vadd.f32 %v4968, %v5061
      %v5063 = vpop.f32.mrb[0].mxu0
      %5064 = vmatprep.mubr.f32.mxu0 %v4093
      %5065 = vmatmul.mubr.f32.gmra.mrb[0].mxu0 %v3966
      %v5066 = vpop.f32.mrb[0].mxu0
      %v5067 = vadd.f32 %v4968, %v5066
      %v5068 = vpop.f32.mrb[0].mxu0
      %5069 = vmatprep.mubr.f32.mxu0 %v4095
      %5070 = vmatmul.mubr.f32.gmra.mrb[0].mxu0 %v3968
      %v5071 = vpop.f32.mrb[0].mxu0
      %v5072 = vadd.f32 %v4968, %v5071
      %v5073 = vpop.f32.mrb[0].mxu0
      %5074 = vmatprep.mubr.f32.mxu0 %v4097
      %5075 = vmatmul.mubr.f32.gmra.mrb[0].mxu0 %v3970
      %v5076 = vpop.f32.mrb[0].mxu0
      %v5077 = vadd.f32 %v4968, %v5076
      %v5078 = vpop.f32.mrb[0].mxu0
      %5079 = vmatprep.mubr.f32.mxu0 %v4099
      %5080 = vmatmul.mubr.f32.gmra.mrb[0].mxu0 %v3972
      %v5081 = vpop.f32.mrb[0].mxu0
      %v5082 = vadd.f32 %v4968, %v5081
      %v5083 = vpop.f32.mrb[0].mxu0
      %5084 = vmatprep.mubr.f32.mxu0 %v4101
      %5085 = vmatmul.mubr.f32.gmra.mrb[0].mxu0 %v3974
      %v5086 = vpop.f32.mrb[0].mxu0
      %v5087 = vadd.f32 %v4968, %v5086
      %v5088 = vpop.f32.mrb[0].mxu0
      %5089 = vmatprep.mubr.f32.mxu0 %v4103
      %5090 = vmatmul.mubr.f32.gmra.mrb[0].mxu0 %v3976
      %v5091 = vpop.f32.mrb[0].mxu0
      %v5092 = vadd.f32 %v4968, %v5091
      %v5093 = vpop.f32.mrb[0].mxu0
      %5094 = vmatprep.mubr.f32.mxu0 %v4105
      %5095 = vmatmul.mubr.f32.gmra.mrb[0].mxu0 %v3978
      %v5096 = vpop.f32.mrb[0].mxu0
      %v5097 = vadd.f32 %v4968, %v5096
      %v5098 = vpop.f32.mrb[0].mxu0
      %5099 = vmatprep.mubr.f32.mxu0 %v4107
      %5100 = vmatmul.mubr.f32.gmra.mrb[0].mxu0 %v3980
      %v5101 = vpop.f32.mrb[0].mxu0
      %v5102 = vadd.f32 %v4968, %v5101
      %v5103 = vpop.f32.mrb[0].mxu0
      %5104 = vmatprep.mubr.f32.mxu0 %v4109
      %5105 = vmatmul.mubr.f32.gmra.mrb[0].mxu0 %v3982
      %v5106 = vpop.f32.mrb[0].mxu0
      %v5107 = vadd.f32 %v4968, %v5106
      %v5108 = vpop.f32.mrb[0].mxu0
      %5109 = vmatprep.mubr.f32.mxu0 %v4111
      %5110 = vmatmul.mubr.f32.gmra.mrb[0].mxu0 %v3984
      %v5111 = vpop.f32.mrb[0].mxu0
      %v5112 = vadd.f32 %v4968, %v5111
      %v5113 = vpop.f32.mrb[0].mxu0
      %5114 = vmatprep.mubr.f32.mxu0 %v4113
      %5115 = vmatmul.mubr.f32.gmra.mrb[0].mxu0 %v3986
      %v5116 = vpop.f32.mrb[0].mxu0
      %v5117 = vadd.f32 %v4968, %v5116
      %v5118 = vpop.f32.mrb[0].mxu0
      %5119 = vmatprep.mubr.f32.mxu0 %v4115
      %5120 = vmatmul.mubr.f32.gmra.mrb[0].mxu0 %v3988
      %v5121 = vpop.f32.mrb[0].mxu0
      %v5122 = vadd.f32 %v4968, %v5121
      %v5123 = vpop.f32.mrb[0].mxu0
      %5124 = vmatprep.mubr.f32.mxu0 %v4117
      %5125 = vmatmul.mubr.f32.gmra.mrb[0].mxu0 %v3990
      %v5126 = vpop.f32.mrb[0].mxu0
      %v5127 = vadd.f32 %v4968, %v5126
      %v5128 = vpop.f32.mrb[0].mxu0
      %5129 = vmatprep.mubr.f32.mxu0 %v4119
      %5130 = vmatmul.mubr.f32.gmra.mrb[0].mxu0 %v3992
      %v5131 = vpop.f32.mrb[0].mxu0
      %v5132 = vadd.f32 %v4968, %v5131
      %v5133 = vpop.f32.mrb[0].mxu0
      %5134 = vmatprep.mubr.f32.mxu0 %v4121
      %5135 = vmatmul.mubr.f32.gmra.mrb[0].mxu0 %v3994
      %v5136 = vpop.f32.mrb[0].mxu0
      %v5137 = vadd.f32 %v4968, %v5136
      %v5138 = vpop.f32.mrb[0].mxu0
      %5139 = vmatprep.mubr.f32.mxu0 %v4123
      %5140 = vmatmul.mubr.f32.gmra.mrb[0].mxu0 %v3996
      %v5141 = vpop.f32.mrb[0].mxu0
      %v5142 = vadd.f32 %v4968, %v5141
      %v5143 = vpop.f32.mrb[0].mxu0
      %5144 = vmatprep.mubr.f32.mxu0 %v4125
      %5145 = vmatmul.mubr.f32.gmra.mrb[0].mxu0 %v3998
      %v5146 = vpop.f32.mrb[0].mxu0
      %v5147 = vadd.f32 %v4968, %v5146
      %v5148 = vpop.f32.mrb[0].mxu0
      %5149 = vmatprep.mubr.f32.mxu0 %v4127
      %5150 = vmatmul.mubr.f32.gmra.mrb[0].mxu0 %v4000
      %v5151 = vpop.f32.mrb[0].mxu0
      %v5152 = vadd.f32 %v4968, %v5151
      %v5153 = vpop.f32.mrb[0].mxu0
      %5154 = vmatprep.mubr.f32.mxu0 %v4129
      %5155 = vmatmul.mubr.f32.gmra.mrb[0].mxu0 %v4002
      %v5156 = vpop.f32.mrb[0].mxu0
      %v5157 = vadd.f32 %v4968, %v5156
      %v5158 = vpop.f32.mrb[0].mxu0
      %5159 = vmatprep.mubr.f32.mxu0 %v4131
      %5160 = vmatmul.mubr.f32.gmra.mrb[0].mxu0 %v4004
      %v5161 = vpop.f32.mrb[0].mxu0
      %v5162 = vadd.f32 %v4968, %v5161
      %v5163 = vpop.f32.mrb[0].mxu0
      %5164 = vmatprep.mubr.f32.mxu0 %v4133
      %5165 = vmatmul.mubr.f32.gmra.mrb[0].mxu0 %v4006
      %v5166 = vpop.f32.mrb[0].mxu0
      %v5167 = vadd.f32 %v4968, %v5166
      %v5168 = vpop.f32.mrb[0].mxu0
      %5169 = vmatprep.mubr.f32.mxu0 %v4135
      %5170 = vmatmul.mubr.f32.gmra.mrb[0].mxu0 %v4008
      %v5171 = vpop.f32.mrb[0].mxu0
      %v5172 = vadd.f32 %v4968, %v5171
      %v5173 = vpop.f32.mrb[0].mxu0
      %5174 = vmatprep.mubr.f32.mxu0 %v4137
      %5175 = vmatmul.mubr.f32.gmra.mrb[0].mxu0 %v4010
      %v5176 = vpop.f32.mrb[0].mxu0
      %v5177 = vadd.f32 %v4968, %v5176
      %v5178 = vpop.f32.mrb[0].mxu0
      %5179 = vmatprep.mubr.f32.mxu0 %v4139
      %5180 = vmatmul.mubr.f32.gmra.mrb[0].mxu0 %v4012
      %v5181 = vpop.f32.mrb[0].mxu0
      %v5182 = vadd.f32 %v4968, %v5181
      %v5183 = vpop.f32.mrb[0].mxu0
      %5184 = vmatprep.mubr.f32.mxu0 %v4141
      %5185 = vmatmul.mubr.f32.gmra.mrb[0].mxu0 %v4014
      %v5186 = vpop.f32.mrb[0].mxu0
      %v5187 = vadd.f32 %v4968, %v5186
      %v5188 = vpop.f32.mrb[0].mxu0
      %5189 = vmatprep.mubr.f32.mxu0 %v4143
      %5190 = vmatmul.mubr.f32.gmra.mrb[0].mxu0 %v4016
      %v5191 = vpop.f32.mrb[0].mxu0
      %v5192 = vadd.f32 %v4968, %v5191
      %v5193 = vpop.f32.mrb[0].mxu0
      %5194 = vmatprep.mubr.f32.mxu0 %v4145
      %5195 = vmatmul.mubr.f32.gmra.mrb[0].mxu0 %v4018
      %v5196 = vpop.f32.mrb[0].mxu0
      %v5197 = vadd.f32 %v4968, %v5196
      %v5198 = vpop.f32.mrb[0].mxu0
      %5199 = vmatprep.mubr.f32.mxu0 %v4147
      %5200 = vmatmul.mubr.f32.gmra.mrb[0].mxu0 %v4020
      %v5201 = vpop.f32.mrb[0].mxu0
      %v5202 = vadd.f32 %v4968, %v5201
      %v5203 = vpop.f32.mrb[0].mxu0
      %5204 = vmatprep.mubr.f32.mxu0 %v4149
      %5205 = vmatmul.mubr.f32.gmra.mrb[0].mxu0 %v4022
      %v5206 = vpop.f32.mrb[0].mxu0
      %v5207 = vadd.f32 %v4968, %v5206
      %v5208 = vpop.f32.mrb[0].mxu0
      %5209 = vmatprep.mubr.f32.mxu0 %v4151
      %5210 = vmatmul.mubr.f32.gmra.mrb[0].mxu0 %v4024
      %v5211 = vpop.f32.mrb[0].mxu0
      %v5212 = vadd.f32 %v4968, %v5211
      %v5213 = vpop.f32.mrb[0].mxu0
      %5214 = vmatprep.mubr.f32.mxu0 %v4153
      %5215 = vmatmul.mubr.f32.gmra.mrb[0].mxu0 %v4026
      %v5216 = vpop.f32.mrb[0].mxu0
      %v5217 = vadd.f32 %v4968, %v5216
      %v5218 = vpop.f32.mrb[0].mxu0
      %5219 = vmatprep.mubr.f32.mxu0 %v4155
      %5220 = vmatmul.mubr.f32.gmra.mrb[0].mxu0 %v4028
      %v5221 = vpop.f32.mrb[0].mxu0
      %v5222 = vadd.f32 %v4968, %v5221
      %v5223 = vpop.f32.mrb[0].mxu0
      %5224 = vmatprep.mubr.f32.mxu0 %v4157
      %5225 = vmatmul.mubr.f32.gmra.mrb[0].mxu0 %v4030
      %v5226 = vpop.f32.mrb[0].mxu0
      %v5227 = vadd.f32 %v4968, %v5226
      %v5228 = vpop.f32.mrb[0].mxu0
      %5229 = vmatprep.mubr.f32.mxu0 %v4159
      %5230 = vmatmul.mubr.f32.gmra.mrb[0].mxu0 %v4032
      %v5231 = vpop.f32.mrb[0].mxu0
      %v5232 = vadd.f32 %v4968, %v5231
      %v5233 = vpop.f32.mrb[0].mxu0
      %5234 = vmatprep.mubr.f32.mxu0 %v4161
      %5235 = vmatmul.mubr.f32.gmra.mrb[0].mxu0 %v4034
      %v5236 = vpop.f32.mrb[0].mxu0
      %v5237 = vadd.f32 %v4968, %v5236
      %v5238 = vpop.f32.mrb[0].mxu0
      %5239 = vdwg.mxu0
      %5240 = vmatprep.subr.mxu0 0.0
      %5241 = vmatpush1.msra.mxu0 %v4851
      %5242 = vmatprep.subr.mxu0 0.0
      %5243 = vmatpush1.msra.mxu0 %v4852
      %5244 = vmatprep.subr.mxu0 0.0
      %5245 = vmatpush1.msra.mxu0 %v4853
      %5246 = vmatprep.subr.mxu0 0.0
      %5247 = vmatpush1.msra.mxu0 %v4854
      %5248 = vmatprep.subr.mxu0 0.0
      %5249 = vmatpush1.msra.mxu0 %v4855
      %5250 = vmatprep.subr.mxu0 0.0
      %5251 = vmatpush1.msra.mxu0 %v4856
      %5252 = vmatprep.subr.mxu0 0.0
      %5253 = vmatpush1.msra.mxu0 %v4857
      %5254 = vmatprep.subr.mxu0 0.0
      %5255 = vmatpush1.msra.mxu0 %v4858
      %5256 = vmatprep.subr.mxu0 0.0
      %5257 = vmatpush1.msra.mxu0 %v4859
      %5258 = vmatprep.subr.mxu0 0.0
      %5259 = vmatpush1.msra.mxu0 %v4860
      %5260 = vmatprep.subr.mxu0 0.0
      %5261 = vmatpush1.msra.mxu0 %v4861
      %5262 = vmatprep.subr.mxu0 0.0
      %5263 = vmatpush1.msra.mxu0 %v4862
      %5264 = vmatprep.subr.mxu0 0.0
      %5265 = vmatpush1.msra.mxu0 %v4863
      %5266 = vmatprep.subr.mxu0 0.0
      %5267 = vmatpush1.msra.mxu0 %v4864
      %5268 = vmatprep.subr.mxu0 0.0
      %5269 = vmatpush1.msra.mxu0 %v4865
      %5270 = vmatprep.subr.mxu0 0.0
      %5271 = vmatpush1.msra.mxu0 %v4866
      %5272 = vmatprep.subr.mxu0 0.0
      %5273 = vmatpush1.msra.mxu0 %v4867
      %5274 = vmatprep.subr.mxu0 0.0
      %5275 = vmatpush1.msra.mxu0 %v4868
      %5276 = vmatprep.subr.mxu0 0.0
      %5277 = vmatpush1.msra.mxu0 %v4869
      %5278 = vmatprep.subr.mxu0 0.0
      %5279 = vmatpush1.msra.mxu0 %v4870
      %5280 = vmatprep.subr.mxu0 0.0
      %5281 = vmatpush1.msra.mxu0 %v4871
      %5282 = vmatprep.subr.mxu0 0.0
      %5283 = vmatpush1.msra.mxu0 %v4872
      %5284 = vmatprep.subr.mxu0 0.0
      %5285 = vmatpush1.msra.mxu0 %v4873
      %5286 = vmatprep.subr.mxu0 0.0
      %5287 = vmatpush1.msra.mxu0 %v4874
      %5288 = vmatprep.subr.mxu0 0.0
      %5289 = vmatpush1.msra.mxu0 %v4875
      %5290 = vmatprep.subr.mxu0 0.0
      %5291 = vmatpush1.msra.mxu0 %v4876
      %5292 = vmatprep.subr.mxu0 0.0
      %5293 = vmatpush1.msra.mxu0 %v4877
      %5294 = vmatprep.subr.mxu0 0.0
      %5295 = vmatpush1.msra.mxu0 %v4878
      %5296 = vmatprep.subr.mxu0 0.0
      %5297 = vmatpush1.msra.mxu0 %v4879
      %5298 = vmatprep.subr.mxu0 0.0
      %5299 = vmatpush1.msra.mxu0 %v4880
      %5300 = vmatprep.subr.mxu0 0.0
      %5301 = vmatpush1.msra.mxu0 %v4881
      %5302 = vmatprep.subr.mxu0 0.0
      %5303 = vmatpush1.msra.mxu0 %v4882
      %5304 = vmatprep.mubr.f32.mxu0 %v4205
      %5305 = vmatmul.mubr.f32.gmra.mrb[0].mxu0 %v1369
      %v5306 = vpop.f32.mrb[0].mxu0
      %v5307 = vadd.f32 %v5037, %v5306
      %v5308 = vpop.f32.mrb[0].mxu0
      %5309 = vmatprep.mubr.f32.mxu0 %v4207
      %5310 = vmatmul.mubr.f32.gmra.mrb[0].mxu0 %v4203
      %v5311 = vpop.f32.mrb[0].mxu0
      %v5312 = vadd.f32 %v5042, %v5311
      %v5313 = vpop.f32.mrb[0].mxu0
      %5314 = vmatprep.mubr.f32.mxu0 %v4209
      %5315 = vmatmul.mubr.f32.gmra.mrb[0].mxu0 %v4205
      %v5316 = vpop.f32.mrb[0].mxu0
      %v5317 = vadd.f32 %v5047, %v5316
      %v5318 = vpop.f32.mrb[0].mxu0
      %5319 = vmatprep.mubr.f32.mxu0 %v4211
      %5320 = vmatmul.mubr.f32.gmra.mrb[0].mxu0 %v4207
      %v5321 = vpop.f32.mrb[0].mxu0
      %v5322 = vadd.f32 %v5052, %v5321
      %v5323 = vpop.f32.mrb[0].mxu0
      %5324 = vmatprep.mubr.f32.mxu0 %v4213
      %5325 = vmatmul.mubr.f32.gmra.mrb[0].mxu0 %v4209
      %v5326 = vpop.f32.mrb[0].mxu0
      %v5327 = vadd.f32 %v5057, %v5326
      %v5328 = vpop.f32.mrb[0].mxu0
      %5329 = vmatprep.mubr.f32.mxu0 %v4215
      %5330 = vmatmul.mubr.f32.gmra.mrb[0].mxu0 %v4211
      %v5331 = vpop.f32.mrb[0].mxu0
      %v5332 = vadd.f32 %v5062, %v5331
      %v5333 = vpop.f32.mrb[0].mxu0
      %5334 = vmatprep.mubr.f32.mxu0 %v4217
      %5335 = vmatmul.mubr.f32.gmra.mrb[0].mxu0 %v4213
      %v5336 = vpop.f32.mrb[0].mxu0
      %v5337 = vadd.f32 %v5067, %v5336
      %v5338 = vpop.f32.mrb[0].mxu0
      %5339 = vmatprep.mubr.f32.mxu0 %v4219
      %5340 = vmatmul.mubr.f32.gmra.mrb[0].mxu0 %v4215
      %v5341 = vpop.f32.mrb[0].mxu0
      %v5342 = vadd.f32 %v5072, %v5341
      %v5343 = vpop.f32.mrb[0].mxu0
      %5344 = vmatprep.mubr.f32.mxu0 %v4221
      %5345 = vmatmul.mubr.f32.gmra.mrb[0].mxu0 %v4217
      %v5346 = vpop.f32.mrb[0].mxu0
      %v5347 = vadd.f32 %v5077, %v5346
      %v5348 = vpop.f32.mrb[0].mxu0
      %5349 = vmatprep.mubr.f32.mxu0 %v4223
      %5350 = vmatmul.mubr.f32.gmra.mrb[0].mxu0 %v4219
      %v5351 = vpop.f32.mrb[0].mxu0
      %v5352 = vadd.f32 %v5082, %v5351
      %v5353 = vpop.f32.mrb[0].mxu0
      %5354 = vmatprep.mubr.f32.mxu0 %v4225
      %5355 = vmatmul.mubr.f32.gmra.mrb[0].mxu0 %v4221
      %v5356 = vpop.f32.mrb[0].mxu0
      %v5357 = vadd.f32 %v5087, %v5356
      %v5358 = vpop.f32.mrb[0].mxu0
      %5359 = vmatprep.mubr.f32.mxu0 %v4227
      %5360 = vmatmul.mubr.f32.gmra.mrb[0].mxu0 %v4223
      %v5361 = vpop.f32.mrb[0].mxu0
      %v5362 = vadd.f32 %v5092, %v5361
      %v5363 = vpop.f32.mrb[0].mxu0
      %5364 = vmatprep.mubr.f32.mxu0 %v4229
      %5365 = vmatmul.mubr.f32.gmra.mrb[0].mxu0 %v4225
      %v5366 = vpop.f32.mrb[0].mxu0
      %v5367 = vadd.f32 %v5097, %v5366
      %v5368 = vpop.f32.mrb[0].mxu0
      %5369 = vmatprep.mubr.f32.mxu0 %v4231
      %5370 = vmatmul.mubr.f32.gmra.mrb[0].mxu0 %v4227
      %v5371 = vpop.f32.mrb[0].mxu0
      %v5372 = vadd.f32 %v5102, %v5371
      %v5373 = vpop.f32.mrb[0].mxu0
      %5374 = vmatprep.mubr.f32.mxu0 %v4233
      %5375 = vmatmul.mubr.f32.gmra.mrb[0].mxu0 %v4229
      %v5376 = vpop.f32.mrb[0].mxu0
      %v5377 = vadd.f32 %v5107, %v5376
      %v5378 = vpop.f32.mrb[0].mxu0
      %5379 = vmatprep.mubr.f32.mxu0 %v4235
      %5380 = vmatmul.mubr.f32.gmra.mrb[0].mxu0 %v4231
      %v5381 = vpop.f32.mrb[0].mxu0
      %v5382 = vadd.f32 %v5112, %v5381
      %v5383 = vpop.f32.mrb[0].mxu0
      %5384 = vmatprep.mubr.f32.mxu0 %v4237
      %5385 = vmatmul.mubr.f32.gmra.mrb[0].mxu0 %v4233
      %v5386 = vpop.f32.mrb[0].mxu0
      %v5387 = vadd.f32 %v5117, %v5386
      %v5388 = vpop.f32.mrb[0].mxu0
      %5389 = vmatprep.mubr.f32.mxu0 %v4239
      %5390 = vmatmul.mubr.f32.gmra.mrb[0].mxu0 %v4235
      %v5391 = vpop.f32.mrb[0].mxu0
      %v5392 = vadd.f32 %v5122, %v5391
      %v5393 = vpop.f32.mrb[0].mxu0
      %5394 = vmatprep.mubr.f32.mxu0 %v4241
      %5395 = vmatmul.mubr.f32.gmra.mrb[0].mxu0 %v4237
      %v5396 = vpop.f32.mrb[0].mxu0
      %v5397 = vadd.f32 %v5127, %v5396
      %v5398 = vpop.f32.mrb[0].mxu0
      %5399 = vmatprep.mubr.f32.mxu0 %v4243
      %5400 = vmatmul.mubr.f32.gmra.mrb[0].mxu0 %v4239
      %v5401 = vpop.f32.mrb[0].mxu0
      %v5402 = vadd.f32 %v5132, %v5401
      %v5403 = vpop.f32.mrb[0].mxu0
      %5404 = vmatprep.mubr.f32.mxu0 %v4245
      %5405 = vmatmul.mubr.f32.gmra.mrb[0].mxu0 %v4241
      %v5406 = vpop.f32.mrb[0].mxu0
      %v5407 = vadd.f32 %v5137, %v5406
      %v5408 = vpop.f32.mrb[0].mxu0
      %5409 = vmatprep.mubr.f32.mxu0 %v4247
      %5410 = vmatmul.mubr.f32.gmra.mrb[0].mxu0 %v4243
      %v5411 = vpop.f32.mrb[0].mxu0
      %v5412 = vadd.f32 %v5142, %v5411
      %v5413 = vpop.f32.mrb[0].mxu0
      %5414 = vmatprep.mubr.f32.mxu0 %v4249
      %5415 = vmatmul.mubr.f32.gmra.mrb[0].mxu0 %v4245
      %v5416 = vpop.f32.mrb[0].mxu0
      %v5417 = vadd.f32 %v5147, %v5416
      %v5418 = vpop.f32.mrb[0].mxu0
      %5419 = vmatprep.mubr.f32.mxu0 %v4251
      %5420 = vmatmul.mubr.f32.gmra.mrb[0].mxu0 %v4247
      %v5421 = vpop.f32.mrb[0].mxu0
      %v5422 = vadd.f32 %v5152, %v5421
      %v5423 = vpop.f32.mrb[0].mxu0
      %5424 = vmatprep.mubr.f32.mxu0 %v4253
      %5425 = vmatmul.mubr.f32.gmra.mrb[0].mxu0 %v4249
      %v5426 = vpop.f32.mrb[0].mxu0
      %v5427 = vadd.f32 %v5157, %v5426
      %v5428 = vpop.f32.mrb[0].mxu0
      %5429 = vmatprep.mubr.f32.mxu0 %v4255
      %5430 = vmatmul.mubr.f32.gmra.mrb[0].mxu0 %v4251
      %v5431 = vpop.f32.mrb[0].mxu0
      %v5432 = vadd.f32 %v5162, %v5431
      %v5433 = vpop.f32.mrb[0].mxu0
      %5434 = vmatprep.mubr.f32.mxu0 %v4257
      %5435 = vmatmul.mubr.f32.gmra.mrb[0].mxu0 %v4253
      %v5436 = vpop.f32.mrb[0].mxu0
      %v5437 = vadd.f32 %v5167, %v5436
      %v5438 = vpop.f32.mrb[0].mxu0
      %5439 = vmatprep.mubr.f32.mxu0 %v4259
      %5440 = vmatmul.mubr.f32.gmra.mrb[0].mxu0 %v4255
      %v5441 = vpop.f32.mrb[0].mxu0
      %v5442 = vadd.f32 %v5172, %v5441
      %v5443 = vpop.f32.mrb[0].mxu0
      %5444 = vmatprep.mubr.f32.mxu0 %v4261
      %5445 = vmatmul.mubr.f32.gmra.mrb[0].mxu0 %v4257
      %v5446 = vpop.f32.mrb[0].mxu0
      %v5447 = vadd.f32 %v5177, %v5446
      %v5448 = vpop.f32.mrb[0].mxu0
      %5449 = vmatprep.mubr.f32.mxu0 %v4263
      %5450 = vmatmul.mubr.f32.gmra.mrb[0].mxu0 %v4259
      %v5451 = vpop.f32.mrb[0].mxu0
      %v5452 = vadd.f32 %v5182, %v5451
      %v5453 = vpop.f32.mrb[0].mxu0
      %5454 = vmatprep.mubr.f32.mxu0 %v4265
      %5455 = vmatmul.mubr.f32.gmra.mrb[0].mxu0 %v4261
      %v5456 = vpop.f32.mrb[0].mxu0
      %v5457 = vadd.f32 %v5187, %v5456
      %v5458 = vpop.f32.mrb[0].mxu0
      %5459 = vmatprep.mubr.f32.mxu0 %v4267
      %5460 = vmatmul.mubr.f32.gmra.mrb[0].mxu0 %v4263
      %v5461 = vpop.f32.mrb[0].mxu0
      %v5462 = vadd.f32 %v5192, %v5461
      %v5463 = vpop.f32.mrb[0].mxu0
      %5464 = vmatprep.mubr.f32.mxu0 %v4269
      %5465 = vmatmul.mubr.f32.gmra.mrb[0].mxu0 %v4265
      %v5466 = vpop.f32.mrb[0].mxu0
      %v5467 = vadd.f32 %v5197, %v5466
      %v5468 = vpop.f32.mrb[0].mxu0
      %5469 = vmatprep.mubr.f32.mxu0 %v4271
      %5470 = vmatmul.mubr.f32.gmra.mrb[0].mxu0 %v4267
      %v5471 = vpop.f32.mrb[0].mxu0
      %v5472 = vadd.f32 %v5202, %v5471
      %v5473 = vpop.f32.mrb[0].mxu0
      %5474 = vmatprep.mubr.f32.mxu0 %v4273
      %5475 = vmatmul.mubr.f32.gmra.mrb[0].mxu0 %v4269
      %v5476 = vpop.f32.mrb[0].mxu0
      %v5477 = vadd.f32 %v5207, %v5476
      %v5478 = vpop.f32.mrb[0].mxu0
      %5479 = vmatprep.mubr.f32.mxu0 %v4275
      %5480 = vmatmul.mubr.f32.gmra.mrb[0].mxu0 %v4271
      %v5481 = vpop.f32.mrb[0].mxu0
      %v5482 = vadd.f32 %v5212, %v5481
      %v5483 = vpop.f32.mrb[0].mxu0
      %5484 = vmatprep.mubr.f32.mxu0 %v4277
      %5485 = vmatmul.mubr.f32.gmra.mrb[0].mxu0 %v4273
      %v5486 = vpop.f32.mrb[0].mxu0
      %v5487 = vadd.f32 %v5217, %v5486
      %v5488 = vpop.f32.mrb[0].mxu0
      %5489 = vmatprep.mubr.f32.mxu0 %v4279
      %5490 = vmatmul.mubr.f32.gmra.mrb[0].mxu0 %v4275
      %v5491 = vpop.f32.mrb[0].mxu0
      %v5492 = vadd.f32 %v5222, %v5491
      %v5493 = vpop.f32.mrb[0].mxu0
      %5494 = vmatprep.mubr.f32.mxu0 %v4281
      %5495 = vmatmul.mubr.f32.gmra.mrb[0].mxu0 %v4277
      %v5496 = vpop.f32.mrb[0].mxu0
      %v5497 = vadd.f32 %v5227, %v5496
      %v5498 = vpop.f32.mrb[0].mxu0
      %5499 = vmatprep.mubr.f32.mxu0 %v4324
      %5500 = vmatmul.mubr.f32.gmra.mrb[0].mxu0 %v4279
      %v5501 = vpop.f32.mrb[0].mxu0
      %v5502 = vadd.f32 %v5232, %v5501
      %v5503 = vpop.f32.mrb[0].mxu0
      %5504 = vmatprep.mubr.f32.mxu0 %v4326
      %5505 = vmatmul.mubr.f32.gmra.mrb[0].mxu0 %v4281
      %v5506 = vpop.f32.mrb[0].mxu0
      %v5507 = vadd.f32 %v5237, %v5506
      %v5508 = vpop.f32.mrb[0].mxu0
      %5509 = vdwg.mxu0
      %5510 = vmatprep.subr.mxu0 0.0
      %5511 = vmatpush1.msra.mxu0 %v4883
      %5512 = vmatprep.subr.mxu0 0.0
      %5513 = vmatpush1.msra.mxu0 %v4884
      %5514 = vmatprep.subr.mxu0 0.0
      %5515 = vmatpush1.msra.mxu0 %v4885
      %5516 = vmatprep.subr.mxu0 0.0
      %5517 = vmatpush1.msra.mxu0 %v4886
      %5518 = vmatprep.subr.mxu0 0.0
      %5519 = vmatpush1.msra.mxu0 %v4887
      %5520 = vmatprep.subr.mxu0 0.0
      %5521 = vmatpush1.msra.mxu0 %v4888
      %5522 = vmatprep.subr.mxu0 0.0
      %5523 = vmatpush1.msra.mxu0 %v4889
      %5524 = vmatprep.subr.mxu0 0.0
      %5525 = vmatpush1.msra.mxu0 %v4890
      %5526 = vmatprep.subr.mxu0 0.0
      %5527 = vmatpush1.msra.mxu0 %v4891
      %5528 = vmatprep.subr.mxu0 0.0
      %5529 = vmatpush1.msra.mxu0 %v4892
      %5530 = vmatprep.subr.mxu0 0.0
      %5531 = vmatpush1.msra.mxu0 %v4893
      %5532 = vmatprep.subr.mxu0 0.0
      %5533 = vmatpush1.msra.mxu0 %v4894
      %5534 = vmatprep.subr.mxu0 0.0
      %5535 = vmatpush1.msra.mxu0 %v4895
      %5536 = vmatprep.subr.mxu0 0.0
      %5537 = vmatpush1.msra.mxu0 %v4896
      %5538 = vmatprep.subr.mxu0 0.0
      %5539 = vmatpush1.msra.mxu0 %v4897
      %5540 = vmatprep.subr.mxu0 0.0
      %5541 = vmatpush1.msra.mxu0 %v4898
      %5542 = vmatprep.subr.mxu0 0.0
      %5543 = vmatpush1.msra.mxu0 %v4899
      %5544 = vmatprep.subr.mxu0 0.0
      %5545 = vmatpush1.msra.mxu0 %v4900
      %5546 = vmatprep.subr.mxu0 0.0
      %5547 = vmatpush1.msra.mxu0 %v4901
      %5548 = vmatprep.subr.mxu0 0.0
      %5549 = vmatpush1.msra.mxu0 %v4902
      %5550 = vmatprep.subr.mxu0 0.0
      %5551 = vmatpush1.msra.mxu0 %v4903
      %5552 = vmatprep.subr.mxu0 0.0
      %5553 = vmatpush1.msra.mxu0 %v4904
      %5554 = vmatprep.subr.mxu0 0.0
      %5555 = vmatpush1.msra.mxu0 %v4905
      %5556 = vmatprep.subr.mxu0 0.0
      %5557 = vmatpush1.msra.mxu0 %v4906
      %5558 = vmatprep.subr.mxu0 0.0
      %5559 = vmatpush1.msra.mxu0 %v4907
      %5560 = vmatprep.subr.mxu0 0.0
      %5561 = vmatpush1.msra.mxu0 %v4908
      %5562 = vmatprep.subr.mxu0 0.0
      %5563 = vmatpush1.msra.mxu0 %v4909
      %5564 = vmatprep.subr.mxu0 0.0
      %5565 = vmatpush1.msra.mxu0 %v4910
      %5566 = vmatprep.subr.mxu0 0.0
      %5567 = vmatpush1.msra.mxu0 %v4911
      %5568 = vmatprep.subr.mxu0 0.0
      %5569 = vmatpush1.msra.mxu0 %v4912
      %5570 = vmatprep.subr.mxu0 0.0
      %5571 = vmatpush1.msra.mxu0 %v4913
      %5572 = vmatprep.subr.mxu0 0.0
      %5573 = vmatpush1.msra.mxu0 %v4914
      %5574 = vmatprep.mubr.f32.mxu0 %v4455
      %5575 = vmatmul.mubr.f32.gmra.mrb[0].mxu0 %v4331
      %v5576 = vpop.f32.mrb[0].mxu0
      %v5577 = vadd.f32 %v5307, %v5576
      %v5578 = vpop.f32.mrb[0].mxu0
      %5579 = vmatprep.mubr.f32.mxu0 %v4457
      %5580 = vmatmul.mubr.f32.gmra.mrb[0].mxu0 %v4333
      %v5581 = vpop.f32.mrb[0].mxu0
      %v5582 = vadd.f32 %v5312, %v5581
      %v5583 = vpop.f32.mrb[0].mxu0
      %5584 = vmatprep.mubr.f32.mxu0 %v4459
      %5585 = vmatmul.mubr.f32.gmra.mrb[0].mxu0 %v4335
      %v5586 = vpop.f32.mrb[0].mxu0
      %v5587 = vadd.f32 %v5317, %v5586
      %v5588 = vpop.f32.mrb[0].mxu0
      %5589 = vmatprep.mubr.f32.mxu0 %v4461
      %5590 = vmatmul.mubr.f32.gmra.mrb[0].mxu0 %v4337
      %v5591 = vpop.f32.mrb[0].mxu0
      %v5592 = vadd.f32 %v5322, %v5591
      %v5593 = vpop.f32.mrb[0].mxu0
      %5594 = vmatprep.mubr.f32.mxu0 %v4463
      %5595 = vmatmul.mubr.f32.gmra.mrb[0].mxu0 %v4339
      %v5596 = vpop.f32.mrb[0].mxu0
      %v5597 = vadd.f32 %v5327, %v5596
      %v5598 = vpop.f32.mrb[0].mxu0
      %5599 = vmatprep.mubr.f32.mxu0 %v4465
      %5600 = vmatmul.mubr.f32.gmra.mrb[0].mxu0 %v4341
      %v5601 = vpop.f32.mrb[0].mxu0
      %v5602 = vadd.f32 %v5332, %v5601
      %v5603 = vpop.f32.mrb[0].mxu0
      %5604 = vmatprep.mubr.f32.mxu0 %v4467
      %5605 = vmatmul.mubr.f32.gmra.mrb[0].mxu0 %v4343
      %v5606 = vpop.f32.mrb[0].mxu0
      %v5607 = vadd.f32 %v5337, %v5606
      %v5608 = vpop.f32.mrb[0].mxu0
      %5609 = vmatprep.mubr.f32.mxu0 %v4469
      %5610 = vmatmul.mubr.f32.gmra.mrb[0].mxu0 %v4345
      %v5611 = vpop.f32.mrb[0].mxu0
      %v5612 = vadd.f32 %v5342, %v5611
      %v5613 = vpop.f32.mrb[0].mxu0
      %5614 = vmatprep.mubr.f32.mxu0 %v4471
      %5615 = vmatmul.mubr.f32.gmra.mrb[0].mxu0 %v4347
      %v5616 = vpop.f32.mrb[0].mxu0
      %v5617 = vadd.f32 %v5347, %v5616
      %v5618 = vpop.f32.mrb[0].mxu0
      %5619 = vmatprep.mubr.f32.mxu0 %v4473
      %5620 = vmatmul.mubr.f32.gmra.mrb[0].mxu0 %v4349
      %v5621 = vpop.f32.mrb[0].mxu0
      %v5622 = vadd.f32 %v5352, %v5621
      %v5623 = vpop.f32.mrb[0].mxu0
      %5624 = vmatprep.mubr.f32.mxu0 %v4475
      %5625 = vmatmul.mubr.f32.gmra.mrb[0].mxu0 %v4351
      %v5626 = vpop.f32.mrb[0].mxu0
      %v5627 = vadd.f32 %v5357, %v5626
      %v5628 = vpop.f32.mrb[0].mxu0
      %5629 = vmatprep.mubr.f32.mxu0 %v4477
      %5630 = vmatmul.mubr.f32.gmra.mrb[0].mxu0 %v4353
      %v5631 = vpop.f32.mrb[0].mxu0
      %v5632 = vadd.f32 %v5362, %v5631
      %v5633 = vpop.f32.mrb[0].mxu0
      %5634 = vmatprep.mubr.f32.mxu0 %v4479
      %5635 = vmatmul.mubr.f32.gmra.mrb[0].mxu0 %v4355
      %v5636 = vpop.f32.mrb[0].mxu0
      %v5637 = vadd.f32 %v5367, %v5636
      %v5638 = vpop.f32.mrb[0].mxu0
      %5639 = vmatprep.mubr.f32.mxu0 %v4481
      %5640 = vmatmul.mubr.f32.gmra.mrb[0].mxu0 %v4357
      %v5641 = vpop.f32.mrb[0].mxu0
      %v5642 = vadd.f32 %v5372, %v5641
      %v5643 = vpop.f32.mrb[0].mxu0
      %5644 = vmatprep.mubr.f32.mxu0 %v4483
      %5645 = vmatmul.mubr.f32.gmra.mrb[0].mxu0 %v4359
      %v5646 = vpop.f32.mrb[0].mxu0
      %v5647 = vadd.f32 %v5377, %v5646
      %v5648 = vpop.f32.mrb[0].mxu0
      %5649 = vmatprep.mubr.f32.mxu0 %v4485
      %5650 = vmatmul.mubr.f32.gmra.mrb[0].mxu0 %v4361
      %v5651 = vpop.f32.mrb[0].mxu0
      %v5652 = vadd.f32 %v5382, %v5651
      %v5653 = vpop.f32.mrb[0].mxu0
      %5654 = vmatprep.mubr.f32.mxu0 %v4487
      %5655 = vmatmul.mubr.f32.gmra.mrb[0].mxu0 %v4363
      %v5656 = vpop.f32.mrb[0].mxu0
      %v5657 = vadd.f32 %v5387, %v5656
      %v5658 = vpop.f32.mrb[0].mxu0
      %5659 = vmatprep.mubr.f32.mxu0 %v4489
      %5660 = vmatmul.mubr.f32.gmra.mrb[0].mxu0 %v4365
      %v5661 = vpop.f32.mrb[0].mxu0
      %v5662 = vadd.f32 %v5392, %v5661
      %v5663 = vpop.f32.mrb[0].mxu0
      %5664 = vmatprep.mubr.f32.mxu0 %v4491
      %5665 = vmatmul.mubr.f32.gmra.mrb[0].mxu0 %v4367
      %v5666 = vpop.f32.mrb[0].mxu0
      %v5667 = vadd.f32 %v5397, %v5666
      %v5668 = vpop.f32.mrb[0].mxu0
      %5669 = vmatprep.mubr.f32.mxu0 %v4493
      %5670 = vmatmul.mubr.f32.gmra.mrb[0].mxu0 %v4369
      %v5671 = vpop.f32.mrb[0].mxu0
      %v5672 = vadd.f32 %v5402, %v5671
      %v5673 = vpop.f32.mrb[0].mxu0
      %5674 = vmatprep.mubr.f32.mxu0 %v4495
      %5675 = vmatmul.mubr.f32.gmra.mrb[0].mxu0 %v4371
      %v5676 = vpop.f32.mrb[0].mxu0
      %v5677 = vadd.f32 %v5407, %v5676
      %v5678 = vpop.f32.mrb[0].mxu0
      %5679 = vmatprep.mubr.f32.mxu0 %v4497
      %5680 = vmatmul.mubr.f32.gmra.mrb[0].mxu0 %v4373
      %v5681 = vpop.f32.mrb[0].mxu0
      %v5682 = vadd.f32 %v5412, %v5681
      %v5683 = vpop.f32.mrb[0].mxu0
      %5684 = vmatprep.mubr.f32.mxu0 %v4499
      %5685 = vmatmul.mubr.f32.gmra.mrb[0].mxu0 %v4375
      %v5686 = vpop.f32.mrb[0].mxu0
      %v5687 = vadd.f32 %v5417, %v5686
      %v5688 = vpop.f32.mrb[0].mxu0
      %5689 = vmatprep.mubr.f32.mxu0 %v4501
      %5690 = vmatmul.mubr.f32.gmra.mrb[0].mxu0 %v4377
      %v5691 = vpop.f32.mrb[0].mxu0
      %v5692 = vadd.f32 %v5422, %v5691
      %v5693 = vpop.f32.mrb[0].mxu0
      %5694 = vmatprep.mubr.f32.mxu0 %v4503
      %5695 = vmatmul.mubr.f32.gmra.mrb[0].mxu0 %v4379
      %v5696 = vpop.f32.mrb[0].mxu0
      %v5697 = vadd.f32 %v5427, %v5696
      %v5698 = vpop.f32.mrb[0].mxu0
      %5699 = vmatprep.mubr.f32.mxu0 %v4505
      %5700 = vmatmul.mubr.f32.gmra.mrb[0].mxu0 %v4381
      %v5701 = vpop.f32.mrb[0].mxu0
      %v5702 = vadd.f32 %v5432, %v5701
      %v5703 = vpop.f32.mrb[0].mxu0
      %5704 = vmatprep.mubr.f32.mxu0 %v4507
      %5705 = vmatmul.mubr.f32.gmra.mrb[0].mxu0 %v4383
      %v5706 = vpop.f32.mrb[0].mxu0
      %v5707 = vadd.f32 %v5437, %v5706
      %v5708 = vpop.f32.mrb[0].mxu0
      %5709 = vmatprep.mubr.f32.mxu0 %v4509
      %5710 = vmatmul.mubr.f32.gmra.mrb[0].mxu0 %v4385
      %v5711 = vpop.f32.mrb[0].mxu0
      %v5712 = vadd.f32 %v5442, %v5711
      %v5713 = vpop.f32.mrb[0].mxu0
      %5714 = vmatprep.mubr.f32.mxu0 %v4511
      %5715 = vmatmul.mubr.f32.gmra.mrb[0].mxu0 %v4387
      %v5716 = vpop.f32.mrb[0].mxu0
      %v5717 = vadd.f32 %v5447, %v5716
      %v5718 = vpop.f32.mrb[0].mxu0
      %5719 = vmatprep.mubr.f32.mxu0 %v4513
      %5720 = vmatmul.mubr.f32.gmra.mrb[0].mxu0 %v4389
      %v5721 = vpop.f32.mrb[0].mxu0
      %v5722 = vadd.f32 %v5452, %v5721
      %v5723 = vpop.f32.mrb[0].mxu0
      %5724 = vmatprep.mubr.f32.mxu0 %v4515
      %5725 = vmatmul.mubr.f32.gmra.mrb[0].mxu0 %v4391
      %v5726 = vpop.f32.mrb[0].mxu0
      %v5727 = vadd.f32 %v5457, %v5726
      %v5728 = vpop.f32.mrb[0].mxu0
      %5729 = vmatprep.mubr.f32.mxu0 %v4517
      %5730 = vmatmul.mubr.f32.gmra.mrb[0].mxu0 %v4393
      %v5731 = vpop.f32.mrb[0].mxu0
      %v5732 = vadd.f32 %v5462, %v5731
      %v5733 = vpop.f32.mrb[0].mxu0
      %5734 = vmatprep.mubr.f32.mxu0 %v4519
      %5735 = vmatmul.mubr.f32.gmra.mrb[0].mxu0 %v4395
      %v5736 = vpop.f32.mrb[0].mxu0
      %v5737 = vadd.f32 %v5467, %v5736
      %v5738 = vpop.f32.mrb[0].mxu0
      %5739 = vmatprep.mubr.f32.mxu0 %v4521
      %5740 = vmatmul.mubr.f32.gmra.mrb[0].mxu0 %v4397
      %v5741 = vpop.f32.mrb[0].mxu0
      %v5742 = vadd.f32 %v5472, %v5741
      %v5743 = vpop.f32.mrb[0].mxu0
      %5744 = vmatprep.mubr.f32.mxu0 %v4523
      %5745 = vmatmul.mubr.f32.gmra.mrb[0].mxu0 %v4399
      %v5746 = vpop.f32.mrb[0].mxu0
      %v5747 = vadd.f32 %v5477, %v5746
      %v5748 = vpop.f32.mrb[0].mxu0
      %5749 = vmatprep.mubr.f32.mxu0 %v4525
      %5750 = vmatmul.mubr.f32.gmra.mrb[0].mxu0 %v4401
      %v5751 = vpop.f32.mrb[0].mxu0
      %v5752 = vadd.f32 %v5482, %v5751
      %v5753 = vpop.f32.mrb[0].mxu0
      %5754 = vmatprep.mubr.f32.mxu0 %v4527
      %5755 = vmatmul.mubr.f32.gmra.mrb[0].mxu0 %v4403
      %v5756 = vpop.f32.mrb[0].mxu0
      %v5757 = vadd.f32 %v5487, %v5756
      %v5758 = vpop.f32.mrb[0].mxu0
      %5759 = vmatprep.mubr.f32.mxu0 %v4529
      %5760 = vmatmul.mubr.f32.gmra.mrb[0].mxu0 %v4405
      %v5761 = vpop.f32.mrb[0].mxu0
      %v5762 = vadd.f32 %v5492, %v5761
      %v5763 = vpop.f32.mrb[0].mxu0
      %5764 = vmatprep.mubr.f32.mxu0 %v4531
      %5765 = vmatmul.mubr.f32.gmra.mrb[0].mxu0 %v4407
      %v5766 = vpop.f32.mrb[0].mxu0
      %v5767 = vadd.f32 %v5497, %v5766
      %v5768 = vpop.f32.mrb[0].mxu0
      %5769 = vmatprep.mubr.f32.mxu0 %v4533
      %5770 = vmatmul.mubr.f32.gmra.mrb[0].mxu0 %v4409
      %v5771 = vpop.f32.mrb[0].mxu0
      %v5772 = vadd.f32 %v5502, %v5771
      %v5773 = vpop.f32.mrb[0].mxu0
      %5774 = vmatprep.mubr.f32.mxu0 %v4535
      %5775 = vmatmul.mubr.f32.gmra.mrb[0].mxu0 %v4411
      %v5776 = vpop.f32.mrb[0].mxu0
      %v5777 = vadd.f32 %v5507, %v5776
      %v5778 = vpop.f32.mrb[0].mxu0
      %5779 = vdwg.mxu0
      %5780 = vmatprep.subr.mxu0 0.0
      %5781 = vmatpush1.msra.mxu0 %v4915
      %5782 = vmatprep.subr.mxu0 0.0
      %5783 = vmatpush1.msra.mxu0 %v4916
      %5784 = vmatprep.subr.mxu0 0.0
      %5785 = vmatpush1.msra.mxu0 %v4917
      %5786 = vmatprep.subr.mxu0 0.0
      %5787 = vmatpush1.msra.mxu0 %v4918
      %5788 = vmatprep.subr.mxu0 0.0
      %5789 = vmatpush1.msra.mxu0 %v4919
      %5790 = vmatprep.subr.mxu0 0.0
      %5791 = vmatpush1.msra.mxu0 %v4920
      %5792 = vmatprep.subr.mxu0 0.0
      %5793 = vmatpush1.msra.mxu0 %v4921
      %5794 = vmatprep.subr.mxu0 0.0
      %5795 = vmatpush1.msra.mxu0 %v4922
      %5796 = vmatprep.subr.mxu0 0.0
      %5797 = vmatpush1.msra.mxu0 %v4923
      %5798 = vmatprep.subr.mxu0 0.0
      %5799 = vmatpush1.msra.mxu0 %v4924
      %5800 = vmatprep.subr.mxu0 0.0
      %5801 = vmatpush1.msra.mxu0 %v4925
      %5802 = vmatprep.subr.mxu0 0.0
      %5803 = vmatpush1.msra.mxu0 %v4926
      %5804 = vmatprep.subr.mxu0 0.0
      %5805 = vmatpush1.msra.mxu0 %v4927
      %5806 = vmatprep.subr.mxu0 0.0
      %5807 = vmatpush1.msra.mxu0 %v4928
      %5808 = vmatprep.subr.mxu0 0.0
      %5809 = vmatpush1.msra.mxu0 %v4929
      %5810 = vmatprep.subr.mxu0 0.0
      %5811 = vmatpush1.msra.mxu0 %v4930
      %5812 = vmatprep.subr.mxu0 0.0
      %5813 = vmatpush1.msra.mxu0 %v4931
      %5814 = vmatprep.subr.mxu0 0.0
      %5815 = vmatpush1.msra.mxu0 %v4932
      %5816 = vmatprep.subr.mxu0 0.0
      %5817 = vmatpush1.msra.mxu0 %v4933
      %5818 = vmatprep.subr.mxu0 0.0
      %5819 = vmatpush1.msra.mxu0 %v4934
      %5820 = vmatprep.subr.mxu0 0.0
      %5821 = vmatpush1.msra.mxu0 %v4935
      %5822 = vmatprep.subr.mxu0 0.0
      %5823 = vmatpush1.msra.mxu0 %v4936
      %5824 = vmatprep.subr.mxu0 0.0
      %5825 = vmatpush1.msra.mxu0 %v4937
      %5826 = vmatprep.subr.mxu0 0.0
      %5827 = vmatpush1.msra.mxu0 %v4938
      %5828 = vmatprep.subr.mxu0 0.0
      %5829 = vmatpush1.msra.mxu0 %v4939
      %5830 = vmatprep.subr.mxu0 0.0
      %5831 = vmatpush1.msra.mxu0 %v4940
      %5832 = vmatprep.subr.mxu0 0.0
      %5833 = vmatpush1.msra.mxu0 %v4941
      %5834 = vmatprep.subr.mxu0 0.0
      %5835 = vmatpush1.msra.mxu0 %v4942
      %5836 = vmatprep.subr.mxu0 0.0
      %5837 = vmatpush1.msra.mxu0 %v4943
      %5838 = vmatprep.subr.mxu0 0.0
      %5839 = vmatpush1.msra.mxu0 %v4944
      %5840 = vmatprep.subr.mxu0 0.0
      %5841 = vmatpush1.msra.mxu0 %v4945
      %5842 = vmatprep.subr.mxu0 0.0
      %5843 = vmatpush1.msra.mxu0 %v4946
      %5844 = vmatprep.mubr.f32.mxu0 %v4581
      %5845 = vmatmul.mubr.f32.gmra.mrb[0].mxu0 %v4459
      %v5846 = vpop.f32.mrb[0].mxu0
      %v5847 = vadd.f32 %v5577, %v5846
      %v5848 = vpop.f32.mrb[0].mxu0
      %5849 = vmatprep.mubr.f32.mxu0 %v4583
      %5850 = vmatmul.mubr.f32.gmra.mrb[0].mxu0 %v4461
      %v5851 = vpop.f32.mrb[0].mxu0
      %v5852 = vadd.f32 %v5582, %v5851
      %v5853 = vpop.f32.mrb[0].mxu0
      %5854 = vmatprep.mubr.f32.mxu0 %v4585
      %5855 = vmatmul.mubr.f32.gmra.mrb[0].mxu0 %v4463
      %v5856 = vpop.f32.mrb[0].mxu0
      %v5857 = vadd.f32 %v5587, %v5856
      %v5858 = vpop.f32.mrb[0].mxu0
      %5859 = vmatprep.mubr.f32.mxu0 %v4587
      %5860 = vmatmul.mubr.f32.gmra.mrb[0].mxu0 %v4465
      %v5861 = vpop.f32.mrb[0].mxu0
      %v5862 = vadd.f32 %v5592, %v5861
      %v5863 = vpop.f32.mrb[0].mxu0
      %5864 = vmatprep.mubr.f32.mxu0 %v4589
      %5865 = vmatmul.mubr.f32.gmra.mrb[0].mxu0 %v4467
      %v5866 = vpop.f32.mrb[0].mxu0
      %v5867 = vadd.f32 %v5597, %v5866
      %v5868 = vpop.f32.mrb[0].mxu0
      %5869 = vmatprep.mubr.f32.mxu0 %v4591
      %5870 = vmatmul.mubr.f32.gmra.mrb[0].mxu0 %v4469
      %v5871 = vpop.f32.mrb[0].mxu0
      %v5872 = vadd.f32 %v5602, %v5871
      %v5873 = vpop.f32.mrb[0].mxu0
      %5874 = vmatprep.mubr.f32.mxu0 %v4593
      %5875 = vmatmul.mubr.f32.gmra.mrb[0].mxu0 %v4471
      %v5876 = vpop.f32.mrb[0].mxu0
      %v5877 = vadd.f32 %v5607, %v5876
      %v5878 = vpop.f32.mrb[0].mxu0
      %5879 = vmatprep.mubr.f32.mxu0 %v4595
      %5880 = vmatmul.mubr.f32.gmra.mrb[0].mxu0 %v4473
      %v5881 = vpop.f32.mrb[0].mxu0
      %v5882 = vadd.f32 %v5612, %v5881
      %v5883 = vpop.f32.mrb[0].mxu0
      %5884 = vmatprep.mubr.f32.mxu0 %v4597
      %5885 = vmatmul.mubr.f32.gmra.mrb[0].mxu0 %v4475
      %v5886 = vpop.f32.mrb[0].mxu0
      %v5887 = vadd.f32 %v5617, %v5886
      %v5888 = vpop.f32.mrb[0].mxu0
      %5889 = vmatprep.mubr.f32.mxu0 %v4599
      %5890 = vmatmul.mubr.f32.gmra.mrb[0].mxu0 %v4477
      %v5891 = vpop.f32.mrb[0].mxu0
      %v5892 = vadd.f32 %v5622, %v5891
      %v5893 = vpop.f32.mrb[0].mxu0
      %5894 = vmatprep.mubr.f32.mxu0 %v4601
      %5895 = vmatmul.mubr.f32.gmra.mrb[0].mxu0 %v4479
      %v5896 = vpop.f32.mrb[0].mxu0
      %v5897 = vadd.f32 %v5627, %v5896
      %v5898 = vpop.f32.mrb[0].mxu0
      %5899 = vmatprep.mubr.f32.mxu0 %v4603
      %5900 = vmatmul.mubr.f32.gmra.mrb[0].mxu0 %v4481
      %v5901 = vpop.f32.mrb[0].mxu0
      %v5902 = vadd.f32 %v5632, %v5901
      %v5903 = vpop.f32.mrb[0].mxu0
      %5904 = vmatprep.mubr.f32.mxu0 %v4605
      %5905 = vmatmul.mubr.f32.gmra.mrb[0].mxu0 %v4483
      %v5906 = vpop.f32.mrb[0].mxu0
      %v5907 = vadd.f32 %v5637, %v5906
      %v5908 = vpop.f32.mrb[0].mxu0
      %5909 = vmatprep.mubr.f32.mxu0 %v4607
      %5910 = vmatmul.mubr.f32.gmra.mrb[0].mxu0 %v4485
      %v5911 = vpop.f32.mrb[0].mxu0
      %v5912 = vadd.f32 %v5642, %v5911
      %v5913 = vpop.f32.mrb[0].mxu0
      %5914 = vmatprep.mubr.f32.mxu0 %v4609
      %5915 = vmatmul.mubr.f32.gmra.mrb[0].mxu0 %v4487
      %v5916 = vpop.f32.mrb[0].mxu0
      %v5917 = vadd.f32 %v5647, %v5916
      %v5918 = vpop.f32.mrb[0].mxu0
      %5919 = vmatprep.mubr.f32.mxu0 %v4611
      %5920 = vmatmul.mubr.f32.gmra.mrb[0].mxu0 %v4489
      %v5921 = vpop.f32.mrb[0].mxu0
      %v5922 = vadd.f32 %v5652, %v5921
      %v5923 = vpop.f32.mrb[0].mxu0
      %5924 = vmatprep.mubr.f32.mxu0 %v4613
      %5925 = vmatmul.mubr.f32.gmra.mrb[0].mxu0 %v4491
      %v5926 = vpop.f32.mrb[0].mxu0
      %v5927 = vadd.f32 %v5657, %v5926
      %v5928 = vpop.f32.mrb[0].mxu0
      %5929 = vmatprep.mubr.f32.mxu0 %v4615
      %5930 = vmatmul.mubr.f32.gmra.mrb[0].mxu0 %v4493
      %v5931 = vpop.f32.mrb[0].mxu0
      %v5932 = vadd.f32 %v5662, %v5931
      %v5933 = vpop.f32.mrb[0].mxu0
      %5934 = vmatprep.mubr.f32.mxu0 %v4617
      %5935 = vmatmul.mubr.f32.gmra.mrb[0].mxu0 %v4495
      %v5936 = vpop.f32.mrb[0].mxu0
      %v5937 = vadd.f32 %v5667, %v5936
      %v5938 = vpop.f32.mrb[0].mxu0
      %5939 = vmatprep.mubr.f32.mxu0 %v4619
      %5940 = vmatmul.mubr.f32.gmra.mrb[0].mxu0 %v4497
      %v5941 = vpop.f32.mrb[0].mxu0
      %v5942 = vadd.f32 %v5672, %v5941
      %v5943 = vpop.f32.mrb[0].mxu0
      %5944 = vmatprep.mubr.f32.mxu0 %v4621
      %5945 = vmatmul.mubr.f32.gmra.mrb[0].mxu0 %v4499
      %v5946 = vpop.f32.mrb[0].mxu0
      %v5947 = vadd.f32 %v5677, %v5946
      %v5948 = vpop.f32.mrb[0].mxu0
      %5949 = vmatprep.mubr.f32.mxu0 %v4623
      %5950 = vmatmul.mubr.f32.gmra.mrb[0].mxu0 %v4501
      %v5951 = vpop.f32.mrb[0].mxu0
      %v5952 = vadd.f32 %v5682, %v5951
      %v5953 = vpop.f32.mrb[0].mxu0
      %5954 = vmatprep.mubr.f32.mxu0 %v4625
      %5955 = vmatmul.mubr.f32.gmra.mrb[0].mxu0 %v4503
      %v5956 = vpop.f32.mrb[0].mxu0
      %v5957 = vadd.f32 %v5687, %v5956
      %v5958 = vpop.f32.mrb[0].mxu0
      %5959 = vmatprep.mubr.f32.mxu0 %v4627
      %5960 = vmatmul.mubr.f32.gmra.mrb[0].mxu0 %v4505
      %v5961 = vpop.f32.mrb[0].mxu0
      %v5962 = vadd.f32 %v5692, %v5961
      %v5963 = vpop.f32.mrb[0].mxu0
      %5964 = vmatprep.mubr.f32.mxu0 %v4629
      %5965 = vmatmul.mubr.f32.gmra.mrb[0].mxu0 %v4507
      %v5966 = vpop.f32.mrb[0].mxu0
      %v5967 = vadd.f32 %v5697, %v5966
      %v5968 = vpop.f32.mrb[0].mxu0
      %5969 = vmatprep.mubr.f32.mxu0 %v4631
      %5970 = vmatmul.mubr.f32.gmra.mrb[0].mxu0 %v4509
      %v5971 = vpop.f32.mrb[0].mxu0
      %v5972 = vadd.f32 %v5702, %v5971
      %v5973 = vpop.f32.mrb[0].mxu0
      %5974 = vmatprep.mubr.f32.mxu0 %v4633
      %5975 = vmatmul.mubr.f32.gmra.mrb[0].mxu0 %v4511
      %v5976 = vpop.f32.mrb[0].mxu0
      %v5977 = vadd.f32 %v5707, %v5976
      %v5978 = vpop.f32.mrb[0].mxu0
      %5979 = vmatprep.mubr.f32.mxu0 %v4635
      %5980 = vmatmul.mubr.f32.gmra.mrb[0].mxu0 %v4513
      %v5981 = vpop.f32.mrb[0].mxu0
      %v5982 = vadd.f32 %v5712, %v5981
      %v5983 = vpop.f32.mrb[0].mxu0
      %5984 = vmatprep.mubr.f32.mxu0 %v4637
      %5985 = vmatmul.mubr.f32.gmra.mrb[0].mxu0 %v4515
      %v5986 = vpop.f32.mrb[0].mxu0
      %v5987 = vadd.f32 %v5717, %v5986
      %v5988 = vpop.f32.mrb[0].mxu0
      %5989 = vmatprep.mubr.f32.mxu0 %v4639
      %5990 = vmatmul.mubr.f32.gmra.mrb[0].mxu0 %v4517
      %v5991 = vpop.f32.mrb[0].mxu0
      %v5992 = vadd.f32 %v5722, %v5991
      %v5993 = vpop.f32.mrb[0].mxu0
      %5994 = vmatprep.mubr.f32.mxu0 %v4641
      %5995 = vmatmul.mubr.f32.gmra.mrb[0].mxu0 %v4519
      %v5996 = vpop.f32.mrb[0].mxu0
      %v5997 = vadd.f32 %v5727, %v5996
      %v5998 = vpop.f32.mrb[0].mxu0
      %5999 = vmatprep.mubr.f32.mxu0 %v4643
      %6000 = vmatmul.mubr.f32.gmra.mrb[0].mxu0 %v4521
      %v6001 = vpop.f32.mrb[0].mxu0
      %v6002 = vadd.f32 %v5732, %v6001
      %v6003 = vpop.f32.mrb[0].mxu0
      %6004 = vmatprep.mubr.f32.mxu0 %v4645
      %6005 = vmatmul.mubr.f32.gmra.mrb[0].mxu0 %v4523
      %v6006 = vpop.f32.mrb[0].mxu0
      %v6007 = vadd.f32 %v5737, %v6006
      %v6008 = vpop.f32.mrb[0].mxu0
      %6009 = vmatprep.mubr.f32.mxu0 %v4647
      %6010 = vmatmul.mubr.f32.gmra.mrb[0].mxu0 %v4525
      %v6011 = vpop.f32.mrb[0].mxu0
      %v6012 = vadd.f32 %v5742, %v6011
      %v6013 = vpop.f32.mrb[0].mxu0
      %6014 = vmatprep.mubr.f32.mxu0 %v4649
      %6015 = vmatmul.mubr.f32.gmra.mrb[0].mxu0 %v4527
      %v6016 = vpop.f32.mrb[0].mxu0
      %v6017 = vadd.f32 %v5747, %v6016
      %v6018 = vpop.f32.mrb[0].mxu0
      %6019 = vmatprep.mubr.f32.mxu0 %v4651
      %6020 = vmatmul.mubr.f32.gmra.mrb[0].mxu0 %v4529
      %v6021 = vpop.f32.mrb[0].mxu0
      %v6022 = vadd.f32 %v5752, %v6021
      %v6023 = vpop.f32.mrb[0].mxu0
      %6024 = vmatprep.mubr.f32.mxu0 %v4653
      %6025 = vmatmul.mubr.f32.gmra.mrb[0].mxu0 %v4531
      %v6026 = vpop.f32.mrb[0].mxu0
      %v6027 = vadd.f32 %v5757, %v6026
      %v6028 = vpop.f32.mrb[0].mxu0
      %6029 = vmatprep.mubr.f32.mxu0 %v4655
      %6030 = vmatmul.mubr.f32.gmra.mrb[0].mxu0 %v4533
      %v6031 = vpop.f32.mrb[0].mxu0
      %v6032 = vadd.f32 %v5762, %v6031
      %v6033 = vpop.f32.mrb[0].mxu0
      %6034 = vmatprep.mubr.f32.mxu0 %v4657
      %6035 = vmatmul.mubr.f32.gmra.mrb[0].mxu0 %v4535
      %v6036 = vpop.f32.mrb[0].mxu0
      %v6037 = vadd.f32 %v5767, %v6036
      %v6038 = vpop.f32.mrb[0].mxu0
      %6039 = vmatprep.mubr.f32.mxu0 %v4658
      %6040 = vmatmul.mubr.f32.gmra.mrb[0].mxu0 %v4577
      %v6041 = vpop.f32.mrb[0].mxu0
      %v6042 = vadd.f32 %v5772, %v6041
      %v6043 = vpop.f32.mrb[0].mxu0
      %6044 = vmatprep.mubr.f32.mxu0 %v1834
      %6045 = vmatmul.mubr.f32.gmra.mrb[0].mxu0 %v1750
      %v6046 = vpop.f32.mrb[0].mxu0
      %v6047 = vadd.f32 %v5777, %v6046
      %v6048 = vpop.f32.mrb[0].mxu0
      %6049 = vdwg.mxu0
      %6050 = vmatprep.subr.mxu0 0.0
      %6051 = vmatpush1.msra.mxu0 %v4947
      %6052 = vmatprep.subr.mxu0 0.0
      %6053 = vmatpush1.msra.mxu0 %v4948
      %6054 = vmatprep.subr.mxu0 0.0
      %6055 = vmatpush1.msra.mxu0 %v4949
      %6056 = vmatprep.subr.mxu0 0.0
      %6057 = vmatpush1.msra.mxu0 %v4950
      %6058 = vmatprep.subr.mxu0 0.0
      %6059 = vmatpush1.msra.mxu0 %v4951
      %6060 = vmatprep.subr.mxu0 0.0
      %6061 = vmatpush1.msra.mxu0 %v4952
      %6062 = vmatprep.subr.mxu0 0.0
      %6063 = vmatpush1.msra.mxu0 %v4953
      %6064 = vmatprep.subr.mxu0 0.0
      %6065 = vmatpush1.msra.mxu0 %v4954
      %6066 = vmatprep.subr.mxu0 0.0
      %6067 = vmatpush1.msra.mxu0 %v4955
      %6068 = vmatprep.subr.mxu0 0.0
      %6069 = vmatpush1.msra.mxu0 %v4956
      %6070 = vmatprep.subr.mxu0 0.0
      %6071 = vmatpush1.msra.mxu0 %v4957
      %6072 = vmatprep.subr.mxu0 0.0
      %6073 = vmatpush1.msra.mxu0 %v4958
      %6074 = vmatprep.subr.mxu0 0.0
      %6075 = vmatpush1.msra.mxu0 %v4959
      %6076 = vmatprep.subr.mxu0 0.0
      %6077 = vmatpush1.msra.mxu0 %v4960
      %6078 = vmatprep.subr.mxu0 0.0
      %6079 = vmatpush1.msra.mxu0 %v4961
      %6080 = vmatprep.subr.mxu0 0.0
      %6081 = vmatpush1.msra.mxu0 %v4962
      %6082 = vmatprep.subr.mxu0 0.0
      %6083 = vmatpush1.msra.mxu0 0.0
      %6084 = vmatprep.subr.mxu0 0.0
      %6085 = vmatpush1.msra.mxu0 0.0
      %6086 = vmatprep.subr.mxu0 0.0
      %6087 = vmatpush1.msra.mxu0 0.0
      %6088 = vmatprep.subr.mxu0 0.0
      %6089 = vmatpush1.msra.mxu0 0.0
      %6090 = vmatprep.subr.mxu0 0.0
      %6091 = vmatpush1.msra.mxu0 0.0
      %6092 = vmatprep.subr.mxu0 0.0
      %6093 = vmatpush1.msra.mxu0 0.0
      %6094 = vmatprep.subr.mxu0 0.0
      %6095 = vmatpush1.msra.mxu0 0.0
      %6096 = vmatprep.subr.mxu0 0.0
      %6097 = vmatpush1.msra.mxu0 0.0
      %6098 = vmatprep.subr.mxu0 0.0
      %6099 = vmatpush1.msra.mxu0 0.0
      %6100 = vmatprep.subr.mxu0 0.0
      %6101 = vmatpush1.msra.mxu0 0.0
      %6102 = vmatprep.subr.mxu0 0.0
      %6103 = vmatpush1.msra.mxu0 0.0
      %6104 = vmatprep.subr.mxu0 0.0
      %6105 = vmatpush1.msra.mxu0 0.0
      %6106 = vmatprep.subr.mxu0 0.0
      %6107 = vmatpush1.msra.mxu0 0.0
      %6108 = vmatprep.subr.mxu0 0.0
      %6109 = vmatpush1.msra.mxu0 0.0
      %6110 = vmatprep.subr.mxu0 0.0
      %6111 = vmatpush1.msra.mxu0 0.0
      %6112 = vmatprep.subr.mxu0 0.0
      %6113 = vmatpush1.msra.mxu0 0.0
      %6114 = vmatprep.mubr.f32.mxu0 0.0
      %6115 = vmatmul.mubr.f32.gmra.mrb[0].mxu0 %v4701
      %v6116 = vpop.f32.mrb[0].mxu0
      %v6117 = vadd.f32 %v5847, %v6116
      %v6118 = vpop.f32.mrb[0].mxu0
      %6119 = vmatprep.mubr.f32.mxu0 0.0
      %6120 = vmatmul.mubr.f32.gmra.mrb[0].mxu0 %v4703
      %v6121 = vpop.f32.mrb[0].mxu0
      %v6122 = vadd.f32 %v5852, %v6121
      %v6123 = vpop.f32.mrb[0].mxu0
      %6124 = vmatprep.mubr.f32.mxu0 0.0
      %6125 = vmatmul.mubr.f32.gmra.mrb[0].mxu0 %v4705
      %v6126 = vpop.f32.mrb[0].mxu0
      %v6127 = vadd.f32 %v5857, %v6126
      %v6128 = vpop.f32.mrb[0].mxu0
      %6129 = vmatprep.mubr.f32.mxu0 0.0
      %6130 = vmatmul.mubr.f32.gmra.mrb[0].mxu0 %v4707
      %v6131 = vpop.f32.mrb[0].mxu0
      %v6132 = vadd.f32 %v5862, %v6131
      %v6133 = vpop.f32.mrb[0].mxu0
      %6134 = vmatprep.mubr.f32.mxu0 0.0
      %6135 = vmatmul.mubr.f32.gmra.mrb[0].mxu0 %v4709
      %v6136 = vpop.f32.mrb[0].mxu0
      %v6137 = vadd.f32 %v5867, %v6136
      %v6138 = vpop.f32.mrb[0].mxu0
      %6139 = vmatprep.mubr.f32.mxu0 0.0
      %6140 = vmatmul.mubr.f32.gmra.mrb[0].mxu0 %v4711
      %v6141 = vpop.f32.mrb[0].mxu0
      %v6142 = vadd.f32 %v5872, %v6141
      %v6143 = vpop.f32.mrb[0].mxu0
      %6144 = vmatprep.mubr.f32.mxu0 0.0
      %6145 = vmatmul.mubr.f32.gmra.mrb[0].mxu0 %v4713
      %v6146 = vpop.f32.mrb[0].mxu0
      %v6147 = vadd.f32 %v5877, %v6146
      %v6148 = vpop.f32.mrb[0].mxu0
      %6149 = vmatprep.mubr.f32.mxu0 0.0
      %6150 = vmatmul.mubr.f32.gmra.mrb[0].mxu0 %v4715
      %v6151 = vpop.f32.mrb[0].mxu0
      %v6152 = vadd.f32 %v5882, %v6151
      %v6153 = vpop.f32.mrb[0].mxu0
      %6154 = vmatprep.mubr.f32.mxu0 0.0
      %6155 = vmatmul.mubr.f32.gmra.mrb[0].mxu0 %v4717
      %v6156 = vpop.f32.mrb[0].mxu0
      %v6157 = vadd.f32 %v5887, %v6156
      %v6158 = vpop.f32.mrb[0].mxu0
      %6159 = vmatprep.mubr.f32.mxu0 0.0
      %6160 = vmatmul.mubr.f32.gmra.mrb[0].mxu0 %v4719
      %v6161 = vpop.f32.mrb[0].mxu0
      %v6162 = vadd.f32 %v5892, %v6161
      %v6163 = vpop.f32.mrb[0].mxu0
      %6164 = vmatprep.mubr.f32.mxu0 0.0
      %6165 = vmatmul.mubr.f32.gmra.mrb[0].mxu0 %v4721
      %v6166 = vpop.f32.mrb[0].mxu0
      %v6167 = vadd.f32 %v5897, %v6166
      %v6168 = vpop.f32.mrb[0].mxu0
      %6169 = vmatprep.mubr.f32.mxu0 0.0
      %6170 = vmatmul.mubr.f32.gmra.mrb[0].mxu0 %v4723
      %v6171 = vpop.f32.mrb[0].mxu0
      %v6172 = vadd.f32 %v5902, %v6171
      %v6173 = vpop.f32.mrb[0].mxu0
      %6174 = vmatprep.mubr.f32.mxu0 0.0
      %6175 = vmatmul.mubr.f32.gmra.mrb[0].mxu0 %v4725
      %v6176 = vpop.f32.mrb[0].mxu0
      %v6177 = vadd.f32 %v5907, %v6176
      %v6178 = vpop.f32.mrb[0].mxu0
      %6179 = vmatprep.mubr.f32.mxu0 0.0
      %6180 = vmatmul.mubr.f32.gmra.mrb[0].mxu0 %v4727
      %v6181 = vpop.f32.mrb[0].mxu0
      %v6182 = vadd.f32 %v5912, %v6181
      %v6183 = vpop.f32.mrb[0].mxu0
      %6184 = vmatprep.mubr.f32.mxu0 0.0
      %6185 = vmatmul.mubr.f32.gmra.mrb[0].mxu0 %v4729
      %v6186 = vpop.f32.mrb[0].mxu0
      %v6187 = vadd.f32 %v5917, %v6186
      %v6188 = vpop.f32.mrb[0].mxu0
      %6189 = vmatprep.mubr.f32.mxu0 0.0
      %6190 = vmatmul.mubr.f32.gmra.mrb[0].mxu0 %v4731
      %v6191 = vpop.f32.mrb[0].mxu0
      %v6192 = vadd.f32 %v5922, %v6191
      %v6193 = vpop.f32.mrb[0].mxu0
      %6194 = vmatprep.mubr.f32.mxu0 0.0
      %6195 = vmatmul.mubr.f32.gmra.mrb[0].mxu0 %v4733
      %v6196 = vpop.f32.mrb[0].mxu0
      %v6197 = vadd.f32 %v5927, %v6196
      %v6198 = vpop.f32.mrb[0].mxu0
      %6199 = vmatprep.mubr.f32.mxu0 0.0
      %6200 = vmatmul.mubr.f32.gmra.mrb[0].mxu0 %v4735
      %v6201 = vpop.f32.mrb[0].mxu0
      %v6202 = vadd.f32 %v5932, %v6201
      %v6203 = vpop.f32.mrb[0].mxu0
      %6204 = vmatprep.mubr.f32.mxu0 0.0
      %6205 = vmatmul.mubr.f32.gmra.mrb[0].mxu0 %v4737
      %v6206 = vpop.f32.mrb[0].mxu0
      %v6207 = vadd.f32 %v5937, %v6206
      %v6208 = vpop.f32.mrb[0].mxu0
      %6209 = vmatprep.mubr.f32.mxu0 0.0
      %6210 = vmatmul.mubr.f32.gmra.mrb[0].mxu0 %v4739
      %v6211 = vpop.f32.mrb[0].mxu0
      %v6212 = vadd.f32 %v5942, %v6211
      %v6213 = vpop.f32.mrb[0].mxu0
      %6214 = vmatprep.mubr.f32.mxu0 0.0
      %6215 = vmatmul.mubr.f32.gmra.mrb[0].mxu0 %v4741
      %v6216 = vpop.f32.mrb[0].mxu0
      %v6217 = vadd.f32 %v5947, %v6216
      %v6218 = vpop.f32.mrb[0].mxu0
      %6219 = vmatprep.mubr.f32.mxu0 0.0
      %6220 = vmatmul.mubr.f32.gmra.mrb[0].mxu0 %v4743
      %v6221 = vpop.f32.mrb[0].mxu0
      %v6222 = vadd.f32 %v5952, %v6221
      %v6223 = vpop.f32.mrb[0].mxu0
      %6224 = vmatprep.mubr.f32.mxu0 0.0
      %6225 = vmatmul.mubr.f32.gmra.mrb[0].mxu0 %v4745
      %v6226 = vpop.f32.mrb[0].mxu0
      %v6227 = vadd.f32 %v5957, %v6226
      %v6228 = vpop.f32.mrb[0].mxu0
      %6229 = vmatprep.mubr.f32.mxu0 0.0
      %6230 = vmatmul.mubr.f32.gmra.mrb[0].mxu0 %v4747
      %v6231 = vpop.f32.mrb[0].mxu0
      %v6232 = vadd.f32 %v5962, %v6231
      %v6233 = vpop.f32.mrb[0].mxu0
      %6234 = vmatprep.mubr.f32.mxu0 0.0
      %6235 = vmatmul.mubr.f32.gmra.mrb[0].mxu0 %v4749
      %v6236 = vpop.f32.mrb[0].mxu0
      %v6237 = vadd.f32 %v5967, %v6236
      %v6238 = vpop.f32.mrb[0].mxu0
      %6239 = vmatprep.mubr.f32.mxu0 0.0
      %6240 = vmatmul.mubr.f32.gmra.mrb[0].mxu0 %v4751
      %v6241 = vpop.f32.mrb[0].mxu0
      %v6242 = vadd.f32 %v5972, %v6241
      %v6243 = vpop.f32.mrb[0].mxu0
      %6244 = vmatprep.mubr.f32.mxu0 0.0
      %6245 = vmatmul.mubr.f32.gmra.mrb[0].mxu0 %v4753
      %v6246 = vpop.f32.mrb[0].mxu0
      %v6247 = vadd.f32 %v5977, %v6246
      %v6248 = vpop.f32.mrb[0].mxu0
      %6249 = vmatprep.mubr.f32.mxu0 0.0
      %6250 = vmatmul.mubr.f32.gmra.mrb[0].mxu0 %v4755
      %v6251 = vpop.f32.mrb[0].mxu0
      %v6252 = vadd.f32 %v5982, %v6251
      %v6253 = vpop.f32.mrb[0].mxu0
      %6254 = vmatprep.mubr.f32.mxu0 0.0
      %6255 = vmatmul.mubr.f32.gmra.mrb[0].mxu0 %v4757
      %v6256 = vpop.f32.mrb[0].mxu0
      %v6257 = vadd.f32 %v5987, %v6256
      %v6258 = vpop.f32.mrb[0].mxu0
      %6259 = vmatprep.mubr.f32.mxu0 0.0
      %6260 = vmatmul.mubr.f32.gmra.mrb[0].mxu0 %v4759
      %v6261 = vpop.f32.mrb[0].mxu0
      %v6262 = vadd.f32 %v5992, %v6261
      %v6263 = vpop.f32.mrb[0].mxu0
      %6264 = vmatprep.mubr.f32.mxu0 0.0
      %6265 = vmatmul.mubr.f32.gmra.mrb[0].mxu0 %v4761
      %v6266 = vpop.f32.mrb[0].mxu0
      %v6267 = vadd.f32 %v5997, %v6266
      %v6268 = vpop.f32.mrb[0].mxu0
      %6269 = vmatprep.mubr.f32.mxu0 0.0
      %6270 = vmatmul.mubr.f32.gmra.mrb[0].mxu0 %v4763
      %v6271 = vpop.f32.mrb[0].mxu0
      %v6272 = vadd.f32 %v6002, %v6271
      %v6273 = vpop.f32.mrb[0].mxu0
      %6274 = vmatprep.mubr.f32.mxu0 0.0
      %6275 = vmatmul.mubr.f32.gmra.mrb[0].mxu0 %v4765
      %v6276 = vpop.f32.mrb[0].mxu0
      %v6277 = vadd.f32 %v6007, %v6276
      %v6278 = vpop.f32.mrb[0].mxu0
      %6279 = vmatprep.mubr.f32.mxu0 0.0
      %6280 = vmatmul.mubr.f32.gmra.mrb[0].mxu0 %v4767
      %v6281 = vpop.f32.mrb[0].mxu0
      %v6282 = vadd.f32 %v6012, %v6281
      %v6283 = vpop.f32.mrb[0].mxu0
      %6284 = vmatprep.mubr.f32.mxu0 0.0
      %6285 = vmatmul.mubr.f32.gmra.mrb[0].mxu0 %v4769
      %v6286 = vpop.f32.mrb[0].mxu0
      %v6287 = vadd.f32 %v6017, %v6286
      %v6288 = vpop.f32.mrb[0].mxu0
      %6289 = vmatprep.mubr.f32.mxu0 0.0
      %6290 = vmatmul.mubr.f32.gmra.mrb[0].mxu0 %v4771
      %v6291 = vpop.f32.mrb[0].mxu0
      %v6292 = vadd.f32 %v6022, %v6291
      %v6293 = vpop.f32.mrb[0].mxu0
      %6294 = vmatprep.mubr.f32.mxu0 0.0
      %6295 = vmatmul.mubr.f32.gmra.mrb[0].mxu0 %v4773
      %v6296 = vpop.f32.mrb[0].mxu0
      %v6297 = vadd.f32 %v6027, %v6296
      %v6298 = vpop.f32.mrb[0].mxu0
      %6299 = vmatprep.mubr.f32.mxu0 0.0
      %6300 = vmatmul.mubr.f32.gmra.mrb[0].mxu0 %v4775
      %v6301 = vpop.f32.mrb[0].mxu0
      %v6302 = vadd.f32 %v6032, %v6301
      %v6303 = vpop.f32.mrb[0].mxu0
      %6304 = vmatprep.mubr.f32.mxu0 0.0
      %6305 = vmatmul.mubr.f32.gmra.mrb[0].mxu0 %v4777
      %v6306 = vpop.f32.mrb[0].mxu0
      %v6307 = vadd.f32 %v6037, %v6306
      %v6308 = vpop.f32.mrb[0].mxu0
      %6309 = vmatprep.mubr.f32.mxu0 0.0
      %6310 = vmatmul.mubr.f32.gmra.mrb[0].mxu0 %v4778
      %v6311 = vpop.f32.mrb[0].mxu0
      %v6312 = vadd.f32 %v6042, %v6311
      %v6313 = vpop.f32.mrb[0].mxu0
      %6314 = vmatprep.mubr.f32.mxu0 0.0
      %6315 = vmatmul.mubr.f32.gmra.mrb[0].mxu0 %v1958
      %v6316 = vpop.f32.mrb[0].mxu0
      %v6317 = vadd.f32 %v6047, %v6316
      %v6318 = vpop.f32.mrb[0].mxu0
      %6319 = vdwg.mxu0
      %v6320 = vmax.f32 %v6117, 0.0
      %v6321 = vmax.f32 %v6122, 0.0
      %v6322 = vmax.f32 %v6127, 0.0
      %v6323 = vmax.f32 %v6132, 0.0
      %v6324 = vmax.f32 %v6137, 0.0
      %v6325 = vmax.f32 %v6142, 0.0
      %v6326 = vmax.f32 %v6147, 0.0
      %v6327 = vmax.f32 %v6152, 0.0
      %v6328 = vmax.f32 %v6157, 0.0
      %v6329 = vmax.f32 %v6162, 0.0
      %v6330 = vmax.f32 %v6167, 0.0
      %v6331 = vmax.f32 %v6172, 0.0
      %v6332 = vmax.f32 %v6177, 0.0
      %v6333 = vmax.f32 %v6182, 0.0
      %v6334 = vmax.f32 %v6187, 0.0
      %v6335 = vmax.f32 %v6192, 0.0
      %v6336 = vmax.f32 %v6197, 0.0
      %v6337 = vmax.f32 %v6202, 0.0
      %v6338 = vmax.f32 %v6207, 0.0
      %v6339 = vmax.f32 %v6212, 0.0
      %v6340 = vmax.f32 %v6217, 0.0
      %v6341 = vmax.f32 %v6222, 0.0
      %v6342 = vmax.f32 %v6227, 0.0
      %v6343 = vmax.f32 %v6232, 0.0
      %v6344 = vmax.f32 %v6237, 0.0
      %v6345 = vmax.f32 %v6242, 0.0
      %v6346 = vmax.f32 %v6247, 0.0
      %v6347 = vmax.f32 %v6252, 0.0
      %v6348 = vmax.f32 %v6257, 0.0
      %v6349 = vmax.f32 %v6262, 0.0
      %v6350 = vmax.f32 %v6267, 0.0
      %v6351 = vmax.f32 %v6272, 0.0
      %v6352 = vmax.f32 %v6277, 0.0
      %v6353 = vmax.f32 %v6282, 0.0
      %v6354 = vmax.f32 %v6287, 0.0
      %v6355 = vmax.f32 %v6292, 0.0
      %v6356 = vmax.f32 %v6297, 0.0
      %v6357 = vmax.f32 %v6302, 0.0
      %v6358 = vmax.f32 %v6307, 0.0
      %v6359 = vmax.f32 %v6312, 0.0
      %v6360 = vmax.f32 %v6317, 0.0
      %v6361 = vld [vmem:[%s10] sm:$0xff]
      %v6362 = vld [vmem:[%s10 + $0x8] sm:$0xff]
      %v6363 = vld [vmem:[%s10 + $0x10] sm:$0xff]
      %v6364 = vld [vmem:[%s10 + $0x18] sm:$0xff]
      %v6365 = vld [vmem:[%s10 + $0x20] sm:$0xff]
      %v6366 = vld [vmem:[%s10 + $0x28] sm:$0xff]
      %v6367 = vld [vmem:[%s10 + $0x30] sm:$0xff]
      %v6368 = vld [vmem:[%s10 + $0x38] sm:$0xff]
      %v6369 = vld [vmem:[%s10 + $0x40] sm:$0xff]
      %v6370 = vld [vmem:[%s10 + $0x48] sm:$0xff]
      %v6371 = vld [vmem:[%s10 + $0x50] sm:$0xff]
      %v6372 = vld [vmem:[%s10 + $0x58] sm:$0xff]
      %v6373 = vld [vmem:[%s10 + $0x60] sm:$0xff]
      %v6374 = vld [vmem:[%s10 + $0x68] sm:$0xff]
      %v6375 = vld [vmem:[%s10 + $0x70] sm:$0xff]
      %v6376 = vld [vmem:[%s10 + $0x78] sm:$0xff]
      %v6377 = vld [vmem:[%s11] sm:$0x1]
      %v6379 = vlaneseq
      %v6380 = vshrl.u32 %v6379, 7
      %v6381 = vsub.s32 0, %v6380
      %v6382 = vrot.slane %v6377, %v6381
      %6384 = vmatprep.subr.mxu0 0.0
      %6385 = vmatpush1.msra.mxu0 %v6361
      %6386 = vmatprep.subr.mxu0 0.0
      %6387 = vmatpush1.msra.mxu0 %v6362
      %6388 = vmatprep.subr.mxu0 0.0
      %6389 = vmatpush1.msra.mxu0 %v6363
      %6390 = vmatprep.subr.mxu0 0.0
      %6391 = vmatpush1.msra.mxu0 %v6364
      %6392 = vmatprep.subr.mxu0 0.0
      %6393 = vmatpush1.msra.mxu0 %v6365
      %6394 = vmatprep.subr.mxu0 0.0
      %6395 = vmatpush1.msra.mxu0 %v6366
      %6396 = vmatprep.subr.mxu0 0.0
      %6397 = vmatpush1.msra.mxu0 %v6367
      %6398 = vmatprep.subr.mxu0 0.0
      %6399 = vmatpush1.msra.mxu0 %v6368
      %6400 = vmatprep.subr.mxu0 0.0
      %6401 = vmatpush1.msra.mxu0 %v6369
      %6402 = vmatprep.subr.mxu0 0.0
      %6403 = vmatpush1.msra.mxu0 %v6370
      %6404 = vmatprep.subr.mxu0 0.0
      %6405 = vmatpush1.msra.mxu0 %v6371
      %6406 = vmatprep.subr.mxu0 0.0
      %6407 = vmatpush1.msra.mxu0 %v6372
      %6408 = vmatprep.subr.mxu0 0.0
      %6409 = vmatpush1.msra.mxu0 %v6373
      %6410 = vmatprep.subr.mxu0 0.0
      %6411 = vmatpush1.msra.mxu0 %v6374
      %6412 = vmatprep.subr.mxu0 0.0
      %6413 = vmatpush1.msra.mxu0 %v6375
      %6414 = vmatprep.subr.mxu0 0.0
      %6415 = vmatpush1.msra.mxu0 %v6376
      %6416 = vmatprep.subr.mxu0 0.0
      %6417 = vmatpush1.msra.mxu0 0.0
      %6418 = vmatprep.subr.mxu0 0.0
      %6419 = vmatpush1.msra.mxu0 0.0
      %6420 = vmatprep.subr.mxu0 0.0
      %6421 = vmatpush1.msra.mxu0 0.0
      %6422 = vmatprep.subr.mxu0 0.0
      %6423 = vmatpush1.msra.mxu0 0.0
      %6424 = vmatprep.subr.mxu0 0.0
      %6425 = vmatpush1.msra.mxu0 0.0
      %6426 = vmatprep.subr.mxu0 0.0
      %6427 = vmatpush1.msra.mxu0 0.0
      %6428 = vmatprep.subr.mxu0 0.0
      %6429 = vmatpush1.msra.mxu0 0.0
      %6430 = vmatprep.subr.mxu0 0.0
      %6431 = vmatpush1.msra.mxu0 0.0
      %6432 = vmatprep.subr.mxu0 0.0
      %6433 = vmatpush1.msra.mxu0 0.0
      %6434 = vmatprep.subr.mxu0 0.0
      %6435 = vmatpush1.msra.mxu0 0.0
      %6436 = vmatprep.subr.mxu0 0.0
      %6437 = vmatpush1.msra.mxu0 0.0
      %6438 = vmatprep.subr.mxu0 0.0
      %6439 = vmatpush1.msra.mxu0 0.0
      %6440 = vmatprep.subr.mxu0 0.0
      %6441 = vmatpush1.msra.mxu0 0.0
      %6442 = vmatprep.subr.mxu0 0.0
      %6443 = vmatpush1.msra.mxu0 0.0
      %6444 = vmatprep.subr.mxu0 0.0
      %6445 = vmatpush1.msra.mxu0 0.0
      %6446 = vmatprep.subr.mxu0 0.0
      %6447 = vmatpush1.msra.mxu0 0.0
      %6448 = vmatprep.mubr.f32.mxu0 0.0
      %6449 = vmatmul.mubr.f32.gmra.mrb[0].mxu0 %v414
      %v6450 = vpop.f32.mrb[0].mxu0
      %v6451 = vadd.f32 %v6382, %v6450
      %v6452 = vpop.f32.mrb[0].mxu0
      %6453 = vmatprep.mubr.f32.mxu0 0.0
      %6454 = vmatmul.mubr.f32.gmra.mrb[0].mxu0 %v415
      %v6455 = vpop.f32.mrb[0].mxu0
      %v6456 = vadd.f32 %v6382, %v6455
      %v6457 = vpop.f32.mrb[0].mxu0
      %6458 = vmatprep.mubr.f32.mxu0 0.0
      %6459 = vmatmul.mubr.f32.gmra.mrb[0].mxu0 %v416
      %v6460 = vpop.f32.mrb[0].mxu0
      %v6461 = vadd.f32 %v6382, %v6460
      %v6462 = vpop.f32.mrb[0].mxu0
      %6463 = vmatprep.mubr.f32.mxu0 0.0
      %6464 = vmatmul.mubr.f32.gmra.mrb[0].mxu0 %v417
      %v6465 = vpop.f32.mrb[0].mxu0
      %v6466 = vadd.f32 %v6382, %v6465
      %v6467 = vpop.f32.mrb[0].mxu0
      %6468 = vmatprep.mubr.f32.mxu0 0.0
      %6469 = vmatmul.mubr.f32.gmra.mrb[0].mxu0 %v418
      %v6470 = vpop.f32.mrb[0].mxu0
      %v6471 = vadd.f32 %v6382, %v6470
      %v6472 = vpop.f32.mrb[0].mxu0
      %6473 = vmatprep.mubr.f32.mxu0 0.0
      %6474 = vmatmul.mubr.f32.gmra.mrb[0].mxu0 %v419
      %v6475 = vpop.f32.mrb[0].mxu0
      %v6476 = vadd.f32 %v6382, %v6475
      %v6477 = vpop.f32.mrb[0].mxu0
      %6478 = vmatprep.mubr.f32.mxu0 0.0
      %6479 = vmatmul.mubr.f32.gmra.mrb[0].mxu0 %v420
      %v6480 = vpop.f32.mrb[0].mxu0
      %v6481 = vadd.f32 %v6382, %v6480
      %v6482 = vpop.f32.mrb[0].mxu0
      %6483 = vmatprep.mubr.f32.mxu0 0.0
      %6484 = vmatmul.mubr.f32.gmra.mrb[0].mxu0 %v421
      %v6485 = vpop.f32.mrb[0].mxu0
      %v6486 = vadd.f32 %v6382, %v6485
      %v6487 = vpop.f32.mrb[0].mxu0
      %6488 = vmatprep.mubr.f32.mxu0 0.0
      %6489 = vmatmul.mubr.f32.gmra.mrb[0].mxu0 %v422
      %v6490 = vpop.f32.mrb[0].mxu0
      %v6491 = vadd.f32 %v6382, %v6490
      %v6492 = vpop.f32.mrb[0].mxu0
      %6493 = vmatprep.mubr.f32.mxu0 0.0
      %6494 = vmatmul.mubr.f32.gmra.mrb[0].mxu0 %v423
      %v6495 = vpop.f32.mrb[0].mxu0
      %v6496 = vadd.f32 %v6382, %v6495
      %v6497 = vpop.f32.mrb[0].mxu0
      %6498 = vmatprep.mubr.f32.mxu0 0.0
      %6499 = vmatmul.mubr.f32.gmra.mrb[0].mxu0 %v424
      %v6500 = vpop.f32.mrb[0].mxu0
      %v6501 = vadd.f32 %v6382, %v6500
      %v6502 = vpop.f32.mrb[0].mxu0
      %6503 = vmatprep.mubr.f32.mxu0 0.0
      %6504 = vmatmul.mubr.f32.gmra.mrb[0].mxu0 %v425
      %v6505 = vpop.f32.mrb[0].mxu0
      %v6506 = vadd.f32 %v6382, %v6505
      %v6507 = vpop.f32.mrb[0].mxu0
      %6508 = vmatprep.mubr.f32.mxu0 0.0
      %6509 = vmatmul.mubr.f32.gmra.mrb[0].mxu0 %v426
      %v6510 = vpop.f32.mrb[0].mxu0
      %v6511 = vadd.f32 %v6382, %v6510
      %v6512 = vpop.f32.mrb[0].mxu0
      %6513 = vmatprep.mubr.f32.mxu0 0.0
      %6514 = vmatmul.mubr.f32.gmra.mrb[0].mxu0 %v427
      %v6515 = vpop.f32.mrb[0].mxu0
      %v6516 = vadd.f32 %v6382, %v6515
      %v6517 = vpop.f32.mrb[0].mxu0
      %6518 = vmatprep.mubr.f32.mxu0 0.0
      %6519 = vmatmul.mubr.f32.gmra.mrb[0].mxu0 %v428
      %v6520 = vpop.f32.mrb[0].mxu0
      %v6521 = vadd.f32 %v6382, %v6520
      %v6522 = vpop.f32.mrb[0].mxu0
      %6523 = vmatprep.mubr.f32.mxu0 0.0
      %6524 = vmatmul.mubr.f32.gmra.mrb[0].mxu0 %v429
      %v6525 = vpop.f32.mrb[0].mxu0
      %v6526 = vadd.f32 %v6382, %v6525
      %v6527 = vpop.f32.mrb[0].mxu0
      %6528 = vmatprep.mubr.f32.mxu0 0.0
      %6529 = vmatmul.mubr.f32.gmra.mrb[0].mxu0 %v430
      %v6530 = vpop.f32.mrb[0].mxu0
      %v6531 = vadd.f32 %v6382, %v6530
      %v6532 = vpop.f32.mrb[0].mxu0
      %6533 = vmatprep.mubr.f32.mxu0 0.0
      %6534 = vmatmul.mubr.f32.gmra.mrb[0].mxu0 %v431
      %v6535 = vpop.f32.mrb[0].mxu0
      %v6536 = vadd.f32 %v6382, %v6535
      %v6537 = vpop.f32.mrb[0].mxu0
      %6538 = vmatprep.mubr.f32.mxu0 0.0
      %6539 = vmatmul.mubr.f32.gmra.mrb[0].mxu0 %v432
      %v6540 = vpop.f32.mrb[0].mxu0
      %v6541 = vadd.f32 %v6382, %v6540
      %v6542 = vpop.f32.mrb[0].mxu0
      %6543 = vmatprep.mubr.f32.mxu0 0.0
      %6544 = vmatmul.mubr.f32.gmra.mrb[0].mxu0 %v433
      %v6545 = vpop.f32.mrb[0].mxu0
      %v6546 = vadd.f32 %v6382, %v6545
      %v6547 = vpop.f32.mrb[0].mxu0
      %6548 = vmatprep.mubr.f32.mxu0 0.0
      %6549 = vmatmul.mubr.f32.gmra.mrb[0].mxu0 %v434
      %v6550 = vpop.f32.mrb[0].mxu0
      %v6551 = vadd.f32 %v6382, %v6550
      %v6552 = vpop.f32.mrb[0].mxu0
      %6553 = vmatprep.mubr.f32.mxu0 0.0
      %6554 = vmatmul.mubr.f32.gmra.mrb[0].mxu0 %v435
      %v6555 = vpop.f32.mrb[0].mxu0
      %v6556 = vadd.f32 %v6382, %v6555
      %v6557 = vpop.f32.mrb[0].mxu0
      %6558 = vmatprep.mubr.f32.mxu0 0.0
      %6559 = vmatmul.mubr.f32.gmra.mrb[0].mxu0 %v436
      %v6560 = vpop.f32.mrb[0].mxu0
      %v6561 = vadd.f32 %v6382, %v6560
      %v6562 = vpop.f32.mrb[0].mxu0
      %6563 = vmatprep.mubr.f32.mxu0 0.0
      %6564 = vmatmul.mubr.f32.gmra.mrb[0].mxu0 %v437
      %v6565 = vpop.f32.mrb[0].mxu0
      %v6566 = vadd.f32 %v6382, %v6565
      %v6567 = vpop.f32.mrb[0].mxu0
      %6568 = vmatprep.mubr.f32.mxu0 0.0
      %6569 = vmatmul.mubr.f32.gmra.mrb[0].mxu0 %v438
      %v6570 = vpop.f32.mrb[0].mxu0
      %v6571 = vadd.f32 %v6382, %v6570
      %v6572 = vpop.f32.mrb[0].mxu0
      %6573 = vmatprep.mubr.f32.mxu0 0.0
      %6574 = vmatmul.mubr.f32.gmra.mrb[0].mxu0 %v439
      %v6575 = vpop.f32.mrb[0].mxu0
      %v6576 = vadd.f32 %v6382, %v6575
      %v6577 = vpop.f32.mrb[0].mxu0
      %6578 = vmatprep.mubr.f32.mxu0 0.0
      %6579 = vmatmul.mubr.f32.gmra.mrb[0].mxu0 %v440
      %v6580 = vpop.f32.mrb[0].mxu0
      %v6581 = vadd.f32 %v6382, %v6580
      %v6582 = vpop.f32.mrb[0].mxu0
      %6583 = vmatprep.mubr.f32.mxu0 0.0
      %6584 = vmatmul.mubr.f32.gmra.mrb[0].mxu0 %v441
      %v6585 = vpop.f32.mrb[0].mxu0
      %v6586 = vadd.f32 %v6382, %v6585
      %v6587 = vpop.f32.mrb[0].mxu0
      %6588 = vmatprep.mubr.f32.mxu0 0.0
      %6589 = vmatmul.mubr.f32.gmra.mrb[0].mxu0 %v442
      %v6590 = vpop.f32.mrb[0].mxu0
      %v6591 = vadd.f32 %v6382, %v6590
      %v6592 = vpop.f32.mrb[0].mxu0
      %6593 = vmatprep.mubr.f32.mxu0 0.0
      %6594 = vmatmul.mubr.f32.gmra.mrb[0].mxu0 %v443
      %v6595 = vpop.f32.mrb[0].mxu0
      %v6596 = vadd.f32 %v6382, %v6595
      %v6597 = vpop.f32.mrb[0].mxu0
      %6598 = vmatprep.mubr.f32.mxu0 0.0
      %6599 = vmatmul.mubr.f32.gmra.mrb[0].mxu0 %v444
      %v6600 = vpop.f32.mrb[0].mxu0
      %v6601 = vadd.f32 %v6382, %v6600
      %v6602 = vpop.f32.mrb[0].mxu0
      %6603 = vmatprep.mubr.f32.mxu0 0.0
      %6604 = vmatmul.mubr.f32.gmra.mrb[0].mxu0 %v445
      %v6605 = vpop.f32.mrb[0].mxu0
      %v6606 = vadd.f32 %v6382, %v6605
      %v6607 = vpop.f32.mrb[0].mxu0
      %6608 = vmatprep.mubr.f32.mxu0 0.0
      %6609 = vmatmul.mubr.f32.gmra.mrb[0].mxu0 %v446
      %v6610 = vpop.f32.mrb[0].mxu0
      %v6611 = vadd.f32 %v6382, %v6610
      %v6612 = vpop.f32.mrb[0].mxu0
      %6613 = vmatprep.mubr.f32.mxu0 0.0
      %6614 = vmatmul.mubr.f32.gmra.mrb[0].mxu0 %v447
      %v6615 = vpop.f32.mrb[0].mxu0
      %v6616 = vadd.f32 %v6382, %v6615
      %v6617 = vpop.f32.mrb[0].mxu0
      %6618 = vmatprep.mubr.f32.mxu0 0.0
      %6619 = vmatmul.mubr.f32.gmra.mrb[0].mxu0 %v448
      %v6620 = vpop.f32.mrb[0].mxu0
      %v6621 = vadd.f32 %v6382, %v6620
      %v6622 = vpop.f32.mrb[0].mxu0
      %6623 = vmatprep.mubr.f32.mxu0 0.0
      %6624 = vmatmul.mubr.f32.gmra.mrb[0].mxu0 %v449
      %v6625 = vpop.f32.mrb[0].mxu0
      %v6626 = vadd.f32 %v6382, %v6625
      %v6627 = vpop.f32.mrb[0].mxu0
      %6628 = vmatprep.mubr.f32.mxu0 0.0
      %6629 = vmatmul.mubr.f32.gmra.mrb[0].mxu0 %v450
      %v6630 = vpop.f32.mrb[0].mxu0
      %v6631 = vadd.f32 %v6382, %v6630
      %v6632 = vpop.f32.mrb[0].mxu0
      %6633 = vmatprep.mubr.f32.mxu0 0.0
      %6634 = vmatmul.mubr.f32.gmra.mrb[0].mxu0 %v451
      %v6635 = vpop.f32.mrb[0].mxu0
      %v6636 = vadd.f32 %v6382, %v6635
      %v6637 = vpop.f32.mrb[0].mxu0
      %6638 = vmatprep.mubr.f32.mxu0 0.0
      %6639 = vmatmul.mubr.f32.gmra.mrb[0].mxu0 %v452
      %v6640 = vpop.f32.mrb[0].mxu0
      %v6641 = vadd.f32 %v6382, %v6640
      %v6642 = vpop.f32.mrb[0].mxu0
      %6643 = vmatprep.mubr.f32.mxu0 0.0
      %6644 = vmatmul.mubr.f32.gmra.mrb[0].mxu0 %v453
      %v6645 = vpop.f32.mrb[0].mxu0
      %v6646 = vadd.f32 %v6382, %v6645
      %v6647 = vpop.f32.mrb[0].mxu0
      %6648 = vmatprep.mubr.f32.mxu0 0.0
      %6649 = vmatmul.mubr.f32.gmra.mrb[0].mxu0 %v454
      %v6650 = vpop.f32.mrb[0].mxu0
      %v6651 = vadd.f32 %v6382, %v6650
      %v6652 = vpop.f32.mrb[0].mxu0
      %6653 = vdwg.mxu0
      %v6654 = vadd.f32 %v6451, %v6320
      %v6655 = vadd.f32 %v6456, %v6321
      %v6656 = vadd.f32 %v6461, %v6322
      %v6657 = vadd.f32 %v6466, %v6323
      %v6658 = vadd.f32 %v6471, %v6324
      %v6659 = vadd.f32 %v6476, %v6325
      %v6660 = vadd.f32 %v6481, %v6326
      %v6661 = vadd.f32 %v6486, %v6327
      %v6662 = vadd.f32 %v6491, %v6328
      %v6663 = vadd.f32 %v6496, %v6329
      %v6664 = vadd.f32 %v6501, %v6330
      %v6665 = vadd.f32 %v6506, %v6331
      %v6666 = vadd.f32 %v6511, %v6332
      %v6667 = vadd.f32 %v6516, %v6333
      %v6668 = vadd.f32 %v6521, %v6334
      %v6669 = vadd.f32 %v6526, %v6335
      %v6670 = vadd.f32 %v6531, %v6336
      %v6671 = vadd.f32 %v6536, %v6337
      %v6672 = vadd.f32 %v6541, %v6338
      %v6673 = vadd.f32 %v6546, %v6339
      %v6674 = vadd.f32 %v6551, %v6340
      %v6675 = vadd.f32 %v6556, %v6341
      %v6676 = vadd.f32 %v6561, %v6342
      %v6677 = vadd.f32 %v6566, %v6343
      %v6678 = vadd.f32 %v6571, %v6344
      %v6679 = vadd.f32 %v6576, %v6345
      %v6680 = vadd.f32 %v6581, %v6346
      %v6681 = vadd.f32 %v6586, %v6347
      %v6682 = vadd.f32 %v6591, %v6348
      %v6683 = vadd.f32 %v6596, %v6349
      %v6684 = vadd.f32 %v6601, %v6350
      %v6685 = vadd.f32 %v6606, %v6351
      %v6686 = vadd.f32 %v6611, %v6352
      %v6687 = vadd.f32 %v6616, %v6353
      %v6688 = vadd.f32 %v6621, %v6354
      %v6689 = vadd.f32 %v6626, %v6355
      %v6690 = vadd.f32 %v6631, %v6356
      %v6691 = vadd.f32 %v6636, %v6357
      %v6692 = vadd.f32 %v6641, %v6358
      %v6693 = vadd.f32 %v6646, %v6359
      %v6694 = vadd.f32 %v6651, %v6360
      %6695 = vst [vmem:[%s413] sm:$0xff] %v6654
      %6696 = vst [vmem:[%s413 + $0x8] sm:$0xff] %v6655
      %6697 = vst [vmem:[%s413 + $0x10] sm:$0xff] %v6656
      %6698 = vst [vmem:[%s413 + $0x18] sm:$0xff] %v6657
      %6699 = vst [vmem:[%s413 + $0x20] sm:$0xff] %v6658
      %6700 = vst [vmem:[%s413 + $0x28] sm:$0xff] %v6659
      %6701 = vst [vmem:[%s413 + $0x30] sm:$0xff] %v6660
      %6702 = vst [vmem:[%s413 + $0x38] sm:$0xff] %v6661
      %6703 = vst [vmem:[%s413 + $0x40] sm:$0xff] %v6662
      %6704 = vst [vmem:[%s413 + $0x48] sm:$0xff] %v6663
      %6705 = vst [vmem:[%s413 + $0x50] sm:$0xff] %v6664
      %6706 = vst [vmem:[%s413 + $0x58] sm:$0xff] %v6665
      %6707 = vst [vmem:[%s413 + $0x60] sm:$0xff] %v6666
      %6708 = vst [vmem:[%s413 + $0x68] sm:$0xff] %v6667
      %6709 = vst [vmem:[%s413 + $0x70] sm:$0xff] %v6668
      %6710 = vst [vmem:[%s413 + $0x78] sm:$0xff] %v6669
      %6711 = vst [vmem:[%s413 + $0x80] sm:$0xff] %v6670
      %6712 = vst [vmem:[%s413 + $0x88] sm:$0xff] %v6671
      %6713 = vst [vmem:[%s413 + $0x90] sm:$0xff] %v6672
      %6714 = vst [vmem:[%s413 + $0x98] sm:$0xff] %v6673
      %6715 = vst [vmem:[%s413 + $0xa0] sm:$0xff] %v6674
      %6716 = vst [vmem:[%s413 + $0xa8] sm:$0xff] %v6675
      %6717 = vst [vmem:[%s413 + $0xb0] sm:$0xff] %v6676
      %6718 = vst [vmem:[%s413 + $0xb8] sm:$0xff] %v6677
      %6719 = vst [vmem:[%s413 + $0xc0] sm:$0xff] %v6678
      %6720 = vst [vmem:[%s413 + $0xc8] sm:$0xff] %v6679
      %6721 = vst [vmem:[%s413 + $0xd0] sm:$0xff] %v6680
      %6722 = vst [vmem:[%s413 + $0xd8] sm:$0xff] %v6681
      %6723 = vst [vmem:[%s413 + $0xe0] sm:$0xff] %v6682
      %6724 = vst [vmem:[%s413 + $0xe8] sm:$0xff] %v6683
      %6725 = vst [vmem:[%s413 + $0xf0] sm:$0xff] %v6684
      %6726 = vst [vmem:[%s413 + $0xf8] sm:$0xff] %v6685
      %6727 = vst [vmem:[%s413 + $0x100] sm:$0xff] %v6686
      %6728 = vst [vmem:[%s413 + $0x108] sm:$0xff] %v6687
      %6729 = vst [vmem:[%s413 + $0x110] sm:$0xff] %v6688
      %6730 = vst [vmem:[%s413 + $0x118] sm:$0xff] %v6689
      %6731 = vst [vmem:[%s413 + $0x120] sm:$0xff] %v6690
      %6732 = vst [vmem:[%s413 + $0x128] sm:$0xff] %v6691
      %6733 = vst [vmem:[%s413 + $0x130] sm:$0xff] %v6692
      %6734 = vst [vmem:[%s413 + $0x138] sm:$0xff] %v6693
      %6735 = vst [vmem:[%s413 + $0x140] sm:$0xff] %v6694
      %p6736 = scmp.lt.s32.totalorder %s23, 1
      %s6737 = scalar_select %p6736, %s23, 1
      %s6738 = smul.addr %s6737, 41
      %s6739 = smul.addr %s6738, 8
      %s6740 = scalar_lea.vmem %s12, %s6739
      // Predicated region
      $region69: #{inv_res_block.1} parent=67 // pred_check
        %p6741 = pneg %p298
      $region70: #{inv_res_block.1} parent=67 // pred_check_branch
        %6743 = sbr.rel (%p6741) target = $region72
      $region71: #{inv_res_block.1} parent=67 // pred_region
        _
      $region72: #{inv_res_block.1} parent=67 // pred_fallthru
        _
    $region68: #{inv_res_block.1} parent=5 // pred_fallthru
      _
    %p6744 = scmp.le.s32.totalorder 2, %s18
    // Predicated region
    $region73: #{inv_res_block.1} parent=5 // pred_check
      %p6745 = pneg %p6744
    $region74: #{inv_res_block.1} parent=5 // pred_check_branch
      %6747 = sbr.rel (%p6745) target = $region76
    $region75: #{inv_res_block.1} parent=5 // pred_region
      %s6748 = ssub.s32 %s18, 2
      // Predicated region
      $region77: #{inv_res_block.1} parent=75 // pred_check
        %p6749 = pneg %p304
      $region78: #{inv_res_block.1} parent=75 // pred_check_branch
        %6751 = sbr.rel (%p6749) target = $region80
      $region79: #{inv_res_block.1} parent=75 // pred_region
        %p6752 = scmp.lt.s32.totalorder %s24, 1
        %s6753 = scalar_select %p6752, %s24, 1
        %s6754 = smul.addr %s6753, 41
        %s6755 = smul.addr %s6754, 8
        %s6756 = scalar_lea.vmem %s12, %s6755
      $region80: #{inv_res_block.1} parent=75 // pred_fallthru
        _
    $region76: #{inv_res_block.1} parent=5 // pred_fallthru
      _
  $region6: #{inv_res_block.1} parent=0 // loop_footer
    %s22 = sadd.s32 1, %s18
  $region7: #{inv_res_block.1} parent=0 // loop_footer_branch
    %17 = sbr.rel target = $region3
  $region8: #{inv_res_block.1} parent=0 // loop_exit
    _

</llo_original>
